<compile_context>
chip_gen: v6e
topology: v6e:2x2x1
jax: 0.10.0
libtpu: 0.0.40
codegen_flags: <defaults>
</compile_context>

<pallas_src>
import jax
import jax.numpy as jnp
from jax import lax
from jax.experimental import pallas as pl
from jax.experimental.pallas import tpu as pltpu

# ----------------------------- configuration (small, CLIP-shaped) ------------
BATCH = 2
CHANNELS = 3
IMAGE_SIZE = 32
PATCH = 8
HIDDEN = 128          # vision tower width (CLIP-L uses 1024)
NHEADS = 4
HEAD_DIM = HIDDEN // NHEADS
INTERMEDIATE = 256    # vision MLP width (CLIP-L uses 4096)
NLAYERS = 2           # CLIP-L uses 24
PROJ_DIM = 768        # visual_projection output == MLP-head input (matches module)
MLP_HIDDEN = 768
MLP_OUT = 512
LN_EPS = 1e-5
NUM_PATCHES = (IMAGE_SIZE // PATCH) ** 2          # 16
SEQ = NUM_PATCHES + 1                              # 17 (+1 CLS token)
T_PAD = ((SEQ + 7) // 8) * 8                       # 24: sublane-aligned sequence
PATCH_FEAT = CHANNELS * PATCH * PATCH              # 192

_VMEM = pl.BlockSpec(memory_space=pltpu.MemorySpace.VMEM)


# ----------------------------- in-kernel helpers ------------------------------
def _ln(x, g, b):
    """Row-wise LayerNorm in f32."""
    mean = jnp.mean(x, axis=-1, keepdims=True)
    var = jnp.mean(jnp.square(x - mean), axis=-1, keepdims=True)
    return (x - mean) * lax.rsqrt(var + LN_EPS) * g + b


# ----------------------------- kernel 1: fused embedding ----------------------
def _embed_kernel(patches_ref, pw_ref, cls_ref, pos_ref, g_ref, b_ref, o_ref):
    # patch conv (stride == kernel, bias-free) as a matmul
    pe = jnp.dot(patches_ref[0].astype(jnp.float32), pw_ref[...],
                 preferred_element_type=jnp.float32)                 # (16, H)
    seq = jnp.concatenate([cls_ref[...], pe], axis=0) + pos_ref[...]  # (SEQ, H)
    xn = _ln(seq, g_ref[...], b_ref[...])
    pad = jnp.zeros((T_PAD - SEQ, HIDDEN), dtype=xn.dtype)
    o_ref[0] = jnp.concatenate([xn, pad], axis=0).astype(o_ref.dtype)


def _embed(patches, p):
    b = patches.shape[0]
    const = lambda i: (0, 0)
    return pl.pallas_call(
        _embed_kernel,
        out_shape=jax.ShapeDtypeStruct((b, T_PAD, HIDDEN), jnp.float32),
        grid=(b,),
        in_specs=[
            pl.BlockSpec((1, NUM_PATCHES, PATCH_FEAT), lambda i: (i, 0, 0)),
            pl.BlockSpec((PATCH_FEAT, HIDDEN), const),
            pl.BlockSpec((1, HIDDEN), const),
            pl.BlockSpec((SEQ, HIDDEN), const),
            pl.BlockSpec((1, HIDDEN), const),
            pl.BlockSpec((1, HIDDEN), const),
        ],
        out_specs=pl.BlockSpec((1, T_PAD, HIDDEN), lambda i: (i, 0, 0)),
        compiler_params=pltpu.CompilerParams(dimension_semantics=("parallel",)),
    )(patches, p["patch_w"], p["class_emb"].reshape(1, HIDDEN), p["pos_emb"],
      p["pre_ln_g"].reshape(1, HIDDEN), p["pre_ln_b"].reshape(1, HIDDEN))


# ----------------------------- kernel 2: fused transformer layer --------------
def _layer_kernel(hid_ref, ln1g_ref, ln1b_ref, qkvw_ref, qkvb_ref,
                  ow_ref, ob_ref, ln2g_ref, ln2b_ref,
                  fc1w_ref, fc1b_ref, fc2w_ref, fc2b_ref, o_ref):
    x = hid_ref[0].astype(jnp.float32)                                # (T_PAD, H)

    # --- attention block (pre-LN residual) ---
    xn = _ln(x, ln1g_ref[...], ln1b_ref[...])
    # fused QKV; the 1/sqrt(head_dim) scale is pre-folded into the Q weight/bias
    qkv = jnp.dot(xn, qkvw_ref[...], preferred_element_type=jnp.float32)
    qkv = qkv + qkvb_ref[...]                                         # (T_PAD, 3H)

    # additive key mask for padded positions (rows >= SEQ are padding)
    col = lax.broadcasted_iota(jnp.int32, (T_PAD, T_PAD), 1)
    key_mask = jnp.where(col < SEQ, 0.0, -1e30)

    heads = []
    for h in range(NHEADS):                                           # unrolled, 4 heads
        q = qkv[:, h * HEAD_DIM:(h + 1) * HEAD_DIM]
        k = qkv[:, HIDDEN + h * HEAD_DIM:HIDDEN + (h + 1) * HEAD_DIM]
        v = qkv[:, 2 * HIDDEN + h * HEAD_DIM:2 * HIDDEN + (h + 1) * HEAD_DIM]
        # q @ k^T via dot_general contracting last dims (no explicit transpose)
        s = lax.dot_general(q, k, (((1,), (1,)), ((), ())),
                            preferred_element_type=jnp.float32)       # (T_PAD, T_PAD)
        s = s + key_mask
        s = s - jnp.max(s, axis=-1, keepdims=True)
        p = jnp.exp(s)
        p = p * pl.reciprocal(jnp.sum(p, axis=-1, keepdims=True), approx=True)
        heads.append(jnp.dot(p, v, preferred_element_type=jnp.float32))
    attn = jnp.concatenate(heads, axis=-1)                            # (T_PAD, H)

    # O-proj with residual fused in the epilogue
    x = x + jnp.dot(attn, ow_ref[...], preferred_element_type=jnp.float32) + ob_ref[...]

    # --- MLP block (quick_gelu), residual fused ---
    xn = _ln(x, ln2g_ref[...], ln2b_ref[...])
    h1 = jnp.dot(xn, fc1w_ref[...], preferred_element_type=jnp.float32) + fc1b_ref[...]
    h1 = h1 * jax.nn.sigmoid(1.702 * h1)                              # QuickGELU
    x = x + jnp.dot(h1, fc2w_ref[...], preferred_element_type=jnp.float32) + fc2b_ref[...]

    o_ref[0] = x.astype(o_ref.dtype)


def _transformer_layer(hid, qkv_w, qkv_b, lyr):
    b = hid.shape[0]
    const = lambda i: (0, 0)
    hspec = pl.BlockSpec((1, T_PAD, HIDDEN), lambda i: (i, 0, 0))

    def w(shape):
        return pl.BlockSpec(shape, const)

    return pl.pallas_call(
        _layer_kernel,
        out_shape=jax.ShapeDtypeStruct((b, T_PAD, HIDDEN), jnp.float32),
        grid=(b,),
        in_specs=[
            hspec,
            w((1, HIDDEN)), w((1, HIDDEN)),                      # ln1 gamma/beta
            w((HIDDEN, 3 * HIDDEN)), w((1, 3 * HIDDEN)),         # fused QKV
            w((HIDDEN, HIDDEN)), w((1, HIDDEN)),                 # out proj
            w((1, HIDDEN)), w((1, HIDDEN)),                      # ln2 gamma/beta
            w((HIDDEN, INTERMEDIATE)), w((1, INTERMEDIATE)),     # fc1
            w((INTERMEDIATE, HIDDEN)), w((1, HIDDEN)),           # fc2
        ],
        out_specs=hspec,
        compiler_params=pltpu.CompilerParams(dimension_semantics=("parallel",)),
    )(hid,
      lyr["ln1_g"].reshape(1, -1), lyr["ln1_b"].reshape(1, -1),
      qkv_w, qkv_b.reshape(1, -1),
      lyr["o_w"], lyr["o_b"].reshape(1, -1),
      lyr["ln2_g"].reshape(1, -1), lyr["ln2_b"].reshape(1, -1),
      lyr["fc1_w"], lyr["fc1_b"].reshape(1, -1),
      lyr["fc2_w"], lyr["fc2_b"].reshape(1, -1))


# ----------------------------- kernel 3: fused head ---------------------------
def _head_kernel(hid_ref, g_ref, b_ref, vproj_ref, m1w_ref, m1b_ref,
                 m2w_ref, m2b_ref, o_ref):
    cls = hid_ref[...][:, 0, :].astype(jnp.float32)                   # (B, H) CLS tokens
    xn = _ln(cls, g_ref[...], b_ref[...])
    feats = jnp.dot(xn, vproj_ref[...], preferred_element_type=jnp.float32)   # (B, 768)
    h1 = jnp.dot(feats, m1w_ref[...], preferred_element_type=jnp.float32) + m1b_ref[...]
    h1 = jnp.maximum(h1, 0.0)                                         # ReLU
    out = jnp.dot(h1, m2w_ref[...], preferred_element_type=jnp.float32) + m2b_ref[...]
    o_ref[...] = out.astype(o_ref.dtype)


def _head(hid, p):
    b = hid.shape[0]
    return pl.pallas_call(
        _head_kernel,
        out_shape=jax.ShapeDtypeStruct((b, MLP_OUT), jnp.float32),
        in_specs=[_VMEM] * 8,
        out_specs=_VMEM,
    )(hid,
      p["post_ln_g"].reshape(1, -1), p["post_ln_b"].reshape(1, -1),
      p["vis_proj_w"],
      p["mlp1_w"], p["mlp1_b"].reshape(1, -1),
      p["mlp2_w"], p["mlp2_b"].reshape(1, -1))


# ----------------------------- parameter init --------------------------------
def init_params(key):
    def nrm(k, shape, scale=0.02):
        return (scale * jax.random.normal(k, shape)).astype(jnp.float32)

    keys = iter(jax.random.split(key, 64 + 16 * NLAYERS))
    p = {
        "patch_w": nrm(next(keys), (PATCH_FEAT, HIDDEN)),   # conv as matmul (no bias)
        "class_emb": nrm(next(keys), (HIDDEN,)),
        "pos_emb": nrm(next(keys), (SEQ, HIDDEN)),
        "pre_ln_g": jnp.ones((HIDDEN,), jnp.float32),
        "pre_ln_b": jnp.zeros((HIDDEN,), jnp.float32),
        "post_ln_g": jnp.ones((HIDDEN,), jnp.float32),
        "post_ln_b": jnp.zeros((HIDDEN,), jnp.float32),
        "vis_proj_w": nrm(next(keys), (HIDDEN, PROJ_DIM)),  # no bias in CLIP
        "mlp1_w": nrm(next(keys), (PROJ_DIM, MLP_HIDDEN)),
        "mlp1_b": jnp.zeros((MLP_HIDDEN,), jnp.float32),
        "mlp2_w": nrm(next(keys), (MLP_HIDDEN, MLP_OUT)),
        "mlp2_b": jnp.zeros((MLP_OUT,), jnp.float32),
        "layers": [],
    }
    for _ in range(NLAYERS):
        p["layers"].append({
            "ln1_g": jnp.ones((HIDDEN,), jnp.float32),
            "ln1_b": jnp.zeros((HIDDEN,), jnp.float32),
            "q_w": nrm(next(keys), (HIDDEN, HIDDEN)), "q_b": jnp.zeros((HIDDEN,), jnp.float32),
            "k_w": nrm(next(keys), (HIDDEN, HIDDEN)), "k_b": jnp.zeros((HIDDEN,), jnp.float32),
            "v_w": nrm(next(keys), (HIDDEN, HIDDEN)), "v_b": jnp.zeros((HIDDEN,), jnp.float32),
            "o_w": nrm(next(keys), (HIDDEN, HIDDEN)), "o_b": jnp.zeros((HIDDEN,), jnp.float32),
            "ln2_g": jnp.ones((HIDDEN,), jnp.float32),
            "ln2_b": jnp.zeros((HIDDEN,), jnp.float32),
            "fc1_w": nrm(next(keys), (HIDDEN, INTERMEDIATE)),
            "fc1_b": jnp.zeros((INTERMEDIATE,), jnp.float32),
            "fc2_w": nrm(next(keys), (INTERMEDIATE, HIDDEN)),
            "fc2_b": jnp.zeros((HIDDEN,), jnp.float32),
        })
    return p


# ----------------------------- forward pass -----------------------------------
def image_encoder_forward(params, x):
    """x: (B, C, H, W) float32, NCHW (same as the PyTorch module)."""
    b, c, h, w = x.shape
    hp, wp = h // PATCH, w // PATCH

    # patch extraction glue (pure layout): (B, hp*wp, C*P*P)
    patches = x.reshape(b, c, hp, PATCH, wp, PATCH).transpose(0, 2, 4, 1, 3, 5)
    patches = patches.reshape(b, hp * wp, c * PATCH * PATCH)

    # fused: patch-embed + CLS + pos + pre-LN (sequence padded to T_PAD)
    hid = _embed(patches, params)

    scale = float(HEAD_DIM) ** -0.5
    for lyr in params["layers"]:
        # fused QKV weight; softmax scale folded into the Q slice
        qkv_w = jnp.concatenate([lyr["q_w"] * scale, lyr["k_w"], lyr["v_w"]], axis=1)
        qkv_b = jnp.concatenate([lyr["q_b"] * scale, lyr["k_b"], lyr["v_b"]], axis=0)
        hid = _transformer_layer(hid, qkv_w, qkv_b, lyr)

    # fused: CLS slice + post-LN + visual projection + Linear/ReLU/Linear head
    return _head(hid, params)


# ----------------------------- main -------------------------------------------
if __name__ == "__main__":
    key = jax.random.PRNGKey(0)
    pkey, xkey = jax.random.split(key)
    params = init_params(pkey)
    x = jax.random.normal(xkey, (BATCH, CHANNELS, IMAGE_SIZE, IMAGE_SIZE), jnp.float32)

    fwd = jax.jit(image_encoder_forward)
    out = fwd(params, x)
    out = jax.block_until_ready(out)
    assert out.shape == (BATCH, MLP_OUT), out.shape
    assert out.dtype == jnp.float32
    assert bool(jnp.all(jnp.isfinite(out)))
    print("KERNEL_OK")
</pallas_src>

<mosaic_0001>
module attributes {stable_mosaic.version = 11 : i64} {
  func.func @_embed_kernel(%arg0: i32, %arg1: memref<1x16x192xf32, #tpu.memory_space<vmem>>, %arg2: memref<192x128xf32, #tpu.memory_space<vmem>>, %arg3: memref<1x128xf32, #tpu.memory_space<vmem>>, %arg4: memref<17x128xf32, #tpu.memory_space<vmem>>, %arg5: memref<1x128xf32, #tpu.memory_space<vmem>>, %arg6: memref<1x128xf32, #tpu.memory_space<vmem>>, %arg7: memref<1x24x128xf32, #tpu.memory_space<vmem>>) attributes {dimension_semantics = [#tpu.dimension_semantics<parallel>], iteration_bounds = array<i64: 2>, scalar_prefetch = 0 : i64, scratch_operands = 0 : i64, tpu.core_type = #tpu.core_type<tc>, window_params = [{transform_indices = @transform_0, window_bounds = array<i64: 1, 16, 192>}, {pipeline_mode = #tpu.pipeline_mode<synchronous>, transform_indices = @transform_1, window_bounds = array<i64: 192, 128>}, {pipeline_mode = #tpu.pipeline_mode<synchronous>, transform_indices = @transform_2, window_bounds = array<i64: 1, 128>}, {pipeline_mode = #tpu.pipeline_mode<synchronous>, transform_indices = @transform_3, window_bounds = array<i64: 17, 128>}, {pipeline_mode = #tpu.pipeline_mode<synchronous>, transform_indices = @transform_4, window_bounds = array<i64: 1, 128>}, {pipeline_mode = #tpu.pipeline_mode<synchronous>, transform_indices = @transform_5, window_bounds = array<i64: 1, 128>}, {transform_indices = @transform_6, window_bounds = array<i64: 1, 24, 128>}]} {
    %c0 = arith.constant 0 : index
    %c0_0 = arith.constant 0 : index
    %c0_1 = arith.constant 0 : index
    %0 = vector.load %arg1[%c0, %c0_0, %c0_1] : memref<1x16x192xf32, #tpu.memory_space<vmem>>, vector<1x16x192xf32>
    %1 = vector.shape_cast %0 : vector<1x16x192xf32> to vector<16x192xf32>
    %c0_2 = arith.constant 0 : index
    %c0_3 = arith.constant 0 : index
    %2 = vector.load %arg2[%c0_2, %c0_3] : memref<192x128xf32, #tpu.memory_space<vmem>>, vector<192x128xf32>
    %cst = arith.constant dense<0.000000e+00> : vector<16x128xf32>
    %3 = tpu.matmul %1, %2, %cst {dimension_numbers = #tpu.dot_dimension_numbers<[1], [0], [0], [1], [0, 0, 1, 1], [], []>} : vector<16x192xf32>, vector<192x128xf32>, vector<16x128xf32> -> vector<16x128xf32>
    %c0_4 = arith.constant 0 : index
    %c0_5 = arith.constant 0 : index
    %4 = vector.load %arg3[%c0_4, %c0_5] : memref<1x128xf32, #tpu.memory_space<vmem>>, vector<1x128xf32>
    %5 = tpu.concatenate %4, %3 in 0 : vector<1x128xf32>, vector<16x128xf32> -> vector<17x128xf32>
    %c0_6 = arith.constant 0 : index
    %c0_7 = arith.constant 0 : index
    %6 = vector.load %arg4[%c0_6, %c0_7] : memref<17x128xf32, #tpu.memory_space<vmem>>, vector<17x128xf32>
    %7 = arith.addf %5, %6 : vector<17x128xf32>
    %c0_8 = arith.constant 0 : index
    %c0_9 = arith.constant 0 : index
    %8 = vector.load %arg5[%c0_8, %c0_9] : memref<1x128xf32, #tpu.memory_space<vmem>>, vector<1x128xf32>
    %c0_10 = arith.constant 0 : index
    %c0_11 = arith.constant 0 : index
    %9 = vector.load %arg6[%c0_10, %c0_11] : memref<1x128xf32, #tpu.memory_space<vmem>>, vector<1x128xf32>
    %cst_12 = arith.constant dense<0.000000e+00> : vector<17xf32>
    %10 = vector.multi_reduction <add>, %7, %cst_12 [1] : vector<17x128xf32> to vector<17xf32>
    %11 = vector.shape_cast %10 : vector<17xf32> to vector<17x1xf32>
    %cst_13 = arith.constant 1.280000e+02 : f32
    %12 = vector.broadcast %cst_13 : f32 to vector<17x1xf32>
    %13 = arith.divf %11, %12 : vector<17x1xf32>
    %14 = vector.broadcast %13 : vector<17x1xf32> to vector<17x128xf32>
    %15 = arith.subf %7, %14 : vector<17x128xf32>
    %16 = arith.mulf %15, %15 : vector<17x128xf32>
    %cst_14 = arith.constant dense<0.000000e+00> : vector<17xf32>
    %17 = vector.multi_reduction <add>, %16, %cst_14 [1] : vector<17x128xf32> to vector<17xf32>
    %18 = vector.shape_cast %17 : vector<17xf32> to vector<17x1xf32>
    %cst_15 = arith.constant 1.280000e+02 : f32
    %19 = vector.broadcast %cst_15 : f32 to vector<17x1xf32>
    %20 = arith.divf %18, %19 : vector<17x1xf32>
    %21 = vector.broadcast %13 : vector<17x1xf32> to vector<17x128xf32>
    %22 = arith.subf %7, %21 : vector<17x128xf32>
    %cst_16 = arith.constant 9.99999974E-6 : f32
    %23 = vector.broadcast %cst_16 : f32 to vector<17x1xf32>
    %24 = arith.addf %20, %23 : vector<17x1xf32>
    %25 = math.rsqrt %24 : vector<17x1xf32>
    %26 = vector.broadcast %25 : vector<17x1xf32> to vector<17x128xf32>
    %27 = arith.mulf %22, %26 : vector<17x128xf32>
    %28 = vector.broadcast %8 : vector<1x128xf32> to vector<17x128xf32>
    %29 = arith.mulf %27, %28 : vector<17x128xf32>
    %30 = vector.broadcast %9 : vector<1x128xf32> to vector<17x128xf32>
    %31 = arith.addf %29, %30 : vector<17x128xf32>
    %cst_17 = arith.constant 0.000000e+00 : f32
    %32 = vector.broadcast %cst_17 : f32 to vector<7x128xf32>
    %33 = tpu.concatenate %31, %32 in 0 : vector<17x128xf32>, vector<7x128xf32> -> vector<24x128xf32>
    %c0_18 = arith.constant 0 : index
    %c0_19 = arith.constant 0 : index
    %c0_20 = arith.constant 0 : index
    %34 = vector.load %arg7[%c0_18, %c0_19, %c0_20] : memref<1x24x128xf32, #tpu.memory_space<vmem>>, vector<1x24x128xf32>
    %35 = vector.shape_cast %34 : vector<1x24x128xf32> to vector<24x128xf32>
    %36 = vector.shape_cast %33 : vector<24x128xf32> to vector<1x24x128xf32>
    tpu.vector_store %arg7[%c0_18, %c0_19, %c0_20], %36 {strides = array<i32>} : memref<1x24x128xf32, #tpu.memory_space<vmem>>, vector<1x24x128xf32>,
    return
  }
  func.func @transform_0(%arg0: i32) -> (i32, i32, i32) {
    %c0_i32 = arith.constant 0 : i32
    %c0_i32_0 = arith.constant 0 : i32
    %c0_i32_1 = arith.constant 0 : i32
    return %arg0, %c0_i32, %c0_i32_0 : i32, i32, i32
  }
  func.func @transform_1(%arg0: i32) -> (i32, i32) {
    %c0_i32 = arith.constant 0 : i32
    %c0_i32_0 = arith.constant 0 : i32
    %c0_i32_1 = arith.constant 0 : i32
    return %c0_i32, %c0_i32_0 : i32, i32
  }
  func.func @transform_2(%arg0: i32) -> (i32, i32) {
    %c0_i32 = arith.constant 0 : i32
    %c0_i32_0 = arith.constant 0 : i32
    %c0_i32_1 = arith.constant 0 : i32
    return %c0_i32, %c0_i32_0 : i32, i32
  }
  func.func @transform_3(%arg0: i32) -> (i32, i32) {
    %c0_i32 = arith.constant 0 : i32
    %c0_i32_0 = arith.constant 0 : i32
    %c0_i32_1 = arith.constant 0 : i32
    return %c0_i32, %c0_i32_0 : i32, i32
  }
  func.func @transform_4(%arg0: i32) -> (i32, i32) {
    %c0_i32 = arith.constant 0 : i32
    %c0_i32_0 = arith.constant 0 : i32
    %c0_i32_1 = arith.constant 0 : i32
    return %c0_i32, %c0_i32_0 : i32, i32
  }
  func.func @transform_5(%arg0: i32) -> (i32, i32) {
    %c0_i32 = arith.constant 0 : i32
    %c0_i32_0 = arith.constant 0 : i32
    %c0_i32_1 = arith.constant 0 : i32
    return %c0_i32, %c0_i32_0 : i32, i32
  }
  func.func @transform_6(%arg0: i32) -> (i32, i32, i32) {
    %c0_i32 = arith.constant 0 : i32
    %c0_i32_0 = arith.constant 0 : i32
    %c0_i32_1 = arith.constant 0 : i32
    return %arg0, %c0_i32, %c0_i32_0 : i32, i32, i32
  }
}

module attributes {stable_mosaic.version = 11 : i64} {
  func.func @_layer_kernel(%arg0: i32, %arg1: memref<1x24x128xf32, #tpu.memory_space<vmem>>, %arg2: memref<1x128xf32, #tpu.memory_space<vmem>>, %arg3: memref<1x128xf32, #tpu.memory_space<vmem>>, %arg4: memref<128x384xf32, #tpu.memory_space<vmem>>, %arg5: memref<1x384xf32, #tpu.memory_space<vmem>>, %arg6: memref<128x128xf32, #tpu.memory_space<vmem>>, %arg7: memref<1x128xf32, #tpu.memory_space<vmem>>, %arg8: memref<1x128xf32, #tpu.memory_space<vmem>>, %arg9: memref<1x128xf32, #tpu.memory_space<vmem>>, %arg10: memref<128x256xf32, #tpu.memory_space<vmem>>, %arg11: memref<1x256xf32, #tpu.memory_space<vmem>>, %arg12: memref<256x128xf32, #tpu.memory_space<vmem>>, %arg13: memref<1x128xf32, #tpu.memory_space<vmem>>, %arg14: memref<1x24x128xf32, #tpu.memory_space<vmem>>) attributes {dimension_semantics = [#tpu.dimension_semantics<parallel>], iteration_bounds = array<i64: 2>, scalar_prefetch = 0 : i64, scratch_operands = 0 : i64, tpu.core_type = #tpu.core_type<tc>, window_params = [{transform_indices = @transform_0, window_bounds = array<i64: 1, 24, 128>}, {pipeline_mode = #tpu.pipeline_mode<synchronous>, transform_indices = @transform_1, window_bounds = array<i64: 1, 128>}, {pipeline_mode = #tpu.pipeline_mode<synchronous>, transform_indices = @transform_2, window_bounds = array<i64: 1, 128>}, {pipeline_mode = #tpu.pipeline_mode<synchronous>, transform_indices = @transform_3, window_bounds = array<i64: 128, 384>}, {pipeline_mode = #tpu.pipeline_mode<synchronous>, transform_indices = @transform_4, window_bounds = array<i64: 1, 384>}, {pipeline_mode = #tpu.pipeline_mode<synchronous>, transform_indices = @transform_5, window_bounds = array<i64: 128, 128>}, {pipeline_mode = #tpu.pipeline_mode<synchronous>, transform_indices = @transform_6, window_bounds = array<i64: 1, 128>}, {pipeline_mode = #tpu.pipeline_mode<synchronous>, transform_indices = @transform_7, window_bounds = array<i64: 1, 128>}, {pipeline_mode = #tpu.pipeline_mode<synchronous>, transform_indices = @transform_8, window_bounds = array<i64: 1, 128>}, {pipeline_mode = #tpu.pipeline_mode<synchronous>, transform_indices = @transform_9, window_bounds = array<i64: 128, 256>}, {pipeline_mode = #tpu.pipeline_mode<synchronous>, transform_indices = @transform_10, window_bounds = array<i64: 1, 256>}, {pipeline_mode = #tpu.pipeline_mode<synchronous>, transform_indices = @transform_11, window_bounds = array<i64: 256, 128>}, {pipeline_mode = #tpu.pipeline_mode<synchronous>, transform_indices = @transform_12, window_bounds = array<i64: 1, 128>}, {transform_indices = @transform_13, window_bounds = array<i64: 1, 24, 128>}]} {
    %c0 = arith.constant 0 : index
    %c0_0 = arith.constant 0 : index
    %c0_1 = arith.constant 0 : index
    %0 = vector.load %arg1[%c0, %c0_0, %c0_1] : memref<1x24x128xf32, #tpu.memory_space<vmem>>, vector<1x24x128xf32>
    %1 = vector.shape_cast %0 : vector<1x24x128xf32> to vector<24x128xf32>
    %c0_2 = arith.constant 0 : index
    %c0_3 = arith.constant 0 : index
    %2 = vector.load %arg2[%c0_2, %c0_3] : memref<1x128xf32, #tpu.memory_space<vmem>>, vector<1x128xf32>
    %c0_4 = arith.constant 0 : index
    %c0_5 = arith.constant 0 : index
    %3 = vector.load %arg3[%c0_4, %c0_5] : memref<1x128xf32, #tpu.memory_space<vmem>>, vector<1x128xf32>
    %cst = arith.constant dense<0.000000e+00> : vector<24xf32>
    %4 = vector.multi_reduction <add>, %1, %cst [1] : vector<24x128xf32> to vector<24xf32>
    %5 = vector.shape_cast %4 : vector<24xf32> to vector<24x1xf32>
    %cst_6 = arith.constant 1.280000e+02 : f32
    %6 = vector.broadcast %cst_6 : f32 to vector<24x1xf32>
    %7 = arith.divf %5, %6 : vector<24x1xf32>
    %8 = vector.broadcast %7 : vector<24x1xf32> to vector<24x128xf32>
    %9 = arith.subf %1, %8 : vector<24x128xf32>
    %10 = arith.mulf %9, %9 : vector<24x128xf32>
    %cst_7 = arith.constant dense<0.000000e+00> : vector<24xf32>
    %11 = vector.multi_reduction <add>, %10, %cst_7 [1] : vector<24x128xf32> to vector<24xf32>
    %12 = vector.shape_cast %11 : vector<24xf32> to vector<24x1xf32>
    %cst_8 = arith.constant 1.280000e+02 : f32
    %13 = vector.broadcast %cst_8 : f32 to vector<24x1xf32>
    %14 = arith.divf %12, %13 : vector<24x1xf32>
    %15 = vector.broadcast %7 : vector<24x1xf32> to vector<24x128xf32>
    %16 = arith.subf %1, %15 : vector<24x128xf32>
    %cst_9 = arith.constant 9.99999974E-6 : f32
    %17 = vector.broadcast %cst_9 : f32 to vector<24x1xf32>
    %18 = arith.addf %14, %17 : vector<24x1xf32>
    %19 = math.rsqrt %18 : vector<24x1xf32>
    %20 = vector.broadcast %19 : vector<24x1xf32> to vector<24x128xf32>
    %21 = arith.mulf %16, %20 : vector<24x128xf32>
    %22 = vector.broadcast %2 : vector<1x128xf32> to vector<24x128xf32>
    %23 = arith.mulf %21, %22 : vector<24x128xf32>
    %24 = vector.broadcast %3 : vector<1x128xf32> to vector<24x128xf32>
    %25 = arith.addf %23, %24 : vector<24x128xf32>
    %c0_10 = arith.constant 0 : index
    %c0_11 = arith.constant 0 : index
    %26 = vector.load %arg4[%c0_10, %c0_11] : memref<128x384xf32, #tpu.memory_space<vmem>>, vector<128x384xf32>
    %cst_12 = arith.constant dense<0.000000e+00> : vector<24x384xf32>
    %27 = tpu.matmul %25, %26, %cst_12 {dimension_numbers = #tpu.dot_dimension_numbers<[1], [0], [0], [1], [0, 0, 1, 1], [], []>} : vector<24x128xf32>, vector<128x384xf32>, vector<24x384xf32> -> vector<24x384xf32>
    %c0_13 = arith.constant 0 : index
    %c0_14 = arith.constant 0 : index
    %28 = vector.load %arg5[%c0_13, %c0_14] : memref<1x384xf32, #tpu.memory_space<vmem>>, vector<1x384xf32>
    %29 = vector.broadcast %28 : vector<1x384xf32> to vector<24x384xf32>
    %30 = arith.addf %27, %29 : vector<24x384xf32>
    %31 = tpu.iota {dimensions = array<i32: 1>} : vector<24x24xi32>
    %c17_i32 = arith.constant 17 : i32
    %32 = vector.broadcast %c17_i32 : i32 to vector<24x24xi32>
    %33 = arith.cmpi slt, %31, %32 : vector<24x24xi32>
    %cst_15 = arith.constant 0.000000e+00 : f32
    %cst_16 = arith.constant -1.000000e+30 : f32
    %34 = vector.broadcast %cst_15 : f32 to vector<24x24xf32>
    %35 = vector.broadcast %cst_16 : f32 to vector<24x24xf32>
    %36 = arith.select %33, %34, %35 : vector<24x24xi1>, vector<24x24xf32>
    %37 = vector.extract_strided_slice %30 {offsets = [0, 0], sizes = [24, 32], strides = [1, 1]} : vector<24x384xf32> to vector<24x32xf32>
    %38 = vector.extract_strided_slice %30 {offsets = [0, 128], sizes = [24, 32], strides = [1, 1]} : vector<24x384xf32> to vector<24x32xf32>
    %39 = vector.extract_strided_slice %30 {offsets = [0, 256], sizes = [24, 32], strides = [1, 1]} : vector<24x384xf32> to vector<24x32xf32>
    %cst_17 = arith.constant dense<0.000000e+00> : vector<24x24xf32>
    %40 = tpu.matmul %37, %38, %cst_17 {dimension_numbers = #tpu.dot_dimension_numbers<[1], [1], [0], [0], [0, 0, 1, 0], [], []>} : vector<24x32xf32>, vector<24x32xf32>, vector<24x24xf32> -> vector<24x24xf32>
    %41 = arith.addf %40, %36 : vector<24x24xf32>
    %cst_18 = arith.constant dense<0xFF800000> : vector<24xf32>
    %42 = vector.multi_reduction <maximumf>, %41, %cst_18 [1] : vector<24x24xf32> to vector<24xf32>
    %43 = vector.shape_cast %42 : vector<24xf32> to vector<24x1xf32>
    %44 = vector.broadcast %43 : vector<24x1xf32> to vector<24x24xf32>
    %45 = arith.subf %41, %44 : vector<24x24xf32>
    %46 = math.exp %45 : vector<24x24xf32>
    %cst_19 = arith.constant dense<0.000000e+00> : vector<24xf32>
    %47 = vector.multi_reduction <add>, %46, %cst_19 [1] : vector<24x24xf32> to vector<24xf32>
    %48 = vector.shape_cast %47 : vector<24xf32> to vector<24x1xf32>
    %49 = tpu.reciprocal %48 {approx = true} : vector<24x1xf32> -> vector<24x1xf32>
    %50 = vector.broadcast %49 : vector<24x1xf32> to vector<24x24xf32>
    %51 = arith.mulf %46, %50 : vector<24x24xf32>
    %cst_20 = arith.constant dense<0.000000e+00> : vector<24x32xf32>
    %52 = tpu.matmul %51, %39, %cst_20 {dimension_numbers = #tpu.dot_dimension_numbers<[1], [0], [0], [1], [0, 0, 1, 1], [], []>} : vector<24x24xf32>, vector<24x32xf32>, vector<24x32xf32> -> vector<24x32xf32>
    %53 = vector.extract_strided_slice %30 {offsets = [0, 32], sizes = [24, 32], strides = [1, 1]} : vector<24x384xf32> to vector<24x32xf32>
    %54 = vector.extract_strided_slice %30 {offsets = [0, 160], sizes = [24, 32], strides = [1, 1]} : vector<24x384xf32> to vector<24x32xf32>
    %55 = vector.extract_strided_slice %30 {offsets = [0, 288], sizes = [24, 32], strides = [1, 1]} : vector<24x384xf32> to vector<24x32xf32>
    %cst_21 = arith.constant dense<0.000000e+00> : vector<24x24xf32>
    %56 = tpu.matmul %53, %54, %cst_21 {dimension_numbers = #tpu.dot_dimension_numbers<[1], [1], [0], [0], [0, 0, 1, 0], [], []>} : vector<24x32xf32>, vector<24x32xf32>, vector<24x24xf32> -> vector<24x24xf32>
    %57 = arith.addf %56, %36 : vector<24x24xf32>
    %cst_22 = arith.constant dense<0xFF800000> : vector<24xf32>
    %58 = vector.multi_reduction <maximumf>, %57, %cst_22 [1] : vector<24x24xf32> to vector<24xf32>
    %59 = vector.shape_cast %58 : vector<24xf32> to vector<24x1xf32>
    %60 = vector.broadcast %59 : vector<24x1xf32> to vector<24x24xf32>
    %61 = arith.subf %57, %60 : vector<24x24xf32>
    %62 = math.exp %61 : vector<24x24xf32>
    %cst_23 = arith.constant dense<0.000000e+00> : vector<24xf32>
    %63 = vector.multi_reduction <add>, %62, %cst_23 [1] : vector<24x24xf32> to vector<24xf32>
    %64 = vector.shape_cast %63 : vector<24xf32> to vector<24x1xf32>
    %65 = tpu.reciprocal %64 {approx = true} : vector<24x1xf32> -> vector<24x1xf32>
    %66 = vector.broadcast %65 : vector<24x1xf32> to vector<24x24xf32>
    %67 = arith.mulf %62, %66 : vector<24x24xf32>
    %cst_24 = arith.constant dense<0.000000e+00> : vector<24x32xf32>
    %68 = tpu.matmul %67, %55, %cst_24 {dimension_numbers = #tpu.dot_dimension_numbers<[1], [0], [0], [1], [0, 0, 1, 1], [], []>} : vector<24x24xf32>, vector<24x32xf32>, vector<24x32xf32> -> vector<24x32xf32>
    %69 = vector.extract_strided_slice %30 {offsets = [0, 64], sizes = [24, 32], strides = [1, 1]} : vector<24x384xf32> to vector<24x32xf32>
    %70 = vector.extract_strided_slice %30 {offsets = [0, 192], sizes = [24, 32], strides = [1, 1]} : vector<24x384xf32> to vector<24x32xf32>
    %71 = vector.extract_strided_slice %30 {offsets = [0, 320], sizes = [24, 32], strides = [1, 1]} : vector<24x384xf32> to vector<24x32xf32>
    %cst_25 = arith.constant dense<0.000000e+00> : vector<24x24xf32>
    %72 = tpu.matmul %69, %70, %cst_25 {dimension_numbers = #tpu.dot_dimension_numbers<[1], [1], [0], [0], [0, 0, 1, 0], [], []>} : vector<24x32xf32>, vector<24x32xf32>, vector<24x24xf32> -> vector<24x24xf32>
    %73 = arith.addf %72, %36 : vector<24x24xf32>
    %cst_26 = arith.constant dense<0xFF800000> : vector<24xf32>
    %74 = vector.multi_reduction <maximumf>, %73, %cst_26 [1] : vector<24x24xf32> to vector<24xf32>
    %75 = vector.shape_cast %74 : vector<24xf32> to vector<24x1xf32>
    %76 = vector.broadcast %75 : vector<24x1xf32> to vector<24x24xf32>
    %77 = arith.subf %73, %76 : vector<24x24xf32>
    %78 = math.exp %77 : vector<24x24xf32>
    %cst_27 = arith.constant dense<0.000000e+00> : vector<24xf32>
    %79 = vector.multi_reduction <add>, %78, %cst_27 [1] : vector<24x24xf32> to vector<24xf32>
    %80 = vector.shape_cast %79 : vector<24xf32> to vector<24x1xf32>
    %81 = tpu.reciprocal %80 {approx = true} : vector<24x1xf32> -> vector<24x1xf32>
    %82 = vector.broadcast %81 : vector<24x1xf32> to vector<24x24xf32>
    %83 = arith.mulf %78, %82 : vector<24x24xf32>
    %cst_28 = arith.constant dense<0.000000e+00> : vector<24x32xf32>
    %84 = tpu.matmul %83, %71, %cst_28 {dimension_numbers = #tpu.dot_dimension_numbers<[1], [0], [0], [1], [0, 0, 1, 1], [], []>} : vector<24x24xf32>, vector<24x32xf32>, vector<24x32xf32> -> vector<24x32xf32>
    %85 = vector.extract_strided_slice %30 {offsets = [0, 96], sizes = [24, 32], strides = [1, 1]} : vector<24x384xf32> to vector<24x32xf32>
    %86 = vector.extract_strided_slice %30 {offsets = [0, 224], sizes = [24, 32], strides = [1, 1]} : vector<24x384xf32> to vector<24x32xf32>
    %87 = vector.extract_strided_slice %30 {offsets = [0, 352], sizes = [24, 32], strides = [1, 1]} : vector<24x384xf32> to vector<24x32xf32>
    %cst_29 = arith.constant dense<0.000000e+00> : vector<24x24xf32>
    %88 = tpu.matmul %85, %86, %cst_29 {dimension_numbers = #tpu.dot_dimension_numbers<[1], [1], [0], [0], [0, 0, 1, 0], [], []>} : vector<24x32xf32>, vector<24x32xf32>, vector<24x24xf32> -> vector<24x24xf32>
    %89 = arith.addf %88, %36 : vector<24x24xf32>
    %cst_30 = arith.constant dense<0xFF800000> : vector<24xf32>
    %90 = vector.multi_reduction <maximumf>, %89, %cst_30 [1] : vector<24x24xf32> to vector<24xf32>
    %91 = vector.shape_cast %90 : vector<24xf32> to vector<24x1xf32>
    %92 = vector.broadcast %91 : vector<24x1xf32> to vector<24x24xf32>
    %93 = arith.subf %89, %92 : vector<24x24xf32>
    %94 = math.exp %93 : vector<24x24xf32>
    %cst_31 = arith.constant dense<0.000000e+00> : vector<24xf32>
    %95 = vector.multi_reduction <add>, %94, %cst_31 [1] : vector<24x24xf32> to vector<24xf32>
    %96 = vector.shape_cast %95 : vector<24xf32> to vector<24x1xf32>
    %97 = tpu.reciprocal %96 {approx = true} : vector<24x1xf32> -> vector<24x1xf32>
    %98 = vector.broadcast %97 : vector<24x1xf32> to vector<24x24xf32>
    %99 = arith.mulf %94, %98 : vector<24x24xf32>
    %cst_32 = arith.constant dense<0.000000e+00> : vector<24x32xf32>
    %100 = tpu.matmul %99, %87, %cst_32 {dimension_numbers = #tpu.dot_dimension_numbers<[1], [0], [0], [1], [0, 0, 1, 1], [], []>} : vector<24x24xf32>, vector<24x32xf32>, vector<24x32xf32> -> vector<24x32xf32>
    %101 = tpu.concatenate %52, %68, %84, %100 in 1 : vector<24x32xf32>, vector<24x32xf32>, vector<24x32xf32>, vector<24x32xf32> -> vector<24x128xf32>
    %c0_33 = arith.constant 0 : index
    %c0_34 = arith.constant 0 : index
    %102 = vector.load %arg6[%c0_33, %c0_34] : memref<128x128xf32, #tpu.memory_space<vmem>>, vector<128x128xf32>
    %cst_35 = arith.constant dense<0.000000e+00> : vector<24x128xf32>
    %103 = tpu.matmul %101, %102, %cst_35 {dimension_numbers = #tpu.dot_dimension_numbers<[1], [0], [0], [1], [0, 0, 1, 1], [], []>} : vector<24x128xf32>, vector<128x128xf32>, vector<24x128xf32> -> vector<24x128xf32>
    %104 = arith.addf %1, %103 : vector<24x128xf32>
    %c0_36 = arith.constant 0 : index
    %c0_37 = arith.constant 0 : index
    %105 = vector.load %arg7[%c0_36, %c0_37] : memref<1x128xf32, #tpu.memory_space<vmem>>, vector<1x128xf32>
    %106 = vector.broadcast %105 : vector<1x128xf32> to vector<24x128xf32>
    %107 = arith.addf %104, %106 : vector<24x128xf32>
    %c0_38 = arith.constant 0 : index
    %c0_39 = arith.constant 0 : index
    %108 = vector.load %arg8[%c0_38, %c0_39] : memref<1x128xf32, #tpu.memory_space<vmem>>, vector<1x128xf32>
    %c0_40 = arith.constant 0 : index
    %c0_41 = arith.constant 0 : index
    %109 = vector.load %arg9[%c0_40, %c0_41] : memref<1x128xf32, #tpu.memory_space<vmem>>, vector<1x128xf32>
    %cst_42 = arith.constant dense<0.000000e+00> : vector<24xf32>
    %110 = vector.multi_reduction <add>, %107, %cst_42 [1] : vector<24x128xf32> to vector<24xf32>
    %111 = vector.shape_cast %110 : vector<24xf32> to vector<24x1xf32>
    %cst_43 = arith.constant 1.280000e+02 : f32
    %112 = vector.broadcast %cst_43 : f32 to vector<24x1xf32>
    %113 = arith.divf %111, %112 : vector<24x1xf32>
    %114 = vector.broadcast %113 : vector<24x1xf32> to vector<24x128xf32>
    %115 = arith.subf %107, %114 : vector<24x128xf32>
    %116 = arith.mulf %115, %115 : vector<24x128xf32>
    %cst_44 = arith.constant dense<0.000000e+00> : vector<24xf32>
    %117 = vector.multi_reduction <add>, %116, %cst_44 [1] : vector<24x128xf32> to vector<24xf32>
    %118 = vector.shape_cast %117 : vector<24xf32> to vector<24x1xf32>
    %cst_45 = arith.constant 1.280000e+02 : f32
    %119 = vector.broadcast %cst_45 : f32 to vector<24x1xf32>
    %120 = arith.divf %118, %119 : vector<24x1xf32>
    %121 = vector.broadcast %113 : vector<24x1xf32> to vector<24x128xf32>
    %122 = arith.subf %107, %121 : vector<24x128xf32>
    %cst_46 = arith.constant 9.99999974E-6 : f32
    %123 = vector.broadcast %cst_46 : f32 to vector<24x1xf32>
    %124 = arith.addf %120, %123 : vector<24x1xf32>
    %125 = math.rsqrt %124 : vector<24x1xf32>
    %126 = vector.broadcast %125 : vector<24x1xf32> to vector<24x128xf32>
    %127 = arith.mulf %122, %126 : vector<24x128xf32>
    %128 = vector.broadcast %108 : vector<1x128xf32> to vector<24x128xf32>
    %129 = arith.mulf %127, %128 : vector<24x128xf32>
    %130 = vector.broadcast %109 : vector<1x128xf32> to vector<24x128xf32>
    %131 = arith.addf %129, %130 : vector<24x128xf32>
    %c0_47 = arith.constant 0 : index
    %c0_48 = arith.constant 0 : index
    %132 = vector.load %arg10[%c0_47, %c0_48] : memref<128x256xf32, #tpu.memory_space<vmem>>, vector<128x256xf32>
    %cst_49 = arith.constant dense<0.000000e+00> : vector<24x256xf32>
    %133 = tpu.matmul %131, %132, %cst_49 {dimension_numbers = #tpu.dot_dimension_numbers<[1], [0], [0], [1], [0, 0, 1, 1], [], []>} : vector<24x128xf32>, vector<128x256xf32>, vector<24x256xf32> -> vector<24x256xf32>
    %c0_50 = arith.constant 0 : index
    %c0_51 = arith.constant 0 : index
    %134 = vector.load %arg11[%c0_50, %c0_51] : memref<1x256xf32, #tpu.memory_space<vmem>>, vector<1x256xf32>
    %135 = vector.broadcast %134 : vector<1x256xf32> to vector<24x256xf32>
    %136 = arith.addf %133, %135 : vector<24x256xf32>
    %cst_52 = arith.constant 1.702000e+00 : f32
    %137 = vector.broadcast %cst_52 : f32 to vector<24x256xf32>
    %138 = arith.mulf %137, %136 : vector<24x256xf32>
    %139 = arith.negf %138 : vector<24x256xf32>
    %140 = math.exp %139 : vector<24x256xf32>
    %cst_53 = arith.constant 1.000000e+00 : f32
    %141 = vector.broadcast %cst_53 : f32 to vector<24x256xf32>
    %142 = arith.addf %141, %140 : vector<24x256xf32>
    %143 = arith.divf %141, %142 : vector<24x256xf32>
    %144 = arith.mulf %136, %143 : vector<24x256xf32>
    %c0_54 = arith.constant 0 : index
    %c0_55 = arith.constant 0 : index
    %145 = vector.load %arg12[%c0_54, %c0_55] : memref<256x128xf32, #tpu.memory_space<vmem>>, vector<256x128xf32>
    %cst_56 = arith.constant dense<0.000000e+00> : vector<24x128xf32>
    %146 = tpu.matmul %144, %145, %cst_56 {dimension_numbers = #tpu.dot_dimension_numbers<[1], [0], [0], [1], [0, 0, 1, 1], [], []>} : vector<24x256xf32>, vector<256x128xf32>, vector<24x128xf32> -> vector<24x128xf32>
    %147 = arith.addf %107, %146 : vector<24x128xf32>
    %c0_57 = arith.constant 0 : index
    %c0_58 = arith.constant 0 : index
    %148 = vector.load %arg13[%c0_57, %c0_58] : memref<1x128xf32, #tpu.memory_space<vmem>>, vector<1x128xf32>
    %149 = vector.broadcast %148 : vector<1x128xf32> to vector<24x128xf32>
    %150 = arith.addf %147, %149 : vector<24x128xf32>
    %c0_59 = arith.constant 0 : index
    %c0_60 = arith.constant 0 : index
    %c0_61 = arith.constant 0 : index
    %151 = vector.load %arg14[%c0_59, %c0_60, %c0_61] : memref<1x24x128xf32, #tpu.memory_space<vmem>>, vector<1x24x128xf32>
    %152 = vector.shape_cast %151 : vector<1x24x128xf32> to vector<24x128xf32>
    %153 = vector.shape_cast %150 : vector<24x128xf32> to vector<1x24x128xf32>
    tpu.vector_store %arg14[%c0_59, %c0_60, %c0_61], %153 {strides = array<i32>} : memref<1x24x128xf32, #tpu.memory_space<vmem>>, vector<1x24x128xf32>,
    return
  }
  func.func @transform_0(%arg0: i32) -> (i32, i32, i32) {
    %c0_i32 = arith.constant 0 : i32
    %c0_i32_0 = arith.constant 0 : i32
    %c0_i32_1 = arith.constant 0 : i32
    return %arg0, %c0_i32, %c0_i32_0 : i32, i32, i32
  }
  func.func @transform_1(%arg0: i32) -> (i32, i32) {
    %c0_i32 = arith.constant 0 : i32
    %c0_i32_0 = arith.constant 0 : i32
    %c0_i32_1 = arith.constant 0 : i32
    return %c0_i32, %c0_i32_0 : i32, i32
  }
  func.func @transform_2(%arg0: i32) -> (i32, i32) {
    %c0_i32 = arith.constant 0 : i32
    %c0_i32_0 = arith.constant 0 : i32
    %c0_i32_1 = arith.constant 0 : i32
    return %c0_i32, %c0_i32_0 : i32, i32
  }
  func.func @transform_3(%arg0: i32) -> (i32, i32) {
    %c0_i32 = arith.constant 0 : i32
    %c0_i32_0 = arith.constant 0 : i32
    %c0_i32_1 = arith.constant 0 : i32
    return %c0_i32, %c0_i32_0 : i32, i32
  }
  func.func @transform_4(%arg0: i32) -> (i32, i32) {
    %c0_i32 = arith.constant 0 : i32
    %c0_i32_0 = arith.constant 0 : i32
    %c0_i32_1 = arith.constant 0 : i32
    return %c0_i32, %c0_i32_0 : i32, i32
  }
  func.func @transform_5(%arg0: i32) -> (i32, i32) {
    %c0_i32 = arith.constant 0 : i32
    %c0_i32_0 = arith.constant 0 : i32
    %c0_i32_1 = arith.constant 0 : i32
    return %c0_i32, %c0_i32_0 : i32, i32
  }
  func.func @transform_6(%arg0: i32) -> (i32, i32) {
    %c0_i32 = arith.constant 0 : i32
    %c0_i32_0 = arith.constant 0 : i32
    %c0_i32_1 = arith.constant 0 : i32
    return %c0_i32, %c0_i32_0 : i32, i32
  }
  func.func @transform_7(%arg0: i32) -> (i32, i32) {
    %c0_i32 = arith.constant 0 : i32
    %c0_i32_0 = arith.constant 0 : i32
    %c0_i32_1 = arith.constant 0 : i32
    return %c0_i32, %c0_i32_0 : i32, i32
  }
  func.func @transform_8(%arg0: i32) -> (i32, i32) {
    %c0_i32 = arith.constant 0 : i32
    %c0_i32_0 = arith.constant 0 : i32
    %c0_i32_1 = arith.constant 0 : i32
    return %c0_i32, %c0_i32_0 : i32, i32
  }
  func.func @transform_9(%arg0: i32) -> (i32, i32) {
    %c0_i32 = arith.constant 0 : i32
    %c0_i32_0 = arith.constant 0 : i32
    %c0_i32_1 = arith.constant 0 : i32
    return %c0_i32, %c0_i32_0 : i32, i32
  }
  func.func @transform_10(%arg0: i32) -> (i32, i32) {
    %c0_i32 = arith.constant 0 : i32
    %c0_i32_0 = arith.constant 0 : i32
    %c0_i32_1 = arith.constant 0 : i32
    return %c0_i32, %c0_i32_0 : i32, i32
  }
  func.func @transform_11(%arg0: i32) -> (i32, i32) {
    %c0_i32 = arith.constant 0 : i32
    %c0_i32_0 = arith.constant 0 : i32
    %c0_i32_1 = arith.constant 0 : i32
    return %c0_i32, %c0_i32_0 : i32, i32
  }
  func.func @transform_12(%arg0: i32) -> (i32, i32) {
    %c0_i32 = arith.constant 0 : i32
    %c0_i32_0 = arith.constant 0 : i32
    %c0_i32_1 = arith.constant 0 : i32
    return %c0_i32, %c0_i32_0 : i32, i32
  }
  func.func @transform_13(%arg0: i32) -> (i32, i32, i32) {
    %c0_i32 = arith.constant 0 : i32
    %c0_i32_0 = arith.constant 0 : i32
    %c0_i32_1 = arith.constant 0 : i32
    return %arg0, %c0_i32, %c0_i32_0 : i32, i32, i32
  }
}

module attributes {stable_mosaic.version = 11 : i64} {
  func.func @_layer_kernel(%arg0: i32, %arg1: memref<1x24x128xf32, #tpu.memory_space<vmem>>, %arg2: memref<1x128xf32, #tpu.memory_space<vmem>>, %arg3: memref<1x128xf32, #tpu.memory_space<vmem>>, %arg4: memref<128x384xf32, #tpu.memory_space<vmem>>, %arg5: memref<1x384xf32, #tpu.memory_space<vmem>>, %arg6: memref<128x128xf32, #tpu.memory_space<vmem>>, %arg7: memref<1x128xf32, #tpu.memory_space<vmem>>, %arg8: memref<1x128xf32, #tpu.memory_space<vmem>>, %arg9: memref<1x128xf32, #tpu.memory_space<vmem>>, %arg10: memref<128x256xf32, #tpu.memory_space<vmem>>, %arg11: memref<1x256xf32, #tpu.memory_space<vmem>>, %arg12: memref<256x128xf32, #tpu.memory_space<vmem>>, %arg13: memref<1x128xf32, #tpu.memory_space<vmem>>, %arg14: memref<1x24x128xf32, #tpu.memory_space<vmem>>) attributes {dimension_semantics = [#tpu.dimension_semantics<parallel>], iteration_bounds = array<i64: 2>, scalar_prefetch = 0 : i64, scratch_operands = 0 : i64, tpu.core_type = #tpu.core_type<tc>, window_params = [{transform_indices = @transform_0, window_bounds = array<i64: 1, 24, 128>}, {pipeline_mode = #tpu.pipeline_mode<synchronous>, transform_indices = @transform_1, window_bounds = array<i64: 1, 128>}, {pipeline_mode = #tpu.pipeline_mode<synchronous>, transform_indices = @transform_2, window_bounds = array<i64: 1, 128>}, {pipeline_mode = #tpu.pipeline_mode<synchronous>, transform_indices = @transform_3, window_bounds = array<i64: 128, 384>}, {pipeline_mode = #tpu.pipeline_mode<synchronous>, transform_indices = @transform_4, window_bounds = array<i64: 1, 384>}, {pipeline_mode = #tpu.pipeline_mode<synchronous>, transform_indices = @transform_5, window_bounds = array<i64: 128, 128>}, {pipeline_mode = #tpu.pipeline_mode<synchronous>, transform_indices = @transform_6, window_bounds = array<i64: 1, 128>}, {pipeline_mode = #tpu.pipeline_mode<synchronous>, transform_indices = @transform_7, window_bounds = array<i64: 1, 128>}, {pipeline_mode = #tpu.pipeline_mode<synchronous>, transform_indices = @transform_8, window_bounds = array<i64: 1, 128>}, {pipeline_mode = #tpu.pipeline_mode<synchronous>, transform_indices = @transform_9, window_bounds = array<i64: 128, 256>}, {pipeline_mode = #tpu.pipeline_mode<synchronous>, transform_indices = @transform_10, window_bounds = array<i64: 1, 256>}, {pipeline_mode = #tpu.pipeline_mode<synchronous>, transform_indices = @transform_11, window_bounds = array<i64: 256, 128>}, {pipeline_mode = #tpu.pipeline_mode<synchronous>, transform_indices = @transform_12, window_bounds = array<i64: 1, 128>}, {transform_indices = @transform_13, window_bounds = array<i64: 1, 24, 128>}]} {
    %c0 = arith.constant 0 : index
    %c0_0 = arith.constant 0 : index
    %c0_1 = arith.constant 0 : index
    %0 = vector.load %arg1[%c0, %c0_0, %c0_1] : memref<1x24x128xf32, #tpu.memory_space<vmem>>, vector<1x24x128xf32>
    %1 = vector.shape_cast %0 : vector<1x24x128xf32> to vector<24x128xf32>
    %c0_2 = arith.constant 0 : index
    %c0_3 = arith.constant 0 : index
    %2 = vector.load %arg2[%c0_2, %c0_3] : memref<1x128xf32, #tpu.memory_space<vmem>>, vector<1x128xf32>
    %c0_4 = arith.constant 0 : index
    %c0_5 = arith.constant 0 : index
    %3 = vector.load %arg3[%c0_4, %c0_5] : memref<1x128xf32, #tpu.memory_space<vmem>>, vector<1x128xf32>
    %cst = arith.constant dense<0.000000e+00> : vector<24xf32>
    %4 = vector.multi_reduction <add>, %1, %cst [1] : vector<24x128xf32> to vector<24xf32>
    %5 = vector.shape_cast %4 : vector<24xf32> to vector<24x1xf32>
    %cst_6 = arith.constant 1.280000e+02 : f32
    %6 = vector.broadcast %cst_6 : f32 to vector<24x1xf32>
    %7 = arith.divf %5, %6 : vector<24x1xf32>
    %8 = vector.broadcast %7 : vector<24x1xf32> to vector<24x128xf32>
    %9 = arith.subf %1, %8 : vector<24x128xf32>
    %10 = arith.mulf %9, %9 : vector<24x128xf32>
    %cst_7 = arith.constant dense<0.000000e+00> : vector<24xf32>
    %11 = vector.multi_reduction <add>, %10, %cst_7 [1] : vector<24x128xf32> to vector<24xf32>
    %12 = vector.shape_cast %11 : vector<24xf32> to vector<24x1xf32>
    %cst_8 = arith.constant 1.280000e+02 : f32
    %13 = vector.broadcast %cst_8 : f32 to vector<24x1xf32>
    %14 = arith.divf %12, %13 : vector<24x1xf32>
    %15 = vector.broadcast %7 : vector<24x1xf32> to vector<24x128xf32>
    %16 = arith.subf %1, %15 : vector<24x128xf32>
    %cst_9 = arith.constant 9.99999974E-6 : f32
    %17 = vector.broadcast %cst_9 : f32 to vector<24x1xf32>
    %18 = arith.addf %14, %17 : vector<24x1xf32>
    %19 = math.rsqrt %18 : vector<24x1xf32>
    %20 = vector.broadcast %19 : vector<24x1xf32> to vector<24x128xf32>
    %21 = arith.mulf %16, %20 : vector<24x128xf32>
    %22 = vector.broadcast %2 : vector<1x128xf32> to vector<24x128xf32>
    %23 = arith.mulf %21, %22 : vector<24x128xf32>
    %24 = vector.broadcast %3 : vector<1x128xf32> to vector<24x128xf32>
    %25 = arith.addf %23, %24 : vector<24x128xf32>
    %c0_10 = arith.constant 0 : index
    %c0_11 = arith.constant 0 : index
    %26 = vector.load %arg4[%c0_10, %c0_11] : memref<128x384xf32, #tpu.memory_space<vmem>>, vector<128x384xf32>
    %cst_12 = arith.constant dense<0.000000e+00> : vector<24x384xf32>
    %27 = tpu.matmul %25, %26, %cst_12 {dimension_numbers = #tpu.dot_dimension_numbers<[1], [0], [0], [1], [0, 0, 1, 1], [], []>} : vector<24x128xf32>, vector<128x384xf32>, vector<24x384xf32> -> vector<24x384xf32>
    %c0_13 = arith.constant 0 : index
    %c0_14 = arith.constant 0 : index
    %28 = vector.load %arg5[%c0_13, %c0_14] : memref<1x384xf32, #tpu.memory_space<vmem>>, vector<1x384xf32>
    %29 = vector.broadcast %28 : vector<1x384xf32> to vector<24x384xf32>
    %30 = arith.addf %27, %29 : vector<24x384xf32>
    %31 = tpu.iota {dimensions = array<i32: 1>} : vector<24x24xi32>
    %c17_i32 = arith.constant 17 : i32
    %32 = vector.broadcast %c17_i32 : i32 to vector<24x24xi32>
    %33 = arith.cmpi slt, %31, %32 : vector<24x24xi32>
    %cst_15 = arith.constant 0.000000e+00 : f32
    %cst_16 = arith.constant -1.000000e+30 : f32
    %34 = vector.broadcast %cst_15 : f32 to vector<24x24xf32>
    %35 = vector.broadcast %cst_16 : f32 to vector<24x24xf32>
    %36 = arith.select %33, %34, %35 : vector<24x24xi1>, vector<24x24xf32>
    %37 = vector.extract_strided_slice %30 {offsets = [0, 0], sizes = [24, 32], strides = [1, 1]} : vector<24x384xf32> to vector<24x32xf32>
    %38 = vector.extract_strided_slice %30 {offsets = [0, 128], sizes = [24, 32], strides = [1, 1]} : vector<24x384xf32> to vector<24x32xf32>
    %39 = vector.extract_strided_slice %30 {offsets = [0, 256], sizes = [24, 32], strides = [1, 1]} : vector<24x384xf32> to vector<24x32xf32>
    %cst_17 = arith.constant dense<0.000000e+00> : vector<24x24xf32>
    %40 = tpu.matmul %37, %38, %cst_17 {dimension_numbers = #tpu.dot_dimension_numbers<[1], [1], [0], [0], [0, 0, 1, 0], [], []>} : vector<24x32xf32>, vector<24x32xf32>, vector<24x24xf32> -> vector<24x24xf32>
    %41 = arith.addf %40, %36 : vector<24x24xf32>
    %cst_18 = arith.constant dense<0xFF800000> : vector<24xf32>
    %42 = vector.multi_reduction <maximumf>, %41, %cst_18 [1] : vector<24x24xf32> to vector<24xf32>
    %43 = vector.shape_cast %42 : vector<24xf32> to vector<24x1xf32>
    %44 = vector.broadcast %43 : vector<24x1xf32> to vector<24x24xf32>
    %45 = arith.subf %41, %44 : vector<24x24xf32>
    %46 = math.exp %45 : vector<24x24xf32>
    %cst_19 = arith.constant dense<0.000000e+00> : vector<24xf32>
    %47 = vector.multi_reduction <add>, %46, %cst_19 [1] : vector<24x24xf32> to vector<24xf32>
    %48 = vector.shape_cast %47 : vector<24xf32> to vector<24x1xf32>
    %49 = tpu.reciprocal %48 {approx = true} : vector<24x1xf32> -> vector<24x1xf32>
    %50 = vector.broadcast %49 : vector<24x1xf32> to vector<24x24xf32>
    %51 = arith.mulf %46, %50 : vector<24x24xf32>
    %cst_20 = arith.constant dense<0.000000e+00> : vector<24x32xf32>
    %52 = tpu.matmul %51, %39, %cst_20 {dimension_numbers = #tpu.dot_dimension_numbers<[1], [0], [0], [1], [0, 0, 1, 1], [], []>} : vector<24x24xf32>, vector<24x32xf32>, vector<24x32xf32> -> vector<24x32xf32>
    %53 = vector.extract_strided_slice %30 {offsets = [0, 32], sizes = [24, 32], strides = [1, 1]} : vector<24x384xf32> to vector<24x32xf32>
    %54 = vector.extract_strided_slice %30 {offsets = [0, 160], sizes = [24, 32], strides = [1, 1]} : vector<24x384xf32> to vector<24x32xf32>
    %55 = vector.extract_strided_slice %30 {offsets = [0, 288], sizes = [24, 32], strides = [1, 1]} : vector<24x384xf32> to vector<24x32xf32>
    %cst_21 = arith.constant dense<0.000000e+00> : vector<24x24xf32>
    %56 = tpu.matmul %53, %54, %cst_21 {dimension_numbers = #tpu.dot_dimension_numbers<[1], [1], [0], [0], [0, 0, 1, 0], [], []>} : vector<24x32xf32>, vector<24x32xf32>, vector<24x24xf32> -> vector<24x24xf32>
    %57 = arith.addf %56, %36 : vector<24x24xf32>
    %cst_22 = arith.constant dense<0xFF800000> : vector<24xf32>
    %58 = vector.multi_reduction <maximumf>, %57, %cst_22 [1] : vector<24x24xf32> to vector<24xf32>
    %59 = vector.shape_cast %58 : vector<24xf32> to vector<24x1xf32>
    %60 = vector.broadcast %59 : vector<24x1xf32> to vector<24x24xf32>
    %61 = arith.subf %57, %60 : vector<24x24xf32>
    %62 = math.exp %61 : vector<24x24xf32>
    %cst_23 = arith.constant dense<0.000000e+00> : vector<24xf32>
    %63 = vector.multi_reduction <add>, %62, %cst_23 [1] : vector<24x24xf32> to vector<24xf32>
    %64 = vector.shape_cast %63 : vector<24xf32> to vector<24x1xf32>
    %65 = tpu.reciprocal %64 {approx = true} : vector<24x1xf32> -> vector<24x1xf32>
    %66 = vector.broadcast %65 : vector<24x1xf32> to vector<24x24xf32>
    %67 = arith.mulf %62, %66 : vector<24x24xf32>
    %cst_24 = arith.constant dense<0.000000e+00> : vector<24x32xf32>
    %68 = tpu.matmul %67, %55, %cst_24 {dimension_numbers = #tpu.dot_dimension_numbers<[1], [0], [0], [1], [0, 0, 1, 1], [], []>} : vector<24x24xf32>, vector<24x32xf32>, vector<24x32xf32> -> vector<24x32xf32>
    %69 = vector.extract_strided_slice %30 {offsets = [0, 64], sizes = [24, 32], strides = [1, 1]} : vector<24x384xf32> to vector<24x32xf32>
    %70 = vector.extract_strided_slice %30 {offsets = [0, 192], sizes = [24, 32], strides = [1, 1]} : vector<24x384xf32> to vector<24x32xf32>
    %71 = vector.extract_strided_slice %30 {offsets = [0, 320], sizes = [24, 32], strides = [1, 1]} : vector<24x384xf32> to vector<24x32xf32>
    %cst_25 = arith.constant dense<0.000000e+00> : vector<24x24xf32>
    %72 = tpu.matmul %69, %70, %cst_25 {dimension_numbers = #tpu.dot_dimension_numbers<[1], [1], [0], [0], [0, 0, 1, 0], [], []>} : vector<24x32xf32>, vector<24x32xf32>, vector<24x24xf32> -> vector<24x24xf32>
    %73 = arith.addf %72, %36 : vector<24x24xf32>
    %cst_26 = arith.constant dense<0xFF800000> : vector<24xf32>
    %74 = vector.multi_reduction <maximumf>, %73, %cst_26 [1] : vector<24x24xf32> to vector<24xf32>
    %75 = vector.shape_cast %74 : vector<24xf32> to vector<24x1xf32>
    %76 = vector.broadcast %75 : vector<24x1xf32> to vector<24x24xf32>
    %77 = arith.subf %73, %76 : vector<24x24xf32>
    %78 = math.exp %77 : vector<24x24xf32>
    %cst_27 = arith.constant dense<0.000000e+00> : vector<24xf32>
    %79 = vector.multi_reduction <add>, %78, %cst_27 [1] : vector<24x24xf32> to vector<24xf32>
    %80 = vector.shape_cast %79 : vector<24xf32> to vector<24x1xf32>
    %81 = tpu.reciprocal %80 {approx = true} : vector<24x1xf32> -> vector<24x1xf32>
    %82 = vector.broadcast %81 : vector<24x1xf32> to vector<24x24xf32>
    %83 = arith.mulf %78, %82 : vector<24x24xf32>
    %cst_28 = arith.constant dense<0.000000e+00> : vector<24x32xf32>
    %84 = tpu.matmul %83, %71, %cst_28 {dimension_numbers = #tpu.dot_dimension_numbers<[1], [0], [0], [1], [0, 0, 1, 1], [], []>} : vector<24x24xf32>, vector<24x32xf32>, vector<24x32xf32> -> vector<24x32xf32>
    %85 = vector.extract_strided_slice %30 {offsets = [0, 96], sizes = [24, 32], strides = [1, 1]} : vector<24x384xf32> to vector<24x32xf32>
    %86 = vector.extract_strided_slice %30 {offsets = [0, 224], sizes = [24, 32], strides = [1, 1]} : vector<24x384xf32> to vector<24x32xf32>
    %87 = vector.extract_strided_slice %30 {offsets = [0, 352], sizes = [24, 32], strides = [1, 1]} : vector<24x384xf32> to vector<24x32xf32>
    %cst_29 = arith.constant dense<0.000000e+00> : vector<24x24xf32>
    %88 = tpu.matmul %85, %86, %cst_29 {dimension_numbers = #tpu.dot_dimension_numbers<[1], [1], [0], [0], [0, 0, 1, 0], [], []>} : vector<24x32xf32>, vector<24x32xf32>, vector<24x24xf32> -> vector<24x24xf32>
    %89 = arith.addf %88, %36 : vector<24x24xf32>
    %cst_30 = arith.constant dense<0xFF800000> : vector<24xf32>
    %90 = vector.multi_reduction <maximumf>, %89, %cst_30 [1] : vector<24x24xf32> to vector<24xf32>
    %91 = vector.shape_cast %90 : vector<24xf32> to vector<24x1xf32>
    %92 = vector.broadcast %91 : vector<24x1xf32> to vector<24x24xf32>
    %93 = arith.subf %89, %92 : vector<24x24xf32>
    %94 = math.exp %93 : vector<24x24xf32>
    %cst_31 = arith.constant dense<0.000000e+00> : vector<24xf32>
    %95 = vector.multi_reduction <add>, %94, %cst_31 [1] : vector<24x24xf32> to vector<24xf32>
    %96 = vector.shape_cast %95 : vector<24xf32> to vector<24x1xf32>
    %97 = tpu.reciprocal %96 {approx = true} : vector<24x1xf32> -> vector<24x1xf32>
    %98 = vector.broadcast %97 : vector<24x1xf32> to vector<24x24xf32>
    %99 = arith.mulf %94, %98 : vector<24x24xf32>
    %cst_32 = arith.constant dense<0.000000e+00> : vector<24x32xf32>
    %100 = tpu.matmul %99, %87, %cst_32 {dimension_numbers = #tpu.dot_dimension_numbers<[1], [0], [0], [1], [0, 0, 1, 1], [], []>} : vector<24x24xf32>, vector<24x32xf32>, vector<24x32xf32> -> vector<24x32xf32>
    %101 = tpu.concatenate %52, %68, %84, %100 in 1 : vector<24x32xf32>, vector<24x32xf32>, vector<24x32xf32>, vector<24x32xf32> -> vector<24x128xf32>
    %c0_33 = arith.constant 0 : index
    %c0_34 = arith.constant 0 : index
    %102 = vector.load %arg6[%c0_33, %c0_34] : memref<128x128xf32, #tpu.memory_space<vmem>>, vector<128x128xf32>
    %cst_35 = arith.constant dense<0.000000e+00> : vector<24x128xf32>
    %103 = tpu.matmul %101, %102, %cst_35 {dimension_numbers = #tpu.dot_dimension_numbers<[1], [0], [0], [1], [0, 0, 1, 1], [], []>} : vector<24x128xf32>, vector<128x128xf32>, vector<24x128xf32> -> vector<24x128xf32>
    %104 = arith.addf %1, %103 : vector<24x128xf32>
    %c0_36 = arith.constant 0 : index
    %c0_37 = arith.constant 0 : index
    %105 = vector.load %arg7[%c0_36, %c0_37] : memref<1x128xf32, #tpu.memory_space<vmem>>, vector<1x128xf32>
    %106 = vector.broadcast %105 : vector<1x128xf32> to vector<24x128xf32>
    %107 = arith.addf %104, %106 : vector<24x128xf32>
    %c0_38 = arith.constant 0 : index
    %c0_39 = arith.constant 0 : index
    %108 = vector.load %arg8[%c0_38, %c0_39] : memref<1x128xf32, #tpu.memory_space<vmem>>, vector<1x128xf32>
    %c0_40 = arith.constant 0 : index
    %c0_41 = arith.constant 0 : index
    %109 = vector.load %arg9[%c0_40, %c0_41] : memref<1x128xf32, #tpu.memory_space<vmem>>, vector<1x128xf32>
    %cst_42 = arith.constant dense<0.000000e+00> : vector<24xf32>
    %110 = vector.multi_reduction <add>, %107, %cst_42 [1] : vector<24x128xf32> to vector<24xf32>
    %111 = vector.shape_cast %110 : vector<24xf32> to vector<24x1xf32>
    %cst_43 = arith.constant 1.280000e+02 : f32
    %112 = vector.broadcast %cst_43 : f32 to vector<24x1xf32>
    %113 = arith.divf %111, %112 : vector<24x1xf32>
    %114 = vector.broadcast %113 : vector<24x1xf32> to vector<24x128xf32>
    %115 = arith.subf %107, %114 : vector<24x128xf32>
    %116 = arith.mulf %115, %115 : vector<24x128xf32>
    %cst_44 = arith.constant dense<0.000000e+00> : vector<24xf32>
    %117 = vector.multi_reduction <add>, %116, %cst_44 [1] : vector<24x128xf32> to vector<24xf32>
    %118 = vector.shape_cast %117 : vector<24xf32> to vector<24x1xf32>
    %cst_45 = arith.constant 1.280000e+02 : f32
    %119 = vector.broadcast %cst_45 : f32 to vector<24x1xf32>
    %120 = arith.divf %118, %119 : vector<24x1xf32>
    %121 = vector.broadcast %113 : vector<24x1xf32> to vector<24x128xf32>
    %122 = arith.subf %107, %121 : vector<24x128xf32>
    %cst_46 = arith.constant 9.99999974E-6 : f32
    %123 = vector.broadcast %cst_46 : f32 to vector<24x1xf32>
    %124 = arith.addf %120, %123 : vector<24x1xf32>
    %125 = math.rsqrt %124 : vector<24x1xf32>
    %126 = vector.broadcast %125 : vector<24x1xf32> to vector<24x128xf32>
    %127 = arith.mulf %122, %126 : vector<24x128xf32>
    %128 = vector.broadcast %108 : vector<1x128xf32> to vector<24x128xf32>
    %129 = arith.mulf %127, %128 : vector<24x128xf32>
    %130 = vector.broadcast %109 : vector<1x128xf32> to vector<24x128xf32>
    %131 = arith.addf %129, %130 : vector<24x128xf32>
    %c0_47 = arith.constant 0 : index
    %c0_48 = arith.constant 0 : index
    %132 = vector.load %arg10[%c0_47, %c0_48] : memref<128x256xf32, #tpu.memory_space<vmem>>, vector<128x256xf32>
    %cst_49 = arith.constant dense<0.000000e+00> : vector<24x256xf32>
    %133 = tpu.matmul %131, %132, %cst_49 {dimension_numbers = #tpu.dot_dimension_numbers<[1], [0], [0], [1], [0, 0, 1, 1], [], []>} : vector<24x128xf32>, vector<128x256xf32>, vector<24x256xf32> -> vector<24x256xf32>
    %c0_50 = arith.constant 0 : index
    %c0_51 = arith.constant 0 : index
    %134 = vector.load %arg11[%c0_50, %c0_51] : memref<1x256xf32, #tpu.memory_space<vmem>>, vector<1x256xf32>
    %135 = vector.broadcast %134 : vector<1x256xf32> to vector<24x256xf32>
    %136 = arith.addf %133, %135 : vector<24x256xf32>
    %cst_52 = arith.constant 1.702000e+00 : f32
    %137 = vector.broadcast %cst_52 : f32 to vector<24x256xf32>
    %138 = arith.mulf %137, %136 : vector<24x256xf32>
    %139 = arith.negf %138 : vector<24x256xf32>
    %140 = math.exp %139 : vector<24x256xf32>
    %cst_53 = arith.constant 1.000000e+00 : f32
    %141 = vector.broadcast %cst_53 : f32 to vector<24x256xf32>
    %142 = arith.addf %141, %140 : vector<24x256xf32>
    %143 = arith.divf %141, %142 : vector<24x256xf32>
    %144 = arith.mulf %136, %143 : vector<24x256xf32>
    %c0_54 = arith.constant 0 : index
    %c0_55 = arith.constant 0 : index
    %145 = vector.load %arg12[%c0_54, %c0_55] : memref<256x128xf32, #tpu.memory_space<vmem>>, vector<256x128xf32>
    %cst_56 = arith.constant dense<0.000000e+00> : vector<24x128xf32>
    %146 = tpu.matmul %144, %145, %cst_56 {dimension_numbers = #tpu.dot_dimension_numbers<[1], [0], [0], [1], [0, 0, 1, 1], [], []>} : vector<24x256xf32>, vector<256x128xf32>, vector<24x128xf32> -> vector<24x128xf32>
    %147 = arith.addf %107, %146 : vector<24x128xf32>
    %c0_57 = arith.constant 0 : index
    %c0_58 = arith.constant 0 : index
    %148 = vector.load %arg13[%c0_57, %c0_58] : memref<1x128xf32, #tpu.memory_space<vmem>>, vector<1x128xf32>
    %149 = vector.broadcast %148 : vector<1x128xf32> to vector<24x128xf32>
    %150 = arith.addf %147, %149 : vector<24x128xf32>
    %c0_59 = arith.constant 0 : index
    %c0_60 = arith.constant 0 : index
    %c0_61 = arith.constant 0 : index
    %151 = vector.load %arg14[%c0_59, %c0_60, %c0_61] : memref<1x24x128xf32, #tpu.memory_space<vmem>>, vector<1x24x128xf32>
    %152 = vector.shape_cast %151 : vector<1x24x128xf32> to vector<24x128xf32>
    %153 = vector.shape_cast %150 : vector<24x128xf32> to vector<1x24x128xf32>
    tpu.vector_store %arg14[%c0_59, %c0_60, %c0_61], %153 {strides = array<i32>} : memref<1x24x128xf32, #tpu.memory_space<vmem>>, vector<1x24x128xf32>,
    return
  }
  func.func @transform_0(%arg0: i32) -> (i32, i32, i32) {
    %c0_i32 = arith.constant 0 : i32
    %c0_i32_0 = arith.constant 0 : i32
    %c0_i32_1 = arith.constant 0 : i32
    return %arg0, %c0_i32, %c0_i32_0 : i32, i32, i32
  }
  func.func @transform_1(%arg0: i32) -> (i32, i32) {
    %c0_i32 = arith.constant 0 : i32
    %c0_i32_0 = arith.constant 0 : i32
    %c0_i32_1 = arith.constant 0 : i32
    return %c0_i32, %c0_i32_0 : i32, i32
  }
  func.func @transform_2(%arg0: i32) -> (i32, i32) {
    %c0_i32 = arith.constant 0 : i32
    %c0_i32_0 = arith.constant 0 : i32
    %c0_i32_1 = arith.constant 0 : i32
    return %c0_i32, %c0_i32_0 : i32, i32
  }
  func.func @transform_3(%arg0: i32) -> (i32, i32) {
    %c0_i32 = arith.constant 0 : i32
    %c0_i32_0 = arith.constant 0 : i32
    %c0_i32_1 = arith.constant 0 : i32
    return %c0_i32, %c0_i32_0 : i32, i32
  }
  func.func @transform_4(%arg0: i32) -> (i32, i32) {
    %c0_i32 = arith.constant 0 : i32
    %c0_i32_0 = arith.constant 0 : i32
    %c0_i32_1 = arith.constant 0 : i32
    return %c0_i32, %c0_i32_0 : i32, i32
  }
  func.func @transform_5(%arg0: i32) -> (i32, i32) {
    %c0_i32 = arith.constant 0 : i32
    %c0_i32_0 = arith.constant 0 : i32
    %c0_i32_1 = arith.constant 0 : i32
    return %c0_i32, %c0_i32_0 : i32, i32
  }
  func.func @transform_6(%arg0: i32) -> (i32, i32) {
    %c0_i32 = arith.constant 0 : i32
    %c0_i32_0 = arith.constant 0 : i32
    %c0_i32_1 = arith.constant 0 : i32
    return %c0_i32, %c0_i32_0 : i32, i32
  }
  func.func @transform_7(%arg0: i32) -> (i32, i32) {
    %c0_i32 = arith.constant 0 : i32
    %c0_i32_0 = arith.constant 0 : i32
    %c0_i32_1 = arith.constant 0 : i32
    return %c0_i32, %c0_i32_0 : i32, i32
  }
  func.func @transform_8(%arg0: i32) -> (i32, i32) {
    %c0_i32 = arith.constant 0 : i32
    %c0_i32_0 = arith.constant 0 : i32
    %c0_i32_1 = arith.constant 0 : i32
    return %c0_i32, %c0_i32_0 : i32, i32
  }
  func.func @transform_9(%arg0: i32) -> (i32, i32) {
    %c0_i32 = arith.constant 0 : i32
    %c0_i32_0 = arith.constant 0 : i32
    %c0_i32_1 = arith.constant 0 : i32
    return %c0_i32, %c0_i32_0 : i32, i32
  }
  func.func @transform_10(%arg0: i32) -> (i32, i32) {
    %c0_i32 = arith.constant 0 : i32
    %c0_i32_0 = arith.constant 0 : i32
    %c0_i32_1 = arith.constant 0 : i32
    return %c0_i32, %c0_i32_0 : i32, i32
  }
  func.func @transform_11(%arg0: i32) -> (i32, i32) {
    %c0_i32 = arith.constant 0 : i32
    %c0_i32_0 = arith.constant 0 : i32
    %c0_i32_1 = arith.constant 0 : i32
    return %c0_i32, %c0_i32_0 : i32, i32
  }
  func.func @transform_12(%arg0: i32) -> (i32, i32) {
    %c0_i32 = arith.constant 0 : i32
    %c0_i32_0 = arith.constant 0 : i32
    %c0_i32_1 = arith.constant 0 : i32
    return %c0_i32, %c0_i32_0 : i32, i32
  }
  func.func @transform_13(%arg0: i32) -> (i32, i32, i32) {
    %c0_i32 = arith.constant 0 : i32
    %c0_i32_0 = arith.constant 0 : i32
    %c0_i32_1 = arith.constant 0 : i32
    return %arg0, %c0_i32, %c0_i32_0 : i32, i32, i32
  }
}

module attributes {stable_mosaic.version = 11 : i64} {
  func.func @_head_kernel(%arg0: memref<2x24x128xf32, #tpu.memory_space<vmem>>, %arg1: memref<1x128xf32, #tpu.memory_space<vmem>>, %arg2: memref<1x128xf32, #tpu.memory_space<vmem>>, %arg3: memref<128x768xf32, #tpu.memory_space<vmem>>, %arg4: memref<768x768xf32, #tpu.memory_space<vmem>>, %arg5: memref<1x768xf32, #tpu.memory_space<vmem>>, %arg6: memref<768x512xf32, #tpu.memory_space<vmem>>, %arg7: memref<1x512xf32, #tpu.memory_space<vmem>>, %arg8: memref<2x512xf32, #tpu.memory_space<vmem>>) attributes {dimension_semantics = [], scalar_prefetch = 0 : i64, scratch_operands = 0 : i64, tpu.core_type = #tpu.core_type<tc>} {
    %c0 = arith.constant 0 : index
    %c0_0 = arith.constant 0 : index
    %c0_1 = arith.constant 0 : index
    %0 = vector.load %arg0[%c0, %c0_0, %c0_1] : memref<2x24x128xf32, #tpu.memory_space<vmem>>, vector<2x24x128xf32>
    %1 = vector.extract_strided_slice %0 {offsets = [0, 0, 0], sizes = [2, 1, 128], strides = [1, 1, 1]} : vector<2x24x128xf32> to vector<2x1x128xf32>
    %2 = vector.shape_cast %1 : vector<2x1x128xf32> to vector<2x128xf32>
    %c0_2 = arith.constant 0 : index
    %c0_3 = arith.constant 0 : index
    %3 = vector.load %arg1[%c0_2, %c0_3] : memref<1x128xf32, #tpu.memory_space<vmem>>, vector<1x128xf32>
    %c0_4 = arith.constant 0 : index
    %c0_5 = arith.constant 0 : index
    %4 = vector.load %arg2[%c0_4, %c0_5] : memref<1x128xf32, #tpu.memory_space<vmem>>, vector<1x128xf32>
    %cst = arith.constant dense<0.000000e+00> : vector<2xf32>
    %5 = vector.multi_reduction <add>, %2, %cst [1] : vector<2x128xf32> to vector<2xf32>
    %6 = vector.shape_cast %5 : vector<2xf32> to vector<2x1xf32>
    %cst_6 = arith.constant 1.280000e+02 : f32
    %7 = vector.broadcast %cst_6 : f32 to vector<2x1xf32>
    %8 = arith.divf %6, %7 : vector<2x1xf32>
    %9 = vector.broadcast %8 : vector<2x1xf32> to vector<2x128xf32>
    %10 = arith.subf %2, %9 : vector<2x128xf32>
    %11 = arith.mulf %10, %10 : vector<2x128xf32>
    %cst_7 = arith.constant dense<0.000000e+00> : vector<2xf32>
    %12 = vector.multi_reduction <add>, %11, %cst_7 [1] : vector<2x128xf32> to vector<2xf32>
    %13 = vector.shape_cast %12 : vector<2xf32> to vector<2x1xf32>
    %cst_8 = arith.constant 1.280000e+02 : f32
    %14 = vector.broadcast %cst_8 : f32 to vector<2x1xf32>
    %15 = arith.divf %13, %14 : vector<2x1xf32>
    %16 = vector.broadcast %8 : vector<2x1xf32> to vector<2x128xf32>
    %17 = arith.subf %2, %16 : vector<2x128xf32>
    %cst_9 = arith.constant 9.99999974E-6 : f32
    %18 = vector.broadcast %cst_9 : f32 to vector<2x1xf32>
    %19 = arith.addf %15, %18 : vector<2x1xf32>
    %20 = math.rsqrt %19 : vector<2x1xf32>
    %21 = vector.broadcast %20 : vector<2x1xf32> to vector<2x128xf32>
    %22 = arith.mulf %17, %21 : vector<2x128xf32>
    %23 = vector.broadcast %3 : vector<1x128xf32> to vector<2x128xf32>
    %24 = arith.mulf %22, %23 : vector<2x128xf32>
    %25 = vector.broadcast %4 : vector<1x128xf32> to vector<2x128xf32>
    %26 = arith.addf %24, %25 : vector<2x128xf32>
    %c0_10 = arith.constant 0 : index
    %c0_11 = arith.constant 0 : index
    %27 = vector.load %arg3[%c0_10, %c0_11] : memref<128x768xf32, #tpu.memory_space<vmem>>, vector<128x768xf32>
    %cst_12 = arith.constant dense<0.000000e+00> : vector<2x768xf32>
    %28 = tpu.matmul %26, %27, %cst_12 {dimension_numbers = #tpu.dot_dimension_numbers<[1], [0], [0], [1], [0, 0, 1, 1], [], []>} : vector<2x128xf32>, vector<128x768xf32>, vector<2x768xf32> -> vector<2x768xf32>
    %c0_13 = arith.constant 0 : index
    %c0_14 = arith.constant 0 : index
    %29 = vector.load %arg4[%c0_13, %c0_14] : memref<768x768xf32, #tpu.memory_space<vmem>>, vector<768x768xf32>
    %cst_15 = arith.constant dense<0.000000e+00> : vector<2x768xf32>
    %30 = tpu.matmul %28, %29, %cst_15 {dimension_numbers = #tpu.dot_dimension_numbers<[1], [0], [0], [1], [0, 0, 1, 1], [], []>} : vector<2x768xf32>, vector<768x768xf32>, vector<2x768xf32> -> vector<2x768xf32>
    %c0_16 = arith.constant 0 : index
    %c0_17 = arith.constant 0 : index
    %31 = vector.load %arg5[%c0_16, %c0_17] : memref<1x768xf32, #tpu.memory_space<vmem>>, vector<1x768xf32>
    %32 = vector.broadcast %31 : vector<1x768xf32> to vector<2x768xf32>
    %33 = arith.addf %30, %32 : vector<2x768xf32>
    %cst_18 = arith.constant 0.000000e+00 : f32
    %34 = vector.broadcast %cst_18 : f32 to vector<2x768xf32>
    %35 = arith.maximumf %33, %34 : vector<2x768xf32>
    %c0_19 = arith.constant 0 : index
    %c0_20 = arith.constant 0 : index
    %36 = vector.load %arg6[%c0_19, %c0_20] : memref<768x512xf32, #tpu.memory_space<vmem>>, vector<768x512xf32>
    %cst_21 = arith.constant dense<0.000000e+00> : vector<2x512xf32>
    %37 = tpu.matmul %35, %36, %cst_21 {dimension_numbers = #tpu.dot_dimension_numbers<[1], [0], [0], [1], [0, 0, 1, 1], [], []>} : vector<2x768xf32>, vector<768x512xf32>, vector<2x512xf32> -> vector<2x512xf32>
    %c0_22 = arith.constant 0 : index
    %c0_23 = arith.constant 0 : index
    %38 = vector.load %arg7[%c0_22, %c0_23] : memref<1x512xf32, #tpu.memory_space<vmem>>, vector<1x512xf32>
    %39 = vector.broadcast %38 : vector<1x512xf32> to vector<2x512xf32>
    %40 = arith.addf %37, %39 : vector<2x512xf32>
    %c0_24 = arith.constant 0 : index
    %c0_25 = arith.constant 0 : index
    %41 = vector.load %arg8[%c0_24, %c0_25] : memref<2x512xf32, #tpu.memory_space<vmem>>, vector<2x512xf32>
    tpu.vector_store %arg8[%c0_24, %c0_25], %40 {strides = array<i32>} : memref<2x512xf32, #tpu.memory_space<vmem>>, vector<2x512xf32>,
    return
  }
}

</mosaic_0001>

<llo_original>
// kernel: image_encoder_forward.4
$region0: #{image_encoder_forward.4}
  #allocation0 [shape = 'u32[]', space=smem, size = 0x4, offset = 0x4, fixed_abs, tag = 'smem constant byte address 0x4 - core index']
  #allocation1 [shape = 'u32[144,128]{1,0:T(1,128)}', space=vmem, size = 0x12000, scoped, tag = 'internal scratch']
  %s0 = inlined_call_operand.vmem [shape: f32[2,16,192], index: 0, kind: input, shape index: {}]
  %s1 = inlined_call_operand.hbm [shape: f32[192,128], index: 1, kind: input, shape index: {}]
  %s2 = inlined_call_operand.hbm [shape: f32[1,128], index: 2, kind: input, shape index: {}]
  %s3 = inlined_call_operand.hbm [shape: f32[17,128], index: 3, kind: input, shape index: {}]
  %s4 = inlined_call_operand.hbm [shape: f32[1,128], index: 4, kind: input, shape index: {}]
  %s5 = inlined_call_operand.hbm [shape: f32[1,128], index: 5, kind: input, shape index: {}]
  %s6 = inlined_call_operand.vmem [shape: f32[2,24,128], index: 6, kind: output, shape index: {}]
  %s7 = sld [smem:[#allocation0]]
  $region77: #{image_encoder_forward.4} parent=0
    _
  %s9 = ssub.s32 1, %s7
  %s10 = scalar_select 0, %s9, %s7
  $region1: #{image_encoder_forward.4} parent=0
    #allocation2 [shape = 'u8[98304]{0}', space=vmem, size = 0x18000, scoped, tag = 'input window, operand 1, single buffered']
    #allocation3 [shape = 's32[2]{0}', space=sflag, size = 0x8, scoped, tag = 'scoped memory for image_encoder_forward.4']
    #allocation4 [shape = 'u8[512]{0}', space=vmem, size = 0x400, scoped, tag = 'input window, operand 2, single buffered']
    #allocation5 [shape = 's32[1]{0}', space=sflag, size = 0x4, scoped, tag = 'scoped memory for image_encoder_forward.4']
    #allocation6 [shape = 'u8[12288]{0}', space=vmem, size = 0x3000, scoped, tag = 'input window, operand 3, single buffered']
    #allocation7 [shape = 'u8[512]{0}', space=vmem, size = 0x400, scoped, tag = 'input window, operand 4, single buffered']
    #allocation8 [shape = 's32[1]{0}', space=sflag, size = 0x4, scoped, tag = 'scoped memory for image_encoder_forward.4']
    #allocation9 [shape = 'u8[512]{0}', space=vmem, size = 0x400, scoped, tag = 'input window, operand 5, single buffered']
    %11 = vsyncpa [#allocation3], 0
    %12 = vsyncpa [#allocation5], 0
    %13 = vsyncpa [#allocation8], 0
    loop: start=0, step=1, limit=4
    $region2: #{image_encoder_forward.4} parent=1 // loop_pre_header
      _
    $region3: #{image_encoder_forward.4} parent=1 // loop_header
      %s15 = sphi 0, %s19
      %p16 = scmp.ge.s32.totalorder %s15, 4
      %s25 = sphi 0, %s27
      %s28 = sphi 0, %s25
      %s29 = sphi 0, %s28
      %s45 = sphi 0, %s29
      %s49 = sphi 0, %s49
      %s51 = sphi 0, %s49
      %s52 = sphi 0, %s51
      %s66 = sphi 0, %s52
      %s70 = sphi 0, %s70
      %s72 = sphi 0, %s70
      %s73 = sphi 0, %s72
      %s87 = sphi 0, %s73
      %s91 = sphi 0, %s91
      %s93 = sphi 0, %s91
      %s94 = sphi 0, %s93
      %s108 = sphi 0, %s94
      %s112 = sphi 0, %s112
      %s114 = sphi 0, %s112
      %s115 = sphi 0, %s114
      %s129 = sphi 0, %s115
      %s133 = sphi 0, %s133
      %s135 = sphi 0, %s133
      %s136 = sphi 0, %s135
      %s150 = sphi 0, %s136
      %s156 = sphi 0, %s158
      %s159 = sphi 0, %s156
      %s160 = sphi 0, %s159
      %s176 = sphi 0, %s160
    $region4: #{image_encoder_forward.4} parent=1 // loop_header_branch
      %18 = sbr.rel (%p16) target = $region8
    $region5: #{image_encoder_forward.4} parent=1 // loop_body
      %s20 = ssub.s32 %s15, 1
      %s21 = ssub.s32 %s15, 2
      %s22 = sadd.s32 %s15, 1
      %s23 = ssub.s32 %s15, %s22
      %p24 = scmp.eq.s32.totalorder %s23, 0
      %s26 = sadd.s32 %s25, 1
      %s27 = scalar_select %p24, %s25, %s26
      %p30 = pneg %p24
      %p31 = scmp.eq.s32.totalorder %s15, 1
      %p32 = por %p30, %p31
      %p33 = scmp.ne.s32.totalorder %s25, %s28
      %p34 = scmp.eq.s32.totalorder %s15, 0
      %p35 = por %p33, %p34
      %p36 = scmp.ne.s32.totalorder %s25, %s28
      %p37 = scmp.eq.s32.totalorder %s20, 1
      %p38 = por %p36, %p37
      %p39 = scmp.ne.s32.totalorder %s28, %s29
      %p40 = scmp.eq.s32.totalorder %s20, 0
      %p41 = por %p39, %p40
      %p42 = scmp.ne.s32.totalorder %s28, %s29
      %p43 = scmp.eq.s32.totalorder %s21, 1
      %p44 = por %p42, %p43
      %p46 = scmp.ne.s32.totalorder %s29, %s45
      %p47 = scmp.eq.s32.totalorder %s21, 0
      %p48 = por %p46, %p47
      %s50 = sadd.s32 %s49, 1
      %p53 = scmp.eq.s32.totalorder %s15, 1
      %p54 = scmp.ne.s32.totalorder %s49, %s51
      %p55 = scmp.eq.s32.totalorder %s15, 0
      %p56 = por %p54, %p55
      %p57 = scmp.ne.s32.totalorder %s49, %s51
      %p58 = scmp.eq.s32.totalorder %s20, 1
      %p59 = por %p57, %p58
      %p60 = scmp.ne.s32.totalorder %s51, %s52
      %p61 = scmp.eq.s32.totalorder %s20, 0
      %p62 = por %p60, %p61
      %p63 = scmp.ne.s32.totalorder %s51, %s52
      %p64 = scmp.eq.s32.totalorder %s21, 1
      %p65 = por %p63, %p64
      %p67 = scmp.ne.s32.totalorder %s52, %s66
      %p68 = scmp.eq.s32.totalorder %s21, 0
      %p69 = por %p67, %p68
      %s71 = sadd.s32 %s70, 1
      %p74 = scmp.eq.s32.totalorder %s15, 1
      %p75 = scmp.ne.s32.totalorder %s70, %s72
      %p76 = scmp.eq.s32.totalorder %s15, 0
      %p77 = por %p75, %p76
      %p78 = scmp.ne.s32.totalorder %s70, %s72
      %p79 = scmp.eq.s32.totalorder %s20, 1
      %p80 = por %p78, %p79
      %p81 = scmp.ne.s32.totalorder %s72, %s73
      %p82 = scmp.eq.s32.totalorder %s20, 0
      %p83 = por %p81, %p82
      %p84 = scmp.ne.s32.totalorder %s72, %s73
      %p85 = scmp.eq.s32.totalorder %s21, 1
      %p86 = por %p84, %p85
      %p88 = scmp.ne.s32.totalorder %s73, %s87
      %p89 = scmp.eq.s32.totalorder %s21, 0
      %p90 = por %p88, %p89
      %s92 = sadd.s32 %s91, 1
      %p95 = scmp.eq.s32.totalorder %s15, 1
      %p96 = scmp.ne.s32.totalorder %s91, %s93
      %p97 = scmp.eq.s32.totalorder %s15, 0
      %p98 = por %p96, %p97
      %p99 = scmp.ne.s32.totalorder %s91, %s93
      %p100 = scmp.eq.s32.totalorder %s20, 1
      %p101 = por %p99, %p100
      %p102 = scmp.ne.s32.totalorder %s93, %s94
      %p103 = scmp.eq.s32.totalorder %s20, 0
      %p104 = por %p102, %p103
      %p105 = scmp.ne.s32.totalorder %s93, %s94
      %p106 = scmp.eq.s32.totalorder %s21, 1
      %p107 = por %p105, %p106
      %p109 = scmp.ne.s32.totalorder %s94, %s108
      %p110 = scmp.eq.s32.totalorder %s21, 0
      %p111 = por %p109, %p110
      %s113 = sadd.s32 %s112, 1
      %p116 = scmp.eq.s32.totalorder %s15, 1
      %p117 = scmp.ne.s32.totalorder %s112, %s114
      %p118 = scmp.eq.s32.totalorder %s15, 0
      %p119 = por %p117, %p118
      %p120 = scmp.ne.s32.totalorder %s112, %s114
      %p121 = scmp.eq.s32.totalorder %s20, 1
      %p122 = por %p120, %p121
      %p123 = scmp.ne.s32.totalorder %s114, %s115
      %p124 = scmp.eq.s32.totalorder %s20, 0
      %p125 = por %p123, %p124
      %p126 = scmp.ne.s32.totalorder %s114, %s115
      %p127 = scmp.eq.s32.totalorder %s21, 1
      %p128 = por %p126, %p127
      %p130 = scmp.ne.s32.totalorder %s115, %s129
      %p131 = scmp.eq.s32.totalorder %s21, 0
      %p132 = por %p130, %p131
      %s134 = sadd.s32 %s133, 1
      %p137 = scmp.eq.s32.totalorder %s15, 1
      %p138 = scmp.ne.s32.totalorder %s133, %s135
      %p139 = scmp.eq.s32.totalorder %s15, 0
      %p140 = por %p138, %p139
      %p141 = scmp.ne.s32.totalorder %s133, %s135
      %p142 = scmp.eq.s32.totalorder %s20, 1
      %p143 = por %p141, %p142
      %p144 = scmp.ne.s32.totalorder %s135, %s136
      %p145 = scmp.eq.s32.totalorder %s20, 0
      %p146 = por %p144, %p145
      %p147 = scmp.ne.s32.totalorder %s135, %s136
      %p148 = scmp.eq.s32.totalorder %s21, 1
      %p149 = por %p147, %p148
      %p151 = scmp.ne.s32.totalorder %s136, %s150
      %p152 = scmp.eq.s32.totalorder %s21, 0
      %p153 = por %p151, %p152
      %s154 = ssub.s32 %s15, %s22
      %p155 = scmp.eq.s32.totalorder %s154, 0
      %s157 = sadd.s32 %s156, 1
      %s158 = scalar_select %p155, %s156, %s157
      %p161 = pneg %p155
      %p162 = scmp.eq.s32.totalorder %s15, 1
      %p163 = por %p161, %p162
      %p164 = scmp.ne.s32.totalorder %s156, %s159
      %p165 = scmp.eq.s32.totalorder %s15, 0
      %p166 = por %p164, %p165
      %p167 = scmp.ne.s32.totalorder %s156, %s159
      %p168 = scmp.eq.s32.totalorder %s20, 1
      %p169 = por %p167, %p168
      %p170 = scmp.ne.s32.totalorder %s159, %s160
      %p171 = scmp.eq.s32.totalorder %s20, 0
      %p172 = por %p170, %p171
      %p173 = scmp.ne.s32.totalorder %s159, %s160
      %p174 = scmp.eq.s32.totalorder %s21, 1
      %p175 = por %p173, %p174
      %p177 = scmp.ne.s32.totalorder %s160, %s176
      %p178 = scmp.eq.s32.totalorder %s21, 0
      %p179 = por %p177, %p178
      %p180 = scmp.le.s32.totalorder 1, %s15
      %p181 = scmp.lt.s32.totalorder %s15, 3
      %p182 = pnand %p180, %p181
      %p183 = pneg %p182
      // Predicated region
      $region9: #{image_encoder_forward.4} parent=5 // pred_check
        _
      $region10: #{image_encoder_forward.4} parent=5 // pred_check_branch
        %185 = sbr.rel (%p182) target = $region12
      $region11: #{image_encoder_forward.4} parent=5 // pred_region
        %s186 = ssub.s32 %s15, 1
        // Predicated region
        $region13: #{image_encoder_forward.4} parent=11 // pred_check
          %p187 = pneg %p62
        $region14: #{image_encoder_forward.4} parent=11 // pred_check_branch
          %189 = sbr.rel (%p187) target = $region16
        $region15: #{image_encoder_forward.4} parent=11 // pred_region
          %s191 = ssub.s32 3072, 3072
          %192 = vsyncadd [#allocation3], %s191
          %s193 = sshll.u32 [#allocation2], 4
          %s194 = int_to_ptr.vmem [resolvable:$true] %s193
          %199 = dma.hbm_to_vmem [thread:$0]  %s1, 3072, %s194, [#allocation3], 128, 128, 8
        $region16: #{image_encoder_forward.4} parent=11 // pred_fallthru
          _
        // Predicated region
        $region17: #{image_encoder_forward.4} parent=11 // pred_check
          %p200 = pneg %p83
        $region18: #{image_encoder_forward.4} parent=11 // pred_check_branch
          %202 = sbr.rel (%p200) target = $region20
        $region19: #{image_encoder_forward.4} parent=11 // pred_region
          %s204 = ssub.s32 16, 16
          %205 = vsyncadd [#allocation5], %s204
          %s207 = sshll.u32 [#allocation4], 4
          %s208 = int_to_ptr.vmem [resolvable:$true] %s207
          %210 = dma.hbm_to_vmem [thread:$0]  %s2, 16, %s208, [#allocation5]
        $region20: #{image_encoder_forward.4} parent=11 // pred_fallthru
          _
        // Predicated region
        $region21: #{image_encoder_forward.4} parent=11 // pred_check
          %p211 = pneg %p104
        $region22: #{image_encoder_forward.4} parent=11 // pred_check_branch
          %213 = sbr.rel (%p211) target = $region24
        $region23: #{image_encoder_forward.4} parent=11 // pred_region
          %s215 = ssub.s32 384, 384
          %216 = vsyncadd [#allocation5], %s215
          %s217 = sshll.u32 [#allocation6], 4
          %s218 = int_to_ptr.vmem [resolvable:$true] %s217
          %223 = dma.hbm_to_vmem [thread:$0]  %s3, 384, %s218, [#allocation5], 128, 128, 8
        $region24: #{image_encoder_forward.4} parent=11 // pred_fallthru
          _
        // Predicated region
        $region25: #{image_encoder_forward.4} parent=11 // pred_check
          %p224 = pneg %p125
        $region26: #{image_encoder_forward.4} parent=11 // pred_check_branch
          %226 = sbr.rel (%p224) target = $region28
        $region27: #{image_encoder_forward.4} parent=11 // pred_region
          %s228 = ssub.s32 16, 16
          %229 = vsyncadd [#allocation8], %s228
          %s231 = sshll.u32 [#allocation7], 4
          %s232 = int_to_ptr.vmem [resolvable:$true] %s231
          %234 = dma.hbm_to_vmem [thread:$0]  %s4, 16, %s232, [#allocation8]
        $region28: #{image_encoder_forward.4} parent=11 // pred_fallthru
          _
        // Predicated region
        $region29: #{image_encoder_forward.4} parent=11 // pred_check
          %p235 = pneg %p146
        $region30: #{image_encoder_forward.4} parent=11 // pred_check_branch
          %237 = sbr.rel (%p235) target = $region32
        $region31: #{image_encoder_forward.4} parent=11 // pred_region
          %s239 = ssub.s32 16, 16
          %240 = vsyncadd [#allocation8], %s239
          %s242 = sshll.u32 [#allocation9], 4
          %s243 = int_to_ptr.vmem [resolvable:$true] %s242
          %245 = dma.hbm_to_vmem [thread:$0]  %s5, 16, %s243, [#allocation8]
        $region32: #{image_encoder_forward.4} parent=11 // pred_fallthru
          _
      $region12: #{image_encoder_forward.4} parent=5 // pred_fallthru
        _
      %p246 = scmp.lt.s32.totalorder %s15, 2
      // Predicated region
      $region33: #{image_encoder_forward.4} parent=5 // pred_check
        %p247 = pneg %p246
      $region34: #{image_encoder_forward.4} parent=5 // pred_check_branch
        %249 = sbr.rel (%p247) target = $region36
      $region35: #{image_encoder_forward.4} parent=5 // pred_region
        // Predicated region
        $region37: #{image_encoder_forward.4} parent=35 // pred_check
          %p250 = pneg %p35
        $region38: #{image_encoder_forward.4} parent=35 // pred_check_branch
          %252 = sbr.rel (%p250) target = $region40
        $region39: #{image_encoder_forward.4} parent=35 // pred_region
          %p253 = scmp.lt.s32.totalorder %s15, 1
          %s254 = scalar_select %p253, %s15, 1
          %s255 = smul.addr %s254, 4
          %s256 = smul.addr %s255, 8
          %s257 = scalar_lea.vmem %s0, %s256
        $region40: #{image_encoder_forward.4} parent=35 // pred_fallthru
          _
      $region36: #{image_encoder_forward.4} parent=5 // pred_fallthru
        _
      %p258 = scmp.le.s32.totalorder 1, %s15
      %p259 = scmp.lt.s32.totalorder %s15, 3
      %p260 = pnand %p258, %p259
      %p261 = pneg %p260
      // Predicated region
      $region41: #{image_encoder_forward.4} parent=5 // pred_check
        _
      $region42: #{image_encoder_forward.4} parent=5 // pred_check_branch
        %263 = sbr.rel (%p260) target = $region44
      $region43: #{image_encoder_forward.4} parent=5 // pred_region
        %s264 = ssub.s32 %s15, 1
        // Predicated region
        $region45: #{image_encoder_forward.4} parent=43 // pred_check
          %p265 = pneg %p62
        $region46: #{image_encoder_forward.4} parent=43 // pred_check_branch
          %267 = sbr.rel (%p265) target = $region48
        $region47: #{image_encoder_forward.4} parent=43 // pred_region
          %268 = dma.done [#allocation3], 3072
        $region48: #{image_encoder_forward.4} parent=43 // pred_fallthru
          _
        // Predicated region
        $region49: #{image_encoder_forward.4} parent=43 // pred_check
          %p269 = pneg %p83
        $region50: #{image_encoder_forward.4} parent=43 // pred_check_branch
          %271 = sbr.rel (%p269) target = $region52
        $region51: #{image_encoder_forward.4} parent=43 // pred_region
          %272 = dma.done [#allocation5], 16
        $region52: #{image_encoder_forward.4} parent=43 // pred_fallthru
          _
        // Predicated region
        $region53: #{image_encoder_forward.4} parent=43 // pred_check
          %p273 = pneg %p104
        $region54: #{image_encoder_forward.4} parent=43 // pred_check_branch
          %275 = sbr.rel (%p273) target = $region56
        $region55: #{image_encoder_forward.4} parent=43 // pred_region
          %276 = dma.done [#allocation5], 384
        $region56: #{image_encoder_forward.4} parent=43 // pred_fallthru
          _
        // Predicated region
        $region57: #{image_encoder_forward.4} parent=43 // pred_check
          %p277 = pneg %p125
        $region58: #{image_encoder_forward.4} parent=43 // pred_check_branch
          %279 = sbr.rel (%p277) target = $region60
        $region59: #{image_encoder_forward.4} parent=43 // pred_region
          %280 = dma.done [#allocation8], 16
        $region60: #{image_encoder_forward.4} parent=43 // pred_fallthru
          _
        // Predicated region
        $region61: #{image_encoder_forward.4} parent=43 // pred_check
          %p281 = pneg %p146
        $region62: #{image_encoder_forward.4} parent=43 // pred_check_branch
          %283 = sbr.rel (%p281) target = $region64
        $region63: #{image_encoder_forward.4} parent=43 // pred_region
          %284 = dma.done [#allocation8], 16
        $region64: #{image_encoder_forward.4} parent=43 // pred_fallthru
          _
        %p285 = scmp.lt.s32.totalorder %s20, 1
        %s286 = scalar_select %p285, %s20, 1
        %s287 = smul.addr %s286, 4
        %s288 = smul.addr %s287, 8
        %s289 = scalar_lea.vmem %s0, %s288
        %p290 = pneg %p41
        %p291 = pneg %p38
        %p292 = pneg %p62
        %p293 = pneg %p59
        %p294 = pneg %p83
        %p295 = pneg %p80
        %p296 = pneg %p104
        %p297 = pneg %p101
        %p298 = pneg %p125
        %p299 = pneg %p122
        %p300 = pneg %p146
        %p301 = pneg %p143
        %p302 = pneg %p172
        %p303 = pneg %p169
        %p304 = scmp.lt.s32.totalorder %s20, 1
        %s305 = scalar_select %p304, %s20, 1
        %s306 = smul.addr %s305, 3
        %s307 = smul.addr %s306, 8
        %s308 = scalar_lea.vmem %s6, %s307
        %p309 = scmp.lt.s32.totalorder %s20, 1
        %s310 = scalar_select %p309, %s20, 1
        %s311 = smul.addr %s310, 4
        %s312 = smul.addr %s311, 8
        %s313 = scalar_lea.vmem %s0, %s312
        %p314 = scmp.lt.s32.totalorder %s20, 1
        %s315 = scalar_select %p314, %s20, 1
        %s316 = smul.addr %s315, 3
        %s317 = smul.addr %s316, 8
        %s318 = scalar_lea.vmem %s6, %s317
        %v319 = vld [vmem:[%s313] sm:$0xff]
        %v320 = vld [vmem:[%s313 + $0x8] sm:$0xff]
        %v321 = vld [vmem:[%s313 + $0x10] sm:$0xff]
        %v322 = vld [vmem:[%s313 + $0x18] sm:$0xff]
        %v323 = vld [vmem:[#allocation2] sm:$0xff]
        %v324 = vld [vmem:[#allocation2 + $0x8] sm:$0xff]
        %v325 = vld [vmem:[#allocation2 + $0x10] sm:$0xff]
        %v326 = vld [vmem:[#allocation2 + $0x18] sm:$0xff]
        %v327 = vld [vmem:[#allocation2 + $0x20] sm:$0xff]
        %v328 = vld [vmem:[#allocation2 + $0x28] sm:$0xff]
        %v329 = vld [vmem:[#allocation2 + $0x30] sm:$0xff]
        %v330 = vld [vmem:[#allocation2 + $0x38] sm:$0xff]
        %v331 = vld [vmem:[#allocation2 + $0x40] sm:$0xff]
        %v332 = vld [vmem:[#allocation2 + $0x48] sm:$0xff]
        %v333 = vld [vmem:[#allocation2 + $0x50] sm:$0xff]
        %v334 = vld [vmem:[#allocation2 + $0x58] sm:$0xff]
        %v335 = vld [vmem:[#allocation2 + $0x60] sm:$0xff]
        %v336 = vld [vmem:[#allocation2 + $0x68] sm:$0xff]
        %v337 = vld [vmem:[#allocation2 + $0x70] sm:$0xff]
        %v338 = vld [vmem:[#allocation2 + $0x78] sm:$0xff]
        %v339 = vld [vmem:[#allocation2 + $0x80] sm:$0xff]
        %v340 = vld [vmem:[#allocation2 + $0x88] sm:$0xff]
        %v341 = vld [vmem:[#allocation2 + $0x90] sm:$0xff]
        %v342 = vld [vmem:[#allocation2 + $0x98] sm:$0xff]
        %v343 = vld [vmem:[#allocation2 + $0xa0] sm:$0xff]
        %v344 = vld [vmem:[#allocation2 + $0xa8] sm:$0xff]
        %v345 = vld [vmem:[#allocation2 + $0xb0] sm:$0xff]
        %v346 = vld [vmem:[#allocation2 + $0xb8] sm:$0xff]
        %vm347 = vcmask 523264
        %v349 = vsel %vm347, %v320, 0
        %v352 = vsel %vm347, %v322, 0
        %354 = vmatprep.subr.mxu0 0.0
        %355 = vmatpush1.msra.mxu0 %v338
        %356 = vmatprep.subr.mxu0 0.0
        %357 = vmatpush1.msra.mxu0 %v337
        %358 = vmatprep.subr.mxu0 0.0
        %359 = vmatpush1.msra.mxu0 %v336
        %360 = vmatprep.subr.mxu0 0.0
        %361 = vmatpush1.msra.mxu0 %v335
        %362 = vmatprep.subr.mxu0 0.0
        %363 = vmatpush1.msra.mxu0 %v334
        %364 = vmatprep.subr.mxu0 0.0
        %365 = vmatpush1.msra.mxu0 %v333
        %366 = vmatprep.subr.mxu0 0.0
        %367 = vmatpush1.msra.mxu0 %v332
        %368 = vmatprep.subr.mxu0 0.0
        %369 = vmatpush1.msra.mxu0 %v331
        %370 = vmatprep.subr.mxu0 0.0
        %371 = vmatpush1.msra.mxu0 %v330
        %372 = vmatprep.subr.mxu0 0.0
        %373 = vmatpush1.msra.mxu0 %v329
        %374 = vmatprep.subr.mxu0 0.0
        %375 = vmatpush1.msra.mxu0 %v328
        %376 = vmatprep.subr.mxu0 0.0
        %377 = vmatpush1.msra.mxu0 %v327
        %378 = vmatprep.subr.mxu0 0.0
        %379 = vmatpush1.msra.mxu0 %v326
        %380 = vmatprep.subr.mxu0 0.0
        %381 = vmatpush1.msra.mxu0 %v325
        %382 = vmatprep.subr.mxu0 0.0
        %383 = vmatpush1.msra.mxu0 %v324
        %384 = vmatprep.subr.mxu0 0.0
        %385 = vmatpush1.msra.mxu0 %v323
        %386 = vmatprep.subr.mxu0 0.0
        %387 = vmatpush2.msra.mxu0 0.0
        %388 = vmatprep.subr.mxu0 0.0
        %389 = vmatpush2.msra.mxu0 0.0
        %390 = vmatprep.subr.mxu0 0.0
        %391 = vmatpush2.msra.mxu0 0.0
        %392 = vmatprep.subr.mxu0 0.0
        %393 = vmatpush2.msra.mxu0 0.0
        %394 = vmatprep.subr.mxu0 0.0
        %395 = vmatpush2.msra.mxu0 0.0
        %396 = vmatprep.subr.mxu0 0.0
        %397 = vmatpush2.msra.mxu0 0.0
        %398 = vmatprep.subr.mxu0 0.0
        %399 = vmatpush2.msra.mxu0 0.0
        %400 = vmatprep.subr.mxu0 0.0
        %401 = vmatpush2.msra.mxu0 0.0
        %402 = vmatprep.subr.mxu0 0.0
        %403 = vmatpush2.msra.mxu0 %v346
        %404 = vmatprep.subr.mxu0 0.0
        %405 = vmatpush2.msra.mxu0 %v345
        %406 = vmatprep.subr.mxu0 0.0
        %407 = vmatpush2.msra.mxu0 %v344
        %408 = vmatprep.subr.mxu0 0.0
        %409 = vmatpush2.msra.mxu0 %v343
        %410 = vmatprep.subr.mxu0 0.0
        %411 = vmatpush2.msra.mxu0 %v342
        %412 = vmatprep.subr.mxu0 0.0
        %413 = vmatpush2.msra.mxu0 %v341
        %414 = vmatprep.subr.mxu0 0.0
        %415 = vmatpush2.msra.mxu0 %v340
        %416 = vmatprep.subr.mxu0 0.0
        %417 = vmatpush2.msra.mxu0 %v339
        %418 = vmatprep.mubr.f32.mxu0 %v349
        %419 = vmatmul.mubr.f32.gmra.mxu0 %v319
        %v420 = vpop.f32.mrf.mxu0
        %v421 = vadd.f32 0.0, %v420
        %v422 = vpop.f32.mrf.mxu0
        %423 = vmatprep.mubr.f32.mxu0 %v352
        %424 = vmatmul.mubr.f32.gmra.mxu0 %v321
        %v425 = vpop.f32.mrf.mxu0
        %v426 = vadd.f32 0.0, %v425
        %v427 = vpop.f32.mrf.mxu0
        %428 = vdwg.mxu0
        %v429 = vld [vmem:[#allocation4] sm:$0x1]
        %vm432 = vcmask 1040384
        %v433 = vrot.slane %v421, 7
        %v434 = vrot.slane %v426, 7
        %v435 = vsel %vm432, %v433, %v434
        %v439 = vsel %vm432, %v429, %v433
        %v440 = vld [vmem:[#allocation6] sm:$0xff]
        %v441 = vld [vmem:[#allocation6 + $0x8] sm:$0xff]
        %v442 = vld [vmem:[#allocation6 + $0x10] sm:$0x1]
        %v443 = vadd.f32 %v439, %v440
        %v444 = vadd.f32 %v435, %v441
        %v445 = vadd.f32 %v434, %v442
        %v446 = vld [vmem:[#allocation7] sm:$0x1]
        %v447 = vld [vmem:[#allocation9] sm:$0x1]
        %448 = vadd.xlane.f32.xlu0 %v443
        %v449 = vpop.xlane.xlu0 %448
        %450 = vadd.xlane.f32.xlu0 %v444
        %v451 = vpop.xlane.xlu0 %450
        %v452 = vsel %vm432, %v445, 0.0
        %453 = vadd.xlane.f32.xlu0 %v452
        %v454 = vpop.xlane.xlu0 %453
        %v455 = vrcp.pop 128.0
        %v456 = vmul.f32 %v449, %v455
        %v457 = vmul.f32 %v451, %v455
        %v458 = vmul.f32 %v454, %v455
        %v459 = vsub.f32 %v443, %v456
        %v460 = vsub.f32 %v444, %v457
        %v461 = vsub.f32 %v445, %v458
        %v462 = vmul.f32 %v459, %v459
        %v463 = vmul.f32 %v460, %v460
        %v464 = vmul.f32 %v461, %v461
        %465 = vadd.xlane.f32.xlu0 %v462
        %v466 = vpop.xlane.xlu0 %465
        %467 = vadd.xlane.f32.xlu0 %v463
        %v468 = vpop.xlane.xlu0 %467
        %v469 = vsel %vm432, %v464, 0.0
        %470 = vadd.xlane.f32.xlu0 %v469
        %v471 = vpop.xlane.xlu0 %470
        %v472 = vmul.f32 %v466, %v455
        %v473 = vmul.f32 %v468, %v455
        %v474 = vmul.f32 %v471, %v455
        %v475 = vadd.f32 %v472, 1e-05
        %v476 = vadd.f32 %v473, 1e-05
        %v477 = vadd.f32 %v474, 1e-05
        %v478 = vrsqrt.pop %v475
        %v479 = vrsqrt.pop %v476
        %v480 = vrsqrt.pop %v477
        %v481 = vmul.f32 %v459, %v478
        %v482 = vmul.f32 %v460, %v479
        %v483 = vmul.f32 %v461, %v480
        %v485 = vlaneseq
        %v486 = vshrl.u32 %v485, 7
        %v487 = vsub.s32 0, %v486
        %v488 = vrot.slane %v446, %v487
        %v490 = vmul.f32 %v481, %v488
        %v491 = vmul.f32 %v482, %v488
        %v492 = vmul.f32 %v483, %v488
        %v494 = vlaneseq
        %v495 = vshrl.u32 %v494, 7
        %v496 = vsub.s32 0, %v495
        %v497 = vrot.slane %v447, %v496
        %v499 = vadd.f32 %v490, %v497
        %v500 = vadd.f32 %v491, %v497
        %v501 = vadd.f32 %v492, %v497
        %v502 = vsel %vm432, %v501, 0.0
        %503 = vst [vmem:[%s318] sm:$0xff] %v499
        %504 = vst [vmem:[%s318 + $0x8] sm:$0xff] %v500
        %505 = vst [vmem:[%s318 + $0x10] sm:$0xff] %v502
        %p506 = scmp.lt.s32.totalorder %s20, 1
        %s507 = scalar_select %p506, %s20, 1
        %s508 = smul.addr %s507, 3
        %s509 = smul.addr %s508, 8
        %s510 = scalar_lea.vmem %s6, %s509
        // Predicated region
        $region65: #{image_encoder_forward.4} parent=43 // pred_check
          %p511 = pneg %p169
        $region66: #{image_encoder_forward.4} parent=43 // pred_check_branch
          %513 = sbr.rel (%p511) target = $region68
        $region67: #{image_encoder_forward.4} parent=43 // pred_region
          _
        $region68: #{image_encoder_forward.4} parent=43 // pred_fallthru
          _
      $region44: #{image_encoder_forward.4} parent=5 // pred_fallthru
        _
      %p514 = scmp.le.s32.totalorder 2, %s15
      // Predicated region
      $region69: #{image_encoder_forward.4} parent=5 // pred_check
        %p515 = pneg %p514
      $region70: #{image_encoder_forward.4} parent=5 // pred_check_branch
        %517 = sbr.rel (%p515) target = $region72
      $region71: #{image_encoder_forward.4} parent=5 // pred_region
        %s518 = ssub.s32 %s15, 2
        // Predicated region
        $region73: #{image_encoder_forward.4} parent=71 // pred_check
          %p519 = pneg %p175
        $region74: #{image_encoder_forward.4} parent=71 // pred_check_branch
          %521 = sbr.rel (%p519) target = $region76
        $region75: #{image_encoder_forward.4} parent=71 // pred_region
          %p522 = scmp.lt.s32.totalorder %s21, 1
          %s523 = scalar_select %p522, %s21, 1
          %s524 = smul.addr %s523, 3
          %s525 = smul.addr %s524, 8
          %s526 = scalar_lea.vmem %s6, %s525
        $region76: #{image_encoder_forward.4} parent=71 // pred_fallthru
          _
      $region72: #{image_encoder_forward.4} parent=5 // pred_fallthru
        _
    $region6: #{image_encoder_forward.4} parent=1 // loop_footer
      %s19 = sadd.s32 1, %s15
    $region7: #{image_encoder_forward.4} parent=1 // loop_footer_branch
      %14 = sbr.rel target = $region3
    $region8: #{image_encoder_forward.4} parent=1 // loop_exit
      _
    %527 = vsyncpa [#allocation3], 1
    %s528 = scalar_lea.sflag [#allocation3], 1
    %529 = vsyncpa %s528, 1
    %530 = vsyncpa [#allocation5], 1
    %531 = vsyncpa [#allocation8], 1

// kernel: image_encoder_forward.6
$region0: #{image_encoder_forward.6}
  #allocation0 [shape = 'u32[]', space=smem, size = 0x4, offset = 0x4, fixed_abs, tag = 'smem constant byte address 0x4 - core index']
  #allocation1 [shape = 'u32[144,128]{1,0:T(1,128)}', space=vmem, size = 0x12000, scoped, tag = 'internal scratch']
  %s0 = inlined_call_operand.vmem [shape: f32[2,24,128], index: 0, kind: input, shape index: {}]
  %s1 = inlined_call_operand.vmem [shape: f32[1,128], index: 1, kind: input, shape index: {}]
  %s2 = inlined_call_operand.vmem [shape: f32[1,128], index: 2, kind: input, shape index: {}]
  %s3 = inlined_call_operand.vmem [shape: f32[128,384], index: 3, kind: input, shape index: {}]
  %s4 = inlined_call_operand.vmem [shape: f32[1,384], index: 4, kind: input, shape index: {}]
  %s5 = inlined_call_operand.hbm [shape: f32[128,128], index: 5, kind: input, shape index: {}]
  %s6 = inlined_call_operand.vmem [shape: f32[1,128], index: 6, kind: input, shape index: {}]
  %s7 = inlined_call_operand.vmem [shape: f32[1,128], index: 7, kind: input, shape index: {}]
  %s8 = inlined_call_operand.vmem [shape: f32[1,128], index: 8, kind: input, shape index: {}]
  %s9 = inlined_call_operand.hbm [shape: f32[128,256], index: 9, kind: input, shape index: {}]
  %s10 = inlined_call_operand.vmem [shape: f32[1,256], index: 10, kind: input, shape index: {}]
  %s11 = inlined_call_operand.hbm [shape: f32[256,128], index: 11, kind: input, shape index: {}]
  %s12 = inlined_call_operand.vmem [shape: f32[1,128], index: 12, kind: input, shape index: {}]
  %s13 = inlined_call_operand.vmem [shape: f32[2,24,128], index: 13, kind: output, shape index: {}]
  %s14 = sld [smem:[#allocation0]]
  $region97: #{image_encoder_forward.6} parent=0
    _
  %s16 = ssub.s32 1, %s14
  %s17 = scalar_select 0, %s16, %s14
  $region1: #{image_encoder_forward.6} parent=0
    #allocation2 [shape = 'u8[65536]{0}', space=vmem, size = 0x10000, scoped, tag = 'input window, operand 5, single buffered']
    #allocation3 [shape = 's32[2]{0}', space=sflag, size = 0x8, scoped, tag = 'scoped memory for image_encoder_forward.6']
    #allocation4 [shape = 'u8[131072]{0}', space=vmem, size = 0x20000, scoped, tag = 'input window, operand 9, single buffered']
    #allocation5 [shape = 's32[1]{0}', space=sflag, size = 0x4, scoped, tag = 'scoped memory for image_encoder_forward.6']
    #allocation6 [shape = 'u8[131072]{0}', space=vmem, size = 0x20000, scoped, tag = 'input window, operand 11, single buffered']
    %18 = vsyncpa [#allocation3], 0
    %19 = vsyncpa [#allocation5], 0
    loop: start=0, step=1, limit=4
    $region2: #{image_encoder_forward.6} parent=1 // loop_pre_header
      _
    $region3: #{image_encoder_forward.6} parent=1 // loop_header
      %s21 = sphi 0, %s25
      %p22 = scmp.ge.s32.totalorder %s21, 4
      %s31 = sphi 0, %s33
      %s34 = sphi 0, %s31
      %s35 = sphi 0, %s34
      %s51 = sphi 0, %s35
      %s55 = sphi 0, %s55
      %s57 = sphi 0, %s55
      %s58 = sphi 0, %s57
      %s72 = sphi 0, %s58
      %s76 = sphi 0, %s76
      %s78 = sphi 0, %s76
      %s79 = sphi 0, %s78
      %s93 = sphi 0, %s79
      %s97 = sphi 0, %s97
      %s99 = sphi 0, %s97
      %s100 = sphi 0, %s99
      %s114 = sphi 0, %s100
      %s118 = sphi 0, %s118
      %s120 = sphi 0, %s118
      %s121 = sphi 0, %s120
      %s135 = sphi 0, %s121
      %s139 = sphi 0, %s139
      %s141 = sphi 0, %s139
      %s142 = sphi 0, %s141
      %s156 = sphi 0, %s142
      %s160 = sphi 0, %s160
      %s162 = sphi 0, %s160
      %s163 = sphi 0, %s162
      %s177 = sphi 0, %s163
      %s181 = sphi 0, %s181
      %s183 = sphi 0, %s181
      %s184 = sphi 0, %s183
      %s198 = sphi 0, %s184
      %s202 = sphi 0, %s202
      %s204 = sphi 0, %s202
      %s205 = sphi 0, %s204
      %s219 = sphi 0, %s205
      %s223 = sphi 0, %s223
      %s225 = sphi 0, %s223
      %s226 = sphi 0, %s225
      %s240 = sphi 0, %s226
      %s244 = sphi 0, %s244
      %s246 = sphi 0, %s244
      %s247 = sphi 0, %s246
      %s261 = sphi 0, %s247
      %s265 = sphi 0, %s265
      %s267 = sphi 0, %s265
      %s268 = sphi 0, %s267
      %s282 = sphi 0, %s268
      %s286 = sphi 0, %s286
      %s288 = sphi 0, %s286
      %s289 = sphi 0, %s288
      %s303 = sphi 0, %s289
      %s309 = sphi 0, %s311
      %s312 = sphi 0, %s309
      %s313 = sphi 0, %s312
      %s329 = sphi 0, %s313
    $region4: #{image_encoder_forward.6} parent=1 // loop_header_branch
      %24 = sbr.rel (%p22) target = $region8
    $region5: #{image_encoder_forward.6} parent=1 // loop_body
      %s26 = ssub.s32 %s21, 1
      %s27 = ssub.s32 %s21, 2
      %s28 = sadd.s32 %s21, 1
      %s29 = ssub.s32 %s21, %s28
      %p30 = scmp.eq.s32.totalorder %s29, 0
      %s32 = sadd.s32 %s31, 1
      %s33 = scalar_select %p30, %s31, %s32
      %p36 = pneg %p30
      %p37 = scmp.eq.s32.totalorder %s21, 1
      %p38 = por %p36, %p37
      %p39 = scmp.ne.s32.totalorder %s31, %s34
      %p40 = scmp.eq.s32.totalorder %s21, 0
      %p41 = por %p39, %p40
      %p42 = scmp.ne.s32.totalorder %s31, %s34
      %p43 = scmp.eq.s32.totalorder %s26, 1
      %p44 = por %p42, %p43
      %p45 = scmp.ne.s32.totalorder %s34, %s35
      %p46 = scmp.eq.s32.totalorder %s26, 0
      %p47 = por %p45, %p46
      %p48 = scmp.ne.s32.totalorder %s34, %s35
      %p49 = scmp.eq.s32.totalorder %s27, 1
      %p50 = por %p48, %p49
      %p52 = scmp.ne.s32.totalorder %s35, %s51
      %p53 = scmp.eq.s32.totalorder %s27, 0
      %p54 = por %p52, %p53
      %s56 = sadd.s32 %s55, 1
      %p59 = scmp.eq.s32.totalorder %s21, 1
      %p60 = scmp.ne.s32.totalorder %s55, %s57
      %p61 = scmp.eq.s32.totalorder %s21, 0
      %p62 = por %p60, %p61
      %p63 = scmp.ne.s32.totalorder %s55, %s57
      %p64 = scmp.eq.s32.totalorder %s26, 1
      %p65 = por %p63, %p64
      %p66 = scmp.ne.s32.totalorder %s57, %s58
      %p67 = scmp.eq.s32.totalorder %s26, 0
      %p68 = por %p66, %p67
      %p69 = scmp.ne.s32.totalorder %s57, %s58
      %p70 = scmp.eq.s32.totalorder %s27, 1
      %p71 = por %p69, %p70
      %p73 = scmp.ne.s32.totalorder %s58, %s72
      %p74 = scmp.eq.s32.totalorder %s27, 0
      %p75 = por %p73, %p74
      %s77 = sadd.s32 %s76, 1
      %p80 = scmp.eq.s32.totalorder %s21, 1
      %p81 = scmp.ne.s32.totalorder %s76, %s78
      %p82 = scmp.eq.s32.totalorder %s21, 0
      %p83 = por %p81, %p82
      %p84 = scmp.ne.s32.totalorder %s76, %s78
      %p85 = scmp.eq.s32.totalorder %s26, 1
      %p86 = por %p84, %p85
      %p87 = scmp.ne.s32.totalorder %s78, %s79
      %p88 = scmp.eq.s32.totalorder %s26, 0
      %p89 = por %p87, %p88
      %p90 = scmp.ne.s32.totalorder %s78, %s79
      %p91 = scmp.eq.s32.totalorder %s27, 1
      %p92 = por %p90, %p91
      %p94 = scmp.ne.s32.totalorder %s79, %s93
      %p95 = scmp.eq.s32.totalorder %s27, 0
      %p96 = por %p94, %p95
      %s98 = sadd.s32 %s97, 1
      %p101 = scmp.eq.s32.totalorder %s21, 1
      %p102 = scmp.ne.s32.totalorder %s97, %s99
      %p103 = scmp.eq.s32.totalorder %s21, 0
      %p104 = por %p102, %p103
      %p105 = scmp.ne.s32.totalorder %s97, %s99
      %p106 = scmp.eq.s32.totalorder %s26, 1
      %p107 = por %p105, %p106
      %p108 = scmp.ne.s32.totalorder %s99, %s100
      %p109 = scmp.eq.s32.totalorder %s26, 0
      %p110 = por %p108, %p109
      %p111 = scmp.ne.s32.totalorder %s99, %s100
      %p112 = scmp.eq.s32.totalorder %s27, 1
      %p113 = por %p111, %p112
      %p115 = scmp.ne.s32.totalorder %s100, %s114
      %p116 = scmp.eq.s32.totalorder %s27, 0
      %p117 = por %p115, %p116
      %s119 = sadd.s32 %s118, 1
      %p122 = scmp.eq.s32.totalorder %s21, 1
      %p123 = scmp.ne.s32.totalorder %s118, %s120
      %p124 = scmp.eq.s32.totalorder %s21, 0
      %p125 = por %p123, %p124
      %p126 = scmp.ne.s32.totalorder %s118, %s120
      %p127 = scmp.eq.s32.totalorder %s26, 1
      %p128 = por %p126, %p127
      %p129 = scmp.ne.s32.totalorder %s120, %s121
      %p130 = scmp.eq.s32.totalorder %s26, 0
      %p131 = por %p129, %p130
      %p132 = scmp.ne.s32.totalorder %s120, %s121
      %p133 = scmp.eq.s32.totalorder %s27, 1
      %p134 = por %p132, %p133
      %p136 = scmp.ne.s32.totalorder %s121, %s135
      %p137 = scmp.eq.s32.totalorder %s27, 0
      %p138 = por %p136, %p137
      %s140 = sadd.s32 %s139, 1
      %p143 = scmp.eq.s32.totalorder %s21, 1
      %p144 = scmp.ne.s32.totalorder %s139, %s141
      %p145 = scmp.eq.s32.totalorder %s21, 0
      %p146 = por %p144, %p145
      %p147 = scmp.ne.s32.totalorder %s139, %s141
      %p148 = scmp.eq.s32.totalorder %s26, 1
      %p149 = por %p147, %p148
      %p150 = scmp.ne.s32.totalorder %s141, %s142
      %p151 = scmp.eq.s32.totalorder %s26, 0
      %p152 = por %p150, %p151
      %p153 = scmp.ne.s32.totalorder %s141, %s142
      %p154 = scmp.eq.s32.totalorder %s27, 1
      %p155 = por %p153, %p154
      %p157 = scmp.ne.s32.totalorder %s142, %s156
      %p158 = scmp.eq.s32.totalorder %s27, 0
      %p159 = por %p157, %p158
      %s161 = sadd.s32 %s160, 1
      %p164 = scmp.eq.s32.totalorder %s21, 1
      %p165 = scmp.ne.s32.totalorder %s160, %s162
      %p166 = scmp.eq.s32.totalorder %s21, 0
      %p167 = por %p165, %p166
      %p168 = scmp.ne.s32.totalorder %s160, %s162
      %p169 = scmp.eq.s32.totalorder %s26, 1
      %p170 = por %p168, %p169
      %p171 = scmp.ne.s32.totalorder %s162, %s163
      %p172 = scmp.eq.s32.totalorder %s26, 0
      %p173 = por %p171, %p172
      %p174 = scmp.ne.s32.totalorder %s162, %s163
      %p175 = scmp.eq.s32.totalorder %s27, 1
      %p176 = por %p174, %p175
      %p178 = scmp.ne.s32.totalorder %s163, %s177
      %p179 = scmp.eq.s32.totalorder %s27, 0
      %p180 = por %p178, %p179
      %s182 = sadd.s32 %s181, 1
      %p185 = scmp.eq.s32.totalorder %s21, 1
      %p186 = scmp.ne.s32.totalorder %s181, %s183
      %p187 = scmp.eq.s32.totalorder %s21, 0
      %p188 = por %p186, %p187
      %p189 = scmp.ne.s32.totalorder %s181, %s183
      %p190 = scmp.eq.s32.totalorder %s26, 1
      %p191 = por %p189, %p190
      %p192 = scmp.ne.s32.totalorder %s183, %s184
      %p193 = scmp.eq.s32.totalorder %s26, 0
      %p194 = por %p192, %p193
      %p195 = scmp.ne.s32.totalorder %s183, %s184
      %p196 = scmp.eq.s32.totalorder %s27, 1
      %p197 = por %p195, %p196
      %p199 = scmp.ne.s32.totalorder %s184, %s198
      %p200 = scmp.eq.s32.totalorder %s27, 0
      %p201 = por %p199, %p200
      %s203 = sadd.s32 %s202, 1
      %p206 = scmp.eq.s32.totalorder %s21, 1
      %p207 = scmp.ne.s32.totalorder %s202, %s204
      %p208 = scmp.eq.s32.totalorder %s21, 0
      %p209 = por %p207, %p208
      %p210 = scmp.ne.s32.totalorder %s202, %s204
      %p211 = scmp.eq.s32.totalorder %s26, 1
      %p212 = por %p210, %p211
      %p213 = scmp.ne.s32.totalorder %s204, %s205
      %p214 = scmp.eq.s32.totalorder %s26, 0
      %p215 = por %p213, %p214
      %p216 = scmp.ne.s32.totalorder %s204, %s205
      %p217 = scmp.eq.s32.totalorder %s27, 1
      %p218 = por %p216, %p217
      %p220 = scmp.ne.s32.totalorder %s205, %s219
      %p221 = scmp.eq.s32.totalorder %s27, 0
      %p222 = por %p220, %p221
      %s224 = sadd.s32 %s223, 1
      %p227 = scmp.eq.s32.totalorder %s21, 1
      %p228 = scmp.ne.s32.totalorder %s223, %s225
      %p229 = scmp.eq.s32.totalorder %s21, 0
      %p230 = por %p228, %p229
      %p231 = scmp.ne.s32.totalorder %s223, %s225
      %p232 = scmp.eq.s32.totalorder %s26, 1
      %p233 = por %p231, %p232
      %p234 = scmp.ne.s32.totalorder %s225, %s226
      %p235 = scmp.eq.s32.totalorder %s26, 0
      %p236 = por %p234, %p235
      %p237 = scmp.ne.s32.totalorder %s225, %s226
      %p238 = scmp.eq.s32.totalorder %s27, 1
      %p239 = por %p237, %p238
      %p241 = scmp.ne.s32.totalorder %s226, %s240
      %p242 = scmp.eq.s32.totalorder %s27, 0
      %p243 = por %p241, %p242
      %s245 = sadd.s32 %s244, 1
      %p248 = scmp.eq.s32.totalorder %s21, 1
      %p249 = scmp.ne.s32.totalorder %s244, %s246
      %p250 = scmp.eq.s32.totalorder %s21, 0
      %p251 = por %p249, %p250
      %p252 = scmp.ne.s32.totalorder %s244, %s246
      %p253 = scmp.eq.s32.totalorder %s26, 1
      %p254 = por %p252, %p253
      %p255 = scmp.ne.s32.totalorder %s246, %s247
      %p256 = scmp.eq.s32.totalorder %s26, 0
      %p257 = por %p255, %p256
      %p258 = scmp.ne.s32.totalorder %s246, %s247
      %p259 = scmp.eq.s32.totalorder %s27, 1
      %p260 = por %p258, %p259
      %p262 = scmp.ne.s32.totalorder %s247, %s261
      %p263 = scmp.eq.s32.totalorder %s27, 0
      %p264 = por %p262, %p263
      %s266 = sadd.s32 %s265, 1
      %p269 = scmp.eq.s32.totalorder %s21, 1
      %p270 = scmp.ne.s32.totalorder %s265, %s267
      %p271 = scmp.eq.s32.totalorder %s21, 0
      %p272 = por %p270, %p271
      %p273 = scmp.ne.s32.totalorder %s265, %s267
      %p274 = scmp.eq.s32.totalorder %s26, 1
      %p275 = por %p273, %p274
      %p276 = scmp.ne.s32.totalorder %s267, %s268
      %p277 = scmp.eq.s32.totalorder %s26, 0
      %p278 = por %p276, %p277
      %p279 = scmp.ne.s32.totalorder %s267, %s268
      %p280 = scmp.eq.s32.totalorder %s27, 1
      %p281 = por %p279, %p280
      %p283 = scmp.ne.s32.totalorder %s268, %s282
      %p284 = scmp.eq.s32.totalorder %s27, 0
      %p285 = por %p283, %p284
      %s287 = sadd.s32 %s286, 1
      %p290 = scmp.eq.s32.totalorder %s21, 1
      %p291 = scmp.ne.s32.totalorder %s286, %s288
      %p292 = scmp.eq.s32.totalorder %s21, 0
      %p293 = por %p291, %p292
      %p294 = scmp.ne.s32.totalorder %s286, %s288
      %p295 = scmp.eq.s32.totalorder %s26, 1
      %p296 = por %p294, %p295
      %p297 = scmp.ne.s32.totalorder %s288, %s289
      %p298 = scmp.eq.s32.totalorder %s26, 0
      %p299 = por %p297, %p298
      %p300 = scmp.ne.s32.totalorder %s288, %s289
      %p301 = scmp.eq.s32.totalorder %s27, 1
      %p302 = por %p300, %p301
      %p304 = scmp.ne.s32.totalorder %s289, %s303
      %p305 = scmp.eq.s32.totalorder %s27, 0
      %p306 = por %p304, %p305
      %s307 = ssub.s32 %s21, %s28
      %p308 = scmp.eq.s32.totalorder %s307, 0
      %s310 = sadd.s32 %s309, 1
      %s311 = scalar_select %p308, %s309, %s310
      %p314 = pneg %p308
      %p315 = scmp.eq.s32.totalorder %s21, 1
      %p316 = por %p314, %p315
      %p317 = scmp.ne.s32.totalorder %s309, %s312
      %p318 = scmp.eq.s32.totalorder %s21, 0
      %p319 = por %p317, %p318
      %p320 = scmp.ne.s32.totalorder %s309, %s312
      %p321 = scmp.eq.s32.totalorder %s26, 1
      %p322 = por %p320, %p321
      %p323 = scmp.ne.s32.totalorder %s312, %s313
      %p324 = scmp.eq.s32.totalorder %s26, 0
      %p325 = por %p323, %p324
      %p326 = scmp.ne.s32.totalorder %s312, %s313
      %p327 = scmp.eq.s32.totalorder %s27, 1
      %p328 = por %p326, %p327
      %p330 = scmp.ne.s32.totalorder %s313, %s329
      %p331 = scmp.eq.s32.totalorder %s27, 0
      %p332 = por %p330, %p331
      %p333 = scmp.le.s32.totalorder 1, %s21
      %p334 = scmp.lt.s32.totalorder %s21, 3
      %p335 = pnand %p333, %p334
      %p336 = pneg %p335
      // Predicated region
      $region9: #{image_encoder_forward.6} parent=5 // pred_check
        _
      $region10: #{image_encoder_forward.6} parent=5 // pred_check_branch
        %338 = sbr.rel (%p335) target = $region12
      $region11: #{image_encoder_forward.6} parent=5 // pred_region
        %s339 = ssub.s32 %s21, 1
        // Predicated region
        $region13: #{image_encoder_forward.6} parent=11 // pred_check
          %p340 = pneg %p68
        $region14: #{image_encoder_forward.6} parent=11 // pred_check_branch
          %342 = sbr.rel (%p340) target = $region16
        $region15: #{image_encoder_forward.6} parent=11 // pred_region
          _
        $region16: #{image_encoder_forward.6} parent=11 // pred_fallthru
          _
        // Predicated region
        $region17: #{image_encoder_forward.6} parent=11 // pred_check
          %p343 = pneg %p89
        $region18: #{image_encoder_forward.6} parent=11 // pred_check_branch
          %345 = sbr.rel (%p343) target = $region20
        $region19: #{image_encoder_forward.6} parent=11 // pred_region
          _
        $region20: #{image_encoder_forward.6} parent=11 // pred_fallthru
          _
        // Predicated region
        $region21: #{image_encoder_forward.6} parent=11 // pred_check
          %p346 = pneg %p110
        $region22: #{image_encoder_forward.6} parent=11 // pred_check_branch
          %348 = sbr.rel (%p346) target = $region24
        $region23: #{image_encoder_forward.6} parent=11 // pred_region
          _
        $region24: #{image_encoder_forward.6} parent=11 // pred_fallthru
          _
        // Predicated region
        $region25: #{image_encoder_forward.6} parent=11 // pred_check
          %p349 = pneg %p131
        $region26: #{image_encoder_forward.6} parent=11 // pred_check_branch
          %351 = sbr.rel (%p349) target = $region28
        $region27: #{image_encoder_forward.6} parent=11 // pred_region
          _
        $region28: #{image_encoder_forward.6} parent=11 // pred_fallthru
          _
        // Predicated region
        $region29: #{image_encoder_forward.6} parent=11 // pred_check
          %p352 = pneg %p152
        $region30: #{image_encoder_forward.6} parent=11 // pred_check_branch
          %354 = sbr.rel (%p352) target = $region32
        $region31: #{image_encoder_forward.6} parent=11 // pred_region
          %s356 = ssub.s32 2048, 2048
          %357 = vsyncadd [#allocation3], %s356
          %s358 = sshll.u32 [#allocation2], 4
          %s359 = int_to_ptr.vmem [resolvable:$true] %s358
          %364 = dma.hbm_to_vmem [thread:$0]  %s5, 2048, %s359, [#allocation3], 128, 128, 8
        $region32: #{image_encoder_forward.6} parent=11 // pred_fallthru
          _
        // Predicated region
        $region33: #{image_encoder_forward.6} parent=11 // pred_check
          %p365 = pneg %p173
        $region34: #{image_encoder_forward.6} parent=11 // pred_check_branch
          %367 = sbr.rel (%p365) target = $region36
        $region35: #{image_encoder_forward.6} parent=11 // pred_region
          _
        $region36: #{image_encoder_forward.6} parent=11 // pred_fallthru
          _
        // Predicated region
        $region37: #{image_encoder_forward.6} parent=11 // pred_check
          %p368 = pneg %p194
        $region38: #{image_encoder_forward.6} parent=11 // pred_check_branch
          %370 = sbr.rel (%p368) target = $region40
        $region39: #{image_encoder_forward.6} parent=11 // pred_region
          _
        $region40: #{image_encoder_forward.6} parent=11 // pred_fallthru
          _
        // Predicated region
        $region41: #{image_encoder_forward.6} parent=11 // pred_check
          %p371 = pneg %p215
        $region42: #{image_encoder_forward.6} parent=11 // pred_check_branch
          %373 = sbr.rel (%p371) target = $region44
        $region43: #{image_encoder_forward.6} parent=11 // pred_region
          _
        $region44: #{image_encoder_forward.6} parent=11 // pred_fallthru
          _
        // Predicated region
        $region45: #{image_encoder_forward.6} parent=11 // pred_check
          %p374 = pneg %p236
        $region46: #{image_encoder_forward.6} parent=11 // pred_check_branch
          %376 = sbr.rel (%p374) target = $region48
        $region47: #{image_encoder_forward.6} parent=11 // pred_region
          %s378 = ssub.s32 4096, 4096
          %379 = vsyncadd [#allocation5], %s378
          %s380 = sshll.u32 [#allocation4], 4
          %s381 = int_to_ptr.vmem [resolvable:$true] %s380
          %386 = dma.hbm_to_vmem [thread:$0]  %s9, 4096, %s381, [#allocation5], 256, 256, 16
        $region48: #{image_encoder_forward.6} parent=11 // pred_fallthru
          _
        // Predicated region
        $region49: #{image_encoder_forward.6} parent=11 // pred_check
          %p387 = pneg %p257
        $region50: #{image_encoder_forward.6} parent=11 // pred_check_branch
          %389 = sbr.rel (%p387) target = $region52
        $region51: #{image_encoder_forward.6} parent=11 // pred_region
          _
        $region52: #{image_encoder_forward.6} parent=11 // pred_fallthru
          _
        // Predicated region
        $region53: #{image_encoder_forward.6} parent=11 // pred_check
          %p390 = pneg %p278
        $region54: #{image_encoder_forward.6} parent=11 // pred_check_branch
          %392 = sbr.rel (%p390) target = $region56
        $region55: #{image_encoder_forward.6} parent=11 // pred_region
          %s394 = ssub.s32 4096, 4096
          %395 = vsyncadd [#allocation5], %s394
          %s396 = sshll.u32 [#allocation6], 4
          %s397 = int_to_ptr.vmem [resolvable:$true] %s396
          %402 = dma.hbm_to_vmem [thread:$0]  %s11, 4096, %s397, [#allocation5], 128, 128, 8
        $region56: #{image_encoder_forward.6} parent=11 // pred_fallthru
          _
        // Predicated region
        $region57: #{image_encoder_forward.6} parent=11 // pred_check
          %p403 = pneg %p299
        $region58: #{image_encoder_forward.6} parent=11 // pred_check_branch
          %405 = sbr.rel (%p403) target = $region60
        $region59: #{image_encoder_forward.6} parent=11 // pred_region
          _
        $region60: #{image_encoder_forward.6} parent=11 // pred_fallthru
          _
      $region12: #{image_encoder_forward.6} parent=5 // pred_fallthru
        _
      %p406 = scmp.lt.s32.totalorder %s21, 2
      // Predicated region
      $region61: #{image_encoder_forward.6} parent=5 // pred_check
        %p407 = pneg %p406
      $region62: #{image_encoder_forward.6} parent=5 // pred_check_branch
        %409 = sbr.rel (%p407) target = $region64
      $region63: #{image_encoder_forward.6} parent=5 // pred_region
        // Predicated region
        $region65: #{image_encoder_forward.6} parent=63 // pred_check
          %p410 = pneg %p41
        $region66: #{image_encoder_forward.6} parent=63 // pred_check_branch
          %412 = sbr.rel (%p410) target = $region68
        $region67: #{image_encoder_forward.6} parent=63 // pred_region
          %p413 = scmp.lt.s32.totalorder %s21, 1
          %s414 = scalar_select %p413, %s21, 1
          %s415 = smul.addr %s414, 3
          %s416 = smul.addr %s415, 8
          %s417 = scalar_lea.vmem %s0, %s416
        $region68: #{image_encoder_forward.6} parent=63 // pred_fallthru
          _
      $region64: #{image_encoder_forward.6} parent=5 // pred_fallthru
        _
      %p418 = scmp.le.s32.totalorder 1, %s21
      %p419 = scmp.lt.s32.totalorder %s21, 3
      %p420 = pnand %p418, %p419
      %p421 = pneg %p420
      // Predicated region
      $region69: #{image_encoder_forward.6} parent=5 // pred_check
        _
      $region70: #{image_encoder_forward.6} parent=5 // pred_check_branch
        %423 = sbr.rel (%p420) target = $region72
      $region71: #{image_encoder_forward.6} parent=5 // pred_region
        %s424 = ssub.s32 %s21, 1
        // Predicated region
        $region73: #{image_encoder_forward.6} parent=71 // pred_check
          %p425 = pneg %p152
        $region74: #{image_encoder_forward.6} parent=71 // pred_check_branch
          %427 = sbr.rel (%p425) target = $region76
        $region75: #{image_encoder_forward.6} parent=71 // pred_region
          %428 = dma.done [#allocation3], 2048
        $region76: #{image_encoder_forward.6} parent=71 // pred_fallthru
          _
        // Predicated region
        $region77: #{image_encoder_forward.6} parent=71 // pred_check
          %p429 = pneg %p236
        $region78: #{image_encoder_forward.6} parent=71 // pred_check_branch
          %431 = sbr.rel (%p429) target = $region80
        $region79: #{image_encoder_forward.6} parent=71 // pred_region
          %432 = dma.done [#allocation5], 4096
        $region80: #{image_encoder_forward.6} parent=71 // pred_fallthru
          _
        // Predicated region
        $region81: #{image_encoder_forward.6} parent=71 // pred_check
          %p433 = pneg %p278
        $region82: #{image_encoder_forward.6} parent=71 // pred_check_branch
          %435 = sbr.rel (%p433) target = $region84
        $region83: #{image_encoder_forward.6} parent=71 // pred_region
          %436 = dma.done [#allocation5], 4096
        $region84: #{image_encoder_forward.6} parent=71 // pred_fallthru
          _
        %p437 = scmp.lt.s32.totalorder %s26, 1
        %s438 = scalar_select %p437, %s26, 1
        %s439 = smul.addr %s438, 3
        %s440 = smul.addr %s439, 8
        %s441 = scalar_lea.vmem %s0, %s440
        %p442 = pneg %p47
        %p443 = pneg %p44
        %p444 = pneg %p68
        %p445 = pneg %p65
        %p446 = pneg %p89
        %p447 = pneg %p86
        %p448 = pneg %p110
        %p449 = pneg %p107
        %p450 = pneg %p131
        %p451 = pneg %p128
        %p452 = pneg %p152
        %p453 = pneg %p149
        %p454 = pneg %p173
        %p455 = pneg %p170
        %p456 = pneg %p194
        %p457 = pneg %p191
        %p458 = pneg %p215
        %p459 = pneg %p212
        %p460 = pneg %p236
        %p461 = pneg %p233
        %p462 = pneg %p257
        %p463 = pneg %p254
        %p464 = pneg %p278
        %p465 = pneg %p275
        %p466 = pneg %p299
        %p467 = pneg %p296
        %p468 = pneg %p325
        %p469 = pneg %p322
        %p470 = scmp.lt.s32.totalorder %s26, 1
        %s471 = scalar_select %p470, %s26, 1
        %s472 = smul.addr %s471, 3
        %s473 = smul.addr %s472, 8
        %s474 = scalar_lea.vmem %s13, %s473
        %p475 = scmp.lt.s32.totalorder %s26, 1
        %s476 = scalar_select %p475, %s26, 1
        %s477 = smul.addr %s476, 3
        %s478 = smul.addr %s477, 8
        %s479 = scalar_lea.vmem %s0, %s478
        %p480 = scmp.lt.s32.totalorder %s26, 1
        %s481 = scalar_select %p480, %s26, 1
        %s482 = smul.addr %s481, 3
        %s483 = smul.addr %s482, 8
        %s484 = scalar_lea.vmem %s13, %s483
        %v485 = vld [vmem:[%s479] sm:$0xff]
        %v486 = vld [vmem:[%s479 + $0x8] sm:$0xff]
        %v487 = vld [vmem:[%s479 + $0x10] sm:$0xff]
        %v488 = vld [vmem:[%s1] sm:$0x1]
        %v489 = vld [vmem:[%s2] sm:$0x1]
        %490 = vadd.xlane.f32.xlu0 %v485
        %v491 = vpop.xlane.xlu0 %490
        %492 = vadd.xlane.f32.xlu0 %v486
        %v493 = vpop.xlane.xlu0 %492
        %494 = vadd.xlane.f32.xlu0 %v487
        %v495 = vpop.xlane.xlu0 %494
        %v496 = vrcp.pop 128.0
        %v497 = vmul.f32 %v491, %v496
        %v498 = vmul.f32 %v493, %v496
        %v499 = vmul.f32 %v495, %v496
        %v500 = vsub.f32 %v485, %v497
        %v501 = vsub.f32 %v486, %v498
        %v502 = vsub.f32 %v487, %v499
        %v503 = vmul.f32 %v500, %v500
        %v504 = vmul.f32 %v501, %v501
        %v505 = vmul.f32 %v502, %v502
        %506 = vadd.xlane.f32.xlu0 %v503
        %v507 = vpop.xlane.xlu0 %506
        %508 = vadd.xlane.f32.xlu0 %v504
        %v509 = vpop.xlane.xlu0 %508
        %510 = vadd.xlane.f32.xlu0 %v505
        %v511 = vpop.xlane.xlu0 %510
        %v512 = vmul.f32 %v507, %v496
        %v513 = vmul.f32 %v509, %v496
        %v514 = vmul.f32 %v511, %v496
        %v515 = vadd.f32 %v512, 1e-05
        %v516 = vadd.f32 %v513, 1e-05
        %v517 = vadd.f32 %v514, 1e-05
        %v518 = vrsqrt.pop %v515
        %v519 = vrsqrt.pop %v516
        %v520 = vrsqrt.pop %v517
        %v521 = vmul.f32 %v500, %v518
        %v522 = vmul.f32 %v501, %v519
        %v523 = vmul.f32 %v502, %v520
        %v525 = vlaneseq
        %v526 = vshrl.u32 %v525, 7
        %v527 = vsub.s32 0, %v526
        %v528 = vrot.slane %v488, %v527
        %v530 = vmul.f32 %v521, %v528
        %v531 = vmul.f32 %v522, %v528
        %v532 = vmul.f32 %v523, %v528
        %v534 = vlaneseq
        %v535 = vshrl.u32 %v534, 7
        %v536 = vsub.s32 0, %v535
        %v537 = vrot.slane %v489, %v536
        %v539 = vadd.f32 %v530, %v537
        %v540 = vadd.f32 %v531, %v537
        %v541 = vadd.f32 %v532, %v537
        %v542 = vld [vmem:[%s3] sm:$0xff]
        %v543 = vld [vmem:[%s3 + $0x8] sm:$0xff]
        %v544 = vld [vmem:[%s3 + $0x10] sm:$0xff]
        %v545 = vld [vmem:[%s3 + $0x18] sm:$0xff]
        %v546 = vld [vmem:[%s3 + $0x20] sm:$0xff]
        %v547 = vld [vmem:[%s3 + $0x28] sm:$0xff]
        %v548 = vld [vmem:[%s3 + $0x30] sm:$0xff]
        %v549 = vld [vmem:[%s3 + $0x38] sm:$0xff]
        %v550 = vld [vmem:[%s3 + $0x40] sm:$0xff]
        %v551 = vld [vmem:[%s3 + $0x48] sm:$0xff]
        %v552 = vld [vmem:[%s3 + $0x50] sm:$0xff]
        %v553 = vld [vmem:[%s3 + $0x58] sm:$0xff]
        %v554 = vld [vmem:[%s3 + $0x60] sm:$0xff]
        %v555 = vld [vmem:[%s3 + $0x68] sm:$0xff]
        %v556 = vld [vmem:[%s3 + $0x70] sm:$0xff]
        %v557 = vld [vmem:[%s3 + $0x78] sm:$0xff]
        %v558 = vld [vmem:[%s3 + $0x80] sm:$0xff]
        %v559 = vld [vmem:[%s3 + $0x88] sm:$0xff]
        %v560 = vld [vmem:[%s3 + $0x90] sm:$0xff]
        %v561 = vld [vmem:[%s3 + $0x98] sm:$0xff]
        %v562 = vld [vmem:[%s3 + $0xa0] sm:$0xff]
        %v563 = vld [vmem:[%s3 + $0xa8] sm:$0xff]
        %v564 = vld [vmem:[%s3 + $0xb0] sm:$0xff]
        %v565 = vld [vmem:[%s3 + $0xb8] sm:$0xff]
        %v566 = vld [vmem:[%s3 + $0xc0] sm:$0xff]
        %v567 = vld [vmem:[%s3 + $0xc8] sm:$0xff]
        %v568 = vld [vmem:[%s3 + $0xd0] sm:$0xff]
        %v569 = vld [vmem:[%s3 + $0xd8] sm:$0xff]
        %v570 = vld [vmem:[%s3 + $0xe0] sm:$0xff]
        %v571 = vld [vmem:[%s3 + $0xe8] sm:$0xff]
        %v572 = vld [vmem:[%s3 + $0xf0] sm:$0xff]
        %v573 = vld [vmem:[%s3 + $0xf8] sm:$0xff]
        %v574 = vld [vmem:[%s3 + $0x100] sm:$0xff]
        %v575 = vld [vmem:[%s3 + $0x108] sm:$0xff]
        %v576 = vld [vmem:[%s3 + $0x110] sm:$0xff]
        %v577 = vld [vmem:[%s3 + $0x118] sm:$0xff]
        %v578 = vld [vmem:[%s3 + $0x120] sm:$0xff]
        %v579 = vld [vmem:[%s3 + $0x128] sm:$0xff]
        %v580 = vld [vmem:[%s3 + $0x130] sm:$0xff]
        %v581 = vld [vmem:[%s3 + $0x138] sm:$0xff]
        %v582 = vld [vmem:[%s3 + $0x140] sm:$0xff]
        %v583 = vld [vmem:[%s3 + $0x148] sm:$0xff]
        %v584 = vld [vmem:[%s3 + $0x150] sm:$0xff]
        %v585 = vld [vmem:[%s3 + $0x158] sm:$0xff]
        %v586 = vld [vmem:[%s3 + $0x160] sm:$0xff]
        %v587 = vld [vmem:[%s3 + $0x168] sm:$0xff]
        %v588 = vld [vmem:[%s3 + $0x170] sm:$0xff]
        %v589 = vld [vmem:[%s3 + $0x178] sm:$0xff]
        %v590 = vld [vmem:[%s4] sm:$0x7]
        %v592 = vlaneseq
        %v593 = vshrl.u32 %v592, 7
        %v594 = vsub.s32 0, %v593
        %v595 = vrot.slane %v590, %v594
        %v596 = vlaneseq
        %v597 = vshrl.u32 %v596, 7
        %v598 = vsub.s32 1, %v597
        %v599 = vrot.slane %v590, %v598
        %v600 = vlaneseq
        %v601 = vshrl.u32 %v600, 7
        %v602 = vsub.s32 2, %v601
        %v603 = vrot.slane %v590, %v602
        %607 = vmatprep.subr.mxu0 %v588
        %608 = vmatpush1.msra.mxu0 %v587
        %609 = vmatprep.subr.mxu0 %v585
        %610 = vmatpush1.msra.mxu0 %v584
        %611 = vmatprep.subr.mxu0 %v582
        %612 = vmatpush1.msra.mxu0 %v581
        %613 = vmatprep.subr.mxu0 %v579
        %614 = vmatpush1.msra.mxu0 %v578
        %615 = vmatprep.subr.mxu0 %v576
        %616 = vmatpush1.msra.mxu0 %v575
        %617 = vmatprep.subr.mxu0 %v573
        %618 = vmatpush1.msra.mxu0 %v572
        %619 = vmatprep.subr.mxu0 %v570
        %620 = vmatpush1.msra.mxu0 %v569
        %621 = vmatprep.subr.mxu0 %v567
        %622 = vmatpush1.msra.mxu0 %v566
        %623 = vmatprep.subr.mxu0 %v564
        %624 = vmatpush1.msra.mxu0 %v563
        %625 = vmatprep.subr.mxu0 %v561
        %626 = vmatpush1.msra.mxu0 %v560
        %627 = vmatprep.subr.mxu0 %v558
        %628 = vmatpush1.msra.mxu0 %v557
        %629 = vmatprep.subr.mxu0 %v555
        %630 = vmatpush1.msra.mxu0 %v554
        %631 = vmatprep.subr.mxu0 %v552
        %632 = vmatpush1.msra.mxu0 %v551
        %633 = vmatprep.subr.mxu0 %v549
        %634 = vmatpush1.msra.mxu0 %v548
        %635 = vmatprep.subr.mxu0 %v546
        %636 = vmatpush1.msra.mxu0 %v545
        %637 = vmatprep.subr.mxu0 %v543
        %638 = vmatpush1.msra.mxu0 %v542
        %639 = vmatprep.subr.mxu0 0.0
        %640 = vmatpush2.msra.mxu0 0.0
        %641 = vmatprep.subr.mxu0 0.0
        %642 = vmatpush2.msra.mxu0 0.0
        %643 = vmatprep.subr.mxu0 0.0
        %644 = vmatpush2.msra.mxu0 0.0
        %645 = vmatprep.subr.mxu0 0.0
        %646 = vmatpush2.msra.mxu0 0.0
        %647 = vmatprep.subr.mxu0 0.0
        %648 = vmatpush2.msra.mxu0 0.0
        %649 = vmatprep.subr.mxu0 0.0
        %650 = vmatpush2.msra.mxu0 0.0
        %651 = vmatprep.subr.mxu0 0.0
        %652 = vmatpush2.msra.mxu0 0.0
        %653 = vmatprep.subr.mxu0 0.0
        %654 = vmatpush2.msra.mxu0 0.0
        %655 = vmatprep.subr.mxu0 0.0
        %656 = vmatpush2.msra.mxu0 0.0
        %657 = vmatprep.subr.mxu0 0.0
        %658 = vmatpush2.msra.mxu0 0.0
        %659 = vmatprep.subr.mxu0 0.0
        %660 = vmatpush2.msra.mxu0 0.0
        %661 = vmatprep.subr.mxu0 0.0
        %662 = vmatpush2.msra.mxu0 0.0
        %663 = vmatprep.subr.mxu0 0.0
        %664 = vmatpush2.msra.mxu0 0.0
        %665 = vmatprep.subr.mxu0 0.0
        %666 = vmatpush2.msra.mxu0 0.0
        %667 = vmatprep.subr.mxu0 0.0
        %668 = vmatpush2.msra.mxu0 0.0
        %669 = vmatprep.subr.mxu0 0.0
        %670 = vmatpush2.msra.mxu0 0.0
        %671 = vmatprep.mubr.f32.mxu0 0.0
        %672 = vmatmul.mubr.f32.gmra.mxu0 %v539
        %v673 = vpop.f32.mrf.mxu0
        %v674 = vadd.f32 %v595, %v673
        %v675 = vpop.f32.mrf.mxu0
        %v676 = vadd.f32 %v599, %v675
        %677 = vmatprep.mubr.f32.mxu0 0.0
        %678 = vmatmul.mubr.f32.gmra.mxu0 %v540
        %v679 = vpop.f32.mrf.mxu0
        %v680 = vadd.f32 %v595, %v679
        %v681 = vpop.f32.mrf.mxu0
        %v682 = vadd.f32 %v599, %v681
        %683 = vmatprep.mubr.f32.mxu0 0.0
        %684 = vmatmul.mubr.f32.gmra.mxu0 %v541
        %v685 = vpop.f32.mrf.mxu0
        %v686 = vadd.f32 %v595, %v685
        %v687 = vpop.f32.mrf.mxu0
        %v688 = vadd.f32 %v599, %v687
        %689 = vdwg.mxu0
        %690 = vmatprep.subr.mxu0 0.0
        %691 = vmatpush1.msra.mxu0 %v589
        %692 = vmatprep.subr.mxu0 0.0
        %693 = vmatpush1.msra.mxu0 %v586
        %694 = vmatprep.subr.mxu0 0.0
        %695 = vmatpush1.msra.mxu0 %v583
        %696 = vmatprep.subr.mxu0 0.0
        %697 = vmatpush1.msra.mxu0 %v580
        %698 = vmatprep.subr.mxu0 0.0
        %699 = vmatpush1.msra.mxu0 %v577
        %700 = vmatprep.subr.mxu0 0.0
        %701 = vmatpush1.msra.mxu0 %v574
        %702 = vmatprep.subr.mxu0 0.0
        %703 = vmatpush1.msra.mxu0 %v571
        %704 = vmatprep.subr.mxu0 0.0
        %705 = vmatpush1.msra.mxu0 %v568
        %706 = vmatprep.subr.mxu0 0.0
        %707 = vmatpush1.msra.mxu0 %v565
        %708 = vmatprep.subr.mxu0 0.0
        %709 = vmatpush1.msra.mxu0 %v562
        %710 = vmatprep.subr.mxu0 0.0
        %711 = vmatpush1.msra.mxu0 %v559
        %712 = vmatprep.subr.mxu0 0.0
        %713 = vmatpush1.msra.mxu0 %v556
        %714 = vmatprep.subr.mxu0 0.0
        %715 = vmatpush1.msra.mxu0 %v553
        %716 = vmatprep.subr.mxu0 0.0
        %717 = vmatpush1.msra.mxu0 %v550
        %718 = vmatprep.subr.mxu0 0.0
        %719 = vmatpush1.msra.mxu0 %v547
        %720 = vmatprep.subr.mxu0 0.0
        %721 = vmatpush1.msra.mxu0 %v544
        %722 = vmatprep.subr.mxu0 0.0
        %723 = vmatpush2.msra.mxu0 0.0
        %724 = vmatprep.subr.mxu0 0.0
        %725 = vmatpush2.msra.mxu0 0.0
        %726 = vmatprep.subr.mxu0 0.0
        %727 = vmatpush2.msra.mxu0 0.0
        %728 = vmatprep.subr.mxu0 0.0
        %729 = vmatpush2.msra.mxu0 0.0
        %730 = vmatprep.subr.mxu0 0.0
        %731 = vmatpush2.msra.mxu0 0.0
        %732 = vmatprep.subr.mxu0 0.0
        %733 = vmatpush2.msra.mxu0 0.0
        %734 = vmatprep.subr.mxu0 0.0
        %735 = vmatpush2.msra.mxu0 0.0
        %736 = vmatprep.subr.mxu0 0.0
        %737 = vmatpush2.msra.mxu0 0.0
        %738 = vmatprep.subr.mxu0 0.0
        %739 = vmatpush2.msra.mxu0 0.0
        %740 = vmatprep.subr.mxu0 0.0
        %741 = vmatpush2.msra.mxu0 0.0
        %742 = vmatprep.subr.mxu0 0.0
        %743 = vmatpush2.msra.mxu0 0.0
        %744 = vmatprep.subr.mxu0 0.0
        %745 = vmatpush2.msra.mxu0 0.0
        %746 = vmatprep.subr.mxu0 0.0
        %747 = vmatpush2.msra.mxu0 0.0
        %748 = vmatprep.subr.mxu0 0.0
        %749 = vmatpush2.msra.mxu0 0.0
        %750 = vmatprep.subr.mxu0 0.0
        %751 = vmatpush2.msra.mxu0 0.0
        %752 = vmatprep.subr.mxu0 0.0
        %753 = vmatpush2.msra.mxu0 0.0
        %754 = vmatprep.mubr.f32.mxu0 0.0
        %755 = vmatmul.mubr.f32.gmra.mxu0 %v539
        %v756 = vpop.f32.mrf.mxu0
        %v757 = vadd.f32 %v603, %v756
        %v758 = vpop.f32.mrf.mxu0
        %759 = vmatprep.mubr.f32.mxu0 0.0
        %760 = vmatmul.mubr.f32.gmra.mxu0 %v540
        %v761 = vpop.f32.mrf.mxu0
        %v762 = vadd.f32 %v603, %v761
        %v763 = vpop.f32.mrf.mxu0
        %764 = vmatprep.mubr.f32.mxu0 0.0
        %765 = vmatmul.mubr.f32.gmra.mxu0 %v541
        %v766 = vpop.f32.mrf.mxu0
        %v767 = vadd.f32 %v603, %v766
        %v768 = vpop.f32.mrf.mxu0
        %769 = vdwg.mxu0
        %v770 = vlaneseq
        %v771 = vand.u32 %v770, 127
        %vm772 = vcmp.lt.s32.totalorder %v771, 17
        %v773 = vsel %vm772, 0.0, -1e+30
        %vm774 = vcmask 261120
        %v776 = vsel %vm774, %v674, 0
        %v779 = vsel %vm774, %v680, 0
        %v782 = vsel %vm774, %v686, 0
        %v785 = vsel %vm774, %v676, 0
        %v788 = vsel %vm774, %v682, 0
        %v791 = vsel %vm774, %v688, 0
        %793 = vmatprep.subr.mxu0 0.0
        %794 = vmatpush1.xpose.msra.mxu0 0.0
        %795 = vmatprep.subr.mxu0 0.0
        %796 = vmatpush1.xpose.msra.mxu0 0.0
        %797 = vmatprep.subr.mxu0 0.0
        %798 = vmatpush1.xpose.msra.mxu0 0.0
        %799 = vmatprep.subr.mxu0 0.0
        %800 = vmatpush1.xpose.msra.mxu0 0.0
        %801 = vmatprep.subr.mxu0 0.0
        %802 = vmatpush1.xpose.msra.mxu0 0.0
        %803 = vmatprep.subr.mxu0 0.0
        %804 = vmatpush1.xpose.msra.mxu0 0.0
        %805 = vmatprep.subr.mxu0 0.0
        %806 = vmatpush1.xpose.msra.mxu0 0.0
        %807 = vmatprep.subr.mxu0 0.0
        %808 = vmatpush1.xpose.msra.mxu0 0.0
        %809 = vmatprep.subr.mxu0 0.0
        %810 = vmatpush1.xpose.msra.mxu0 0.0
        %811 = vmatprep.subr.mxu0 0.0
        %812 = vmatpush1.xpose.msra.mxu0 0.0
        %813 = vmatprep.subr.mxu0 0.0
        %814 = vmatpush1.xpose.msra.mxu0 0.0
        %815 = vmatprep.subr.mxu0 0.0
        %816 = vmatpush1.xpose.msra.mxu0 0.0
        %817 = vmatprep.subr.mxu0 0.0
        %818 = vmatpush1.xpose.msra.mxu0 0.0
        %819 = vmatprep.subr.mxu0 0.0
        %820 = vmatpush1.xpose.msra.mxu0 %v791
        %821 = vmatprep.subr.mxu0 0.0
        %822 = vmatpush1.xpose.msra.mxu0 %v788
        %823 = vmatprep.subr.mxu0 0.0
        %824 = vmatpush1.xpose.msra.mxu0 %v785
        %825 = vmatprep.subr.mxu0 0.0
        %826 = vmatpush2.xpose.msra.mxu0 0.0
        %827 = vmatprep.subr.mxu0 0.0
        %828 = vmatpush2.xpose.msra.mxu0 0.0
        %829 = vmatprep.subr.mxu0 0.0
        %830 = vmatpush2.xpose.msra.mxu0 0.0
        %831 = vmatprep.subr.mxu0 0.0
        %832 = vmatpush2.xpose.msra.mxu0 0.0
        %833 = vmatprep.subr.mxu0 0.0
        %834 = vmatpush2.xpose.msra.mxu0 0.0
        %835 = vmatprep.subr.mxu0 0.0
        %836 = vmatpush2.xpose.msra.mxu0 0.0
        %837 = vmatprep.subr.mxu0 0.0
        %838 = vmatpush2.xpose.msra.mxu0 0.0
        %839 = vmatprep.subr.mxu0 0.0
        %840 = vmatpush2.xpose.msra.mxu0 0.0
        %841 = vmatprep.subr.mxu0 0.0
        %842 = vmatpush2.xpose.msra.mxu0 0.0
        %843 = vmatprep.subr.mxu0 0.0
        %844 = vmatpush2.xpose.msra.mxu0 0.0
        %845 = vmatprep.subr.mxu0 0.0
        %846 = vmatpush2.xpose.msra.mxu0 0.0
        %847 = vmatprep.subr.mxu0 0.0
        %848 = vmatpush2.xpose.msra.mxu0 0.0
        %849 = vmatprep.subr.mxu0 0.0
        %850 = vmatpush2.xpose.msra.mxu0 0.0
        %851 = vmatprep.subr.mxu0 0.0
        %852 = vmatpush2.xpose.msra.mxu0 0.0
        %853 = vmatprep.subr.mxu0 0.0
        %854 = vmatpush2.xpose.msra.mxu0 0.0
        %855 = vmatprep.subr.mxu0 0.0
        %856 = vmatpush2.xpose.msra.mxu0 0.0
        %857 = vmatprep.mubr.f32.mxu0 0.0
        %858 = vmatmul.mubr.f32.gmra.mxu0 %v776
        %v859 = vpop.f32.mrf.mxu0
        %v860 = vadd.f32 %v773, %v859
        %v861 = vpop.f32.mrf.mxu0
        %862 = vmatprep.mubr.f32.mxu0 0.0
        %863 = vmatmul.mubr.f32.gmra.mxu0 %v779
        %v864 = vpop.f32.mrf.mxu0
        %v865 = vadd.f32 %v773, %v864
        %v866 = vpop.f32.mrf.mxu0
        %867 = vmatprep.mubr.f32.mxu0 0.0
        %868 = vmatmul.mubr.f32.gmra.mxu0 %v782
        %v869 = vpop.f32.mrf.mxu0
        %v870 = vadd.f32 %v773, %v869
        %v871 = vpop.f32.mrf.mxu0
        %872 = vdwg.mxu0
        %vm873 = vcmask 195584
        %v874 = vsel %vm873, %v860, -inf
        %875 = vmax.xlane.f32.xlu0 %v874
        %v876 = vpop.xlane.xlu0 %875
        %v877 = vsel %vm873, %v865, -inf
        %878 = vmax.xlane.f32.xlu0 %v877
        %v879 = vpop.xlane.xlu0 %878
        %v880 = vsel %vm873, %v870, -inf
        %881 = vmax.xlane.f32.xlu0 %v880
        %v882 = vpop.xlane.xlu0 %881
        %v883 = vsub.f32 %v860, %v876
        %v884 = vsub.f32 %v865, %v879
        %v885 = vsub.f32 %v870, %v882
        %v886 = vmul.f32 %v883, 1.442695
        %v887 = vpow.pop %v886
        %v888 = vmul.f32 %v884, 1.442695
        %v889 = vpow.pop %v888
        %v890 = vmul.f32 %v885, 1.442695
        %v891 = vpow.pop %v890
        %v892 = vsel %vm873, %v887, 0.0
        %893 = vadd.xlane.f32.xlu0 %v892
        %v894 = vpop.xlane.xlu0 %893
        %v895 = vsel %vm873, %v889, 0.0
        %896 = vadd.xlane.f32.xlu0 %v895
        %v897 = vpop.xlane.xlu0 %896
        %v898 = vsel %vm873, %v891, 0.0
        %899 = vadd.xlane.f32.xlu0 %v898
        %v900 = vpop.xlane.xlu0 %899
        %v901 = vrcp.pop %v894
        %v902 = vrcp.pop %v897
        %v903 = vrcp.pop %v900
        %v904 = vmul.f32 %v887, %v901
        %v905 = vmul.f32 %v889, %v902
        %v906 = vmul.f32 %v891, %v903
        %v908 = vsel %vm873, %v904, 0
        %v911 = vsel %vm873, %v905, 0
        %v914 = vsel %vm873, %v906, 0
        %916 = vmatprep.subr.mxu0 0.0
        %917 = vmatpush1.msra.mxu0 0.0
        %918 = vmatprep.subr.mxu0 0.0
        %919 = vmatpush1.msra.mxu0 0.0
        %920 = vmatprep.subr.mxu0 0.0
        %921 = vmatpush1.msra.mxu0 0.0
        %922 = vmatprep.subr.mxu0 0.0
        %923 = vmatpush1.msra.mxu0 0.0
        %924 = vmatprep.subr.mxu0 0.0
        %925 = vmatpush1.msra.mxu0 0.0
        %926 = vmatprep.subr.mxu0 0.0
        %927 = vmatpush1.msra.mxu0 0.0
        %928 = vmatprep.subr.mxu0 0.0
        %929 = vmatpush1.msra.mxu0 0.0
        %930 = vmatprep.subr.mxu0 0.0
        %931 = vmatpush1.msra.mxu0 0.0
        %932 = vmatprep.subr.mxu0 0.0
        %933 = vmatpush1.msra.mxu0 0.0
        %934 = vmatprep.subr.mxu0 0.0
        %935 = vmatpush1.msra.mxu0 0.0
        %936 = vmatprep.subr.mxu0 0.0
        %937 = vmatpush1.msra.mxu0 0.0
        %938 = vmatprep.subr.mxu0 0.0
        %939 = vmatpush1.msra.mxu0 0.0
        %940 = vmatprep.subr.mxu0 0.0
        %941 = vmatpush1.msra.mxu0 0.0
        %942 = vmatprep.subr.mxu0 0.0
        %943 = vmatpush1.msra.mxu0 %v767
        %944 = vmatprep.subr.mxu0 0.0
        %945 = vmatpush1.msra.mxu0 %v762
        %946 = vmatprep.subr.mxu0 0.0
        %947 = vmatpush1.msra.mxu0 %v757
        %948 = vmatprep.subr.mxu0 0.0
        %949 = vmatpush2.msra.mxu0 0.0
        %950 = vmatprep.subr.mxu0 0.0
        %951 = vmatpush2.msra.mxu0 0.0
        %952 = vmatprep.subr.mxu0 0.0
        %953 = vmatpush2.msra.mxu0 0.0
        %954 = vmatprep.subr.mxu0 0.0
        %955 = vmatpush2.msra.mxu0 0.0
        %956 = vmatprep.subr.mxu0 0.0
        %957 = vmatpush2.msra.mxu0 0.0
        %958 = vmatprep.subr.mxu0 0.0
        %959 = vmatpush2.msra.mxu0 0.0
        %960 = vmatprep.subr.mxu0 0.0
        %961 = vmatpush2.msra.mxu0 0.0
        %962 = vmatprep.subr.mxu0 0.0
        %963 = vmatpush2.msra.mxu0 0.0
        %964 = vmatprep.subr.mxu0 0.0
        %965 = vmatpush2.msra.mxu0 0.0
        %966 = vmatprep.subr.mxu0 0.0
        %967 = vmatpush2.msra.mxu0 0.0
        %968 = vmatprep.subr.mxu0 0.0
        %969 = vmatpush2.msra.mxu0 0.0
        %970 = vmatprep.subr.mxu0 0.0
        %971 = vmatpush2.msra.mxu0 0.0
        %972 = vmatprep.subr.mxu0 0.0
        %973 = vmatpush2.msra.mxu0 0.0
        %974 = vmatprep.subr.mxu0 0.0
        %975 = vmatpush2.msra.mxu0 0.0
        %976 = vmatprep.subr.mxu0 0.0
        %977 = vmatpush2.msra.mxu0 0.0
        %978 = vmatprep.subr.mxu0 0.0
        %979 = vmatpush2.msra.mxu0 0.0
        %980 = vmatprep.mubr.f32.mxu0 0.0
        %981 = vmatmul.mubr.f32.gmra.mxu0 %v908
        %v982 = vpop.f32.mrf.mxu0
        %v983 = vadd.f32 0.0, %v982
        %v984 = vpop.f32.mrf.mxu0
        %985 = vmatprep.mubr.f32.mxu0 0.0
        %986 = vmatmul.mubr.f32.gmra.mxu0 %v911
        %v987 = vpop.f32.mrf.mxu0
        %v988 = vadd.f32 0.0, %v987
        %v989 = vpop.f32.mrf.mxu0
        %990 = vmatprep.mubr.f32.mxu0 0.0
        %991 = vmatmul.mubr.f32.gmra.mxu0 %v914
        %v992 = vpop.f32.mrf.mxu0
        %v993 = vadd.f32 0.0, %v992
        %v994 = vpop.f32.mrf.mxu0
        %995 = vdwg.mxu0
        %996 = vrot.lane.b32.xlu0 %v674, 96
        %v997 = vpop.permute.xlu0 %996
        %998 = vrot.lane.b32.xlu0 %v680, 96
        %v999 = vpop.permute.xlu0 %998
        %1000 = vrot.lane.b32.xlu0 %v686, 96
        %v1001 = vpop.permute.xlu0 %1000
        %1002 = vrot.lane.b32.xlu0 %v676, 96
        %v1003 = vpop.permute.xlu0 %1002
        %1004 = vrot.lane.b32.xlu0 %v682, 96
        %v1005 = vpop.permute.xlu0 %1004
        %1006 = vrot.lane.b32.xlu0 %v688, 96
        %v1007 = vpop.permute.xlu0 %1006
        %v1008 = vsel %vm774, %v997, 0
        %v1010 = vsel %vm774, %v999, 0
        %v1012 = vsel %vm774, %v1001, 0
        %v1014 = vsel %vm774, %v1003, 0
        %v1016 = vsel %vm774, %v1005, 0
        %v1018 = vsel %vm774, %v1007, 0
        %1020 = vmatprep.subr.mxu0 0.0
        %1021 = vmatpush1.xpose.msra.mxu0 0.0
        %1022 = vmatprep.subr.mxu0 0.0
        %1023 = vmatpush1.xpose.msra.mxu0 0.0
        %1024 = vmatprep.subr.mxu0 0.0
        %1025 = vmatpush1.xpose.msra.mxu0 0.0
        %1026 = vmatprep.subr.mxu0 0.0
        %1027 = vmatpush1.xpose.msra.mxu0 0.0
        %1028 = vmatprep.subr.mxu0 0.0
        %1029 = vmatpush1.xpose.msra.mxu0 0.0
        %1030 = vmatprep.subr.mxu0 0.0
        %1031 = vmatpush1.xpose.msra.mxu0 0.0
        %1032 = vmatprep.subr.mxu0 0.0
        %1033 = vmatpush1.xpose.msra.mxu0 0.0
        %1034 = vmatprep.subr.mxu0 0.0
        %1035 = vmatpush1.xpose.msra.mxu0 0.0
        %1036 = vmatprep.subr.mxu0 0.0
        %1037 = vmatpush1.xpose.msra.mxu0 0.0
        %1038 = vmatprep.subr.mxu0 0.0
        %1039 = vmatpush1.xpose.msra.mxu0 0.0
        %1040 = vmatprep.subr.mxu0 0.0
        %1041 = vmatpush1.xpose.msra.mxu0 0.0
        %1042 = vmatprep.subr.mxu0 0.0
        %1043 = vmatpush1.xpose.msra.mxu0 0.0
        %1044 = vmatprep.subr.mxu0 0.0
        %1045 = vmatpush1.xpose.msra.mxu0 0.0
        %1046 = vmatprep.subr.mxu0 0.0
        %1047 = vmatpush1.xpose.msra.mxu0 %v1018
        %1048 = vmatprep.subr.mxu0 0.0
        %1049 = vmatpush1.xpose.msra.mxu0 %v1016
        %1050 = vmatprep.subr.mxu0 0.0
        %1051 = vmatpush1.xpose.msra.mxu0 %v1014
        %1052 = vmatprep.subr.mxu0 0.0
        %1053 = vmatpush2.xpose.msra.mxu0 0.0
        %1054 = vmatprep.subr.mxu0 0.0
        %1055 = vmatpush2.xpose.msra.mxu0 0.0
        %1056 = vmatprep.subr.mxu0 0.0
        %1057 = vmatpush2.xpose.msra.mxu0 0.0
        %1058 = vmatprep.subr.mxu0 0.0
        %1059 = vmatpush2.xpose.msra.mxu0 0.0
        %1060 = vmatprep.subr.mxu0 0.0
        %1061 = vmatpush2.xpose.msra.mxu0 0.0
        %1062 = vmatprep.subr.mxu0 0.0
        %1063 = vmatpush2.xpose.msra.mxu0 0.0
        %1064 = vmatprep.subr.mxu0 0.0
        %1065 = vmatpush2.xpose.msra.mxu0 0.0
        %1066 = vmatprep.subr.mxu0 0.0
        %1067 = vmatpush2.xpose.msra.mxu0 0.0
        %1068 = vmatprep.subr.mxu0 0.0
        %1069 = vmatpush2.xpose.msra.mxu0 0.0
        %1070 = vmatprep.subr.mxu0 0.0
        %1071 = vmatpush2.xpose.msra.mxu0 0.0
        %1072 = vmatprep.subr.mxu0 0.0
        %1073 = vmatpush2.xpose.msra.mxu0 0.0
        %1074 = vmatprep.subr.mxu0 0.0
        %1075 = vmatpush2.xpose.msra.mxu0 0.0
        %1076 = vmatprep.subr.mxu0 0.0
        %1077 = vmatpush2.xpose.msra.mxu0 0.0
        %1078 = vmatprep.subr.mxu0 0.0
        %1079 = vmatpush2.xpose.msra.mxu0 0.0
        %1080 = vmatprep.subr.mxu0 0.0
        %1081 = vmatpush2.xpose.msra.mxu0 0.0
        %1082 = vmatprep.subr.mxu0 0.0
        %1083 = vmatpush2.xpose.msra.mxu0 0.0
        %1084 = vmatprep.mubr.f32.mxu0 0.0
        %1085 = vmatmul.mubr.f32.gmra.mxu0 %v1008
        %v1086 = vpop.f32.mrf.mxu0
        %v1087 = vadd.f32 %v773, %v1086
        %v1088 = vpop.f32.mrf.mxu0
        %1089 = vmatprep.mubr.f32.mxu0 0.0
        %1090 = vmatmul.mubr.f32.gmra.mxu0 %v1010
        %v1091 = vpop.f32.mrf.mxu0
        %v1092 = vadd.f32 %v773, %v1091
        %v1093 = vpop.f32.mrf.mxu0
        %1094 = vmatprep.mubr.f32.mxu0 0.0
        %1095 = vmatmul.mubr.f32.gmra.mxu0 %v1012
        %v1096 = vpop.f32.mrf.mxu0
        %v1097 = vadd.f32 %v773, %v1096
        %v1098 = vpop.f32.mrf.mxu0
        %1099 = vdwg.mxu0
        %v1100 = vsel %vm873, %v1087, -inf
        %1101 = vmax.xlane.f32.xlu0 %v1100
        %v1102 = vpop.xlane.xlu0 %1101
        %v1103 = vsel %vm873, %v1092, -inf
        %1104 = vmax.xlane.f32.xlu0 %v1103
        %v1105 = vpop.xlane.xlu0 %1104
        %v1106 = vsel %vm873, %v1097, -inf
        %1107 = vmax.xlane.f32.xlu0 %v1106
        %v1108 = vpop.xlane.xlu0 %1107
        %v1109 = vsub.f32 %v1087, %v1102
        %v1110 = vsub.f32 %v1092, %v1105
        %v1111 = vsub.f32 %v1097, %v1108
        %v1112 = vmul.f32 %v1109, 1.442695
        %v1113 = vpow.pop %v1112
        %v1114 = vmul.f32 %v1110, 1.442695
        %v1115 = vpow.pop %v1114
        %v1116 = vmul.f32 %v1111, 1.442695
        %v1117 = vpow.pop %v1116
        %v1118 = vsel %vm873, %v1113, 0.0
        %1119 = vadd.xlane.f32.xlu0 %v1118
        %v1120 = vpop.xlane.xlu0 %1119
        %v1121 = vsel %vm873, %v1115, 0.0
        %1122 = vadd.xlane.f32.xlu0 %v1121
        %v1123 = vpop.xlane.xlu0 %1122
        %v1124 = vsel %vm873, %v1117, 0.0
        %1125 = vadd.xlane.f32.xlu0 %v1124
        %v1126 = vpop.xlane.xlu0 %1125
        %v1127 = vrcp.pop %v1120
        %v1128 = vrcp.pop %v1123
        %v1129 = vrcp.pop %v1126
        %v1130 = vmul.f32 %v1113, %v1127
        %v1131 = vmul.f32 %v1115, %v1128
        %v1132 = vmul.f32 %v1117, %v1129
        %1136 = vrot.lane.b32.xlu0 %v757, 96
        %v1137 = vpop.permute.xlu0 %1136
        %1138 = vrot.lane.b32.xlu0 %v762, 96
        %v1139 = vpop.permute.xlu0 %1138
        %1140 = vrot.lane.b32.xlu0 %v767, 96
        %v1141 = vpop.permute.xlu0 %1140
        %v1146 = vsel %vm873, %v1130, 0
        %v1149 = vsel %vm873, %v1131, 0
        %v1152 = vsel %vm873, %v1132, 0
        %1154 = vmatprep.subr.mxu0 0.0
        %1155 = vmatpush1.msra.mxu0 0.0
        %1156 = vmatprep.subr.mxu0 0.0
        %1157 = vmatpush1.msra.mxu0 0.0
        %1158 = vmatprep.subr.mxu0 0.0
        %1159 = vmatpush1.msra.mxu0 0.0
        %1160 = vmatprep.subr.mxu0 0.0
        %1161 = vmatpush1.msra.mxu0 0.0
        %1162 = vmatprep.subr.mxu0 0.0
        %1163 = vmatpush1.msra.mxu0 0.0
        %1164 = vmatprep.subr.mxu0 0.0
        %1165 = vmatpush1.msra.mxu0 0.0
        %1166 = vmatprep.subr.mxu0 0.0
        %1167 = vmatpush1.msra.mxu0 0.0
        %1168 = vmatprep.subr.mxu0 0.0
        %1169 = vmatpush1.msra.mxu0 0.0
        %1170 = vmatprep.subr.mxu0 0.0
        %1171 = vmatpush1.msra.mxu0 0.0
        %1172 = vmatprep.subr.mxu0 0.0
        %1173 = vmatpush1.msra.mxu0 0.0
        %1174 = vmatprep.subr.mxu0 0.0
        %1175 = vmatpush1.msra.mxu0 0.0
        %1176 = vmatprep.subr.mxu0 0.0
        %1177 = vmatpush1.msra.mxu0 0.0
        %1178 = vmatprep.subr.mxu0 0.0
        %1179 = vmatpush1.msra.mxu0 0.0
        %1180 = vmatprep.subr.mxu0 0.0
        %1181 = vmatpush1.msra.mxu0 %v1141
        %1182 = vmatprep.subr.mxu0 0.0
        %1183 = vmatpush1.msra.mxu0 %v1139
        %1184 = vmatprep.subr.mxu0 0.0
        %1185 = vmatpush1.msra.mxu0 %v1137
        %1186 = vmatprep.subr.mxu0 0.0
        %1187 = vmatpush2.msra.mxu0 0.0
        %1188 = vmatprep.subr.mxu0 0.0
        %1189 = vmatpush2.msra.mxu0 0.0
        %1190 = vmatprep.subr.mxu0 0.0
        %1191 = vmatpush2.msra.mxu0 0.0
        %1192 = vmatprep.subr.mxu0 0.0
        %1193 = vmatpush2.msra.mxu0 0.0
        %1194 = vmatprep.subr.mxu0 0.0
        %1195 = vmatpush2.msra.mxu0 0.0
        %1196 = vmatprep.subr.mxu0 0.0
        %1197 = vmatpush2.msra.mxu0 0.0
        %1198 = vmatprep.subr.mxu0 0.0
        %1199 = vmatpush2.msra.mxu0 0.0
        %1200 = vmatprep.subr.mxu0 0.0
        %1201 = vmatpush2.msra.mxu0 0.0
        %1202 = vmatprep.subr.mxu0 0.0
        %1203 = vmatpush2.msra.mxu0 0.0
        %1204 = vmatprep.subr.mxu0 0.0
        %1205 = vmatpush2.msra.mxu0 0.0
        %1206 = vmatprep.subr.mxu0 0.0
        %1207 = vmatpush2.msra.mxu0 0.0
        %1208 = vmatprep.subr.mxu0 0.0
        %1209 = vmatpush2.msra.mxu0 0.0
        %1210 = vmatprep.subr.mxu0 0.0
        %1211 = vmatpush2.msra.mxu0 0.0
        %1212 = vmatprep.subr.mxu0 0.0
        %1213 = vmatpush2.msra.mxu0 0.0
        %1214 = vmatprep.subr.mxu0 0.0
        %1215 = vmatpush2.msra.mxu0 0.0
        %1216 = vmatprep.subr.mxu0 0.0
        %1217 = vmatpush2.msra.mxu0 0.0
        %1218 = vmatprep.mubr.f32.mxu0 0.0
        %1219 = vmatmul.mubr.f32.gmra.mxu0 %v1146
        %v1220 = vpop.f32.mrf.mxu0
        %v1221 = vadd.f32 0.0, %v1220
        %v1222 = vpop.f32.mrf.mxu0
        %1223 = vmatprep.mubr.f32.mxu0 0.0
        %1224 = vmatmul.mubr.f32.gmra.mxu0 %v1149
        %v1225 = vpop.f32.mrf.mxu0
        %v1226 = vadd.f32 0.0, %v1225
        %v1227 = vpop.f32.mrf.mxu0
        %1228 = vmatprep.mubr.f32.mxu0 0.0
        %1229 = vmatmul.mubr.f32.gmra.mxu0 %v1152
        %v1230 = vpop.f32.mrf.mxu0
        %v1231 = vadd.f32 0.0, %v1230
        %v1232 = vpop.f32.mrf.mxu0
        %1233 = vdwg.mxu0
        %1234 = vrot.lane.b32.xlu0 %v674, 64
        %v1235 = vpop.permute.xlu0 %1234
        %1236 = vrot.lane.b32.xlu0 %v680, 64
        %v1237 = vpop.permute.xlu0 %1236
        %1238 = vrot.lane.b32.xlu0 %v686, 64
        %v1239 = vpop.permute.xlu0 %1238
        %1240 = vrot.lane.b32.xlu0 %v676, 64
        %v1241 = vpop.permute.xlu0 %1240
        %1242 = vrot.lane.b32.xlu0 %v682, 64
        %v1243 = vpop.permute.xlu0 %1242
        %1244 = vrot.lane.b32.xlu0 %v688, 64
        %v1245 = vpop.permute.xlu0 %1244
        %v1246 = vsel %vm774, %v1235, 0
        %v1248 = vsel %vm774, %v1237, 0
        %v1250 = vsel %vm774, %v1239, 0
        %v1252 = vsel %vm774, %v1241, 0
        %v1254 = vsel %vm774, %v1243, 0
        %v1256 = vsel %vm774, %v1245, 0
        %1258 = vmatprep.subr.mxu0 0.0
        %1259 = vmatpush1.xpose.msra.mxu0 0.0
        %1260 = vmatprep.subr.mxu0 0.0
        %1261 = vmatpush1.xpose.msra.mxu0 0.0
        %1262 = vmatprep.subr.mxu0 0.0
        %1263 = vmatpush1.xpose.msra.mxu0 0.0
        %1264 = vmatprep.subr.mxu0 0.0
        %1265 = vmatpush1.xpose.msra.mxu0 0.0
        %1266 = vmatprep.subr.mxu0 0.0
        %1267 = vmatpush1.xpose.msra.mxu0 0.0
        %1268 = vmatprep.subr.mxu0 0.0
        %1269 = vmatpush1.xpose.msra.mxu0 0.0
        %1270 = vmatprep.subr.mxu0 0.0
        %1271 = vmatpush1.xpose.msra.mxu0 0.0
        %1272 = vmatprep.subr.mxu0 0.0
        %1273 = vmatpush1.xpose.msra.mxu0 0.0
        %1274 = vmatprep.subr.mxu0 0.0
        %1275 = vmatpush1.xpose.msra.mxu0 0.0
        %1276 = vmatprep.subr.mxu0 0.0
        %1277 = vmatpush1.xpose.msra.mxu0 0.0
        %1278 = vmatprep.subr.mxu0 0.0
        %1279 = vmatpush1.xpose.msra.mxu0 0.0
        %1280 = vmatprep.subr.mxu0 0.0
        %1281 = vmatpush1.xpose.msra.mxu0 0.0
        %1282 = vmatprep.subr.mxu0 0.0
        %1283 = vmatpush1.xpose.msra.mxu0 0.0
        %1284 = vmatprep.subr.mxu0 0.0
        %1285 = vmatpush1.xpose.msra.mxu0 %v1256
        %1286 = vmatprep.subr.mxu0 0.0
        %1287 = vmatpush1.xpose.msra.mxu0 %v1254
        %1288 = vmatprep.subr.mxu0 0.0
        %1289 = vmatpush1.xpose.msra.mxu0 %v1252
        %1290 = vmatprep.subr.mxu0 0.0
        %1291 = vmatpush2.xpose.msra.mxu0 0.0
        %1292 = vmatprep.subr.mxu0 0.0
        %1293 = vmatpush2.xpose.msra.mxu0 0.0
        %1294 = vmatprep.subr.mxu0 0.0
        %1295 = vmatpush2.xpose.msra.mxu0 0.0
        %1296 = vmatprep.subr.mxu0 0.0
        %1297 = vmatpush2.xpose.msra.mxu0 0.0
        %1298 = vmatprep.subr.mxu0 0.0
        %1299 = vmatpush2.xpose.msra.mxu0 0.0
        %1300 = vmatprep.subr.mxu0 0.0
        %1301 = vmatpush2.xpose.msra.mxu0 0.0
        %1302 = vmatprep.subr.mxu0 0.0
        %1303 = vmatpush2.xpose.msra.mxu0 0.0
        %1304 = vmatprep.subr.mxu0 0.0
        %1305 = vmatpush2.xpose.msra.mxu0 0.0
        %1306 = vmatprep.subr.mxu0 0.0
        %1307 = vmatpush2.xpose.msra.mxu0 0.0
        %1308 = vmatprep.subr.mxu0 0.0
        %1309 = vmatpush2.xpose.msra.mxu0 0.0
        %1310 = vmatprep.subr.mxu0 0.0
        %1311 = vmatpush2.xpose.msra.mxu0 0.0
        %1312 = vmatprep.subr.mxu0 0.0
        %1313 = vmatpush2.xpose.msra.mxu0 0.0
        %1314 = vmatprep.subr.mxu0 0.0
        %1315 = vmatpush2.xpose.msra.mxu0 0.0
        %1316 = vmatprep.subr.mxu0 0.0
        %1317 = vmatpush2.xpose.msra.mxu0 0.0
        %1318 = vmatprep.subr.mxu0 0.0
        %1319 = vmatpush2.xpose.msra.mxu0 0.0
        %1320 = vmatprep.subr.mxu0 0.0
        %1321 = vmatpush2.xpose.msra.mxu0 0.0
        %1322 = vmatprep.mubr.f32.mxu0 0.0
        %1323 = vmatmul.mubr.f32.gmra.mxu0 %v1246
        %v1324 = vpop.f32.mrf.mxu0
        %v1325 = vadd.f32 %v773, %v1324
        %v1326 = vpop.f32.mrf.mxu0
        %1327 = vmatprep.mubr.f32.mxu0 0.0
        %1328 = vmatmul.mubr.f32.gmra.mxu0 %v1248
        %v1329 = vpop.f32.mrf.mxu0
        %v1330 = vadd.f32 %v773, %v1329
        %v1331 = vpop.f32.mrf.mxu0
        %1332 = vmatprep.mubr.f32.mxu0 0.0
        %1333 = vmatmul.mubr.f32.gmra.mxu0 %v1250
        %v1334 = vpop.f32.mrf.mxu0
        %v1335 = vadd.f32 %v773, %v1334
        %v1336 = vpop.f32.mrf.mxu0
        %1337 = vdwg.mxu0
        %v1338 = vsel %vm873, %v1325, -inf
        %1339 = vmax.xlane.f32.xlu0 %v1338
        %v1340 = vpop.xlane.xlu0 %1339
        %v1341 = vsel %vm873, %v1330, -inf
        %1342 = vmax.xlane.f32.xlu0 %v1341
        %v1343 = vpop.xlane.xlu0 %1342
        %v1344 = vsel %vm873, %v1335, -inf
        %1345 = vmax.xlane.f32.xlu0 %v1344
        %v1346 = vpop.xlane.xlu0 %1345
        %v1347 = vsub.f32 %v1325, %v1340
        %v1348 = vsub.f32 %v1330, %v1343
        %v1349 = vsub.f32 %v1335, %v1346
        %v1350 = vmul.f32 %v1347, 1.442695
        %v1351 = vpow.pop %v1350
        %v1352 = vmul.f32 %v1348, 1.442695
        %v1353 = vpow.pop %v1352
        %v1354 = vmul.f32 %v1349, 1.442695
        %v1355 = vpow.pop %v1354
        %v1356 = vsel %vm873, %v1351, 0.0
        %1357 = vadd.xlane.f32.xlu0 %v1356
        %v1358 = vpop.xlane.xlu0 %1357
        %v1359 = vsel %vm873, %v1353, 0.0
        %1360 = vadd.xlane.f32.xlu0 %v1359
        %v1361 = vpop.xlane.xlu0 %1360
        %v1362 = vsel %vm873, %v1355, 0.0
        %1363 = vadd.xlane.f32.xlu0 %v1362
        %v1364 = vpop.xlane.xlu0 %1363
        %v1365 = vrcp.pop %v1358
        %v1366 = vrcp.pop %v1361
        %v1367 = vrcp.pop %v1364
        %v1368 = vmul.f32 %v1351, %v1365
        %v1369 = vmul.f32 %v1353, %v1366
        %v1370 = vmul.f32 %v1355, %v1367
        %1371 = vrot.lane.b32.xlu0 %v757, 64
        %v1372 = vpop.permute.xlu0 %1371
        %1373 = vrot.lane.b32.xlu0 %v762, 64
        %v1374 = vpop.permute.xlu0 %1373
        %1375 = vrot.lane.b32.xlu0 %v767, 64
        %v1376 = vpop.permute.xlu0 %1375
        %v1381 = vsel %vm873, %v1368, 0
        %v1384 = vsel %vm873, %v1369, 0
        %v1387 = vsel %vm873, %v1370, 0
        %1389 = vmatprep.subr.mxu0 0.0
        %1390 = vmatpush1.msra.mxu0 0.0
        %1391 = vmatprep.subr.mxu0 0.0
        %1392 = vmatpush1.msra.mxu0 0.0
        %1393 = vmatprep.subr.mxu0 0.0
        %1394 = vmatpush1.msra.mxu0 0.0
        %1395 = vmatprep.subr.mxu0 0.0
        %1396 = vmatpush1.msra.mxu0 0.0
        %1397 = vmatprep.subr.mxu0 0.0
        %1398 = vmatpush1.msra.mxu0 0.0
        %1399 = vmatprep.subr.mxu0 0.0
        %1400 = vmatpush1.msra.mxu0 0.0
        %1401 = vmatprep.subr.mxu0 0.0
        %1402 = vmatpush1.msra.mxu0 0.0
        %1403 = vmatprep.subr.mxu0 0.0
        %1404 = vmatpush1.msra.mxu0 0.0
        %1405 = vmatprep.subr.mxu0 0.0
        %1406 = vmatpush1.msra.mxu0 0.0
        %1407 = vmatprep.subr.mxu0 0.0
        %1408 = vmatpush1.msra.mxu0 0.0
        %1409 = vmatprep.subr.mxu0 0.0
        %1410 = vmatpush1.msra.mxu0 0.0
        %1411 = vmatprep.subr.mxu0 0.0
        %1412 = vmatpush1.msra.mxu0 0.0
        %1413 = vmatprep.subr.mxu0 0.0
        %1414 = vmatpush1.msra.mxu0 0.0
        %1415 = vmatprep.subr.mxu0 0.0
        %1416 = vmatpush1.msra.mxu0 %v1376
        %1417 = vmatprep.subr.mxu0 0.0
        %1418 = vmatpush1.msra.mxu0 %v1374
        %1419 = vmatprep.subr.mxu0 0.0
        %1420 = vmatpush1.msra.mxu0 %v1372
        %1421 = vmatprep.subr.mxu0 0.0
        %1422 = vmatpush2.msra.mxu0 0.0
        %1423 = vmatprep.subr.mxu0 0.0
        %1424 = vmatpush2.msra.mxu0 0.0
        %1425 = vmatprep.subr.mxu0 0.0
        %1426 = vmatpush2.msra.mxu0 0.0
        %1427 = vmatprep.subr.mxu0 0.0
        %1428 = vmatpush2.msra.mxu0 0.0
        %1429 = vmatprep.subr.mxu0 0.0
        %1430 = vmatpush2.msra.mxu0 0.0
        %1431 = vmatprep.subr.mxu0 0.0
        %1432 = vmatpush2.msra.mxu0 0.0
        %1433 = vmatprep.subr.mxu0 0.0
        %1434 = vmatpush2.msra.mxu0 0.0
        %1435 = vmatprep.subr.mxu0 0.0
        %1436 = vmatpush2.msra.mxu0 0.0
        %1437 = vmatprep.subr.mxu0 0.0
        %1438 = vmatpush2.msra.mxu0 0.0
        %1439 = vmatprep.subr.mxu0 0.0
        %1440 = vmatpush2.msra.mxu0 0.0
        %1441 = vmatprep.subr.mxu0 0.0
        %1442 = vmatpush2.msra.mxu0 0.0
        %1443 = vmatprep.subr.mxu0 0.0
        %1444 = vmatpush2.msra.mxu0 0.0
        %1445 = vmatprep.subr.mxu0 0.0
        %1446 = vmatpush2.msra.mxu0 0.0
        %1447 = vmatprep.subr.mxu0 0.0
        %1448 = vmatpush2.msra.mxu0 0.0
        %1449 = vmatprep.subr.mxu0 0.0
        %1450 = vmatpush2.msra.mxu0 0.0
        %1451 = vmatprep.subr.mxu0 0.0
        %1452 = vmatpush2.msra.mxu0 0.0
        %1453 = vmatprep.mubr.f32.mxu0 0.0
        %1454 = vmatmul.mubr.f32.gmra.mxu0 %v1381
        %v1455 = vpop.f32.mrf.mxu0
        %v1456 = vadd.f32 0.0, %v1455
        %v1457 = vpop.f32.mrf.mxu0
        %1458 = vmatprep.mubr.f32.mxu0 0.0
        %1459 = vmatmul.mubr.f32.gmra.mxu0 %v1384
        %v1460 = vpop.f32.mrf.mxu0
        %v1461 = vadd.f32 0.0, %v1460
        %v1462 = vpop.f32.mrf.mxu0
        %1463 = vmatprep.mubr.f32.mxu0 0.0
        %1464 = vmatmul.mubr.f32.gmra.mxu0 %v1387
        %v1465 = vpop.f32.mrf.mxu0
        %v1466 = vadd.f32 0.0, %v1465
        %v1467 = vpop.f32.mrf.mxu0
        %1468 = vdwg.mxu0
        %1469 = vrot.lane.b32.xlu0 %v674, 32
        %v1470 = vpop.permute.xlu0 %1469
        %1471 = vrot.lane.b32.xlu0 %v680, 32
        %v1472 = vpop.permute.xlu0 %1471
        %1473 = vrot.lane.b32.xlu0 %v686, 32
        %v1474 = vpop.permute.xlu0 %1473
        %1475 = vrot.lane.b32.xlu0 %v676, 32
        %v1476 = vpop.permute.xlu0 %1475
        %1477 = vrot.lane.b32.xlu0 %v682, 32
        %v1478 = vpop.permute.xlu0 %1477
        %1479 = vrot.lane.b32.xlu0 %v688, 32
        %v1480 = vpop.permute.xlu0 %1479
        %v1481 = vsel %vm774, %v1470, 0
        %v1483 = vsel %vm774, %v1472, 0
        %v1485 = vsel %vm774, %v1474, 0
        %v1487 = vsel %vm774, %v1476, 0
        %v1489 = vsel %vm774, %v1478, 0
        %v1491 = vsel %vm774, %v1480, 0
        %1493 = vmatprep.subr.mxu0 0.0
        %1494 = vmatpush1.xpose.msra.mxu0 0.0
        %1495 = vmatprep.subr.mxu0 0.0
        %1496 = vmatpush1.xpose.msra.mxu0 0.0
        %1497 = vmatprep.subr.mxu0 0.0
        %1498 = vmatpush1.xpose.msra.mxu0 0.0
        %1499 = vmatprep.subr.mxu0 0.0
        %1500 = vmatpush1.xpose.msra.mxu0 0.0
        %1501 = vmatprep.subr.mxu0 0.0
        %1502 = vmatpush1.xpose.msra.mxu0 0.0
        %1503 = vmatprep.subr.mxu0 0.0
        %1504 = vmatpush1.xpose.msra.mxu0 0.0
        %1505 = vmatprep.subr.mxu0 0.0
        %1506 = vmatpush1.xpose.msra.mxu0 0.0
        %1507 = vmatprep.subr.mxu0 0.0
        %1508 = vmatpush1.xpose.msra.mxu0 0.0
        %1509 = vmatprep.subr.mxu0 0.0
        %1510 = vmatpush1.xpose.msra.mxu0 0.0
        %1511 = vmatprep.subr.mxu0 0.0
        %1512 = vmatpush1.xpose.msra.mxu0 0.0
        %1513 = vmatprep.subr.mxu0 0.0
        %1514 = vmatpush1.xpose.msra.mxu0 0.0
        %1515 = vmatprep.subr.mxu0 0.0
        %1516 = vmatpush1.xpose.msra.mxu0 0.0
        %1517 = vmatprep.subr.mxu0 0.0
        %1518 = vmatpush1.xpose.msra.mxu0 0.0
        %1519 = vmatprep.subr.mxu0 0.0
        %1520 = vmatpush1.xpose.msra.mxu0 %v1491
        %1521 = vmatprep.subr.mxu0 0.0
        %1522 = vmatpush1.xpose.msra.mxu0 %v1489
        %1523 = vmatprep.subr.mxu0 0.0
        %1524 = vmatpush1.xpose.msra.mxu0 %v1487
        %1525 = vmatprep.subr.mxu0 0.0
        %1526 = vmatpush2.xpose.msra.mxu0 0.0
        %1527 = vmatprep.subr.mxu0 0.0
        %1528 = vmatpush2.xpose.msra.mxu0 0.0
        %1529 = vmatprep.subr.mxu0 0.0
        %1530 = vmatpush2.xpose.msra.mxu0 0.0
        %1531 = vmatprep.subr.mxu0 0.0
        %1532 = vmatpush2.xpose.msra.mxu0 0.0
        %1533 = vmatprep.subr.mxu0 0.0
        %1534 = vmatpush2.xpose.msra.mxu0 0.0
        %1535 = vmatprep.subr.mxu0 0.0
        %1536 = vmatpush2.xpose.msra.mxu0 0.0
        %1537 = vmatprep.subr.mxu0 0.0
        %1538 = vmatpush2.xpose.msra.mxu0 0.0
        %1539 = vmatprep.subr.mxu0 0.0
        %1540 = vmatpush2.xpose.msra.mxu0 0.0
        %1541 = vmatprep.subr.mxu0 0.0
        %1542 = vmatpush2.xpose.msra.mxu0 0.0
        %1543 = vmatprep.subr.mxu0 0.0
        %1544 = vmatpush2.xpose.msra.mxu0 0.0
        %1545 = vmatprep.subr.mxu0 0.0
        %1546 = vmatpush2.xpose.msra.mxu0 0.0
        %1547 = vmatprep.subr.mxu0 0.0
        %1548 = vmatpush2.xpose.msra.mxu0 0.0
        %1549 = vmatprep.subr.mxu0 0.0
        %1550 = vmatpush2.xpose.msra.mxu0 0.0
        %1551 = vmatprep.subr.mxu0 0.0
        %1552 = vmatpush2.xpose.msra.mxu0 0.0
        %1553 = vmatprep.subr.mxu0 0.0
        %1554 = vmatpush2.xpose.msra.mxu0 0.0
        %1555 = vmatprep.subr.mxu0 0.0
        %1556 = vmatpush2.xpose.msra.mxu0 0.0
        %1557 = vmatprep.mubr.f32.mxu0 0.0
        %1558 = vmatmul.mubr.f32.gmra.mxu0 %v1481
        %v1559 = vpop.f32.mrf.mxu0
        %v1560 = vadd.f32 %v773, %v1559
        %v1561 = vpop.f32.mrf.mxu0
        %1562 = vmatprep.mubr.f32.mxu0 0.0
        %1563 = vmatmul.mubr.f32.gmra.mxu0 %v1483
        %v1564 = vpop.f32.mrf.mxu0
        %v1565 = vadd.f32 %v773, %v1564
        %v1566 = vpop.f32.mrf.mxu0
        %1567 = vmatprep.mubr.f32.mxu0 0.0
        %1568 = vmatmul.mubr.f32.gmra.mxu0 %v1485
        %v1569 = vpop.f32.mrf.mxu0
        %v1570 = vadd.f32 %v773, %v1569
        %v1571 = vpop.f32.mrf.mxu0
        %1572 = vdwg.mxu0
        %v1573 = vsel %vm873, %v1560, -inf
        %1574 = vmax.xlane.f32.xlu0 %v1573
        %v1575 = vpop.xlane.xlu0 %1574
        %v1576 = vsel %vm873, %v1565, -inf
        %1577 = vmax.xlane.f32.xlu0 %v1576
        %v1578 = vpop.xlane.xlu0 %1577
        %v1579 = vsel %vm873, %v1570, -inf
        %1580 = vmax.xlane.f32.xlu0 %v1579
        %v1581 = vpop.xlane.xlu0 %1580
        %v1582 = vsub.f32 %v1560, %v1575
        %v1583 = vsub.f32 %v1565, %v1578
        %v1584 = vsub.f32 %v1570, %v1581
        %v1585 = vmul.f32 %v1582, 1.442695
        %v1586 = vpow.pop %v1585
        %v1587 = vmul.f32 %v1583, 1.442695
        %v1588 = vpow.pop %v1587
        %v1589 = vmul.f32 %v1584, 1.442695
        %v1590 = vpow.pop %v1589
        %v1591 = vsel %vm873, %v1586, 0.0
        %1592 = vadd.xlane.f32.xlu0 %v1591
        %v1593 = vpop.xlane.xlu0 %1592
        %v1594 = vsel %vm873, %v1588, 0.0
        %1595 = vadd.xlane.f32.xlu0 %v1594
        %v1596 = vpop.xlane.xlu0 %1595
        %v1597 = vsel %vm873, %v1590, 0.0
        %1598 = vadd.xlane.f32.xlu0 %v1597
        %v1599 = vpop.xlane.xlu0 %1598
        %v1600 = vrcp.pop %v1593
        %v1601 = vrcp.pop %v1596
        %v1602 = vrcp.pop %v1599
        %v1603 = vmul.f32 %v1586, %v1600
        %v1604 = vmul.f32 %v1588, %v1601
        %v1605 = vmul.f32 %v1590, %v1602
        %1606 = vrot.lane.b32.xlu0 %v757, 32
        %v1607 = vpop.permute.xlu0 %1606
        %1608 = vrot.lane.b32.xlu0 %v762, 32
        %v1609 = vpop.permute.xlu0 %1608
        %1610 = vrot.lane.b32.xlu0 %v767, 32
        %v1611 = vpop.permute.xlu0 %1610
        %v1616 = vsel %vm873, %v1603, 0
        %v1619 = vsel %vm873, %v1604, 0
        %v1622 = vsel %vm873, %v1605, 0
        %1624 = vmatprep.subr.mxu0 0.0
        %1625 = vmatpush1.msra.mxu0 0.0
        %1626 = vmatprep.subr.mxu0 0.0
        %1627 = vmatpush1.msra.mxu0 0.0
        %1628 = vmatprep.subr.mxu0 0.0
        %1629 = vmatpush1.msra.mxu0 0.0
        %1630 = vmatprep.subr.mxu0 0.0
        %1631 = vmatpush1.msra.mxu0 0.0
        %1632 = vmatprep.subr.mxu0 0.0
        %1633 = vmatpush1.msra.mxu0 0.0
        %1634 = vmatprep.subr.mxu0 0.0
        %1635 = vmatpush1.msra.mxu0 0.0
        %1636 = vmatprep.subr.mxu0 0.0
        %1637 = vmatpush1.msra.mxu0 0.0
        %1638 = vmatprep.subr.mxu0 0.0
        %1639 = vmatpush1.msra.mxu0 0.0
        %1640 = vmatprep.subr.mxu0 0.0
        %1641 = vmatpush1.msra.mxu0 0.0
        %1642 = vmatprep.subr.mxu0 0.0
        %1643 = vmatpush1.msra.mxu0 0.0
        %1644 = vmatprep.subr.mxu0 0.0
        %1645 = vmatpush1.msra.mxu0 0.0
        %1646 = vmatprep.subr.mxu0 0.0
        %1647 = vmatpush1.msra.mxu0 0.0
        %1648 = vmatprep.subr.mxu0 0.0
        %1649 = vmatpush1.msra.mxu0 0.0
        %1650 = vmatprep.subr.mxu0 0.0
        %1651 = vmatpush1.msra.mxu0 %v1611
        %1652 = vmatprep.subr.mxu0 0.0
        %1653 = vmatpush1.msra.mxu0 %v1609
        %1654 = vmatprep.subr.mxu0 0.0
        %1655 = vmatpush1.msra.mxu0 %v1607
        %1656 = vmatprep.subr.mxu0 0.0
        %1657 = vmatpush2.msra.mxu0 0.0
        %1658 = vmatprep.subr.mxu0 0.0
        %1659 = vmatpush2.msra.mxu0 0.0
        %1660 = vmatprep.subr.mxu0 0.0
        %1661 = vmatpush2.msra.mxu0 0.0
        %1662 = vmatprep.subr.mxu0 0.0
        %1663 = vmatpush2.msra.mxu0 0.0
        %1664 = vmatprep.subr.mxu0 0.0
        %1665 = vmatpush2.msra.mxu0 0.0
        %1666 = vmatprep.subr.mxu0 0.0
        %1667 = vmatpush2.msra.mxu0 0.0
        %1668 = vmatprep.subr.mxu0 0.0
        %1669 = vmatpush2.msra.mxu0 0.0
        %1670 = vmatprep.subr.mxu0 0.0
        %1671 = vmatpush2.msra.mxu0 0.0
        %1672 = vmatprep.subr.mxu0 0.0
        %1673 = vmatpush2.msra.mxu0 0.0
        %1674 = vmatprep.subr.mxu0 0.0
        %1675 = vmatpush2.msra.mxu0 0.0
        %1676 = vmatprep.subr.mxu0 0.0
        %1677 = vmatpush2.msra.mxu0 0.0
        %1678 = vmatprep.subr.mxu0 0.0
        %1679 = vmatpush2.msra.mxu0 0.0
        %1680 = vmatprep.subr.mxu0 0.0
        %1681 = vmatpush2.msra.mxu0 0.0
        %1682 = vmatprep.subr.mxu0 0.0
        %1683 = vmatpush2.msra.mxu0 0.0
        %1684 = vmatprep.subr.mxu0 0.0
        %1685 = vmatpush2.msra.mxu0 0.0
        %1686 = vmatprep.subr.mxu0 0.0
        %1687 = vmatpush2.msra.mxu0 0.0
        %1688 = vmatprep.mubr.f32.mxu0 0.0
        %1689 = vmatmul.mubr.f32.gmra.mxu0 %v1616
        %v1690 = vpop.f32.mrf.mxu0
        %v1691 = vadd.f32 0.0, %v1690
        %v1692 = vpop.f32.mrf.mxu0
        %1693 = vmatprep.mubr.f32.mxu0 0.0
        %1694 = vmatmul.mubr.f32.gmra.mxu0 %v1619
        %v1695 = vpop.f32.mrf.mxu0
        %v1696 = vadd.f32 0.0, %v1695
        %v1697 = vpop.f32.mrf.mxu0
        %1698 = vmatprep.mubr.f32.mxu0 0.0
        %1699 = vmatmul.mubr.f32.gmra.mxu0 %v1622
        %v1700 = vpop.f32.mrf.mxu0
        %v1701 = vadd.f32 0.0, %v1700
        %v1702 = vpop.f32.mrf.mxu0
        %1703 = vdwg.mxu0
        %1707 = vrot.lane.b32.xlu0 %v1221, 32
        %v1708 = vpop.permute.xlu0 %1707
        %1709 = vrot.lane.b32.xlu0 %v1226, 32
        %v1710 = vpop.permute.xlu0 %1709
        %1711 = vrot.lane.b32.xlu0 %v1231, 32
        %v1712 = vpop.permute.xlu0 %1711
        %1719 = vrot.lane.b32.xlu0 %v1456, 64
        %v1720 = vpop.permute.xlu0 %1719
        %1721 = vrot.lane.b32.xlu0 %v1461, 64
        %v1722 = vpop.permute.xlu0 %1721
        %1723 = vrot.lane.b32.xlu0 %v1466, 64
        %v1724 = vpop.permute.xlu0 %1723
        %1731 = vrot.lane.b32.xlu0 %v1691, 96
        %v1732 = vpop.permute.xlu0 %1731
        %1733 = vrot.lane.b32.xlu0 %v1696, 96
        %v1734 = vpop.permute.xlu0 %1733
        %1735 = vrot.lane.b32.xlu0 %v1701, 96
        %v1736 = vpop.permute.xlu0 %1735
        %v1740 = vsel %vm774, %v983, %v1708
        %v1741 = vsel %vm774, %v988, %v1710
        %v1742 = vsel %vm774, %v993, %v1712
        %vm1743 = vcmask 523264
        %v1744 = vsel %vm1743, %v1740, %v1720
        %v1745 = vsel %vm1743, %v1741, %v1722
        %v1746 = vsel %vm1743, %v1742, %v1724
        %vm1747 = vcmask 785408
        %v1748 = vsel %vm1747, %v1744, %v1732
        %v1749 = vsel %vm1747, %v1745, %v1734
        %v1750 = vsel %vm1747, %v1746, %v1736
        %v1751 = vld [vmem:[#allocation2] sm:$0xff]
        %v1752 = vld [vmem:[#allocation2 + $0x8] sm:$0xff]
        %v1753 = vld [vmem:[#allocation2 + $0x10] sm:$0xff]
        %v1754 = vld [vmem:[#allocation2 + $0x18] sm:$0xff]
        %v1755 = vld [vmem:[#allocation2 + $0x20] sm:$0xff]
        %v1756 = vld [vmem:[#allocation2 + $0x28] sm:$0xff]
        %v1757 = vld [vmem:[#allocation2 + $0x30] sm:$0xff]
        %v1758 = vld [vmem:[#allocation2 + $0x38] sm:$0xff]
        %v1759 = vld [vmem:[#allocation2 + $0x40] sm:$0xff]
        %v1760 = vld [vmem:[#allocation2 + $0x48] sm:$0xff]
        %v1761 = vld [vmem:[#allocation2 + $0x50] sm:$0xff]
        %v1762 = vld [vmem:[#allocation2 + $0x58] sm:$0xff]
        %v1763 = vld [vmem:[#allocation2 + $0x60] sm:$0xff]
        %v1764 = vld [vmem:[#allocation2 + $0x68] sm:$0xff]
        %v1765 = vld [vmem:[#allocation2 + $0x70] sm:$0xff]
        %v1766 = vld [vmem:[#allocation2 + $0x78] sm:$0xff]
        %1767 = vmatprep.subr.mxu0 0.0
        %1768 = vmatpush1.msra.mxu0 %v1766
        %1769 = vmatprep.subr.mxu0 0.0
        %1770 = vmatpush1.msra.mxu0 %v1765
        %1771 = vmatprep.subr.mxu0 0.0
        %1772 = vmatpush1.msra.mxu0 %v1764
        %1773 = vmatprep.subr.mxu0 0.0
        %1774 = vmatpush1.msra.mxu0 %v1763
        %1775 = vmatprep.subr.mxu0 0.0
        %1776 = vmatpush1.msra.mxu0 %v1762
        %1777 = vmatprep.subr.mxu0 0.0
        %1778 = vmatpush1.msra.mxu0 %v1761
        %1779 = vmatprep.subr.mxu0 0.0
        %1780 = vmatpush1.msra.mxu0 %v1760
        %1781 = vmatprep.subr.mxu0 0.0
        %1782 = vmatpush1.msra.mxu0 %v1759
        %1783 = vmatprep.subr.mxu0 0.0
        %1784 = vmatpush1.msra.mxu0 %v1758
        %1785 = vmatprep.subr.mxu0 0.0
        %1786 = vmatpush1.msra.mxu0 %v1757
        %1787 = vmatprep.subr.mxu0 0.0
        %1788 = vmatpush1.msra.mxu0 %v1756
        %1789 = vmatprep.subr.mxu0 0.0
        %1790 = vmatpush1.msra.mxu0 %v1755
        %1791 = vmatprep.subr.mxu0 0.0
        %1792 = vmatpush1.msra.mxu0 %v1754
        %1793 = vmatprep.subr.mxu0 0.0
        %1794 = vmatpush1.msra.mxu0 %v1753
        %1795 = vmatprep.subr.mxu0 0.0
        %1796 = vmatpush1.msra.mxu0 %v1752
        %1797 = vmatprep.subr.mxu0 0.0
        %1798 = vmatpush1.msra.mxu0 %v1751
        %1799 = vmatprep.subr.mxu0 0.0
        %1800 = vmatpush2.msra.mxu0 0.0
        %1801 = vmatprep.subr.mxu0 0.0
        %1802 = vmatpush2.msra.mxu0 0.0
        %1803 = vmatprep.subr.mxu0 0.0
        %1804 = vmatpush2.msra.mxu0 0.0
        %1805 = vmatprep.subr.mxu0 0.0
        %1806 = vmatpush2.msra.mxu0 0.0
        %1807 = vmatprep.subr.mxu0 0.0
        %1808 = vmatpush2.msra.mxu0 0.0
        %1809 = vmatprep.subr.mxu0 0.0
        %1810 = vmatpush2.msra.mxu0 0.0
        %1811 = vmatprep.subr.mxu0 0.0
        %1812 = vmatpush2.msra.mxu0 0.0
        %1813 = vmatprep.subr.mxu0 0.0
        %1814 = vmatpush2.msra.mxu0 0.0
        %1815 = vmatprep.subr.mxu0 0.0
        %1816 = vmatpush2.msra.mxu0 0.0
        %1817 = vmatprep.subr.mxu0 0.0
        %1818 = vmatpush2.msra.mxu0 0.0
        %1819 = vmatprep.subr.mxu0 0.0
        %1820 = vmatpush2.msra.mxu0 0.0
        %1821 = vmatprep.subr.mxu0 0.0
        %1822 = vmatpush2.msra.mxu0 0.0
        %1823 = vmatprep.subr.mxu0 0.0
        %1824 = vmatpush2.msra.mxu0 0.0
        %1825 = vmatprep.subr.mxu0 0.0
        %1826 = vmatpush2.msra.mxu0 0.0
        %1827 = vmatprep.subr.mxu0 0.0
        %1828 = vmatpush2.msra.mxu0 0.0
        %1829 = vmatprep.subr.mxu0 0.0
        %1830 = vmatpush2.msra.mxu0 0.0
        %1831 = vmatprep.mubr.f32.mxu0 0.0
        %1832 = vmatmul.mubr.f32.gmra.mxu0 %v1748
        %v1833 = vpop.f32.mrf.mxu0
        %v1834 = vadd.f32 0.0, %v1833
        %v1835 = vpop.f32.mrf.mxu0
        %1836 = vmatprep.mubr.f32.mxu0 0.0
        %1837 = vmatmul.mubr.f32.gmra.mxu0 %v1749
        %v1838 = vpop.f32.mrf.mxu0
        %v1839 = vadd.f32 0.0, %v1838
        %v1840 = vpop.f32.mrf.mxu0
        %1841 = vmatprep.mubr.f32.mxu0 0.0
        %1842 = vmatmul.mubr.f32.gmra.mxu0 %v1750
        %v1843 = vpop.f32.mrf.mxu0
        %v1844 = vadd.f32 0.0, %v1843
        %v1845 = vpop.f32.mrf.mxu0
        %1846 = vdwg.mxu0
        %v1847 = vadd.f32 %v485, %v1834
        %v1848 = vadd.f32 %v486, %v1839
        %v1849 = vadd.f32 %v487, %v1844
        %v1850 = vld [vmem:[%s6] sm:$0x1]
        %v1852 = vlaneseq
        %v1853 = vshrl.u32 %v1852, 7
        %v1854 = vsub.s32 0, %v1853
        %v1855 = vrot.slane %v1850, %v1854
        %v1857 = vadd.f32 %v1847, %v1855
        %v1858 = vadd.f32 %v1848, %v1855
        %v1859 = vadd.f32 %v1849, %v1855
        %v1860 = vld [vmem:[%s7] sm:$0x1]
        %v1861 = vld [vmem:[%s8] sm:$0x1]
        %1862 = vadd.xlane.f32.xlu0 %v1857
        %v1863 = vpop.xlane.xlu0 %1862
        %1864 = vadd.xlane.f32.xlu0 %v1858
        %v1865 = vpop.xlane.xlu0 %1864
        %1866 = vadd.xlane.f32.xlu0 %v1859
        %v1867 = vpop.xlane.xlu0 %1866
        %v1868 = vmul.f32 %v1863, %v496
        %v1869 = vmul.f32 %v1865, %v496
        %v1870 = vmul.f32 %v1867, %v496
        %v1871 = vsub.f32 %v1857, %v1868
        %v1872 = vsub.f32 %v1858, %v1869
        %v1873 = vsub.f32 %v1859, %v1870
        %v1874 = vmul.f32 %v1871, %v1871
        %v1875 = vmul.f32 %v1872, %v1872
        %v1876 = vmul.f32 %v1873, %v1873
        %1877 = vadd.xlane.f32.xlu0 %v1874
        %v1878 = vpop.xlane.xlu0 %1877
        %1879 = vadd.xlane.f32.xlu0 %v1875
        %v1880 = vpop.xlane.xlu0 %1879
        %1881 = vadd.xlane.f32.xlu0 %v1876
        %v1882 = vpop.xlane.xlu0 %1881
        %v1883 = vmul.f32 %v1878, %v496
        %v1884 = vmul.f32 %v1880, %v496
        %v1885 = vmul.f32 %v1882, %v496
        %v1886 = vadd.f32 %v1883, 1e-05
        %v1887 = vadd.f32 %v1884, 1e-05
        %v1888 = vadd.f32 %v1885, 1e-05
        %v1889 = vrsqrt.pop %v1886
        %v1890 = vrsqrt.pop %v1887
        %v1891 = vrsqrt.pop %v1888
        %v1892 = vmul.f32 %v1871, %v1889
        %v1893 = vmul.f32 %v1872, %v1890
        %v1894 = vmul.f32 %v1873, %v1891
        %v1896 = vlaneseq
        %v1897 = vshrl.u32 %v1896, 7
        %v1898 = vsub.s32 0, %v1897
        %v1899 = vrot.slane %v1860, %v1898
        %v1901 = vmul.f32 %v1892, %v1899
        %v1902 = vmul.f32 %v1893, %v1899
        %v1903 = vmul.f32 %v1894, %v1899
        %v1905 = vlaneseq
        %v1906 = vshrl.u32 %v1905, 7
        %v1907 = vsub.s32 0, %v1906
        %v1908 = vrot.slane %v1861, %v1907
        %v1910 = vadd.f32 %v1901, %v1908
        %v1911 = vadd.f32 %v1902, %v1908
        %v1912 = vadd.f32 %v1903, %v1908
        %v1913 = vld [vmem:[#allocation4] sm:$0xff]
        %v1914 = vld [vmem:[#allocation4 + $0x8] sm:$0xff]
        %v1915 = vld [vmem:[#allocation4 + $0x10] sm:$0xff]
        %v1916 = vld [vmem:[#allocation4 + $0x18] sm:$0xff]
        %v1917 = vld [vmem:[#allocation4 + $0x20] sm:$0xff]
        %v1918 = vld [vmem:[#allocation4 + $0x28] sm:$0xff]
        %v1919 = vld [vmem:[#allocation4 + $0x30] sm:$0xff]
        %v1920 = vld [vmem:[#allocation4 + $0x38] sm:$0xff]
        %v1921 = vld [vmem:[#allocation4 + $0x40] sm:$0xff]
        %v1922 = vld [vmem:[#allocation4 + $0x48] sm:$0xff]
        %v1923 = vld [vmem:[#allocation4 + $0x50] sm:$0xff]
        %v1924 = vld [vmem:[#allocation4 + $0x58] sm:$0xff]
        %v1925 = vld [vmem:[#allocation4 + $0x60] sm:$0xff]
        %v1926 = vld [vmem:[#allocation4 + $0x68] sm:$0xff]
        %v1927 = vld [vmem:[#allocation4 + $0x70] sm:$0xff]
        %v1928 = vld [vmem:[#allocation4 + $0x78] sm:$0xff]
        %v1929 = vld [vmem:[#allocation4 + $0x80] sm:$0xff]
        %v1930 = vld [vmem:[#allocation4 + $0x88] sm:$0xff]
        %v1931 = vld [vmem:[#allocation4 + $0x90] sm:$0xff]
        %v1932 = vld [vmem:[#allocation4 + $0x98] sm:$0xff]
        %v1933 = vld [vmem:[#allocation4 + $0xa0] sm:$0xff]
        %v1934 = vld [vmem:[#allocation4 + $0xa8] sm:$0xff]
        %v1935 = vld [vmem:[#allocation4 + $0xb0] sm:$0xff]
        %v1936 = vld [vmem:[#allocation4 + $0xb8] sm:$0xff]
        %v1937 = vld [vmem:[#allocation4 + $0xc0] sm:$0xff]
        %v1938 = vld [vmem:[#allocation4 + $0xc8] sm:$0xff]
        %v1939 = vld [vmem:[#allocation4 + $0xd0] sm:$0xff]
        %v1940 = vld [vmem:[#allocation4 + $0xd8] sm:$0xff]
        %v1941 = vld [vmem:[#allocation4 + $0xe0] sm:$0xff]
        %v1942 = vld [vmem:[#allocation4 + $0xe8] sm:$0xff]
        %v1943 = vld [vmem:[#allocation4 + $0xf0] sm:$0xff]
        %v1944 = vld [vmem:[#allocation4 + $0xf8] sm:$0xff]
        %v1945 = vld [vmem:[%s10] sm:$0x3]
        %v1947 = vlaneseq
        %v1948 = vshrl.u32 %v1947, 7
        %v1949 = vsub.s32 0, %v1948
        %v1950 = vrot.slane %v1945, %v1949
        %v1951 = vlaneseq
        %v1952 = vshrl.u32 %v1951, 7
        %v1953 = vsub.s32 1, %v1952
        %v1954 = vrot.slane %v1945, %v1953
        %1957 = vmatprep.subr.mxu0 %v1944
        %1958 = vmatpush1.msra.mxu0 %v1943
        %1959 = vmatprep.subr.mxu0 %v1942
        %1960 = vmatpush1.msra.mxu0 %v1941
        %1961 = vmatprep.subr.mxu0 %v1940
        %1962 = vmatpush1.msra.mxu0 %v1939
        %1963 = vmatprep.subr.mxu0 %v1938
        %1964 = vmatpush1.msra.mxu0 %v1937
        %1965 = vmatprep.subr.mxu0 %v1936
        %1966 = vmatpush1.msra.mxu0 %v1935
        %1967 = vmatprep.subr.mxu0 %v1934
        %1968 = vmatpush1.msra.mxu0 %v1933
        %1969 = vmatprep.subr.mxu0 %v1932
        %1970 = vmatpush1.msra.mxu0 %v1931
        %1971 = vmatprep.subr.mxu0 %v1930
        %1972 = vmatpush1.msra.mxu0 %v1929
        %1973 = vmatprep.subr.mxu0 %v1928
        %1974 = vmatpush1.msra.mxu0 %v1927
        %1975 = vmatprep.subr.mxu0 %v1926
        %1976 = vmatpush1.msra.mxu0 %v1925
        %1977 = vmatprep.subr.mxu0 %v1924
        %1978 = vmatpush1.msra.mxu0 %v1923
        %1979 = vmatprep.subr.mxu0 %v1922
        %1980 = vmatpush1.msra.mxu0 %v1921
        %1981 = vmatprep.subr.mxu0 %v1920
        %1982 = vmatpush1.msra.mxu0 %v1919
        %1983 = vmatprep.subr.mxu0 %v1918
        %1984 = vmatpush1.msra.mxu0 %v1917
        %1985 = vmatprep.subr.mxu0 %v1916
        %1986 = vmatpush1.msra.mxu0 %v1915
        %1987 = vmatprep.subr.mxu0 %v1914
        %1988 = vmatpush1.msra.mxu0 %v1913
        %1989 = vmatprep.subr.mxu0 0.0
        %1990 = vmatpush2.msra.mxu0 0.0
        %1991 = vmatprep.subr.mxu0 0.0
        %1992 = vmatpush2.msra.mxu0 0.0
        %1993 = vmatprep.subr.mxu0 0.0
        %1994 = vmatpush2.msra.mxu0 0.0
        %1995 = vmatprep.subr.mxu0 0.0
        %1996 = vmatpush2.msra.mxu0 0.0
        %1997 = vmatprep.subr.mxu0 0.0
        %1998 = vmatpush2.msra.mxu0 0.0
        %1999 = vmatprep.subr.mxu0 0.0
        %2000 = vmatpush2.msra.mxu0 0.0
        %2001 = vmatprep.subr.mxu0 0.0
        %2002 = vmatpush2.msra.mxu0 0.0
        %2003 = vmatprep.subr.mxu0 0.0
        %2004 = vmatpush2.msra.mxu0 0.0
        %2005 = vmatprep.subr.mxu0 0.0
        %2006 = vmatpush2.msra.mxu0 0.0
        %2007 = vmatprep.subr.mxu0 0.0
        %2008 = vmatpush2.msra.mxu0 0.0
        %2009 = vmatprep.subr.mxu0 0.0
        %2010 = vmatpush2.msra.mxu0 0.0
        %2011 = vmatprep.subr.mxu0 0.0
        %2012 = vmatpush2.msra.mxu0 0.0
        %2013 = vmatprep.subr.mxu0 0.0
        %2014 = vmatpush2.msra.mxu0 0.0
        %2015 = vmatprep.subr.mxu0 0.0
        %2016 = vmatpush2.msra.mxu0 0.0
        %2017 = vmatprep.subr.mxu0 0.0
        %2018 = vmatpush2.msra.mxu0 0.0
        %2019 = vmatprep.subr.mxu0 0.0
        %2020 = vmatpush2.msra.mxu0 0.0
        %2021 = vmatprep.mubr.f32.mxu0 0.0
        %2022 = vmatmul.mubr.f32.gmra.mxu0 %v1910
        %v2023 = vpop.f32.mrf.mxu0
        %v2024 = vadd.f32 %v1950, %v2023
        %v2025 = vpop.f32.mrf.mxu0
        %v2026 = vadd.f32 %v1954, %v2025
        %2027 = vmatprep.mubr.f32.mxu0 0.0
        %2028 = vmatmul.mubr.f32.gmra.mxu0 %v1911
        %v2029 = vpop.f32.mrf.mxu0
        %v2030 = vadd.f32 %v1950, %v2029
        %v2031 = vpop.f32.mrf.mxu0
        %v2032 = vadd.f32 %v1954, %v2031
        %2033 = vmatprep.mubr.f32.mxu0 0.0
        %2034 = vmatmul.mubr.f32.gmra.mxu0 %v1912
        %v2035 = vpop.f32.mrf.mxu0
        %v2036 = vadd.f32 %v1950, %v2035
        %v2037 = vpop.f32.mrf.mxu0
        %v2038 = vadd.f32 %v1954, %v2037
        %2039 = vdwg.mxu0
        %v2040 = vmul.f32 %v2024, 1.702
        %v2041 = vmul.f32 %v2026, 1.702
        %v2042 = vmul.f32 %v2030, 1.702
        %v2043 = vmul.f32 %v2032, 1.702
        %v2044 = vmul.f32 %v2036, 1.702
        %v2045 = vmul.f32 %v2038, 1.702
        %v2046 = vxor.u32 %v2040, 2147483648
        %v2047 = vxor.u32 %v2041, 2147483648
        %v2048 = vxor.u32 %v2042, 2147483648
        %v2049 = vxor.u32 %v2043, 2147483648
        %v2050 = vxor.u32 %v2044, 2147483648
        %v2051 = vxor.u32 %v2045, 2147483648
        %v2052 = vmul.f32 %v2046, 1.442695
        %v2053 = vpow.pop %v2052
        %v2054 = vmul.f32 %v2047, 1.442695
        %v2055 = vpow.pop %v2054
        %v2056 = vmul.f32 %v2048, 1.442695
        %v2057 = vpow.pop %v2056
        %v2058 = vmul.f32 %v2049, 1.442695
        %v2059 = vpow.pop %v2058
        %v2060 = vmul.f32 %v2050, 1.442695
        %v2061 = vpow.pop %v2060
        %v2062 = vmul.f32 %v2051, 1.442695
        %v2063 = vpow.pop %v2062
        %v2064 = vadd.f32 %v2053, 1.0
        %v2065 = vadd.f32 %v2055, 1.0
        %v2066 = vadd.f32 %v2057, 1.0
        %v2067 = vadd.f32 %v2059, 1.0
        %v2068 = vadd.f32 %v2061, 1.0
        %v2069 = vadd.f32 %v2063, 1.0
        %v2070 = vrcp.pop %v2064
        %v2071 = vmul.f32 1.0, %v2070
        %v2072 = vrcp.pop %v2065
        %v2073 = vmul.f32 1.0, %v2072
        %v2074 = vrcp.pop %v2066
        %v2075 = vmul.f32 1.0, %v2074
        %v2076 = vrcp.pop %v2067
        %v2077 = vmul.f32 1.0, %v2076
        %v2078 = vrcp.pop %v2068
        %v2079 = vmul.f32 1.0, %v2078
        %v2080 = vrcp.pop %v2069
        %v2081 = vmul.f32 1.0, %v2080
        %v2082 = vmul.f32 %v2024, %v2071
        %v2083 = vmul.f32 %v2026, %v2073
        %v2084 = vmul.f32 %v2030, %v2075
        %v2085 = vmul.f32 %v2032, %v2077
        %v2086 = vmul.f32 %v2036, %v2079
        %v2087 = vmul.f32 %v2038, %v2081
        %v2088 = vld [vmem:[#allocation6] sm:$0xff]
        %v2089 = vld [vmem:[#allocation6 + $0x8] sm:$0xff]
        %v2090 = vld [vmem:[#allocation6 + $0x10] sm:$0xff]
        %v2091 = vld [vmem:[#allocation6 + $0x18] sm:$0xff]
        %v2092 = vld [vmem:[#allocation6 + $0x20] sm:$0xff]
        %v2093 = vld [vmem:[#allocation6 + $0x28] sm:$0xff]
        %v2094 = vld [vmem:[#allocation6 + $0x30] sm:$0xff]
        %v2095 = vld [vmem:[#allocation6 + $0x38] sm:$0xff]
        %v2096 = vld [vmem:[#allocation6 + $0x40] sm:$0xff]
        %v2097 = vld [vmem:[#allocation6 + $0x48] sm:$0xff]
        %v2098 = vld [vmem:[#allocation6 + $0x50] sm:$0xff]
        %v2099 = vld [vmem:[#allocation6 + $0x58] sm:$0xff]
        %v2100 = vld [vmem:[#allocation6 + $0x60] sm:$0xff]
        %v2101 = vld [vmem:[#allocation6 + $0x68] sm:$0xff]
        %v2102 = vld [vmem:[#allocation6 + $0x70] sm:$0xff]
        %v2103 = vld [vmem:[#allocation6 + $0x78] sm:$0xff]
        %v2104 = vld [vmem:[#allocation6 + $0x80] sm:$0xff]
        %v2105 = vld [vmem:[#allocation6 + $0x88] sm:$0xff]
        %v2106 = vld [vmem:[#allocation6 + $0x90] sm:$0xff]
        %v2107 = vld [vmem:[#allocation6 + $0x98] sm:$0xff]
        %v2108 = vld [vmem:[#allocation6 + $0xa0] sm:$0xff]
        %v2109 = vld [vmem:[#allocation6 + $0xa8] sm:$0xff]
        %v2110 = vld [vmem:[#allocation6 + $0xb0] sm:$0xff]
        %v2111 = vld [vmem:[#allocation6 + $0xb8] sm:$0xff]
        %v2112 = vld [vmem:[#allocation6 + $0xc0] sm:$0xff]
        %v2113 = vld [vmem:[#allocation6 + $0xc8] sm:$0xff]
        %v2114 = vld [vmem:[#allocation6 + $0xd0] sm:$0xff]
        %v2115 = vld [vmem:[#allocation6 + $0xd8] sm:$0xff]
        %v2116 = vld [vmem:[#allocation6 + $0xe0] sm:$0xff]
        %v2117 = vld [vmem:[#allocation6 + $0xe8] sm:$0xff]
        %v2118 = vld [vmem:[#allocation6 + $0xf0] sm:$0xff]
        %v2119 = vld [vmem:[#allocation6 + $0xf8] sm:$0xff]
        %2120 = vmatprep.subr.mxu0 0.0
        %2121 = vmatpush1.msra.mxu0 %v2103
        %2122 = vmatprep.subr.mxu0 0.0
        %2123 = vmatpush1.msra.mxu0 %v2102
        %2124 = vmatprep.subr.mxu0 0.0
        %2125 = vmatpush1.msra.mxu0 %v2101
        %2126 = vmatprep.subr.mxu0 0.0
        %2127 = vmatpush1.msra.mxu0 %v2100
        %2128 = vmatprep.subr.mxu0 0.0
        %2129 = vmatpush1.msra.mxu0 %v2099
        %2130 = vmatprep.subr.mxu0 0.0
        %2131 = vmatpush1.msra.mxu0 %v2098
        %2132 = vmatprep.subr.mxu0 0.0
        %2133 = vmatpush1.msra.mxu0 %v2097
        %2134 = vmatprep.subr.mxu0 0.0
        %2135 = vmatpush1.msra.mxu0 %v2096
        %2136 = vmatprep.subr.mxu0 0.0
        %2137 = vmatpush1.msra.mxu0 %v2095
        %2138 = vmatprep.subr.mxu0 0.0
        %2139 = vmatpush1.msra.mxu0 %v2094
        %2140 = vmatprep.subr.mxu0 0.0
        %2141 = vmatpush1.msra.mxu0 %v2093
        %2142 = vmatprep.subr.mxu0 0.0
        %2143 = vmatpush1.msra.mxu0 %v2092
        %2144 = vmatprep.subr.mxu0 0.0
        %2145 = vmatpush1.msra.mxu0 %v2091
        %2146 = vmatprep.subr.mxu0 0.0
        %2147 = vmatpush1.msra.mxu0 %v2090
        %2148 = vmatprep.subr.mxu0 0.0
        %2149 = vmatpush1.msra.mxu0 %v2089
        %2150 = vmatprep.subr.mxu0 0.0
        %2151 = vmatpush1.msra.mxu0 %v2088
        %2152 = vmatprep.subr.mxu0 0.0
        %2153 = vmatpush2.msra.mxu0 %v2119
        %2154 = vmatprep.subr.mxu0 0.0
        %2155 = vmatpush2.msra.mxu0 %v2118
        %2156 = vmatprep.subr.mxu0 0.0
        %2157 = vmatpush2.msra.mxu0 %v2117
        %2158 = vmatprep.subr.mxu0 0.0
        %2159 = vmatpush2.msra.mxu0 %v2116
        %2160 = vmatprep.subr.mxu0 0.0
        %2161 = vmatpush2.msra.mxu0 %v2115
        %2162 = vmatprep.subr.mxu0 0.0
        %2163 = vmatpush2.msra.mxu0 %v2114
        %2164 = vmatprep.subr.mxu0 0.0
        %2165 = vmatpush2.msra.mxu0 %v2113
        %2166 = vmatprep.subr.mxu0 0.0
        %2167 = vmatpush2.msra.mxu0 %v2112
        %2168 = vmatprep.subr.mxu0 0.0
        %2169 = vmatpush2.msra.mxu0 %v2111
        %2170 = vmatprep.subr.mxu0 0.0
        %2171 = vmatpush2.msra.mxu0 %v2110
        %2172 = vmatprep.subr.mxu0 0.0
        %2173 = vmatpush2.msra.mxu0 %v2109
        %2174 = vmatprep.subr.mxu0 0.0
        %2175 = vmatpush2.msra.mxu0 %v2108
        %2176 = vmatprep.subr.mxu0 0.0
        %2177 = vmatpush2.msra.mxu0 %v2107
        %2178 = vmatprep.subr.mxu0 0.0
        %2179 = vmatpush2.msra.mxu0 %v2106
        %2180 = vmatprep.subr.mxu0 0.0
        %2181 = vmatpush2.msra.mxu0 %v2105
        %2182 = vmatprep.subr.mxu0 0.0
        %2183 = vmatpush2.msra.mxu0 %v2104
        %2184 = vmatprep.mubr.f32.mxu0 %v2083
        %2185 = vmatmul.mubr.f32.gmra.mxu0 %v2082
        %v2186 = vpop.f32.mrf.mxu0
        %v2187 = vadd.f32 0.0, %v2186
        %v2188 = vpop.f32.mrf.mxu0
        %2189 = vmatprep.mubr.f32.mxu0 %v2085
        %2190 = vmatmul.mubr.f32.gmra.mxu0 %v2084
        %v2191 = vpop.f32.mrf.mxu0
        %v2192 = vadd.f32 0.0, %v2191
        %v2193 = vpop.f32.mrf.mxu0
        %2194 = vmatprep.mubr.f32.mxu0 %v2087
        %2195 = vmatmul.mubr.f32.gmra.mxu0 %v2086
        %v2196 = vpop.f32.mrf.mxu0
        %v2197 = vadd.f32 0.0, %v2196
        %v2198 = vpop.f32.mrf.mxu0
        %2199 = vdwg.mxu0
        %v2200 = vadd.f32 %v1857, %v2187
        %v2201 = vadd.f32 %v1858, %v2192
        %v2202 = vadd.f32 %v1859, %v2197
        %v2203 = vld [vmem:[%s12] sm:$0x1]
        %v2205 = vlaneseq
        %v2206 = vshrl.u32 %v2205, 7
        %v2207 = vsub.s32 0, %v2206
        %v2208 = vrot.slane %v2203, %v2207
        %v2210 = vadd.f32 %v2200, %v2208
        %v2211 = vadd.f32 %v2201, %v2208
        %v2212 = vadd.f32 %v2202, %v2208
        %2213 = vst [vmem:[%s484] sm:$0xff] %v2210
        %2214 = vst [vmem:[%s484 + $0x8] sm:$0xff] %v2211
        %2215 = vst [vmem:[%s484 + $0x10] sm:$0xff] %v2212
        %p2216 = scmp.lt.s32.totalorder %s26, 1
        %s2217 = scalar_select %p2216, %s26, 1
        %s2218 = smul.addr %s2217, 3
        %s2219 = smul.addr %s2218, 8
        %s2220 = scalar_lea.vmem %s13, %s2219
        // Predicated region
        $region85: #{image_encoder_forward.6} parent=71 // pred_check
          %p2221 = pneg %p322
        $region86: #{image_encoder_forward.6} parent=71 // pred_check_branch
          %2223 = sbr.rel (%p2221) target = $region88
        $region87: #{image_encoder_forward.6} parent=71 // pred_region
          _
        $region88: #{image_encoder_forward.6} parent=71 // pred_fallthru
          _
      $region72: #{image_encoder_forward.6} parent=5 // pred_fallthru
        _
      %p2224 = scmp.le.s32.totalorder 2, %s21
      // Predicated region
      $region89: #{image_encoder_forward.6} parent=5 // pred_check
        %p2225 = pneg %p2224
      $region90: #{image_encoder_forward.6} parent=5 // pred_check_branch
        %2227 = sbr.rel (%p2225) target = $region92
      $region91: #{image_encoder_forward.6} parent=5 // pred_region
        %s2228 = ssub.s32 %s21, 2
        // Predicated region
        $region93: #{image_encoder_forward.6} parent=91 // pred_check
          %p2229 = pneg %p328
        $region94: #{image_encoder_forward.6} parent=91 // pred_check_branch
          %2231 = sbr.rel (%p2229) target = $region96
        $region95: #{image_encoder_forward.6} parent=91 // pred_region
          %p2232 = scmp.lt.s32.totalorder %s27, 1
          %s2233 = scalar_select %p2232, %s27, 1
          %s2234 = smul.addr %s2233, 3
          %s2235 = smul.addr %s2234, 8
          %s2236 = scalar_lea.vmem %s13, %s2235
        $region96: #{image_encoder_forward.6} parent=91 // pred_fallthru
          _
      $region92: #{image_encoder_forward.6} parent=5 // pred_fallthru
        _
    $region6: #{image_encoder_forward.6} parent=1 // loop_footer
      %s25 = sadd.s32 1, %s21
    $region7: #{image_encoder_forward.6} parent=1 // loop_footer_branch
      %20 = sbr.rel target = $region3
    $region8: #{image_encoder_forward.6} parent=1 // loop_exit
      _
    %2237 = vsyncpa [#allocation3], 1
    %s2238 = scalar_lea.sflag [#allocation3], 1
    %2239 = vsyncpa %s2238, 1
    %2240 = vsyncpa [#allocation5], 1

// kernel: image_encoder_forward.5
$region0: #{image_encoder_forward.5}
  #allocation0 [shape = 'u32[]', space=smem, size = 0x4, offset = 0x4, fixed_abs, tag = 'smem constant byte address 0x4 - core index']
  #allocation1 [shape = 'u32[144,128]{1,0:T(1,128)}', space=vmem, size = 0x12000, scoped, tag = 'internal scratch']
  %s0 = inlined_call_operand.vmem [shape: f32[2,24,128], index: 0, kind: input, shape index: {}]
  %s1 = inlined_call_operand.vmem [shape: f32[1,128], index: 1, kind: input, shape index: {}]
  %s2 = inlined_call_operand.vmem [shape: f32[1,128], index: 2, kind: input, shape index: {}]
  %s3 = inlined_call_operand.vmem [shape: f32[128,384], index: 3, kind: input, shape index: {}]
  %s4 = inlined_call_operand.vmem [shape: f32[1,384], index: 4, kind: input, shape index: {}]
  %s5 = inlined_call_operand.hbm [shape: f32[128,128], index: 5, kind: input, shape index: {}]
  %s6 = inlined_call_operand.vmem [shape: f32[1,128], index: 6, kind: input, shape index: {}]
  %s7 = inlined_call_operand.vmem [shape: f32[1,128], index: 7, kind: input, shape index: {}]
  %s8 = inlined_call_operand.vmem [shape: f32[1,128], index: 8, kind: input, shape index: {}]
  %s9 = inlined_call_operand.vmem [shape: f32[128,256], index: 9, kind: input, shape index: {}]
  %s10 = inlined_call_operand.vmem [shape: f32[1,256], index: 10, kind: input, shape index: {}]
  %s11 = inlined_call_operand.hbm [shape: f32[256,128], index: 11, kind: input, shape index: {}]
  %s12 = inlined_call_operand.vmem [shape: f32[1,128], index: 12, kind: input, shape index: {}]
  %s13 = inlined_call_operand.vmem [shape: f32[2,24,128], index: 13, kind: output, shape index: {}]
  %s14 = sld [smem:[#allocation0]]
  $region93: #{image_encoder_forward.5} parent=0
    _
  %s16 = ssub.s32 1, %s14
  %s17 = scalar_select 0, %s16, %s14
  $region1: #{image_encoder_forward.5} parent=0
    #allocation2 [shape = 'u8[65536]{0}', space=vmem, size = 0x10000, scoped, tag = 'input window, operand 5, single buffered']
    #allocation3 [shape = 's32[2]{0}', space=sflag, size = 0x8, scoped, tag = 'scoped memory for image_encoder_forward.5']
    #allocation4 [shape = 'u8[131072]{0}', space=vmem, size = 0x20000, scoped, tag = 'input window, operand 11, single buffered']
    #allocation5 [shape = 's32[1]{0}', space=sflag, size = 0x4, scoped, tag = 'scoped memory for image_encoder_forward.5']
    %18 = vsyncpa [#allocation3], 0
    %19 = vsyncpa [#allocation5], 0
    loop: start=0, step=1, limit=4
    $region2: #{image_encoder_forward.5} parent=1 // loop_pre_header
      _
    $region3: #{image_encoder_forward.5} parent=1 // loop_header
      %s21 = sphi 0, %s25
      %p22 = scmp.ge.s32.totalorder %s21, 4
      %s31 = sphi 0, %s33
      %s34 = sphi 0, %s31
      %s35 = sphi 0, %s34
      %s51 = sphi 0, %s35
      %s55 = sphi 0, %s55
      %s57 = sphi 0, %s55
      %s58 = sphi 0, %s57
      %s72 = sphi 0, %s58
      %s76 = sphi 0, %s76
      %s78 = sphi 0, %s76
      %s79 = sphi 0, %s78
      %s93 = sphi 0, %s79
      %s97 = sphi 0, %s97
      %s99 = sphi 0, %s97
      %s100 = sphi 0, %s99
      %s114 = sphi 0, %s100
      %s118 = sphi 0, %s118
      %s120 = sphi 0, %s118
      %s121 = sphi 0, %s120
      %s135 = sphi 0, %s121
      %s139 = sphi 0, %s139
      %s141 = sphi 0, %s139
      %s142 = sphi 0, %s141
      %s156 = sphi 0, %s142
      %s160 = sphi 0, %s160
      %s162 = sphi 0, %s160
      %s163 = sphi 0, %s162
      %s177 = sphi 0, %s163
      %s181 = sphi 0, %s181
      %s183 = sphi 0, %s181
      %s184 = sphi 0, %s183
      %s198 = sphi 0, %s184
      %s202 = sphi 0, %s202
      %s204 = sphi 0, %s202
      %s205 = sphi 0, %s204
      %s219 = sphi 0, %s205
      %s223 = sphi 0, %s223
      %s225 = sphi 0, %s223
      %s226 = sphi 0, %s225
      %s240 = sphi 0, %s226
      %s244 = sphi 0, %s244
      %s246 = sphi 0, %s244
      %s247 = sphi 0, %s246
      %s261 = sphi 0, %s247
      %s265 = sphi 0, %s265
      %s267 = sphi 0, %s265
      %s268 = sphi 0, %s267
      %s282 = sphi 0, %s268
      %s286 = sphi 0, %s286
      %s288 = sphi 0, %s286
      %s289 = sphi 0, %s288
      %s303 = sphi 0, %s289
      %s309 = sphi 0, %s311
      %s312 = sphi 0, %s309
      %s313 = sphi 0, %s312
      %s329 = sphi 0, %s313
    $region4: #{image_encoder_forward.5} parent=1 // loop_header_branch
      %24 = sbr.rel (%p22) target = $region8
    $region5: #{image_encoder_forward.5} parent=1 // loop_body
      %s26 = ssub.s32 %s21, 1
      %s27 = ssub.s32 %s21, 2
      %s28 = sadd.s32 %s21, 1
      %s29 = ssub.s32 %s21, %s28
      %p30 = scmp.eq.s32.totalorder %s29, 0
      %s32 = sadd.s32 %s31, 1
      %s33 = scalar_select %p30, %s31, %s32
      %p36 = pneg %p30
      %p37 = scmp.eq.s32.totalorder %s21, 1
      %p38 = por %p36, %p37
      %p39 = scmp.ne.s32.totalorder %s31, %s34
      %p40 = scmp.eq.s32.totalorder %s21, 0
      %p41 = por %p39, %p40
      %p42 = scmp.ne.s32.totalorder %s31, %s34
      %p43 = scmp.eq.s32.totalorder %s26, 1
      %p44 = por %p42, %p43
      %p45 = scmp.ne.s32.totalorder %s34, %s35
      %p46 = scmp.eq.s32.totalorder %s26, 0
      %p47 = por %p45, %p46
      %p48 = scmp.ne.s32.totalorder %s34, %s35
      %p49 = scmp.eq.s32.totalorder %s27, 1
      %p50 = por %p48, %p49
      %p52 = scmp.ne.s32.totalorder %s35, %s51
      %p53 = scmp.eq.s32.totalorder %s27, 0
      %p54 = por %p52, %p53
      %s56 = sadd.s32 %s55, 1
      %p59 = scmp.eq.s32.totalorder %s21, 1
      %p60 = scmp.ne.s32.totalorder %s55, %s57
      %p61 = scmp.eq.s32.totalorder %s21, 0
      %p62 = por %p60, %p61
      %p63 = scmp.ne.s32.totalorder %s55, %s57
      %p64 = scmp.eq.s32.totalorder %s26, 1
      %p65 = por %p63, %p64
      %p66 = scmp.ne.s32.totalorder %s57, %s58
      %p67 = scmp.eq.s32.totalorder %s26, 0
      %p68 = por %p66, %p67
      %p69 = scmp.ne.s32.totalorder %s57, %s58
      %p70 = scmp.eq.s32.totalorder %s27, 1
      %p71 = por %p69, %p70
      %p73 = scmp.ne.s32.totalorder %s58, %s72
      %p74 = scmp.eq.s32.totalorder %s27, 0
      %p75 = por %p73, %p74
      %s77 = sadd.s32 %s76, 1
      %p80 = scmp.eq.s32.totalorder %s21, 1
      %p81 = scmp.ne.s32.totalorder %s76, %s78
      %p82 = scmp.eq.s32.totalorder %s21, 0
      %p83 = por %p81, %p82
      %p84 = scmp.ne.s32.totalorder %s76, %s78
      %p85 = scmp.eq.s32.totalorder %s26, 1
      %p86 = por %p84, %p85
      %p87 = scmp.ne.s32.totalorder %s78, %s79
      %p88 = scmp.eq.s32.totalorder %s26, 0
      %p89 = por %p87, %p88
      %p90 = scmp.ne.s32.totalorder %s78, %s79
      %p91 = scmp.eq.s32.totalorder %s27, 1
      %p92 = por %p90, %p91
      %p94 = scmp.ne.s32.totalorder %s79, %s93
      %p95 = scmp.eq.s32.totalorder %s27, 0
      %p96 = por %p94, %p95
      %s98 = sadd.s32 %s97, 1
      %p101 = scmp.eq.s32.totalorder %s21, 1
      %p102 = scmp.ne.s32.totalorder %s97, %s99
      %p103 = scmp.eq.s32.totalorder %s21, 0
      %p104 = por %p102, %p103
      %p105 = scmp.ne.s32.totalorder %s97, %s99
      %p106 = scmp.eq.s32.totalorder %s26, 1
      %p107 = por %p105, %p106
      %p108 = scmp.ne.s32.totalorder %s99, %s100
      %p109 = scmp.eq.s32.totalorder %s26, 0
      %p110 = por %p108, %p109
      %p111 = scmp.ne.s32.totalorder %s99, %s100
      %p112 = scmp.eq.s32.totalorder %s27, 1
      %p113 = por %p111, %p112
      %p115 = scmp.ne.s32.totalorder %s100, %s114
      %p116 = scmp.eq.s32.totalorder %s27, 0
      %p117 = por %p115, %p116
      %s119 = sadd.s32 %s118, 1
      %p122 = scmp.eq.s32.totalorder %s21, 1
      %p123 = scmp.ne.s32.totalorder %s118, %s120
      %p124 = scmp.eq.s32.totalorder %s21, 0
      %p125 = por %p123, %p124
      %p126 = scmp.ne.s32.totalorder %s118, %s120
      %p127 = scmp.eq.s32.totalorder %s26, 1
      %p128 = por %p126, %p127
      %p129 = scmp.ne.s32.totalorder %s120, %s121
      %p130 = scmp.eq.s32.totalorder %s26, 0
      %p131 = por %p129, %p130
      %p132 = scmp.ne.s32.totalorder %s120, %s121
      %p133 = scmp.eq.s32.totalorder %s27, 1
      %p134 = por %p132, %p133
      %p136 = scmp.ne.s32.totalorder %s121, %s135
      %p137 = scmp.eq.s32.totalorder %s27, 0
      %p138 = por %p136, %p137
      %s140 = sadd.s32 %s139, 1
      %p143 = scmp.eq.s32.totalorder %s21, 1
      %p144 = scmp.ne.s32.totalorder %s139, %s141
      %p145 = scmp.eq.s32.totalorder %s21, 0
      %p146 = por %p144, %p145
      %p147 = scmp.ne.s32.totalorder %s139, %s141
      %p148 = scmp.eq.s32.totalorder %s26, 1
      %p149 = por %p147, %p148
      %p150 = scmp.ne.s32.totalorder %s141, %s142
      %p151 = scmp.eq.s32.totalorder %s26, 0
      %p152 = por %p150, %p151
      %p153 = scmp.ne.s32.totalorder %s141, %s142
      %p154 = scmp.eq.s32.totalorder %s27, 1
      %p155 = por %p153, %p154
      %p157 = scmp.ne.s32.totalorder %s142, %s156
      %p158 = scmp.eq.s32.totalorder %s27, 0
      %p159 = por %p157, %p158
      %s161 = sadd.s32 %s160, 1
      %p164 = scmp.eq.s32.totalorder %s21, 1
      %p165 = scmp.ne.s32.totalorder %s160, %s162
      %p166 = scmp.eq.s32.totalorder %s21, 0
      %p167 = por %p165, %p166
      %p168 = scmp.ne.s32.totalorder %s160, %s162
      %p169 = scmp.eq.s32.totalorder %s26, 1
      %p170 = por %p168, %p169
      %p171 = scmp.ne.s32.totalorder %s162, %s163
      %p172 = scmp.eq.s32.totalorder %s26, 0
      %p173 = por %p171, %p172
      %p174 = scmp.ne.s32.totalorder %s162, %s163
      %p175 = scmp.eq.s32.totalorder %s27, 1
      %p176 = por %p174, %p175
      %p178 = scmp.ne.s32.totalorder %s163, %s177
      %p179 = scmp.eq.s32.totalorder %s27, 0
      %p180 = por %p178, %p179
      %s182 = sadd.s32 %s181, 1
      %p185 = scmp.eq.s32.totalorder %s21, 1
      %p186 = scmp.ne.s32.totalorder %s181, %s183
      %p187 = scmp.eq.s32.totalorder %s21, 0
      %p188 = por %p186, %p187
      %p189 = scmp.ne.s32.totalorder %s181, %s183
      %p190 = scmp.eq.s32.totalorder %s26, 1
      %p191 = por %p189, %p190
      %p192 = scmp.ne.s32.totalorder %s183, %s184
      %p193 = scmp.eq.s32.totalorder %s26, 0
      %p194 = por %p192, %p193
      %p195 = scmp.ne.s32.totalorder %s183, %s184
      %p196 = scmp.eq.s32.totalorder %s27, 1
      %p197 = por %p195, %p196
      %p199 = scmp.ne.s32.totalorder %s184, %s198
      %p200 = scmp.eq.s32.totalorder %s27, 0
      %p201 = por %p199, %p200
      %s203 = sadd.s32 %s202, 1
      %p206 = scmp.eq.s32.totalorder %s21, 1
      %p207 = scmp.ne.s32.totalorder %s202, %s204
      %p208 = scmp.eq.s32.totalorder %s21, 0
      %p209 = por %p207, %p208
      %p210 = scmp.ne.s32.totalorder %s202, %s204
      %p211 = scmp.eq.s32.totalorder %s26, 1
      %p212 = por %p210, %p211
      %p213 = scmp.ne.s32.totalorder %s204, %s205
      %p214 = scmp.eq.s32.totalorder %s26, 0
      %p215 = por %p213, %p214
      %p216 = scmp.ne.s32.totalorder %s204, %s205
      %p217 = scmp.eq.s32.totalorder %s27, 1
      %p218 = por %p216, %p217
      %p220 = scmp.ne.s32.totalorder %s205, %s219
      %p221 = scmp.eq.s32.totalorder %s27, 0
      %p222 = por %p220, %p221
      %s224 = sadd.s32 %s223, 1
      %p227 = scmp.eq.s32.totalorder %s21, 1
      %p228 = scmp.ne.s32.totalorder %s223, %s225
      %p229 = scmp.eq.s32.totalorder %s21, 0
      %p230 = por %p228, %p229
      %p231 = scmp.ne.s32.totalorder %s223, %s225
      %p232 = scmp.eq.s32.totalorder %s26, 1
      %p233 = por %p231, %p232
      %p234 = scmp.ne.s32.totalorder %s225, %s226
      %p235 = scmp.eq.s32.totalorder %s26, 0
      %p236 = por %p234, %p235
      %p237 = scmp.ne.s32.totalorder %s225, %s226
      %p238 = scmp.eq.s32.totalorder %s27, 1
      %p239 = por %p237, %p238
      %p241 = scmp.ne.s32.totalorder %s226, %s240
      %p242 = scmp.eq.s32.totalorder %s27, 0
      %p243 = por %p241, %p242
      %s245 = sadd.s32 %s244, 1
      %p248 = scmp.eq.s32.totalorder %s21, 1
      %p249 = scmp.ne.s32.totalorder %s244, %s246
      %p250 = scmp.eq.s32.totalorder %s21, 0
      %p251 = por %p249, %p250
      %p252 = scmp.ne.s32.totalorder %s244, %s246
      %p253 = scmp.eq.s32.totalorder %s26, 1
      %p254 = por %p252, %p253
      %p255 = scmp.ne.s32.totalorder %s246, %s247
      %p256 = scmp.eq.s32.totalorder %s26, 0
      %p257 = por %p255, %p256
      %p258 = scmp.ne.s32.totalorder %s246, %s247
      %p259 = scmp.eq.s32.totalorder %s27, 1
      %p260 = por %p258, %p259
      %p262 = scmp.ne.s32.totalorder %s247, %s261
      %p263 = scmp.eq.s32.totalorder %s27, 0
      %p264 = por %p262, %p263
      %s266 = sadd.s32 %s265, 1
      %p269 = scmp.eq.s32.totalorder %s21, 1
      %p270 = scmp.ne.s32.totalorder %s265, %s267
      %p271 = scmp.eq.s32.totalorder %s21, 0
      %p272 = por %p270, %p271
      %p273 = scmp.ne.s32.totalorder %s265, %s267
      %p274 = scmp.eq.s32.totalorder %s26, 1
      %p275 = por %p273, %p274
      %p276 = scmp.ne.s32.totalorder %s267, %s268
      %p277 = scmp.eq.s32.totalorder %s26, 0
      %p278 = por %p276, %p277
      %p279 = scmp.ne.s32.totalorder %s267, %s268
      %p280 = scmp.eq.s32.totalorder %s27, 1
      %p281 = por %p279, %p280
      %p283 = scmp.ne.s32.totalorder %s268, %s282
      %p284 = scmp.eq.s32.totalorder %s27, 0
      %p285 = por %p283, %p284
      %s287 = sadd.s32 %s286, 1
      %p290 = scmp.eq.s32.totalorder %s21, 1
      %p291 = scmp.ne.s32.totalorder %s286, %s288
      %p292 = scmp.eq.s32.totalorder %s21, 0
      %p293 = por %p291, %p292
      %p294 = scmp.ne.s32.totalorder %s286, %s288
      %p295 = scmp.eq.s32.totalorder %s26, 1
      %p296 = por %p294, %p295
      %p297 = scmp.ne.s32.totalorder %s288, %s289
      %p298 = scmp.eq.s32.totalorder %s26, 0
      %p299 = por %p297, %p298
      %p300 = scmp.ne.s32.totalorder %s288, %s289
      %p301 = scmp.eq.s32.totalorder %s27, 1
      %p302 = por %p300, %p301
      %p304 = scmp.ne.s32.totalorder %s289, %s303
      %p305 = scmp.eq.s32.totalorder %s27, 0
      %p306 = por %p304, %p305
      %s307 = ssub.s32 %s21, %s28
      %p308 = scmp.eq.s32.totalorder %s307, 0
      %s310 = sadd.s32 %s309, 1
      %s311 = scalar_select %p308, %s309, %s310
      %p314 = pneg %p308
      %p315 = scmp.eq.s32.totalorder %s21, 1
      %p316 = por %p314, %p315
      %p317 = scmp.ne.s32.totalorder %s309, %s312
      %p318 = scmp.eq.s32.totalorder %s21, 0
      %p319 = por %p317, %p318
      %p320 = scmp.ne.s32.totalorder %s309, %s312
      %p321 = scmp.eq.s32.totalorder %s26, 1
      %p322 = por %p320, %p321
      %p323 = scmp.ne.s32.totalorder %s312, %s313
      %p324 = scmp.eq.s32.totalorder %s26, 0
      %p325 = por %p323, %p324
      %p326 = scmp.ne.s32.totalorder %s312, %s313
      %p327 = scmp.eq.s32.totalorder %s27, 1
      %p328 = por %p326, %p327
      %p330 = scmp.ne.s32.totalorder %s313, %s329
      %p331 = scmp.eq.s32.totalorder %s27, 0
      %p332 = por %p330, %p331
      %p333 = scmp.le.s32.totalorder 1, %s21
      %p334 = scmp.lt.s32.totalorder %s21, 3
      %p335 = pnand %p333, %p334
      %p336 = pneg %p335
      // Predicated region
      $region9: #{image_encoder_forward.5} parent=5 // pred_check
        _
      $region10: #{image_encoder_forward.5} parent=5 // pred_check_branch
        %338 = sbr.rel (%p335) target = $region12
      $region11: #{image_encoder_forward.5} parent=5 // pred_region
        %s339 = ssub.s32 %s21, 1
        // Predicated region
        $region13: #{image_encoder_forward.5} parent=11 // pred_check
          %p340 = pneg %p68
        $region14: #{image_encoder_forward.5} parent=11 // pred_check_branch
          %342 = sbr.rel (%p340) target = $region16
        $region15: #{image_encoder_forward.5} parent=11 // pred_region
          _
        $region16: #{image_encoder_forward.5} parent=11 // pred_fallthru
          _
        // Predicated region
        $region17: #{image_encoder_forward.5} parent=11 // pred_check
          %p343 = pneg %p89
        $region18: #{image_encoder_forward.5} parent=11 // pred_check_branch
          %345 = sbr.rel (%p343) target = $region20
        $region19: #{image_encoder_forward.5} parent=11 // pred_region
          _
        $region20: #{image_encoder_forward.5} parent=11 // pred_fallthru
          _
        // Predicated region
        $region21: #{image_encoder_forward.5} parent=11 // pred_check
          %p346 = pneg %p110
        $region22: #{image_encoder_forward.5} parent=11 // pred_check_branch
          %348 = sbr.rel (%p346) target = $region24
        $region23: #{image_encoder_forward.5} parent=11 // pred_region
          _
        $region24: #{image_encoder_forward.5} parent=11 // pred_fallthru
          _
        // Predicated region
        $region25: #{image_encoder_forward.5} parent=11 // pred_check
          %p349 = pneg %p131
        $region26: #{image_encoder_forward.5} parent=11 // pred_check_branch
          %351 = sbr.rel (%p349) target = $region28
        $region27: #{image_encoder_forward.5} parent=11 // pred_region
          _
        $region28: #{image_encoder_forward.5} parent=11 // pred_fallthru
          _
        // Predicated region
        $region29: #{image_encoder_forward.5} parent=11 // pred_check
          %p352 = pneg %p152
        $region30: #{image_encoder_forward.5} parent=11 // pred_check_branch
          %354 = sbr.rel (%p352) target = $region32
        $region31: #{image_encoder_forward.5} parent=11 // pred_region
          %s356 = ssub.s32 2048, 2048
          %357 = vsyncadd [#allocation3], %s356
          %s358 = sshll.u32 [#allocation2], 4
          %s359 = int_to_ptr.vmem [resolvable:$true] %s358
          %364 = dma.hbm_to_vmem [thread:$0]  %s5, 2048, %s359, [#allocation3], 128, 128, 8
        $region32: #{image_encoder_forward.5} parent=11 // pred_fallthru
          _
        // Predicated region
        $region33: #{image_encoder_forward.5} parent=11 // pred_check
          %p365 = pneg %p173
        $region34: #{image_encoder_forward.5} parent=11 // pred_check_branch
          %367 = sbr.rel (%p365) target = $region36
        $region35: #{image_encoder_forward.5} parent=11 // pred_region
          _
        $region36: #{image_encoder_forward.5} parent=11 // pred_fallthru
          _
        // Predicated region
        $region37: #{image_encoder_forward.5} parent=11 // pred_check
          %p368 = pneg %p194
        $region38: #{image_encoder_forward.5} parent=11 // pred_check_branch
          %370 = sbr.rel (%p368) target = $region40
        $region39: #{image_encoder_forward.5} parent=11 // pred_region
          _
        $region40: #{image_encoder_forward.5} parent=11 // pred_fallthru
          _
        // Predicated region
        $region41: #{image_encoder_forward.5} parent=11 // pred_check
          %p371 = pneg %p215
        $region42: #{image_encoder_forward.5} parent=11 // pred_check_branch
          %373 = sbr.rel (%p371) target = $region44
        $region43: #{image_encoder_forward.5} parent=11 // pred_region
          _
        $region44: #{image_encoder_forward.5} parent=11 // pred_fallthru
          _
        // Predicated region
        $region45: #{image_encoder_forward.5} parent=11 // pred_check
          %p374 = pneg %p236
        $region46: #{image_encoder_forward.5} parent=11 // pred_check_branch
          %376 = sbr.rel (%p374) target = $region48
        $region47: #{image_encoder_forward.5} parent=11 // pred_region
          _
        $region48: #{image_encoder_forward.5} parent=11 // pred_fallthru
          _
        // Predicated region
        $region49: #{image_encoder_forward.5} parent=11 // pred_check
          %p377 = pneg %p257
        $region50: #{image_encoder_forward.5} parent=11 // pred_check_branch
          %379 = sbr.rel (%p377) target = $region52
        $region51: #{image_encoder_forward.5} parent=11 // pred_region
          _
        $region52: #{image_encoder_forward.5} parent=11 // pred_fallthru
          _
        // Predicated region
        $region53: #{image_encoder_forward.5} parent=11 // pred_check
          %p380 = pneg %p278
        $region54: #{image_encoder_forward.5} parent=11 // pred_check_branch
          %382 = sbr.rel (%p380) target = $region56
        $region55: #{image_encoder_forward.5} parent=11 // pred_region
          %s384 = ssub.s32 4096, 4096
          %385 = vsyncadd [#allocation5], %s384
          %s386 = sshll.u32 [#allocation4], 4
          %s387 = int_to_ptr.vmem [resolvable:$true] %s386
          %392 = dma.hbm_to_vmem [thread:$0]  %s11, 4096, %s387, [#allocation5], 128, 128, 8
        $region56: #{image_encoder_forward.5} parent=11 // pred_fallthru
          _
        // Predicated region
        $region57: #{image_encoder_forward.5} parent=11 // pred_check
          %p393 = pneg %p299
        $region58: #{image_encoder_forward.5} parent=11 // pred_check_branch
          %395 = sbr.rel (%p393) target = $region60
        $region59: #{image_encoder_forward.5} parent=11 // pred_region
          _
        $region60: #{image_encoder_forward.5} parent=11 // pred_fallthru
          _
      $region12: #{image_encoder_forward.5} parent=5 // pred_fallthru
        _
      %p396 = scmp.lt.s32.totalorder %s21, 2
      // Predicated region
      $region61: #{image_encoder_forward.5} parent=5 // pred_check
        %p397 = pneg %p396
      $region62: #{image_encoder_forward.5} parent=5 // pred_check_branch
        %399 = sbr.rel (%p397) target = $region64
      $region63: #{image_encoder_forward.5} parent=5 // pred_region
        // Predicated region
        $region65: #{image_encoder_forward.5} parent=63 // pred_check
          %p400 = pneg %p41
        $region66: #{image_encoder_forward.5} parent=63 // pred_check_branch
          %402 = sbr.rel (%p400) target = $region68
        $region67: #{image_encoder_forward.5} parent=63 // pred_region
          %p403 = scmp.lt.s32.totalorder %s21, 1
          %s404 = scalar_select %p403, %s21, 1
          %s405 = smul.addr %s404, 3
          %s406 = smul.addr %s405, 8
          %s407 = scalar_lea.vmem %s0, %s406
        $region68: #{image_encoder_forward.5} parent=63 // pred_fallthru
          _
      $region64: #{image_encoder_forward.5} parent=5 // pred_fallthru
        _
      %p408 = scmp.le.s32.totalorder 1, %s21
      %p409 = scmp.lt.s32.totalorder %s21, 3
      %p410 = pnand %p408, %p409
      %p411 = pneg %p410
      // Predicated region
      $region69: #{image_encoder_forward.5} parent=5 // pred_check
        _
      $region70: #{image_encoder_forward.5} parent=5 // pred_check_branch
        %413 = sbr.rel (%p410) target = $region72
      $region71: #{image_encoder_forward.5} parent=5 // pred_region
        %s414 = ssub.s32 %s21, 1
        // Predicated region
        $region73: #{image_encoder_forward.5} parent=71 // pred_check
          %p415 = pneg %p152
        $region74: #{image_encoder_forward.5} parent=71 // pred_check_branch
          %417 = sbr.rel (%p415) target = $region76
        $region75: #{image_encoder_forward.5} parent=71 // pred_region
          %418 = dma.done [#allocation3], 2048
        $region76: #{image_encoder_forward.5} parent=71 // pred_fallthru
          _
        // Predicated region
        $region77: #{image_encoder_forward.5} parent=71 // pred_check
          %p419 = pneg %p278
        $region78: #{image_encoder_forward.5} parent=71 // pred_check_branch
          %421 = sbr.rel (%p419) target = $region80
        $region79: #{image_encoder_forward.5} parent=71 // pred_region
          %422 = dma.done [#allocation5], 4096
        $region80: #{image_encoder_forward.5} parent=71 // pred_fallthru
          _
        %p423 = scmp.lt.s32.totalorder %s26, 1
        %s424 = scalar_select %p423, %s26, 1
        %s425 = smul.addr %s424, 3
        %s426 = smul.addr %s425, 8
        %s427 = scalar_lea.vmem %s0, %s426
        %p428 = pneg %p47
        %p429 = pneg %p44
        %p430 = pneg %p68
        %p431 = pneg %p65
        %p432 = pneg %p89
        %p433 = pneg %p86
        %p434 = pneg %p110
        %p435 = pneg %p107
        %p436 = pneg %p131
        %p437 = pneg %p128
        %p438 = pneg %p152
        %p439 = pneg %p149
        %p440 = pneg %p173
        %p441 = pneg %p170
        %p442 = pneg %p194
        %p443 = pneg %p191
        %p444 = pneg %p215
        %p445 = pneg %p212
        %p446 = pneg %p236
        %p447 = pneg %p233
        %p448 = pneg %p257
        %p449 = pneg %p254
        %p450 = pneg %p278
        %p451 = pneg %p275
        %p452 = pneg %p299
        %p453 = pneg %p296
        %p454 = pneg %p325
        %p455 = pneg %p322
        %p456 = scmp.lt.s32.totalorder %s26, 1
        %s457 = scalar_select %p456, %s26, 1
        %s458 = smul.addr %s457, 3
        %s459 = smul.addr %s458, 8
        %s460 = scalar_lea.vmem %s13, %s459
        %p461 = scmp.lt.s32.totalorder %s26, 1
        %s462 = scalar_select %p461, %s26, 1
        %s463 = smul.addr %s462, 3
        %s464 = smul.addr %s463, 8
        %s465 = scalar_lea.vmem %s0, %s464
        %p466 = scmp.lt.s32.totalorder %s26, 1
        %s467 = scalar_select %p466, %s26, 1
        %s468 = smul.addr %s467, 3
        %s469 = smul.addr %s468, 8
        %s470 = scalar_lea.vmem %s13, %s469
        %v471 = vld [vmem:[%s465] sm:$0xff]
        %v472 = vld [vmem:[%s465 + $0x8] sm:$0xff]
        %v473 = vld [vmem:[%s465 + $0x10] sm:$0xff]
        %v474 = vld [vmem:[%s1] sm:$0x1]
        %v475 = vld [vmem:[%s2] sm:$0x1]
        %476 = vadd.xlane.f32.xlu0 %v471
        %v477 = vpop.xlane.xlu0 %476
        %478 = vadd.xlane.f32.xlu0 %v472
        %v479 = vpop.xlane.xlu0 %478
        %480 = vadd.xlane.f32.xlu0 %v473
        %v481 = vpop.xlane.xlu0 %480
        %v482 = vrcp.pop 128.0
        %v483 = vmul.f32 %v477, %v482
        %v484 = vmul.f32 %v479, %v482
        %v485 = vmul.f32 %v481, %v482
        %v486 = vsub.f32 %v471, %v483
        %v487 = vsub.f32 %v472, %v484
        %v488 = vsub.f32 %v473, %v485
        %v489 = vmul.f32 %v486, %v486
        %v490 = vmul.f32 %v487, %v487
        %v491 = vmul.f32 %v488, %v488
        %492 = vadd.xlane.f32.xlu0 %v489
        %v493 = vpop.xlane.xlu0 %492
        %494 = vadd.xlane.f32.xlu0 %v490
        %v495 = vpop.xlane.xlu0 %494
        %496 = vadd.xlane.f32.xlu0 %v491
        %v497 = vpop.xlane.xlu0 %496
        %v498 = vmul.f32 %v493, %v482
        %v499 = vmul.f32 %v495, %v482
        %v500 = vmul.f32 %v497, %v482
        %v501 = vadd.f32 %v498, 1e-05
        %v502 = vadd.f32 %v499, 1e-05
        %v503 = vadd.f32 %v500, 1e-05
        %v504 = vrsqrt.pop %v501
        %v505 = vrsqrt.pop %v502
        %v506 = vrsqrt.pop %v503
        %v507 = vmul.f32 %v486, %v504
        %v508 = vmul.f32 %v487, %v505
        %v509 = vmul.f32 %v488, %v506
        %v511 = vlaneseq
        %v512 = vshrl.u32 %v511, 7
        %v513 = vsub.s32 0, %v512
        %v514 = vrot.slane %v474, %v513
        %v516 = vmul.f32 %v507, %v514
        %v517 = vmul.f32 %v508, %v514
        %v518 = vmul.f32 %v509, %v514
        %v520 = vlaneseq
        %v521 = vshrl.u32 %v520, 7
        %v522 = vsub.s32 0, %v521
        %v523 = vrot.slane %v475, %v522
        %v525 = vadd.f32 %v516, %v523
        %v526 = vadd.f32 %v517, %v523
        %v527 = vadd.f32 %v518, %v523
        %v528 = vld [vmem:[%s3] sm:$0xff]
        %v529 = vld [vmem:[%s3 + $0x8] sm:$0xff]
        %v530 = vld [vmem:[%s3 + $0x10] sm:$0xff]
        %v531 = vld [vmem:[%s3 + $0x18] sm:$0xff]
        %v532 = vld [vmem:[%s3 + $0x20] sm:$0xff]
        %v533 = vld [vmem:[%s3 + $0x28] sm:$0xff]
        %v534 = vld [vmem:[%s3 + $0x30] sm:$0xff]
        %v535 = vld [vmem:[%s3 + $0x38] sm:$0xff]
        %v536 = vld [vmem:[%s3 + $0x40] sm:$0xff]
        %v537 = vld [vmem:[%s3 + $0x48] sm:$0xff]
        %v538 = vld [vmem:[%s3 + $0x50] sm:$0xff]
        %v539 = vld [vmem:[%s3 + $0x58] sm:$0xff]
        %v540 = vld [vmem:[%s3 + $0x60] sm:$0xff]
        %v541 = vld [vmem:[%s3 + $0x68] sm:$0xff]
        %v542 = vld [vmem:[%s3 + $0x70] sm:$0xff]
        %v543 = vld [vmem:[%s3 + $0x78] sm:$0xff]
        %v544 = vld [vmem:[%s3 + $0x80] sm:$0xff]
        %v545 = vld [vmem:[%s3 + $0x88] sm:$0xff]
        %v546 = vld [vmem:[%s3 + $0x90] sm:$0xff]
        %v547 = vld [vmem:[%s3 + $0x98] sm:$0xff]
        %v548 = vld [vmem:[%s3 + $0xa0] sm:$0xff]
        %v549 = vld [vmem:[%s3 + $0xa8] sm:$0xff]
        %v550 = vld [vmem:[%s3 + $0xb0] sm:$0xff]
        %v551 = vld [vmem:[%s3 + $0xb8] sm:$0xff]
        %v552 = vld [vmem:[%s3 + $0xc0] sm:$0xff]
        %v553 = vld [vmem:[%s3 + $0xc8] sm:$0xff]
        %v554 = vld [vmem:[%s3 + $0xd0] sm:$0xff]
        %v555 = vld [vmem:[%s3 + $0xd8] sm:$0xff]
        %v556 = vld [vmem:[%s3 + $0xe0] sm:$0xff]
        %v557 = vld [vmem:[%s3 + $0xe8] sm:$0xff]
        %v558 = vld [vmem:[%s3 + $0xf0] sm:$0xff]
        %v559 = vld [vmem:[%s3 + $0xf8] sm:$0xff]
        %v560 = vld [vmem:[%s3 + $0x100] sm:$0xff]
        %v561 = vld [vmem:[%s3 + $0x108] sm:$0xff]
        %v562 = vld [vmem:[%s3 + $0x110] sm:$0xff]
        %v563 = vld [vmem:[%s3 + $0x118] sm:$0xff]
        %v564 = vld [vmem:[%s3 + $0x120] sm:$0xff]
        %v565 = vld [vmem:[%s3 + $0x128] sm:$0xff]
        %v566 = vld [vmem:[%s3 + $0x130] sm:$0xff]
        %v567 = vld [vmem:[%s3 + $0x138] sm:$0xff]
        %v568 = vld [vmem:[%s3 + $0x140] sm:$0xff]
        %v569 = vld [vmem:[%s3 + $0x148] sm:$0xff]
        %v570 = vld [vmem:[%s3 + $0x150] sm:$0xff]
        %v571 = vld [vmem:[%s3 + $0x158] sm:$0xff]
        %v572 = vld [vmem:[%s3 + $0x160] sm:$0xff]
        %v573 = vld [vmem:[%s3 + $0x168] sm:$0xff]
        %v574 = vld [vmem:[%s3 + $0x170] sm:$0xff]
        %v575 = vld [vmem:[%s3 + $0x178] sm:$0xff]
        %v576 = vld [vmem:[%s4] sm:$0x7]
        %v578 = vlaneseq
        %v579 = vshrl.u32 %v578, 7
        %v580 = vsub.s32 0, %v579
        %v581 = vrot.slane %v576, %v580
        %v582 = vlaneseq
        %v583 = vshrl.u32 %v582, 7
        %v584 = vsub.s32 1, %v583
        %v585 = vrot.slane %v576, %v584
        %v586 = vlaneseq
        %v587 = vshrl.u32 %v586, 7
        %v588 = vsub.s32 2, %v587
        %v589 = vrot.slane %v576, %v588
        %593 = vmatprep.subr.mxu0 %v574
        %594 = vmatpush1.msra.mxu0 %v573
        %595 = vmatprep.subr.mxu0 %v571
        %596 = vmatpush1.msra.mxu0 %v570
        %597 = vmatprep.subr.mxu0 %v568
        %598 = vmatpush1.msra.mxu0 %v567
        %599 = vmatprep.subr.mxu0 %v565
        %600 = vmatpush1.msra.mxu0 %v564
        %601 = vmatprep.subr.mxu0 %v562
        %602 = vmatpush1.msra.mxu0 %v561
        %603 = vmatprep.subr.mxu0 %v559
        %604 = vmatpush1.msra.mxu0 %v558
        %605 = vmatprep.subr.mxu0 %v556
        %606 = vmatpush1.msra.mxu0 %v555
        %607 = vmatprep.subr.mxu0 %v553
        %608 = vmatpush1.msra.mxu0 %v552
        %609 = vmatprep.subr.mxu0 %v550
        %610 = vmatpush1.msra.mxu0 %v549
        %611 = vmatprep.subr.mxu0 %v547
        %612 = vmatpush1.msra.mxu0 %v546
        %613 = vmatprep.subr.mxu0 %v544
        %614 = vmatpush1.msra.mxu0 %v543
        %615 = vmatprep.subr.mxu0 %v541
        %616 = vmatpush1.msra.mxu0 %v540
        %617 = vmatprep.subr.mxu0 %v538
        %618 = vmatpush1.msra.mxu0 %v537
        %619 = vmatprep.subr.mxu0 %v535
        %620 = vmatpush1.msra.mxu0 %v534
        %621 = vmatprep.subr.mxu0 %v532
        %622 = vmatpush1.msra.mxu0 %v531
        %623 = vmatprep.subr.mxu0 %v529
        %624 = vmatpush1.msra.mxu0 %v528
        %625 = vmatprep.subr.mxu0 0.0
        %626 = vmatpush2.msra.mxu0 0.0
        %627 = vmatprep.subr.mxu0 0.0
        %628 = vmatpush2.msra.mxu0 0.0
        %629 = vmatprep.subr.mxu0 0.0
        %630 = vmatpush2.msra.mxu0 0.0
        %631 = vmatprep.subr.mxu0 0.0
        %632 = vmatpush2.msra.mxu0 0.0
        %633 = vmatprep.subr.mxu0 0.0
        %634 = vmatpush2.msra.mxu0 0.0
        %635 = vmatprep.subr.mxu0 0.0
        %636 = vmatpush2.msra.mxu0 0.0
        %637 = vmatprep.subr.mxu0 0.0
        %638 = vmatpush2.msra.mxu0 0.0
        %639 = vmatprep.subr.mxu0 0.0
        %640 = vmatpush2.msra.mxu0 0.0
        %641 = vmatprep.subr.mxu0 0.0
        %642 = vmatpush2.msra.mxu0 0.0
        %643 = vmatprep.subr.mxu0 0.0
        %644 = vmatpush2.msra.mxu0 0.0
        %645 = vmatprep.subr.mxu0 0.0
        %646 = vmatpush2.msra.mxu0 0.0
        %647 = vmatprep.subr.mxu0 0.0
        %648 = vmatpush2.msra.mxu0 0.0
        %649 = vmatprep.subr.mxu0 0.0
        %650 = vmatpush2.msra.mxu0 0.0
        %651 = vmatprep.subr.mxu0 0.0
        %652 = vmatpush2.msra.mxu0 0.0
        %653 = vmatprep.subr.mxu0 0.0
        %654 = vmatpush2.msra.mxu0 0.0
        %655 = vmatprep.subr.mxu0 0.0
        %656 = vmatpush2.msra.mxu0 0.0
        %657 = vmatprep.mubr.f32.mxu0 0.0
        %658 = vmatmul.mubr.f32.gmra.mxu0 %v525
        %v659 = vpop.f32.mrf.mxu0
        %v660 = vadd.f32 %v581, %v659
        %v661 = vpop.f32.mrf.mxu0
        %v662 = vadd.f32 %v585, %v661
        %663 = vmatprep.mubr.f32.mxu0 0.0
        %664 = vmatmul.mubr.f32.gmra.mxu0 %v526
        %v665 = vpop.f32.mrf.mxu0
        %v666 = vadd.f32 %v581, %v665
        %v667 = vpop.f32.mrf.mxu0
        %v668 = vadd.f32 %v585, %v667
        %669 = vmatprep.mubr.f32.mxu0 0.0
        %670 = vmatmul.mubr.f32.gmra.mxu0 %v527
        %v671 = vpop.f32.mrf.mxu0
        %v672 = vadd.f32 %v581, %v671
        %v673 = vpop.f32.mrf.mxu0
        %v674 = vadd.f32 %v585, %v673
        %675 = vdwg.mxu0
        %676 = vmatprep.subr.mxu0 0.0
        %677 = vmatpush1.msra.mxu0 %v575
        %678 = vmatprep.subr.mxu0 0.0
        %679 = vmatpush1.msra.mxu0 %v572
        %680 = vmatprep.subr.mxu0 0.0
        %681 = vmatpush1.msra.mxu0 %v569
        %682 = vmatprep.subr.mxu0 0.0
        %683 = vmatpush1.msra.mxu0 %v566
        %684 = vmatprep.subr.mxu0 0.0
        %685 = vmatpush1.msra.mxu0 %v563
        %686 = vmatprep.subr.mxu0 0.0
        %687 = vmatpush1.msra.mxu0 %v560
        %688 = vmatprep.subr.mxu0 0.0
        %689 = vmatpush1.msra.mxu0 %v557
        %690 = vmatprep.subr.mxu0 0.0
        %691 = vmatpush1.msra.mxu0 %v554
        %692 = vmatprep.subr.mxu0 0.0
        %693 = vmatpush1.msra.mxu0 %v551
        %694 = vmatprep.subr.mxu0 0.0
        %695 = vmatpush1.msra.mxu0 %v548
        %696 = vmatprep.subr.mxu0 0.0
        %697 = vmatpush1.msra.mxu0 %v545
        %698 = vmatprep.subr.mxu0 0.0
        %699 = vmatpush1.msra.mxu0 %v542
        %700 = vmatprep.subr.mxu0 0.0
        %701 = vmatpush1.msra.mxu0 %v539
        %702 = vmatprep.subr.mxu0 0.0
        %703 = vmatpush1.msra.mxu0 %v536
        %704 = vmatprep.subr.mxu0 0.0
        %705 = vmatpush1.msra.mxu0 %v533
        %706 = vmatprep.subr.mxu0 0.0
        %707 = vmatpush1.msra.mxu0 %v530
        %708 = vmatprep.subr.mxu0 0.0
        %709 = vmatpush2.msra.mxu0 0.0
        %710 = vmatprep.subr.mxu0 0.0
        %711 = vmatpush2.msra.mxu0 0.0
        %712 = vmatprep.subr.mxu0 0.0
        %713 = vmatpush2.msra.mxu0 0.0
        %714 = vmatprep.subr.mxu0 0.0
        %715 = vmatpush2.msra.mxu0 0.0
        %716 = vmatprep.subr.mxu0 0.0
        %717 = vmatpush2.msra.mxu0 0.0
        %718 = vmatprep.subr.mxu0 0.0
        %719 = vmatpush2.msra.mxu0 0.0
        %720 = vmatprep.subr.mxu0 0.0
        %721 = vmatpush2.msra.mxu0 0.0
        %722 = vmatprep.subr.mxu0 0.0
        %723 = vmatpush2.msra.mxu0 0.0
        %724 = vmatprep.subr.mxu0 0.0
        %725 = vmatpush2.msra.mxu0 0.0
        %726 = vmatprep.subr.mxu0 0.0
        %727 = vmatpush2.msra.mxu0 0.0
        %728 = vmatprep.subr.mxu0 0.0
        %729 = vmatpush2.msra.mxu0 0.0
        %730 = vmatprep.subr.mxu0 0.0
        %731 = vmatpush2.msra.mxu0 0.0
        %732 = vmatprep.subr.mxu0 0.0
        %733 = vmatpush2.msra.mxu0 0.0
        %734 = vmatprep.subr.mxu0 0.0
        %735 = vmatpush2.msra.mxu0 0.0
        %736 = vmatprep.subr.mxu0 0.0
        %737 = vmatpush2.msra.mxu0 0.0
        %738 = vmatprep.subr.mxu0 0.0
        %739 = vmatpush2.msra.mxu0 0.0
        %740 = vmatprep.mubr.f32.mxu0 0.0
        %741 = vmatmul.mubr.f32.gmra.mxu0 %v525
        %v742 = vpop.f32.mrf.mxu0
        %v743 = vadd.f32 %v589, %v742
        %v744 = vpop.f32.mrf.mxu0
        %745 = vmatprep.mubr.f32.mxu0 0.0
        %746 = vmatmul.mubr.f32.gmra.mxu0 %v526
        %v747 = vpop.f32.mrf.mxu0
        %v748 = vadd.f32 %v589, %v747
        %v749 = vpop.f32.mrf.mxu0
        %750 = vmatprep.mubr.f32.mxu0 0.0
        %751 = vmatmul.mubr.f32.gmra.mxu0 %v527
        %v752 = vpop.f32.mrf.mxu0
        %v753 = vadd.f32 %v589, %v752
        %v754 = vpop.f32.mrf.mxu0
        %755 = vdwg.mxu0
        %v756 = vlaneseq
        %v757 = vand.u32 %v756, 127
        %vm758 = vcmp.lt.s32.totalorder %v757, 17
        %v759 = vsel %vm758, 0.0, -1e+30
        %vm760 = vcmask 261120
        %v762 = vsel %vm760, %v660, 0
        %v765 = vsel %vm760, %v666, 0
        %v768 = vsel %vm760, %v672, 0
        %v771 = vsel %vm760, %v662, 0
        %v774 = vsel %vm760, %v668, 0
        %v777 = vsel %vm760, %v674, 0
        %779 = vmatprep.subr.mxu0 0.0
        %780 = vmatpush1.xpose.msra.mxu0 0.0
        %781 = vmatprep.subr.mxu0 0.0
        %782 = vmatpush1.xpose.msra.mxu0 0.0
        %783 = vmatprep.subr.mxu0 0.0
        %784 = vmatpush1.xpose.msra.mxu0 0.0
        %785 = vmatprep.subr.mxu0 0.0
        %786 = vmatpush1.xpose.msra.mxu0 0.0
        %787 = vmatprep.subr.mxu0 0.0
        %788 = vmatpush1.xpose.msra.mxu0 0.0
        %789 = vmatprep.subr.mxu0 0.0
        %790 = vmatpush1.xpose.msra.mxu0 0.0
        %791 = vmatprep.subr.mxu0 0.0
        %792 = vmatpush1.xpose.msra.mxu0 0.0
        %793 = vmatprep.subr.mxu0 0.0
        %794 = vmatpush1.xpose.msra.mxu0 0.0
        %795 = vmatprep.subr.mxu0 0.0
        %796 = vmatpush1.xpose.msra.mxu0 0.0
        %797 = vmatprep.subr.mxu0 0.0
        %798 = vmatpush1.xpose.msra.mxu0 0.0
        %799 = vmatprep.subr.mxu0 0.0
        %800 = vmatpush1.xpose.msra.mxu0 0.0
        %801 = vmatprep.subr.mxu0 0.0
        %802 = vmatpush1.xpose.msra.mxu0 0.0
        %803 = vmatprep.subr.mxu0 0.0
        %804 = vmatpush1.xpose.msra.mxu0 0.0
        %805 = vmatprep.subr.mxu0 0.0
        %806 = vmatpush1.xpose.msra.mxu0 %v777
        %807 = vmatprep.subr.mxu0 0.0
        %808 = vmatpush1.xpose.msra.mxu0 %v774
        %809 = vmatprep.subr.mxu0 0.0
        %810 = vmatpush1.xpose.msra.mxu0 %v771
        %811 = vmatprep.subr.mxu0 0.0
        %812 = vmatpush2.xpose.msra.mxu0 0.0
        %813 = vmatprep.subr.mxu0 0.0
        %814 = vmatpush2.xpose.msra.mxu0 0.0
        %815 = vmatprep.subr.mxu0 0.0
        %816 = vmatpush2.xpose.msra.mxu0 0.0
        %817 = vmatprep.subr.mxu0 0.0
        %818 = vmatpush2.xpose.msra.mxu0 0.0
        %819 = vmatprep.subr.mxu0 0.0
        %820 = vmatpush2.xpose.msra.mxu0 0.0
        %821 = vmatprep.subr.mxu0 0.0
        %822 = vmatpush2.xpose.msra.mxu0 0.0
        %823 = vmatprep.subr.mxu0 0.0
        %824 = vmatpush2.xpose.msra.mxu0 0.0
        %825 = vmatprep.subr.mxu0 0.0
        %826 = vmatpush2.xpose.msra.mxu0 0.0
        %827 = vmatprep.subr.mxu0 0.0
        %828 = vmatpush2.xpose.msra.mxu0 0.0
        %829 = vmatprep.subr.mxu0 0.0
        %830 = vmatpush2.xpose.msra.mxu0 0.0
        %831 = vmatprep.subr.mxu0 0.0
        %832 = vmatpush2.xpose.msra.mxu0 0.0
        %833 = vmatprep.subr.mxu0 0.0
        %834 = vmatpush2.xpose.msra.mxu0 0.0
        %835 = vmatprep.subr.mxu0 0.0
        %836 = vmatpush2.xpose.msra.mxu0 0.0
        %837 = vmatprep.subr.mxu0 0.0
        %838 = vmatpush2.xpose.msra.mxu0 0.0
        %839 = vmatprep.subr.mxu0 0.0
        %840 = vmatpush2.xpose.msra.mxu0 0.0
        %841 = vmatprep.subr.mxu0 0.0
        %842 = vmatpush2.xpose.msra.mxu0 0.0
        %843 = vmatprep.mubr.f32.mxu0 0.0
        %844 = vmatmul.mubr.f32.gmra.mxu0 %v762
        %v845 = vpop.f32.mrf.mxu0
        %v846 = vadd.f32 %v759, %v845
        %v847 = vpop.f32.mrf.mxu0
        %848 = vmatprep.mubr.f32.mxu0 0.0
        %849 = vmatmul.mubr.f32.gmra.mxu0 %v765
        %v850 = vpop.f32.mrf.mxu0
        %v851 = vadd.f32 %v759, %v850
        %v852 = vpop.f32.mrf.mxu0
        %853 = vmatprep.mubr.f32.mxu0 0.0
        %854 = vmatmul.mubr.f32.gmra.mxu0 %v768
        %v855 = vpop.f32.mrf.mxu0
        %v856 = vadd.f32 %v759, %v855
        %v857 = vpop.f32.mrf.mxu0
        %858 = vdwg.mxu0
        %vm859 = vcmask 195584
        %v860 = vsel %vm859, %v846, -inf
        %861 = vmax.xlane.f32.xlu0 %v860
        %v862 = vpop.xlane.xlu0 %861
        %v863 = vsel %vm859, %v851, -inf
        %864 = vmax.xlane.f32.xlu0 %v863
        %v865 = vpop.xlane.xlu0 %864
        %v866 = vsel %vm859, %v856, -inf
        %867 = vmax.xlane.f32.xlu0 %v866
        %v868 = vpop.xlane.xlu0 %867
        %v869 = vsub.f32 %v846, %v862
        %v870 = vsub.f32 %v851, %v865
        %v871 = vsub.f32 %v856, %v868
        %v872 = vmul.f32 %v869, 1.442695
        %v873 = vpow.pop %v872
        %v874 = vmul.f32 %v870, 1.442695
        %v875 = vpow.pop %v874
        %v876 = vmul.f32 %v871, 1.442695
        %v877 = vpow.pop %v876
        %v878 = vsel %vm859, %v873, 0.0
        %879 = vadd.xlane.f32.xlu0 %v878
        %v880 = vpop.xlane.xlu0 %879
        %v881 = vsel %vm859, %v875, 0.0
        %882 = vadd.xlane.f32.xlu0 %v881
        %v883 = vpop.xlane.xlu0 %882
        %v884 = vsel %vm859, %v877, 0.0
        %885 = vadd.xlane.f32.xlu0 %v884
        %v886 = vpop.xlane.xlu0 %885
        %v887 = vrcp.pop %v880
        %v888 = vrcp.pop %v883
        %v889 = vrcp.pop %v886
        %v890 = vmul.f32 %v873, %v887
        %v891 = vmul.f32 %v875, %v888
        %v892 = vmul.f32 %v877, %v889
        %v894 = vsel %vm859, %v890, 0
        %v897 = vsel %vm859, %v891, 0
        %v900 = vsel %vm859, %v892, 0
        %902 = vmatprep.subr.mxu0 0.0
        %903 = vmatpush1.msra.mxu0 0.0
        %904 = vmatprep.subr.mxu0 0.0
        %905 = vmatpush1.msra.mxu0 0.0
        %906 = vmatprep.subr.mxu0 0.0
        %907 = vmatpush1.msra.mxu0 0.0
        %908 = vmatprep.subr.mxu0 0.0
        %909 = vmatpush1.msra.mxu0 0.0
        %910 = vmatprep.subr.mxu0 0.0
        %911 = vmatpush1.msra.mxu0 0.0
        %912 = vmatprep.subr.mxu0 0.0
        %913 = vmatpush1.msra.mxu0 0.0
        %914 = vmatprep.subr.mxu0 0.0
        %915 = vmatpush1.msra.mxu0 0.0
        %916 = vmatprep.subr.mxu0 0.0
        %917 = vmatpush1.msra.mxu0 0.0
        %918 = vmatprep.subr.mxu0 0.0
        %919 = vmatpush1.msra.mxu0 0.0
        %920 = vmatprep.subr.mxu0 0.0
        %921 = vmatpush1.msra.mxu0 0.0
        %922 = vmatprep.subr.mxu0 0.0
        %923 = vmatpush1.msra.mxu0 0.0
        %924 = vmatprep.subr.mxu0 0.0
        %925 = vmatpush1.msra.mxu0 0.0
        %926 = vmatprep.subr.mxu0 0.0
        %927 = vmatpush1.msra.mxu0 0.0
        %928 = vmatprep.subr.mxu0 0.0
        %929 = vmatpush1.msra.mxu0 %v753
        %930 = vmatprep.subr.mxu0 0.0
        %931 = vmatpush1.msra.mxu0 %v748
        %932 = vmatprep.subr.mxu0 0.0
        %933 = vmatpush1.msra.mxu0 %v743
        %934 = vmatprep.subr.mxu0 0.0
        %935 = vmatpush2.msra.mxu0 0.0
        %936 = vmatprep.subr.mxu0 0.0
        %937 = vmatpush2.msra.mxu0 0.0
        %938 = vmatprep.subr.mxu0 0.0
        %939 = vmatpush2.msra.mxu0 0.0
        %940 = vmatprep.subr.mxu0 0.0
        %941 = vmatpush2.msra.mxu0 0.0
        %942 = vmatprep.subr.mxu0 0.0
        %943 = vmatpush2.msra.mxu0 0.0
        %944 = vmatprep.subr.mxu0 0.0
        %945 = vmatpush2.msra.mxu0 0.0
        %946 = vmatprep.subr.mxu0 0.0
        %947 = vmatpush2.msra.mxu0 0.0
        %948 = vmatprep.subr.mxu0 0.0
        %949 = vmatpush2.msra.mxu0 0.0
        %950 = vmatprep.subr.mxu0 0.0
        %951 = vmatpush2.msra.mxu0 0.0
        %952 = vmatprep.subr.mxu0 0.0
        %953 = vmatpush2.msra.mxu0 0.0
        %954 = vmatprep.subr.mxu0 0.0
        %955 = vmatpush2.msra.mxu0 0.0
        %956 = vmatprep.subr.mxu0 0.0
        %957 = vmatpush2.msra.mxu0 0.0
        %958 = vmatprep.subr.mxu0 0.0
        %959 = vmatpush2.msra.mxu0 0.0
        %960 = vmatprep.subr.mxu0 0.0
        %961 = vmatpush2.msra.mxu0 0.0
        %962 = vmatprep.subr.mxu0 0.0
        %963 = vmatpush2.msra.mxu0 0.0
        %964 = vmatprep.subr.mxu0 0.0
        %965 = vmatpush2.msra.mxu0 0.0
        %966 = vmatprep.mubr.f32.mxu0 0.0
        %967 = vmatmul.mubr.f32.gmra.mxu0 %v894
        %v968 = vpop.f32.mrf.mxu0
        %v969 = vadd.f32 0.0, %v968
        %v970 = vpop.f32.mrf.mxu0
        %971 = vmatprep.mubr.f32.mxu0 0.0
        %972 = vmatmul.mubr.f32.gmra.mxu0 %v897
        %v973 = vpop.f32.mrf.mxu0
        %v974 = vadd.f32 0.0, %v973
        %v975 = vpop.f32.mrf.mxu0
        %976 = vmatprep.mubr.f32.mxu0 0.0
        %977 = vmatmul.mubr.f32.gmra.mxu0 %v900
        %v978 = vpop.f32.mrf.mxu0
        %v979 = vadd.f32 0.0, %v978
        %v980 = vpop.f32.mrf.mxu0
        %981 = vdwg.mxu0
        %982 = vrot.lane.b32.xlu0 %v660, 96
        %v983 = vpop.permute.xlu0 %982
        %984 = vrot.lane.b32.xlu0 %v666, 96
        %v985 = vpop.permute.xlu0 %984
        %986 = vrot.lane.b32.xlu0 %v672, 96
        %v987 = vpop.permute.xlu0 %986
        %988 = vrot.lane.b32.xlu0 %v662, 96
        %v989 = vpop.permute.xlu0 %988
        %990 = vrot.lane.b32.xlu0 %v668, 96
        %v991 = vpop.permute.xlu0 %990
        %992 = vrot.lane.b32.xlu0 %v674, 96
        %v993 = vpop.permute.xlu0 %992
        %v994 = vsel %vm760, %v983, 0
        %v996 = vsel %vm760, %v985, 0
        %v998 = vsel %vm760, %v987, 0
        %v1000 = vsel %vm760, %v989, 0
        %v1002 = vsel %vm760, %v991, 0
        %v1004 = vsel %vm760, %v993, 0
        %1006 = vmatprep.subr.mxu0 0.0
        %1007 = vmatpush1.xpose.msra.mxu0 0.0
        %1008 = vmatprep.subr.mxu0 0.0
        %1009 = vmatpush1.xpose.msra.mxu0 0.0
        %1010 = vmatprep.subr.mxu0 0.0
        %1011 = vmatpush1.xpose.msra.mxu0 0.0
        %1012 = vmatprep.subr.mxu0 0.0
        %1013 = vmatpush1.xpose.msra.mxu0 0.0
        %1014 = vmatprep.subr.mxu0 0.0
        %1015 = vmatpush1.xpose.msra.mxu0 0.0
        %1016 = vmatprep.subr.mxu0 0.0
        %1017 = vmatpush1.xpose.msra.mxu0 0.0
        %1018 = vmatprep.subr.mxu0 0.0
        %1019 = vmatpush1.xpose.msra.mxu0 0.0
        %1020 = vmatprep.subr.mxu0 0.0
        %1021 = vmatpush1.xpose.msra.mxu0 0.0
        %1022 = vmatprep.subr.mxu0 0.0
        %1023 = vmatpush1.xpose.msra.mxu0 0.0
        %1024 = vmatprep.subr.mxu0 0.0
        %1025 = vmatpush1.xpose.msra.mxu0 0.0
        %1026 = vmatprep.subr.mxu0 0.0
        %1027 = vmatpush1.xpose.msra.mxu0 0.0
        %1028 = vmatprep.subr.mxu0 0.0
        %1029 = vmatpush1.xpose.msra.mxu0 0.0
        %1030 = vmatprep.subr.mxu0 0.0
        %1031 = vmatpush1.xpose.msra.mxu0 0.0
        %1032 = vmatprep.subr.mxu0 0.0
        %1033 = vmatpush1.xpose.msra.mxu0 %v1004
        %1034 = vmatprep.subr.mxu0 0.0
        %1035 = vmatpush1.xpose.msra.mxu0 %v1002
        %1036 = vmatprep.subr.mxu0 0.0
        %1037 = vmatpush1.xpose.msra.mxu0 %v1000
        %1038 = vmatprep.subr.mxu0 0.0
        %1039 = vmatpush2.xpose.msra.mxu0 0.0
        %1040 = vmatprep.subr.mxu0 0.0
        %1041 = vmatpush2.xpose.msra.mxu0 0.0
        %1042 = vmatprep.subr.mxu0 0.0
        %1043 = vmatpush2.xpose.msra.mxu0 0.0
        %1044 = vmatprep.subr.mxu0 0.0
        %1045 = vmatpush2.xpose.msra.mxu0 0.0
        %1046 = vmatprep.subr.mxu0 0.0
        %1047 = vmatpush2.xpose.msra.mxu0 0.0
        %1048 = vmatprep.subr.mxu0 0.0
        %1049 = vmatpush2.xpose.msra.mxu0 0.0
        %1050 = vmatprep.subr.mxu0 0.0
        %1051 = vmatpush2.xpose.msra.mxu0 0.0
        %1052 = vmatprep.subr.mxu0 0.0
        %1053 = vmatpush2.xpose.msra.mxu0 0.0
        %1054 = vmatprep.subr.mxu0 0.0
        %1055 = vmatpush2.xpose.msra.mxu0 0.0
        %1056 = vmatprep.subr.mxu0 0.0
        %1057 = vmatpush2.xpose.msra.mxu0 0.0
        %1058 = vmatprep.subr.mxu0 0.0
        %1059 = vmatpush2.xpose.msra.mxu0 0.0
        %1060 = vmatprep.subr.mxu0 0.0
        %1061 = vmatpush2.xpose.msra.mxu0 0.0
        %1062 = vmatprep.subr.mxu0 0.0
        %1063 = vmatpush2.xpose.msra.mxu0 0.0
        %1064 = vmatprep.subr.mxu0 0.0
        %1065 = vmatpush2.xpose.msra.mxu0 0.0
        %1066 = vmatprep.subr.mxu0 0.0
        %1067 = vmatpush2.xpose.msra.mxu0 0.0
        %1068 = vmatprep.subr.mxu0 0.0
        %1069 = vmatpush2.xpose.msra.mxu0 0.0
        %1070 = vmatprep.mubr.f32.mxu0 0.0
        %1071 = vmatmul.mubr.f32.gmra.mxu0 %v994
        %v1072 = vpop.f32.mrf.mxu0
        %v1073 = vadd.f32 %v759, %v1072
        %v1074 = vpop.f32.mrf.mxu0
        %1075 = vmatprep.mubr.f32.mxu0 0.0
        %1076 = vmatmul.mubr.f32.gmra.mxu0 %v996
        %v1077 = vpop.f32.mrf.mxu0
        %v1078 = vadd.f32 %v759, %v1077
        %v1079 = vpop.f32.mrf.mxu0
        %1080 = vmatprep.mubr.f32.mxu0 0.0
        %1081 = vmatmul.mubr.f32.gmra.mxu0 %v998
        %v1082 = vpop.f32.mrf.mxu0
        %v1083 = vadd.f32 %v759, %v1082
        %v1084 = vpop.f32.mrf.mxu0
        %1085 = vdwg.mxu0
        %v1086 = vsel %vm859, %v1073, -inf
        %1087 = vmax.xlane.f32.xlu0 %v1086
        %v1088 = vpop.xlane.xlu0 %1087
        %v1089 = vsel %vm859, %v1078, -inf
        %1090 = vmax.xlane.f32.xlu0 %v1089
        %v1091 = vpop.xlane.xlu0 %1090
        %v1092 = vsel %vm859, %v1083, -inf
        %1093 = vmax.xlane.f32.xlu0 %v1092
        %v1094 = vpop.xlane.xlu0 %1093
        %v1095 = vsub.f32 %v1073, %v1088
        %v1096 = vsub.f32 %v1078, %v1091
        %v1097 = vsub.f32 %v1083, %v1094
        %v1098 = vmul.f32 %v1095, 1.442695
        %v1099 = vpow.pop %v1098
        %v1100 = vmul.f32 %v1096, 1.442695
        %v1101 = vpow.pop %v1100
        %v1102 = vmul.f32 %v1097, 1.442695
        %v1103 = vpow.pop %v1102
        %v1104 = vsel %vm859, %v1099, 0.0
        %1105 = vadd.xlane.f32.xlu0 %v1104
        %v1106 = vpop.xlane.xlu0 %1105
        %v1107 = vsel %vm859, %v1101, 0.0
        %1108 = vadd.xlane.f32.xlu0 %v1107
        %v1109 = vpop.xlane.xlu0 %1108
        %v1110 = vsel %vm859, %v1103, 0.0
        %1111 = vadd.xlane.f32.xlu0 %v1110
        %v1112 = vpop.xlane.xlu0 %1111
        %v1113 = vrcp.pop %v1106
        %v1114 = vrcp.pop %v1109
        %v1115 = vrcp.pop %v1112
        %v1116 = vmul.f32 %v1099, %v1113
        %v1117 = vmul.f32 %v1101, %v1114
        %v1118 = vmul.f32 %v1103, %v1115
        %1122 = vrot.lane.b32.xlu0 %v743, 96
        %v1123 = vpop.permute.xlu0 %1122
        %1124 = vrot.lane.b32.xlu0 %v748, 96
        %v1125 = vpop.permute.xlu0 %1124
        %1126 = vrot.lane.b32.xlu0 %v753, 96
        %v1127 = vpop.permute.xlu0 %1126
        %v1132 = vsel %vm859, %v1116, 0
        %v1135 = vsel %vm859, %v1117, 0
        %v1138 = vsel %vm859, %v1118, 0
        %1140 = vmatprep.subr.mxu0 0.0
        %1141 = vmatpush1.msra.mxu0 0.0
        %1142 = vmatprep.subr.mxu0 0.0
        %1143 = vmatpush1.msra.mxu0 0.0
        %1144 = vmatprep.subr.mxu0 0.0
        %1145 = vmatpush1.msra.mxu0 0.0
        %1146 = vmatprep.subr.mxu0 0.0
        %1147 = vmatpush1.msra.mxu0 0.0
        %1148 = vmatprep.subr.mxu0 0.0
        %1149 = vmatpush1.msra.mxu0 0.0
        %1150 = vmatprep.subr.mxu0 0.0
        %1151 = vmatpush1.msra.mxu0 0.0
        %1152 = vmatprep.subr.mxu0 0.0
        %1153 = vmatpush1.msra.mxu0 0.0
        %1154 = vmatprep.subr.mxu0 0.0
        %1155 = vmatpush1.msra.mxu0 0.0
        %1156 = vmatprep.subr.mxu0 0.0
        %1157 = vmatpush1.msra.mxu0 0.0
        %1158 = vmatprep.subr.mxu0 0.0
        %1159 = vmatpush1.msra.mxu0 0.0
        %1160 = vmatprep.subr.mxu0 0.0
        %1161 = vmatpush1.msra.mxu0 0.0
        %1162 = vmatprep.subr.mxu0 0.0
        %1163 = vmatpush1.msra.mxu0 0.0
        %1164 = vmatprep.subr.mxu0 0.0
        %1165 = vmatpush1.msra.mxu0 0.0
        %1166 = vmatprep.subr.mxu0 0.0
        %1167 = vmatpush1.msra.mxu0 %v1127
        %1168 = vmatprep.subr.mxu0 0.0
        %1169 = vmatpush1.msra.mxu0 %v1125
        %1170 = vmatprep.subr.mxu0 0.0
        %1171 = vmatpush1.msra.mxu0 %v1123
        %1172 = vmatprep.subr.mxu0 0.0
        %1173 = vmatpush2.msra.mxu0 0.0
        %1174 = vmatprep.subr.mxu0 0.0
        %1175 = vmatpush2.msra.mxu0 0.0
        %1176 = vmatprep.subr.mxu0 0.0
        %1177 = vmatpush2.msra.mxu0 0.0
        %1178 = vmatprep.subr.mxu0 0.0
        %1179 = vmatpush2.msra.mxu0 0.0
        %1180 = vmatprep.subr.mxu0 0.0
        %1181 = vmatpush2.msra.mxu0 0.0
        %1182 = vmatprep.subr.mxu0 0.0
        %1183 = vmatpush2.msra.mxu0 0.0
        %1184 = vmatprep.subr.mxu0 0.0
        %1185 = vmatpush2.msra.mxu0 0.0
        %1186 = vmatprep.subr.mxu0 0.0
        %1187 = vmatpush2.msra.mxu0 0.0
        %1188 = vmatprep.subr.mxu0 0.0
        %1189 = vmatpush2.msra.mxu0 0.0
        %1190 = vmatprep.subr.mxu0 0.0
        %1191 = vmatpush2.msra.mxu0 0.0
        %1192 = vmatprep.subr.mxu0 0.0
        %1193 = vmatpush2.msra.mxu0 0.0
        %1194 = vmatprep.subr.mxu0 0.0
        %1195 = vmatpush2.msra.mxu0 0.0
        %1196 = vmatprep.subr.mxu0 0.0
        %1197 = vmatpush2.msra.mxu0 0.0
        %1198 = vmatprep.subr.mxu0 0.0
        %1199 = vmatpush2.msra.mxu0 0.0
        %1200 = vmatprep.subr.mxu0 0.0
        %1201 = vmatpush2.msra.mxu0 0.0
        %1202 = vmatprep.subr.mxu0 0.0
        %1203 = vmatpush2.msra.mxu0 0.0
        %1204 = vmatprep.mubr.f32.mxu0 0.0
        %1205 = vmatmul.mubr.f32.gmra.mxu0 %v1132
        %v1206 = vpop.f32.mrf.mxu0
        %v1207 = vadd.f32 0.0, %v1206
        %v1208 = vpop.f32.mrf.mxu0
        %1209 = vmatprep.mubr.f32.mxu0 0.0
        %1210 = vmatmul.mubr.f32.gmra.mxu0 %v1135
        %v1211 = vpop.f32.mrf.mxu0
        %v1212 = vadd.f32 0.0, %v1211
        %v1213 = vpop.f32.mrf.mxu0
        %1214 = vmatprep.mubr.f32.mxu0 0.0
        %1215 = vmatmul.mubr.f32.gmra.mxu0 %v1138
        %v1216 = vpop.f32.mrf.mxu0
        %v1217 = vadd.f32 0.0, %v1216
        %v1218 = vpop.f32.mrf.mxu0
        %1219 = vdwg.mxu0
        %1220 = vrot.lane.b32.xlu0 %v660, 64
        %v1221 = vpop.permute.xlu0 %1220
        %1222 = vrot.lane.b32.xlu0 %v666, 64
        %v1223 = vpop.permute.xlu0 %1222
        %1224 = vrot.lane.b32.xlu0 %v672, 64
        %v1225 = vpop.permute.xlu0 %1224
        %1226 = vrot.lane.b32.xlu0 %v662, 64
        %v1227 = vpop.permute.xlu0 %1226
        %1228 = vrot.lane.b32.xlu0 %v668, 64
        %v1229 = vpop.permute.xlu0 %1228
        %1230 = vrot.lane.b32.xlu0 %v674, 64
        %v1231 = vpop.permute.xlu0 %1230
        %v1232 = vsel %vm760, %v1221, 0
        %v1234 = vsel %vm760, %v1223, 0
        %v1236 = vsel %vm760, %v1225, 0
        %v1238 = vsel %vm760, %v1227, 0
        %v1240 = vsel %vm760, %v1229, 0
        %v1242 = vsel %vm760, %v1231, 0
        %1244 = vmatprep.subr.mxu0 0.0
        %1245 = vmatpush1.xpose.msra.mxu0 0.0
        %1246 = vmatprep.subr.mxu0 0.0
        %1247 = vmatpush1.xpose.msra.mxu0 0.0
        %1248 = vmatprep.subr.mxu0 0.0
        %1249 = vmatpush1.xpose.msra.mxu0 0.0
        %1250 = vmatprep.subr.mxu0 0.0
        %1251 = vmatpush1.xpose.msra.mxu0 0.0
        %1252 = vmatprep.subr.mxu0 0.0
        %1253 = vmatpush1.xpose.msra.mxu0 0.0
        %1254 = vmatprep.subr.mxu0 0.0
        %1255 = vmatpush1.xpose.msra.mxu0 0.0
        %1256 = vmatprep.subr.mxu0 0.0
        %1257 = vmatpush1.xpose.msra.mxu0 0.0
        %1258 = vmatprep.subr.mxu0 0.0
        %1259 = vmatpush1.xpose.msra.mxu0 0.0
        %1260 = vmatprep.subr.mxu0 0.0
        %1261 = vmatpush1.xpose.msra.mxu0 0.0
        %1262 = vmatprep.subr.mxu0 0.0
        %1263 = vmatpush1.xpose.msra.mxu0 0.0
        %1264 = vmatprep.subr.mxu0 0.0
        %1265 = vmatpush1.xpose.msra.mxu0 0.0
        %1266 = vmatprep.subr.mxu0 0.0
        %1267 = vmatpush1.xpose.msra.mxu0 0.0
        %1268 = vmatprep.subr.mxu0 0.0
        %1269 = vmatpush1.xpose.msra.mxu0 0.0
        %1270 = vmatprep.subr.mxu0 0.0
        %1271 = vmatpush1.xpose.msra.mxu0 %v1242
        %1272 = vmatprep.subr.mxu0 0.0
        %1273 = vmatpush1.xpose.msra.mxu0 %v1240
        %1274 = vmatprep.subr.mxu0 0.0
        %1275 = vmatpush1.xpose.msra.mxu0 %v1238
        %1276 = vmatprep.subr.mxu0 0.0
        %1277 = vmatpush2.xpose.msra.mxu0 0.0
        %1278 = vmatprep.subr.mxu0 0.0
        %1279 = vmatpush2.xpose.msra.mxu0 0.0
        %1280 = vmatprep.subr.mxu0 0.0
        %1281 = vmatpush2.xpose.msra.mxu0 0.0
        %1282 = vmatprep.subr.mxu0 0.0
        %1283 = vmatpush2.xpose.msra.mxu0 0.0
        %1284 = vmatprep.subr.mxu0 0.0
        %1285 = vmatpush2.xpose.msra.mxu0 0.0
        %1286 = vmatprep.subr.mxu0 0.0
        %1287 = vmatpush2.xpose.msra.mxu0 0.0
        %1288 = vmatprep.subr.mxu0 0.0
        %1289 = vmatpush2.xpose.msra.mxu0 0.0
        %1290 = vmatprep.subr.mxu0 0.0
        %1291 = vmatpush2.xpose.msra.mxu0 0.0
        %1292 = vmatprep.subr.mxu0 0.0
        %1293 = vmatpush2.xpose.msra.mxu0 0.0
        %1294 = vmatprep.subr.mxu0 0.0
        %1295 = vmatpush2.xpose.msra.mxu0 0.0
        %1296 = vmatprep.subr.mxu0 0.0
        %1297 = vmatpush2.xpose.msra.mxu0 0.0
        %1298 = vmatprep.subr.mxu0 0.0
        %1299 = vmatpush2.xpose.msra.mxu0 0.0
        %1300 = vmatprep.subr.mxu0 0.0
        %1301 = vmatpush2.xpose.msra.mxu0 0.0
        %1302 = vmatprep.subr.mxu0 0.0
        %1303 = vmatpush2.xpose.msra.mxu0 0.0
        %1304 = vmatprep.subr.mxu0 0.0
        %1305 = vmatpush2.xpose.msra.mxu0 0.0
        %1306 = vmatprep.subr.mxu0 0.0
        %1307 = vmatpush2.xpose.msra.mxu0 0.0
        %1308 = vmatprep.mubr.f32.mxu0 0.0
        %1309 = vmatmul.mubr.f32.gmra.mxu0 %v1232
        %v1310 = vpop.f32.mrf.mxu0
        %v1311 = vadd.f32 %v759, %v1310
        %v1312 = vpop.f32.mrf.mxu0
        %1313 = vmatprep.mubr.f32.mxu0 0.0
        %1314 = vmatmul.mubr.f32.gmra.mxu0 %v1234
        %v1315 = vpop.f32.mrf.mxu0
        %v1316 = vadd.f32 %v759, %v1315
        %v1317 = vpop.f32.mrf.mxu0
        %1318 = vmatprep.mubr.f32.mxu0 0.0
        %1319 = vmatmul.mubr.f32.gmra.mxu0 %v1236
        %v1320 = vpop.f32.mrf.mxu0
        %v1321 = vadd.f32 %v759, %v1320
        %v1322 = vpop.f32.mrf.mxu0
        %1323 = vdwg.mxu0
        %v1324 = vsel %vm859, %v1311, -inf
        %1325 = vmax.xlane.f32.xlu0 %v1324
        %v1326 = vpop.xlane.xlu0 %1325
        %v1327 = vsel %vm859, %v1316, -inf
        %1328 = vmax.xlane.f32.xlu0 %v1327
        %v1329 = vpop.xlane.xlu0 %1328
        %v1330 = vsel %vm859, %v1321, -inf
        %1331 = vmax.xlane.f32.xlu0 %v1330
        %v1332 = vpop.xlane.xlu0 %1331
        %v1333 = vsub.f32 %v1311, %v1326
        %v1334 = vsub.f32 %v1316, %v1329
        %v1335 = vsub.f32 %v1321, %v1332
        %v1336 = vmul.f32 %v1333, 1.442695
        %v1337 = vpow.pop %v1336
        %v1338 = vmul.f32 %v1334, 1.442695
        %v1339 = vpow.pop %v1338
        %v1340 = vmul.f32 %v1335, 1.442695
        %v1341 = vpow.pop %v1340
        %v1342 = vsel %vm859, %v1337, 0.0
        %1343 = vadd.xlane.f32.xlu0 %v1342
        %v1344 = vpop.xlane.xlu0 %1343
        %v1345 = vsel %vm859, %v1339, 0.0
        %1346 = vadd.xlane.f32.xlu0 %v1345
        %v1347 = vpop.xlane.xlu0 %1346
        %v1348 = vsel %vm859, %v1341, 0.0
        %1349 = vadd.xlane.f32.xlu0 %v1348
        %v1350 = vpop.xlane.xlu0 %1349
        %v1351 = vrcp.pop %v1344
        %v1352 = vrcp.pop %v1347
        %v1353 = vrcp.pop %v1350
        %v1354 = vmul.f32 %v1337, %v1351
        %v1355 = vmul.f32 %v1339, %v1352
        %v1356 = vmul.f32 %v1341, %v1353
        %1357 = vrot.lane.b32.xlu0 %v743, 64
        %v1358 = vpop.permute.xlu0 %1357
        %1359 = vrot.lane.b32.xlu0 %v748, 64
        %v1360 = vpop.permute.xlu0 %1359
        %1361 = vrot.lane.b32.xlu0 %v753, 64
        %v1362 = vpop.permute.xlu0 %1361
        %v1367 = vsel %vm859, %v1354, 0
        %v1370 = vsel %vm859, %v1355, 0
        %v1373 = vsel %vm859, %v1356, 0
        %1375 = vmatprep.subr.mxu0 0.0
        %1376 = vmatpush1.msra.mxu0 0.0
        %1377 = vmatprep.subr.mxu0 0.0
        %1378 = vmatpush1.msra.mxu0 0.0
        %1379 = vmatprep.subr.mxu0 0.0
        %1380 = vmatpush1.msra.mxu0 0.0
        %1381 = vmatprep.subr.mxu0 0.0
        %1382 = vmatpush1.msra.mxu0 0.0
        %1383 = vmatprep.subr.mxu0 0.0
        %1384 = vmatpush1.msra.mxu0 0.0
        %1385 = vmatprep.subr.mxu0 0.0
        %1386 = vmatpush1.msra.mxu0 0.0
        %1387 = vmatprep.subr.mxu0 0.0
        %1388 = vmatpush1.msra.mxu0 0.0
        %1389 = vmatprep.subr.mxu0 0.0
        %1390 = vmatpush1.msra.mxu0 0.0
        %1391 = vmatprep.subr.mxu0 0.0
        %1392 = vmatpush1.msra.mxu0 0.0
        %1393 = vmatprep.subr.mxu0 0.0
        %1394 = vmatpush1.msra.mxu0 0.0
        %1395 = vmatprep.subr.mxu0 0.0
        %1396 = vmatpush1.msra.mxu0 0.0
        %1397 = vmatprep.subr.mxu0 0.0
        %1398 = vmatpush1.msra.mxu0 0.0
        %1399 = vmatprep.subr.mxu0 0.0
        %1400 = vmatpush1.msra.mxu0 0.0
        %1401 = vmatprep.subr.mxu0 0.0
        %1402 = vmatpush1.msra.mxu0 %v1362
        %1403 = vmatprep.subr.mxu0 0.0
        %1404 = vmatpush1.msra.mxu0 %v1360
        %1405 = vmatprep.subr.mxu0 0.0
        %1406 = vmatpush1.msra.mxu0 %v1358
        %1407 = vmatprep.subr.mxu0 0.0
        %1408 = vmatpush2.msra.mxu0 0.0
        %1409 = vmatprep.subr.mxu0 0.0
        %1410 = vmatpush2.msra.mxu0 0.0
        %1411 = vmatprep.subr.mxu0 0.0
        %1412 = vmatpush2.msra.mxu0 0.0
        %1413 = vmatprep.subr.mxu0 0.0
        %1414 = vmatpush2.msra.mxu0 0.0
        %1415 = vmatprep.subr.mxu0 0.0
        %1416 = vmatpush2.msra.mxu0 0.0
        %1417 = vmatprep.subr.mxu0 0.0
        %1418 = vmatpush2.msra.mxu0 0.0
        %1419 = vmatprep.subr.mxu0 0.0
        %1420 = vmatpush2.msra.mxu0 0.0
        %1421 = vmatprep.subr.mxu0 0.0
        %1422 = vmatpush2.msra.mxu0 0.0
        %1423 = vmatprep.subr.mxu0 0.0
        %1424 = vmatpush2.msra.mxu0 0.0
        %1425 = vmatprep.subr.mxu0 0.0
        %1426 = vmatpush2.msra.mxu0 0.0
        %1427 = vmatprep.subr.mxu0 0.0
        %1428 = vmatpush2.msra.mxu0 0.0
        %1429 = vmatprep.subr.mxu0 0.0
        %1430 = vmatpush2.msra.mxu0 0.0
        %1431 = vmatprep.subr.mxu0 0.0
        %1432 = vmatpush2.msra.mxu0 0.0
        %1433 = vmatprep.subr.mxu0 0.0
        %1434 = vmatpush2.msra.mxu0 0.0
        %1435 = vmatprep.subr.mxu0 0.0
        %1436 = vmatpush2.msra.mxu0 0.0
        %1437 = vmatprep.subr.mxu0 0.0
        %1438 = vmatpush2.msra.mxu0 0.0
        %1439 = vmatprep.mubr.f32.mxu0 0.0
        %1440 = vmatmul.mubr.f32.gmra.mxu0 %v1367
        %v1441 = vpop.f32.mrf.mxu0
        %v1442 = vadd.f32 0.0, %v1441
        %v1443 = vpop.f32.mrf.mxu0
        %1444 = vmatprep.mubr.f32.mxu0 0.0
        %1445 = vmatmul.mubr.f32.gmra.mxu0 %v1370
        %v1446 = vpop.f32.mrf.mxu0
        %v1447 = vadd.f32 0.0, %v1446
        %v1448 = vpop.f32.mrf.mxu0
        %1449 = vmatprep.mubr.f32.mxu0 0.0
        %1450 = vmatmul.mubr.f32.gmra.mxu0 %v1373
        %v1451 = vpop.f32.mrf.mxu0
        %v1452 = vadd.f32 0.0, %v1451
        %v1453 = vpop.f32.mrf.mxu0
        %1454 = vdwg.mxu0
        %1455 = vrot.lane.b32.xlu0 %v660, 32
        %v1456 = vpop.permute.xlu0 %1455
        %1457 = vrot.lane.b32.xlu0 %v666, 32
        %v1458 = vpop.permute.xlu0 %1457
        %1459 = vrot.lane.b32.xlu0 %v672, 32
        %v1460 = vpop.permute.xlu0 %1459
        %1461 = vrot.lane.b32.xlu0 %v662, 32
        %v1462 = vpop.permute.xlu0 %1461
        %1463 = vrot.lane.b32.xlu0 %v668, 32
        %v1464 = vpop.permute.xlu0 %1463
        %1465 = vrot.lane.b32.xlu0 %v674, 32
        %v1466 = vpop.permute.xlu0 %1465
        %v1467 = vsel %vm760, %v1456, 0
        %v1469 = vsel %vm760, %v1458, 0
        %v1471 = vsel %vm760, %v1460, 0
        %v1473 = vsel %vm760, %v1462, 0
        %v1475 = vsel %vm760, %v1464, 0
        %v1477 = vsel %vm760, %v1466, 0
        %1479 = vmatprep.subr.mxu0 0.0
        %1480 = vmatpush1.xpose.msra.mxu0 0.0
        %1481 = vmatprep.subr.mxu0 0.0
        %1482 = vmatpush1.xpose.msra.mxu0 0.0
        %1483 = vmatprep.subr.mxu0 0.0
        %1484 = vmatpush1.xpose.msra.mxu0 0.0
        %1485 = vmatprep.subr.mxu0 0.0
        %1486 = vmatpush1.xpose.msra.mxu0 0.0
        %1487 = vmatprep.subr.mxu0 0.0
        %1488 = vmatpush1.xpose.msra.mxu0 0.0
        %1489 = vmatprep.subr.mxu0 0.0
        %1490 = vmatpush1.xpose.msra.mxu0 0.0
        %1491 = vmatprep.subr.mxu0 0.0
        %1492 = vmatpush1.xpose.msra.mxu0 0.0
        %1493 = vmatprep.subr.mxu0 0.0
        %1494 = vmatpush1.xpose.msra.mxu0 0.0
        %1495 = vmatprep.subr.mxu0 0.0
        %1496 = vmatpush1.xpose.msra.mxu0 0.0
        %1497 = vmatprep.subr.mxu0 0.0
        %1498 = vmatpush1.xpose.msra.mxu0 0.0
        %1499 = vmatprep.subr.mxu0 0.0
        %1500 = vmatpush1.xpose.msra.mxu0 0.0
        %1501 = vmatprep.subr.mxu0 0.0
        %1502 = vmatpush1.xpose.msra.mxu0 0.0
        %1503 = vmatprep.subr.mxu0 0.0
        %1504 = vmatpush1.xpose.msra.mxu0 0.0
        %1505 = vmatprep.subr.mxu0 0.0
        %1506 = vmatpush1.xpose.msra.mxu0 %v1477
        %1507 = vmatprep.subr.mxu0 0.0
        %1508 = vmatpush1.xpose.msra.mxu0 %v1475
        %1509 = vmatprep.subr.mxu0 0.0
        %1510 = vmatpush1.xpose.msra.mxu0 %v1473
        %1511 = vmatprep.subr.mxu0 0.0
        %1512 = vmatpush2.xpose.msra.mxu0 0.0
        %1513 = vmatprep.subr.mxu0 0.0
        %1514 = vmatpush2.xpose.msra.mxu0 0.0
        %1515 = vmatprep.subr.mxu0 0.0
        %1516 = vmatpush2.xpose.msra.mxu0 0.0
        %1517 = vmatprep.subr.mxu0 0.0
        %1518 = vmatpush2.xpose.msra.mxu0 0.0
        %1519 = vmatprep.subr.mxu0 0.0
        %1520 = vmatpush2.xpose.msra.mxu0 0.0
        %1521 = vmatprep.subr.mxu0 0.0
        %1522 = vmatpush2.xpose.msra.mxu0 0.0
        %1523 = vmatprep.subr.mxu0 0.0
        %1524 = vmatpush2.xpose.msra.mxu0 0.0
        %1525 = vmatprep.subr.mxu0 0.0
        %1526 = vmatpush2.xpose.msra.mxu0 0.0
        %1527 = vmatprep.subr.mxu0 0.0
        %1528 = vmatpush2.xpose.msra.mxu0 0.0
        %1529 = vmatprep.subr.mxu0 0.0
        %1530 = vmatpush2.xpose.msra.mxu0 0.0
        %1531 = vmatprep.subr.mxu0 0.0
        %1532 = vmatpush2.xpose.msra.mxu0 0.0
        %1533 = vmatprep.subr.mxu0 0.0
        %1534 = vmatpush2.xpose.msra.mxu0 0.0
        %1535 = vmatprep.subr.mxu0 0.0
        %1536 = vmatpush2.xpose.msra.mxu0 0.0
        %1537 = vmatprep.subr.mxu0 0.0
        %1538 = vmatpush2.xpose.msra.mxu0 0.0
        %1539 = vmatprep.subr.mxu0 0.0
        %1540 = vmatpush2.xpose.msra.mxu0 0.0
        %1541 = vmatprep.subr.mxu0 0.0
        %1542 = vmatpush2.xpose.msra.mxu0 0.0
        %1543 = vmatprep.mubr.f32.mxu0 0.0
        %1544 = vmatmul.mubr.f32.gmra.mxu0 %v1467
        %v1545 = vpop.f32.mrf.mxu0
        %v1546 = vadd.f32 %v759, %v1545
        %v1547 = vpop.f32.mrf.mxu0
        %1548 = vmatprep.mubr.f32.mxu0 0.0
        %1549 = vmatmul.mubr.f32.gmra.mxu0 %v1469
        %v1550 = vpop.f32.mrf.mxu0
        %v1551 = vadd.f32 %v759, %v1550
        %v1552 = vpop.f32.mrf.mxu0
        %1553 = vmatprep.mubr.f32.mxu0 0.0
        %1554 = vmatmul.mubr.f32.gmra.mxu0 %v1471
        %v1555 = vpop.f32.mrf.mxu0
        %v1556 = vadd.f32 %v759, %v1555
        %v1557 = vpop.f32.mrf.mxu0
        %1558 = vdwg.mxu0
        %v1559 = vsel %vm859, %v1546, -inf
        %1560 = vmax.xlane.f32.xlu0 %v1559
        %v1561 = vpop.xlane.xlu0 %1560
        %v1562 = vsel %vm859, %v1551, -inf
        %1563 = vmax.xlane.f32.xlu0 %v1562
        %v1564 = vpop.xlane.xlu0 %1563
        %v1565 = vsel %vm859, %v1556, -inf
        %1566 = vmax.xlane.f32.xlu0 %v1565
        %v1567 = vpop.xlane.xlu0 %1566
        %v1568 = vsub.f32 %v1546, %v1561
        %v1569 = vsub.f32 %v1551, %v1564
        %v1570 = vsub.f32 %v1556, %v1567
        %v1571 = vmul.f32 %v1568, 1.442695
        %v1572 = vpow.pop %v1571
        %v1573 = vmul.f32 %v1569, 1.442695
        %v1574 = vpow.pop %v1573
        %v1575 = vmul.f32 %v1570, 1.442695
        %v1576 = vpow.pop %v1575
        %v1577 = vsel %vm859, %v1572, 0.0
        %1578 = vadd.xlane.f32.xlu0 %v1577
        %v1579 = vpop.xlane.xlu0 %1578
        %v1580 = vsel %vm859, %v1574, 0.0
        %1581 = vadd.xlane.f32.xlu0 %v1580
        %v1582 = vpop.xlane.xlu0 %1581
        %v1583 = vsel %vm859, %v1576, 0.0
        %1584 = vadd.xlane.f32.xlu0 %v1583
        %v1585 = vpop.xlane.xlu0 %1584
        %v1586 = vrcp.pop %v1579
        %v1587 = vrcp.pop %v1582
        %v1588 = vrcp.pop %v1585
        %v1589 = vmul.f32 %v1572, %v1586
        %v1590 = vmul.f32 %v1574, %v1587
        %v1591 = vmul.f32 %v1576, %v1588
        %1592 = vrot.lane.b32.xlu0 %v743, 32
        %v1593 = vpop.permute.xlu0 %1592
        %1594 = vrot.lane.b32.xlu0 %v748, 32
        %v1595 = vpop.permute.xlu0 %1594
        %1596 = vrot.lane.b32.xlu0 %v753, 32
        %v1597 = vpop.permute.xlu0 %1596
        %v1602 = vsel %vm859, %v1589, 0
        %v1605 = vsel %vm859, %v1590, 0
        %v1608 = vsel %vm859, %v1591, 0
        %1610 = vmatprep.subr.mxu0 0.0
        %1611 = vmatpush1.msra.mxu0 0.0
        %1612 = vmatprep.subr.mxu0 0.0
        %1613 = vmatpush1.msra.mxu0 0.0
        %1614 = vmatprep.subr.mxu0 0.0
        %1615 = vmatpush1.msra.mxu0 0.0
        %1616 = vmatprep.subr.mxu0 0.0
        %1617 = vmatpush1.msra.mxu0 0.0
        %1618 = vmatprep.subr.mxu0 0.0
        %1619 = vmatpush1.msra.mxu0 0.0
        %1620 = vmatprep.subr.mxu0 0.0
        %1621 = vmatpush1.msra.mxu0 0.0
        %1622 = vmatprep.subr.mxu0 0.0
        %1623 = vmatpush1.msra.mxu0 0.0
        %1624 = vmatprep.subr.mxu0 0.0
        %1625 = vmatpush1.msra.mxu0 0.0
        %1626 = vmatprep.subr.mxu0 0.0
        %1627 = vmatpush1.msra.mxu0 0.0
        %1628 = vmatprep.subr.mxu0 0.0
        %1629 = vmatpush1.msra.mxu0 0.0
        %1630 = vmatprep.subr.mxu0 0.0
        %1631 = vmatpush1.msra.mxu0 0.0
        %1632 = vmatprep.subr.mxu0 0.0
        %1633 = vmatpush1.msra.mxu0 0.0
        %1634 = vmatprep.subr.mxu0 0.0
        %1635 = vmatpush1.msra.mxu0 0.0
        %1636 = vmatprep.subr.mxu0 0.0
        %1637 = vmatpush1.msra.mxu0 %v1597
        %1638 = vmatprep.subr.mxu0 0.0
        %1639 = vmatpush1.msra.mxu0 %v1595
        %1640 = vmatprep.subr.mxu0 0.0
        %1641 = vmatpush1.msra.mxu0 %v1593
        %1642 = vmatprep.subr.mxu0 0.0
        %1643 = vmatpush2.msra.mxu0 0.0
        %1644 = vmatprep.subr.mxu0 0.0
        %1645 = vmatpush2.msra.mxu0 0.0
        %1646 = vmatprep.subr.mxu0 0.0
        %1647 = vmatpush2.msra.mxu0 0.0
        %1648 = vmatprep.subr.mxu0 0.0
        %1649 = vmatpush2.msra.mxu0 0.0
        %1650 = vmatprep.subr.mxu0 0.0
        %1651 = vmatpush2.msra.mxu0 0.0
        %1652 = vmatprep.subr.mxu0 0.0
        %1653 = vmatpush2.msra.mxu0 0.0
        %1654 = vmatprep.subr.mxu0 0.0
        %1655 = vmatpush2.msra.mxu0 0.0
        %1656 = vmatprep.subr.mxu0 0.0
        %1657 = vmatpush2.msra.mxu0 0.0
        %1658 = vmatprep.subr.mxu0 0.0
        %1659 = vmatpush2.msra.mxu0 0.0
        %1660 = vmatprep.subr.mxu0 0.0
        %1661 = vmatpush2.msra.mxu0 0.0
        %1662 = vmatprep.subr.mxu0 0.0
        %1663 = vmatpush2.msra.mxu0 0.0
        %1664 = vmatprep.subr.mxu0 0.0
        %1665 = vmatpush2.msra.mxu0 0.0
        %1666 = vmatprep.subr.mxu0 0.0
        %1667 = vmatpush2.msra.mxu0 0.0
        %1668 = vmatprep.subr.mxu0 0.0
        %1669 = vmatpush2.msra.mxu0 0.0
        %1670 = vmatprep.subr.mxu0 0.0
        %1671 = vmatpush2.msra.mxu0 0.0
        %1672 = vmatprep.subr.mxu0 0.0
        %1673 = vmatpush2.msra.mxu0 0.0
        %1674 = vmatprep.mubr.f32.mxu0 0.0
        %1675 = vmatmul.mubr.f32.gmra.mxu0 %v1602
        %v1676 = vpop.f32.mrf.mxu0
        %v1677 = vadd.f32 0.0, %v1676
        %v1678 = vpop.f32.mrf.mxu0
        %1679 = vmatprep.mubr.f32.mxu0 0.0
        %1680 = vmatmul.mubr.f32.gmra.mxu0 %v1605
        %v1681 = vpop.f32.mrf.mxu0
        %v1682 = vadd.f32 0.0, %v1681
        %v1683 = vpop.f32.mrf.mxu0
        %1684 = vmatprep.mubr.f32.mxu0 0.0
        %1685 = vmatmul.mubr.f32.gmra.mxu0 %v1608
        %v1686 = vpop.f32.mrf.mxu0
        %v1687 = vadd.f32 0.0, %v1686
        %v1688 = vpop.f32.mrf.mxu0
        %1689 = vdwg.mxu0
        %1693 = vrot.lane.b32.xlu0 %v1207, 32
        %v1694 = vpop.permute.xlu0 %1693
        %1695 = vrot.lane.b32.xlu0 %v1212, 32
        %v1696 = vpop.permute.xlu0 %1695
        %1697 = vrot.lane.b32.xlu0 %v1217, 32
        %v1698 = vpop.permute.xlu0 %1697
        %1705 = vrot.lane.b32.xlu0 %v1442, 64
        %v1706 = vpop.permute.xlu0 %1705
        %1707 = vrot.lane.b32.xlu0 %v1447, 64
        %v1708 = vpop.permute.xlu0 %1707
        %1709 = vrot.lane.b32.xlu0 %v1452, 64
        %v1710 = vpop.permute.xlu0 %1709
        %1717 = vrot.lane.b32.xlu0 %v1677, 96
        %v1718 = vpop.permute.xlu0 %1717
        %1719 = vrot.lane.b32.xlu0 %v1682, 96
        %v1720 = vpop.permute.xlu0 %1719
        %1721 = vrot.lane.b32.xlu0 %v1687, 96
        %v1722 = vpop.permute.xlu0 %1721
        %v1726 = vsel %vm760, %v969, %v1694
        %v1727 = vsel %vm760, %v974, %v1696
        %v1728 = vsel %vm760, %v979, %v1698
        %vm1729 = vcmask 523264
        %v1730 = vsel %vm1729, %v1726, %v1706
        %v1731 = vsel %vm1729, %v1727, %v1708
        %v1732 = vsel %vm1729, %v1728, %v1710
        %vm1733 = vcmask 785408
        %v1734 = vsel %vm1733, %v1730, %v1718
        %v1735 = vsel %vm1733, %v1731, %v1720
        %v1736 = vsel %vm1733, %v1732, %v1722
        %v1737 = vld [vmem:[#allocation2] sm:$0xff]
        %v1738 = vld [vmem:[#allocation2 + $0x8] sm:$0xff]
        %v1739 = vld [vmem:[#allocation2 + $0x10] sm:$0xff]
        %v1740 = vld [vmem:[#allocation2 + $0x18] sm:$0xff]
        %v1741 = vld [vmem:[#allocation2 + $0x20] sm:$0xff]
        %v1742 = vld [vmem:[#allocation2 + $0x28] sm:$0xff]
        %v1743 = vld [vmem:[#allocation2 + $0x30] sm:$0xff]
        %v1744 = vld [vmem:[#allocation2 + $0x38] sm:$0xff]
        %v1745 = vld [vmem:[#allocation2 + $0x40] sm:$0xff]
        %v1746 = vld [vmem:[#allocation2 + $0x48] sm:$0xff]
        %v1747 = vld [vmem:[#allocation2 + $0x50] sm:$0xff]
        %v1748 = vld [vmem:[#allocation2 + $0x58] sm:$0xff]
        %v1749 = vld [vmem:[#allocation2 + $0x60] sm:$0xff]
        %v1750 = vld [vmem:[#allocation2 + $0x68] sm:$0xff]
        %v1751 = vld [vmem:[#allocation2 + $0x70] sm:$0xff]
        %v1752 = vld [vmem:[#allocation2 + $0x78] sm:$0xff]
        %1753 = vmatprep.subr.mxu0 0.0
        %1754 = vmatpush1.msra.mxu0 %v1752
        %1755 = vmatprep.subr.mxu0 0.0
        %1756 = vmatpush1.msra.mxu0 %v1751
        %1757 = vmatprep.subr.mxu0 0.0
        %1758 = vmatpush1.msra.mxu0 %v1750
        %1759 = vmatprep.subr.mxu0 0.0
        %1760 = vmatpush1.msra.mxu0 %v1749
        %1761 = vmatprep.subr.mxu0 0.0
        %1762 = vmatpush1.msra.mxu0 %v1748
        %1763 = vmatprep.subr.mxu0 0.0
        %1764 = vmatpush1.msra.mxu0 %v1747
        %1765 = vmatprep.subr.mxu0 0.0
        %1766 = vmatpush1.msra.mxu0 %v1746
        %1767 = vmatprep.subr.mxu0 0.0
        %1768 = vmatpush1.msra.mxu0 %v1745
        %1769 = vmatprep.subr.mxu0 0.0
        %1770 = vmatpush1.msra.mxu0 %v1744
        %1771 = vmatprep.subr.mxu0 0.0
        %1772 = vmatpush1.msra.mxu0 %v1743
        %1773 = vmatprep.subr.mxu0 0.0
        %1774 = vmatpush1.msra.mxu0 %v1742
        %1775 = vmatprep.subr.mxu0 0.0
        %1776 = vmatpush1.msra.mxu0 %v1741
        %1777 = vmatprep.subr.mxu0 0.0
        %1778 = vmatpush1.msra.mxu0 %v1740
        %1779 = vmatprep.subr.mxu0 0.0
        %1780 = vmatpush1.msra.mxu0 %v1739
        %1781 = vmatprep.subr.mxu0 0.0
        %1782 = vmatpush1.msra.mxu0 %v1738
        %1783 = vmatprep.subr.mxu0 0.0
        %1784 = vmatpush1.msra.mxu0 %v1737
        %1785 = vmatprep.subr.mxu0 0.0
        %1786 = vmatpush2.msra.mxu0 0.0
        %1787 = vmatprep.subr.mxu0 0.0
        %1788 = vmatpush2.msra.mxu0 0.0
        %1789 = vmatprep.subr.mxu0 0.0
        %1790 = vmatpush2.msra.mxu0 0.0
        %1791 = vmatprep.subr.mxu0 0.0
        %1792 = vmatpush2.msra.mxu0 0.0
        %1793 = vmatprep.subr.mxu0 0.0
        %1794 = vmatpush2.msra.mxu0 0.0
        %1795 = vmatprep.subr.mxu0 0.0
        %1796 = vmatpush2.msra.mxu0 0.0
        %1797 = vmatprep.subr.mxu0 0.0
        %1798 = vmatpush2.msra.mxu0 0.0
        %1799 = vmatprep.subr.mxu0 0.0
        %1800 = vmatpush2.msra.mxu0 0.0
        %1801 = vmatprep.subr.mxu0 0.0
        %1802 = vmatpush2.msra.mxu0 0.0
        %1803 = vmatprep.subr.mxu0 0.0
        %1804 = vmatpush2.msra.mxu0 0.0
        %1805 = vmatprep.subr.mxu0 0.0
        %1806 = vmatpush2.msra.mxu0 0.0
        %1807 = vmatprep.subr.mxu0 0.0
        %1808 = vmatpush2.msra.mxu0 0.0
        %1809 = vmatprep.subr.mxu0 0.0
        %1810 = vmatpush2.msra.mxu0 0.0
        %1811 = vmatprep.subr.mxu0 0.0
        %1812 = vmatpush2.msra.mxu0 0.0
        %1813 = vmatprep.subr.mxu0 0.0
        %1814 = vmatpush2.msra.mxu0 0.0
        %1815 = vmatprep.subr.mxu0 0.0
        %1816 = vmatpush2.msra.mxu0 0.0
        %1817 = vmatprep.mubr.f32.mxu0 0.0
        %1818 = vmatmul.mubr.f32.gmra.mxu0 %v1734
        %v1819 = vpop.f32.mrf.mxu0
        %v1820 = vadd.f32 0.0, %v1819
        %v1821 = vpop.f32.mrf.mxu0
        %1822 = vmatprep.mubr.f32.mxu0 0.0
        %1823 = vmatmul.mubr.f32.gmra.mxu0 %v1735
        %v1824 = vpop.f32.mrf.mxu0
        %v1825 = vadd.f32 0.0, %v1824
        %v1826 = vpop.f32.mrf.mxu0
        %1827 = vmatprep.mubr.f32.mxu0 0.0
        %1828 = vmatmul.mubr.f32.gmra.mxu0 %v1736
        %v1829 = vpop.f32.mrf.mxu0
        %v1830 = vadd.f32 0.0, %v1829
        %v1831 = vpop.f32.mrf.mxu0
        %1832 = vdwg.mxu0
        %v1833 = vadd.f32 %v471, %v1820
        %v1834 = vadd.f32 %v472, %v1825
        %v1835 = vadd.f32 %v473, %v1830
        %v1836 = vld [vmem:[%s6] sm:$0x1]
        %v1838 = vlaneseq
        %v1839 = vshrl.u32 %v1838, 7
        %v1840 = vsub.s32 0, %v1839
        %v1841 = vrot.slane %v1836, %v1840
        %v1843 = vadd.f32 %v1833, %v1841
        %v1844 = vadd.f32 %v1834, %v1841
        %v1845 = vadd.f32 %v1835, %v1841
        %v1846 = vld [vmem:[%s7] sm:$0x1]
        %v1847 = vld [vmem:[%s8] sm:$0x1]
        %1848 = vadd.xlane.f32.xlu0 %v1843
        %v1849 = vpop.xlane.xlu0 %1848
        %1850 = vadd.xlane.f32.xlu0 %v1844
        %v1851 = vpop.xlane.xlu0 %1850
        %1852 = vadd.xlane.f32.xlu0 %v1845
        %v1853 = vpop.xlane.xlu0 %1852
        %v1854 = vmul.f32 %v1849, %v482
        %v1855 = vmul.f32 %v1851, %v482
        %v1856 = vmul.f32 %v1853, %v482
        %v1857 = vsub.f32 %v1843, %v1854
        %v1858 = vsub.f32 %v1844, %v1855
        %v1859 = vsub.f32 %v1845, %v1856
        %v1860 = vmul.f32 %v1857, %v1857
        %v1861 = vmul.f32 %v1858, %v1858
        %v1862 = vmul.f32 %v1859, %v1859
        %1863 = vadd.xlane.f32.xlu0 %v1860
        %v1864 = vpop.xlane.xlu0 %1863
        %1865 = vadd.xlane.f32.xlu0 %v1861
        %v1866 = vpop.xlane.xlu0 %1865
        %1867 = vadd.xlane.f32.xlu0 %v1862
        %v1868 = vpop.xlane.xlu0 %1867
        %v1869 = vmul.f32 %v1864, %v482
        %v1870 = vmul.f32 %v1866, %v482
        %v1871 = vmul.f32 %v1868, %v482
        %v1872 = vadd.f32 %v1869, 1e-05
        %v1873 = vadd.f32 %v1870, 1e-05
        %v1874 = vadd.f32 %v1871, 1e-05
        %v1875 = vrsqrt.pop %v1872
        %v1876 = vrsqrt.pop %v1873
        %v1877 = vrsqrt.pop %v1874
        %v1878 = vmul.f32 %v1857, %v1875
        %v1879 = vmul.f32 %v1858, %v1876
        %v1880 = vmul.f32 %v1859, %v1877
        %v1882 = vlaneseq
        %v1883 = vshrl.u32 %v1882, 7
        %v1884 = vsub.s32 0, %v1883
        %v1885 = vrot.slane %v1846, %v1884
        %v1887 = vmul.f32 %v1878, %v1885
        %v1888 = vmul.f32 %v1879, %v1885
        %v1889 = vmul.f32 %v1880, %v1885
        %v1891 = vlaneseq
        %v1892 = vshrl.u32 %v1891, 7
        %v1893 = vsub.s32 0, %v1892
        %v1894 = vrot.slane %v1847, %v1893
        %v1896 = vadd.f32 %v1887, %v1894
        %v1897 = vadd.f32 %v1888, %v1894
        %v1898 = vadd.f32 %v1889, %v1894
        %v1899 = vld [vmem:[%s9] sm:$0xff]
        %v1900 = vld [vmem:[%s9 + $0x8] sm:$0xff]
        %v1901 = vld [vmem:[%s9 + $0x10] sm:$0xff]
        %v1902 = vld [vmem:[%s9 + $0x18] sm:$0xff]
        %v1903 = vld [vmem:[%s9 + $0x20] sm:$0xff]
        %v1904 = vld [vmem:[%s9 + $0x28] sm:$0xff]
        %v1905 = vld [vmem:[%s9 + $0x30] sm:$0xff]
        %v1906 = vld [vmem:[%s9 + $0x38] sm:$0xff]
        %v1907 = vld [vmem:[%s9 + $0x40] sm:$0xff]
        %v1908 = vld [vmem:[%s9 + $0x48] sm:$0xff]
        %v1909 = vld [vmem:[%s9 + $0x50] sm:$0xff]
        %v1910 = vld [vmem:[%s9 + $0x58] sm:$0xff]
        %v1911 = vld [vmem:[%s9 + $0x60] sm:$0xff]
        %v1912 = vld [vmem:[%s9 + $0x68] sm:$0xff]
        %v1913 = vld [vmem:[%s9 + $0x70] sm:$0xff]
        %v1914 = vld [vmem:[%s9 + $0x78] sm:$0xff]
        %v1915 = vld [vmem:[%s9 + $0x80] sm:$0xff]
        %v1916 = vld [vmem:[%s9 + $0x88] sm:$0xff]
        %v1917 = vld [vmem:[%s9 + $0x90] sm:$0xff]
        %v1918 = vld [vmem:[%s9 + $0x98] sm:$0xff]
        %v1919 = vld [vmem:[%s9 + $0xa0] sm:$0xff]
        %v1920 = vld [vmem:[%s9 + $0xa8] sm:$0xff]
        %v1921 = vld [vmem:[%s9 + $0xb0] sm:$0xff]
        %v1922 = vld [vmem:[%s9 + $0xb8] sm:$0xff]
        %v1923 = vld [vmem:[%s9 + $0xc0] sm:$0xff]
        %v1924 = vld [vmem:[%s9 + $0xc8] sm:$0xff]
        %v1925 = vld [vmem:[%s9 + $0xd0] sm:$0xff]
        %v1926 = vld [vmem:[%s9 + $0xd8] sm:$0xff]
        %v1927 = vld [vmem:[%s9 + $0xe0] sm:$0xff]
        %v1928 = vld [vmem:[%s9 + $0xe8] sm:$0xff]
        %v1929 = vld [vmem:[%s9 + $0xf0] sm:$0xff]
        %v1930 = vld [vmem:[%s9 + $0xf8] sm:$0xff]
        %v1931 = vld [vmem:[%s10] sm:$0x3]
        %v1933 = vlaneseq
        %v1934 = vshrl.u32 %v1933, 7
        %v1935 = vsub.s32 0, %v1934
        %v1936 = vrot.slane %v1931, %v1935
        %v1937 = vlaneseq
        %v1938 = vshrl.u32 %v1937, 7
        %v1939 = vsub.s32 1, %v1938
        %v1940 = vrot.slane %v1931, %v1939
        %1943 = vmatprep.subr.mxu0 %v1930
        %1944 = vmatpush1.msra.mxu0 %v1929
        %1945 = vmatprep.subr.mxu0 %v1928
        %1946 = vmatpush1.msra.mxu0 %v1927
        %1947 = vmatprep.subr.mxu0 %v1926
        %1948 = vmatpush1.msra.mxu0 %v1925
        %1949 = vmatprep.subr.mxu0 %v1924
        %1950 = vmatpush1.msra.mxu0 %v1923
        %1951 = vmatprep.subr.mxu0 %v1922
        %1952 = vmatpush1.msra.mxu0 %v1921
        %1953 = vmatprep.subr.mxu0 %v1920
        %1954 = vmatpush1.msra.mxu0 %v1919
        %1955 = vmatprep.subr.mxu0 %v1918
        %1956 = vmatpush1.msra.mxu0 %v1917
        %1957 = vmatprep.subr.mxu0 %v1916
        %1958 = vmatpush1.msra.mxu0 %v1915
        %1959 = vmatprep.subr.mxu0 %v1914
        %1960 = vmatpush1.msra.mxu0 %v1913
        %1961 = vmatprep.subr.mxu0 %v1912
        %1962 = vmatpush1.msra.mxu0 %v1911
        %1963 = vmatprep.subr.mxu0 %v1910
        %1964 = vmatpush1.msra.mxu0 %v1909
        %1965 = vmatprep.subr.mxu0 %v1908
        %1966 = vmatpush1.msra.mxu0 %v1907
        %1967 = vmatprep.subr.mxu0 %v1906
        %1968 = vmatpush1.msra.mxu0 %v1905
        %1969 = vmatprep.subr.mxu0 %v1904
        %1970 = vmatpush1.msra.mxu0 %v1903
        %1971 = vmatprep.subr.mxu0 %v1902
        %1972 = vmatpush1.msra.mxu0 %v1901
        %1973 = vmatprep.subr.mxu0 %v1900
        %1974 = vmatpush1.msra.mxu0 %v1899
        %1975 = vmatprep.subr.mxu0 0.0
        %1976 = vmatpush2.msra.mxu0 0.0
        %1977 = vmatprep.subr.mxu0 0.0
        %1978 = vmatpush2.msra.mxu0 0.0
        %1979 = vmatprep.subr.mxu0 0.0
        %1980 = vmatpush2.msra.mxu0 0.0
        %1981 = vmatprep.subr.mxu0 0.0
        %1982 = vmatpush2.msra.mxu0 0.0
        %1983 = vmatprep.subr.mxu0 0.0
        %1984 = vmatpush2.msra.mxu0 0.0
        %1985 = vmatprep.subr.mxu0 0.0
        %1986 = vmatpush2.msra.mxu0 0.0
        %1987 = vmatprep.subr.mxu0 0.0
        %1988 = vmatpush2.msra.mxu0 0.0
        %1989 = vmatprep.subr.mxu0 0.0
        %1990 = vmatpush2.msra.mxu0 0.0
        %1991 = vmatprep.subr.mxu0 0.0
        %1992 = vmatpush2.msra.mxu0 0.0
        %1993 = vmatprep.subr.mxu0 0.0
        %1994 = vmatpush2.msra.mxu0 0.0
        %1995 = vmatprep.subr.mxu0 0.0
        %1996 = vmatpush2.msra.mxu0 0.0
        %1997 = vmatprep.subr.mxu0 0.0
        %1998 = vmatpush2.msra.mxu0 0.0
        %1999 = vmatprep.subr.mxu0 0.0
        %2000 = vmatpush2.msra.mxu0 0.0
        %2001 = vmatprep.subr.mxu0 0.0
        %2002 = vmatpush2.msra.mxu0 0.0
        %2003 = vmatprep.subr.mxu0 0.0
        %2004 = vmatpush2.msra.mxu0 0.0
        %2005 = vmatprep.subr.mxu0 0.0
        %2006 = vmatpush2.msra.mxu0 0.0
        %2007 = vmatprep.mubr.f32.mxu0 0.0
        %2008 = vmatmul.mubr.f32.gmra.mxu0 %v1896
        %v2009 = vpop.f32.mrf.mxu0
        %v2010 = vadd.f32 %v1936, %v2009
        %v2011 = vpop.f32.mrf.mxu0
        %v2012 = vadd.f32 %v1940, %v2011
        %2013 = vmatprep.mubr.f32.mxu0 0.0
        %2014 = vmatmul.mubr.f32.gmra.mxu0 %v1897
        %v2015 = vpop.f32.mrf.mxu0
        %v2016 = vadd.f32 %v1936, %v2015
        %v2017 = vpop.f32.mrf.mxu0
        %v2018 = vadd.f32 %v1940, %v2017
        %2019 = vmatprep.mubr.f32.mxu0 0.0
        %2020 = vmatmul.mubr.f32.gmra.mxu0 %v1898
        %v2021 = vpop.f32.mrf.mxu0
        %v2022 = vadd.f32 %v1936, %v2021
        %v2023 = vpop.f32.mrf.mxu0
        %v2024 = vadd.f32 %v1940, %v2023
        %2025 = vdwg.mxu0
        %v2026 = vmul.f32 %v2010, 1.702
        %v2027 = vmul.f32 %v2012, 1.702
        %v2028 = vmul.f32 %v2016, 1.702
        %v2029 = vmul.f32 %v2018, 1.702
        %v2030 = vmul.f32 %v2022, 1.702
        %v2031 = vmul.f32 %v2024, 1.702
        %v2032 = vxor.u32 %v2026, 2147483648
        %v2033 = vxor.u32 %v2027, 2147483648
        %v2034 = vxor.u32 %v2028, 2147483648
        %v2035 = vxor.u32 %v2029, 2147483648
        %v2036 = vxor.u32 %v2030, 2147483648
        %v2037 = vxor.u32 %v2031, 2147483648
        %v2038 = vmul.f32 %v2032, 1.442695
        %v2039 = vpow.pop %v2038
        %v2040 = vmul.f32 %v2033, 1.442695
        %v2041 = vpow.pop %v2040
        %v2042 = vmul.f32 %v2034, 1.442695
        %v2043 = vpow.pop %v2042
        %v2044 = vmul.f32 %v2035, 1.442695
        %v2045 = vpow.pop %v2044
        %v2046 = vmul.f32 %v2036, 1.442695
        %v2047 = vpow.pop %v2046
        %v2048 = vmul.f32 %v2037, 1.442695
        %v2049 = vpow.pop %v2048
        %v2050 = vadd.f32 %v2039, 1.0
        %v2051 = vadd.f32 %v2041, 1.0
        %v2052 = vadd.f32 %v2043, 1.0
        %v2053 = vadd.f32 %v2045, 1.0
        %v2054 = vadd.f32 %v2047, 1.0
        %v2055 = vadd.f32 %v2049, 1.0
        %v2056 = vrcp.pop %v2050
        %v2057 = vmul.f32 1.0, %v2056
        %v2058 = vrcp.pop %v2051
        %v2059 = vmul.f32 1.0, %v2058
        %v2060 = vrcp.pop %v2052
        %v2061 = vmul.f32 1.0, %v2060
        %v2062 = vrcp.pop %v2053
        %v2063 = vmul.f32 1.0, %v2062
        %v2064 = vrcp.pop %v2054
        %v2065 = vmul.f32 1.0, %v2064
        %v2066 = vrcp.pop %v2055
        %v2067 = vmul.f32 1.0, %v2066
        %v2068 = vmul.f32 %v2010, %v2057
        %v2069 = vmul.f32 %v2012, %v2059
        %v2070 = vmul.f32 %v2016, %v2061
        %v2071 = vmul.f32 %v2018, %v2063
        %v2072 = vmul.f32 %v2022, %v2065
        %v2073 = vmul.f32 %v2024, %v2067
        %v2074 = vld [vmem:[#allocation4] sm:$0xff]
        %v2075 = vld [vmem:[#allocation4 + $0x8] sm:$0xff]
        %v2076 = vld [vmem:[#allocation4 + $0x10] sm:$0xff]
        %v2077 = vld [vmem:[#allocation4 + $0x18] sm:$0xff]
        %v2078 = vld [vmem:[#allocation4 + $0x20] sm:$0xff]
        %v2079 = vld [vmem:[#allocation4 + $0x28] sm:$0xff]
        %v2080 = vld [vmem:[#allocation4 + $0x30] sm:$0xff]
        %v2081 = vld [vmem:[#allocation4 + $0x38] sm:$0xff]
        %v2082 = vld [vmem:[#allocation4 + $0x40] sm:$0xff]
        %v2083 = vld [vmem:[#allocation4 + $0x48] sm:$0xff]
        %v2084 = vld [vmem:[#allocation4 + $0x50] sm:$0xff]
        %v2085 = vld [vmem:[#allocation4 + $0x58] sm:$0xff]
        %v2086 = vld [vmem:[#allocation4 + $0x60] sm:$0xff]
        %v2087 = vld [vmem:[#allocation4 + $0x68] sm:$0xff]
        %v2088 = vld [vmem:[#allocation4 + $0x70] sm:$0xff]
        %v2089 = vld [vmem:[#allocation4 + $0x78] sm:$0xff]
        %v2090 = vld [vmem:[#allocation4 + $0x80] sm:$0xff]
        %v2091 = vld [vmem:[#allocation4 + $0x88] sm:$0xff]
        %v2092 = vld [vmem:[#allocation4 + $0x90] sm:$0xff]
        %v2093 = vld [vmem:[#allocation4 + $0x98] sm:$0xff]
        %v2094 = vld [vmem:[#allocation4 + $0xa0] sm:$0xff]
        %v2095 = vld [vmem:[#allocation4 + $0xa8] sm:$0xff]
        %v2096 = vld [vmem:[#allocation4 + $0xb0] sm:$0xff]
        %v2097 = vld [vmem:[#allocation4 + $0xb8] sm:$0xff]
        %v2098 = vld [vmem:[#allocation4 + $0xc0] sm:$0xff]
        %v2099 = vld [vmem:[#allocation4 + $0xc8] sm:$0xff]
        %v2100 = vld [vmem:[#allocation4 + $0xd0] sm:$0xff]
        %v2101 = vld [vmem:[#allocation4 + $0xd8] sm:$0xff]
        %v2102 = vld [vmem:[#allocation4 + $0xe0] sm:$0xff]
        %v2103 = vld [vmem:[#allocation4 + $0xe8] sm:$0xff]
        %v2104 = vld [vmem:[#allocation4 + $0xf0] sm:$0xff]
        %v2105 = vld [vmem:[#allocation4 + $0xf8] sm:$0xff]
        %2106 = vmatprep.subr.mxu0 0.0
        %2107 = vmatpush1.msra.mxu0 %v2089
        %2108 = vmatprep.subr.mxu0 0.0
        %2109 = vmatpush1.msra.mxu0 %v2088
        %2110 = vmatprep.subr.mxu0 0.0
        %2111 = vmatpush1.msra.mxu0 %v2087
        %2112 = vmatprep.subr.mxu0 0.0
        %2113 = vmatpush1.msra.mxu0 %v2086
        %2114 = vmatprep.subr.mxu0 0.0
        %2115 = vmatpush1.msra.mxu0 %v2085
        %2116 = vmatprep.subr.mxu0 0.0
        %2117 = vmatpush1.msra.mxu0 %v2084
        %2118 = vmatprep.subr.mxu0 0.0
        %2119 = vmatpush1.msra.mxu0 %v2083
        %2120 = vmatprep.subr.mxu0 0.0
        %2121 = vmatpush1.msra.mxu0 %v2082
        %2122 = vmatprep.subr.mxu0 0.0
        %2123 = vmatpush1.msra.mxu0 %v2081
        %2124 = vmatprep.subr.mxu0 0.0
        %2125 = vmatpush1.msra.mxu0 %v2080
        %2126 = vmatprep.subr.mxu0 0.0
        %2127 = vmatpush1.msra.mxu0 %v2079
        %2128 = vmatprep.subr.mxu0 0.0
        %2129 = vmatpush1.msra.mxu0 %v2078
        %2130 = vmatprep.subr.mxu0 0.0
        %2131 = vmatpush1.msra.mxu0 %v2077
        %2132 = vmatprep.subr.mxu0 0.0
        %2133 = vmatpush1.msra.mxu0 %v2076
        %2134 = vmatprep.subr.mxu0 0.0
        %2135 = vmatpush1.msra.mxu0 %v2075
        %2136 = vmatprep.subr.mxu0 0.0
        %2137 = vmatpush1.msra.mxu0 %v2074
        %2138 = vmatprep.subr.mxu0 0.0
        %2139 = vmatpush2.msra.mxu0 %v2105
        %2140 = vmatprep.subr.mxu0 0.0
        %2141 = vmatpush2.msra.mxu0 %v2104
        %2142 = vmatprep.subr.mxu0 0.0
        %2143 = vmatpush2.msra.mxu0 %v2103
        %2144 = vmatprep.subr.mxu0 0.0
        %2145 = vmatpush2.msra.mxu0 %v2102
        %2146 = vmatprep.subr.mxu0 0.0
        %2147 = vmatpush2.msra.mxu0 %v2101
        %2148 = vmatprep.subr.mxu0 0.0
        %2149 = vmatpush2.msra.mxu0 %v2100
        %2150 = vmatprep.subr.mxu0 0.0
        %2151 = vmatpush2.msra.mxu0 %v2099
        %2152 = vmatprep.subr.mxu0 0.0
        %2153 = vmatpush2.msra.mxu0 %v2098
        %2154 = vmatprep.subr.mxu0 0.0
        %2155 = vmatpush2.msra.mxu0 %v2097
        %2156 = vmatprep.subr.mxu0 0.0
        %2157 = vmatpush2.msra.mxu0 %v2096
        %2158 = vmatprep.subr.mxu0 0.0
        %2159 = vmatpush2.msra.mxu0 %v2095
        %2160 = vmatprep.subr.mxu0 0.0
        %2161 = vmatpush2.msra.mxu0 %v2094
        %2162 = vmatprep.subr.mxu0 0.0
        %2163 = vmatpush2.msra.mxu0 %v2093
        %2164 = vmatprep.subr.mxu0 0.0
        %2165 = vmatpush2.msra.mxu0 %v2092
        %2166 = vmatprep.subr.mxu0 0.0
        %2167 = vmatpush2.msra.mxu0 %v2091
        %2168 = vmatprep.subr.mxu0 0.0
        %2169 = vmatpush2.msra.mxu0 %v2090
        %2170 = vmatprep.mubr.f32.mxu0 %v2069
        %2171 = vmatmul.mubr.f32.gmra.mxu0 %v2068
        %v2172 = vpop.f32.mrf.mxu0
        %v2173 = vadd.f32 0.0, %v2172
        %v2174 = vpop.f32.mrf.mxu0
        %2175 = vmatprep.mubr.f32.mxu0 %v2071
        %2176 = vmatmul.mubr.f32.gmra.mxu0 %v2070
        %v2177 = vpop.f32.mrf.mxu0
        %v2178 = vadd.f32 0.0, %v2177
        %v2179 = vpop.f32.mrf.mxu0
        %2180 = vmatprep.mubr.f32.mxu0 %v2073
        %2181 = vmatmul.mubr.f32.gmra.mxu0 %v2072
        %v2182 = vpop.f32.mrf.mxu0
        %v2183 = vadd.f32 0.0, %v2182
        %v2184 = vpop.f32.mrf.mxu0
        %2185 = vdwg.mxu0
        %v2186 = vadd.f32 %v1843, %v2173
        %v2187 = vadd.f32 %v1844, %v2178
        %v2188 = vadd.f32 %v1845, %v2183
        %v2189 = vld [vmem:[%s12] sm:$0x1]
        %v2191 = vlaneseq
        %v2192 = vshrl.u32 %v2191, 7
        %v2193 = vsub.s32 0, %v2192
        %v2194 = vrot.slane %v2189, %v2193
        %v2196 = vadd.f32 %v2186, %v2194
        %v2197 = vadd.f32 %v2187, %v2194
        %v2198 = vadd.f32 %v2188, %v2194
        %2199 = vst [vmem:[%s470] sm:$0xff] %v2196
        %2200 = vst [vmem:[%s470 + $0x8] sm:$0xff] %v2197
        %2201 = vst [vmem:[%s470 + $0x10] sm:$0xff] %v2198
        %p2202 = scmp.lt.s32.totalorder %s26, 1
        %s2203 = scalar_select %p2202, %s26, 1
        %s2204 = smul.addr %s2203, 3
        %s2205 = smul.addr %s2204, 8
        %s2206 = scalar_lea.vmem %s13, %s2205
        // Predicated region
        $region81: #{image_encoder_forward.5} parent=71 // pred_check
          %p2207 = pneg %p322
        $region82: #{image_encoder_forward.5} parent=71 // pred_check_branch
          %2209 = sbr.rel (%p2207) target = $region84
        $region83: #{image_encoder_forward.5} parent=71 // pred_region
          _
        $region84: #{image_encoder_forward.5} parent=71 // pred_fallthru
          _
      $region72: #{image_encoder_forward.5} parent=5 // pred_fallthru
        _
      %p2210 = scmp.le.s32.totalorder 2, %s21
      // Predicated region
      $region85: #{image_encoder_forward.5} parent=5 // pred_check
        %p2211 = pneg %p2210
      $region86: #{image_encoder_forward.5} parent=5 // pred_check_branch
        %2213 = sbr.rel (%p2211) target = $region88
      $region87: #{image_encoder_forward.5} parent=5 // pred_region
        %s2214 = ssub.s32 %s21, 2
        // Predicated region
        $region89: #{image_encoder_forward.5} parent=87 // pred_check
          %p2215 = pneg %p328
        $region90: #{image_encoder_forward.5} parent=87 // pred_check_branch
          %2217 = sbr.rel (%p2215) target = $region92
        $region91: #{image_encoder_forward.5} parent=87 // pred_region
          %p2218 = scmp.lt.s32.totalorder %s27, 1
          %s2219 = scalar_select %p2218, %s27, 1
          %s2220 = smul.addr %s2219, 3
          %s2221 = smul.addr %s2220, 8
          %s2222 = scalar_lea.vmem %s13, %s2221
        $region92: #{image_encoder_forward.5} parent=87 // pred_fallthru
          _
      $region88: #{image_encoder_forward.5} parent=5 // pred_fallthru
        _
    $region6: #{image_encoder_forward.5} parent=1 // loop_footer
      %s25 = sadd.s32 1, %s21
    $region7: #{image_encoder_forward.5} parent=1 // loop_footer_branch
      %20 = sbr.rel target = $region3
    $region8: #{image_encoder_forward.5} parent=1 // loop_exit
      _
    %2223 = vsyncpa [#allocation3], 1
    %s2224 = scalar_lea.sflag [#allocation3], 1
    %2225 = vsyncpa %s2224, 1
    %2226 = vsyncpa [#allocation5], 1

// kernel: image_encoder_forward.7
$region0: #{image_encoder_forward.7}
  #allocation0 [shape = 'u32[]', space=smem, size = 0x4, offset = 0x4, fixed_abs, tag = 'smem constant byte address 0x4 - core index']
  #allocation1 [shape = 'u32[144,128]{1,0:T(1,128)}', space=vmem, size = 0x12000, scoped, tag = 'internal scratch']
  %s0 = inlined_call_operand.vmem [shape: f32[2,24,128], index: 0, kind: input, shape index: {}]
  %s1 = inlined_call_operand.vmem [shape: f32[1,128], index: 1, kind: input, shape index: {}]
  %s2 = inlined_call_operand.vmem [shape: f32[1,128], index: 2, kind: input, shape index: {}]
  %s3 = inlined_call_operand.hbm [shape: f32[128,768], index: 3, kind: input, shape index: {}]
  %s4 = inlined_call_operand.vmem [shape: f32[768,768], index: 4, kind: input, shape index: {}]
  %s5 = inlined_call_operand.vmem [shape: f32[1,768], index: 5, kind: input, shape index: {}]
  %s6 = inlined_call_operand.vmem [shape: f32[768,512], index: 6, kind: input, shape index: {}]
  %s7 = inlined_call_operand.vmem [shape: f32[1,512], index: 7, kind: input, shape index: {}]
  %s8 = inlined_call_operand.hbm [shape: f32[2,512], index: 8, kind: output, shape index: {}]
  %s9 = sld [smem:[#allocation0]]
  $region46: #{image_encoder_forward.7} parent=0
    _
  %s11 = ssub.s32 1, %s9
  %s12 = scalar_select 0, %s11, %s9
  $region1: #{image_encoder_forward.7} parent=0
    #allocation2 [shape = 'u8[393216]{0}', space=vmem, size = 0x60000, scoped, tag = 'input window, operand 3, single buffered']
    #allocation3 [shape = 's32[1]{0}', space=sflag, size = 0x4, scoped, tag = 'scoped memory for image_encoder_forward.7']
    #allocation4 [shape = 's32[1]{0}', space=sflag, size = 0x4, scoped, tag = 'scoped memory for image_encoder_forward.7']
    #allocation5 [shape = 'u8[4096]{0}', space=vmem, size = 0x1000, scoped, tag = 'output window, operand 0, single buffered']
    %13 = vsyncpa [#allocation3], 0
    %14 = vsyncpa [#allocation4], 0
    // Predicated region
    $region2: #{image_encoder_forward.7} parent=1 // pred_check
      _
    $region3: #{image_encoder_forward.7} parent=1 // pred_check_branch
      %16 = sbr.rel (0) target = $region5
    $region4: #{image_encoder_forward.7} parent=1 // pred_region
      _
    $region5: #{image_encoder_forward.7} parent=1 // pred_fallthru
      _
    // Predicated region
    $region6: #{image_encoder_forward.7} parent=1 // pred_check
      _
    $region7: #{image_encoder_forward.7} parent=1 // pred_check_branch
      %18 = sbr.rel (0) target = $region9
    $region8: #{image_encoder_forward.7} parent=1 // pred_region
      _
    $region9: #{image_encoder_forward.7} parent=1 // pred_fallthru
      _
    // Predicated region
    $region10: #{image_encoder_forward.7} parent=1 // pred_check
      _
    $region11: #{image_encoder_forward.7} parent=1 // pred_check_branch
      %20 = sbr.rel (0) target = $region13
    $region12: #{image_encoder_forward.7} parent=1 // pred_region
      _
    $region13: #{image_encoder_forward.7} parent=1 // pred_fallthru
      _
    // Predicated region
    $region14: #{image_encoder_forward.7} parent=1 // pred_check
      _
    $region15: #{image_encoder_forward.7} parent=1 // pred_check_branch
      %22 = sbr.rel (0) target = $region17
    $region16: #{image_encoder_forward.7} parent=1 // pred_region
      %s24 = ssub.s32 12288, 12288
      %25 = vsyncadd [#allocation3], %s24
      %s26 = sshll.u32 [#allocation2], 4
      %s27 = int_to_ptr.vmem [resolvable:$true] %s26
      %32 = dma.hbm_to_vmem [thread:$0]  %s3, 12288, %s27, [#allocation3], 768, 768, 48
    $region17: #{image_encoder_forward.7} parent=1 // pred_fallthru
      _
    // Predicated region
    $region18: #{image_encoder_forward.7} parent=1 // pred_check
      _
    $region19: #{image_encoder_forward.7} parent=1 // pred_check_branch
      %34 = sbr.rel (0) target = $region21
    $region20: #{image_encoder_forward.7} parent=1 // pred_region
      _
    $region21: #{image_encoder_forward.7} parent=1 // pred_fallthru
      _
    // Predicated region
    $region22: #{image_encoder_forward.7} parent=1 // pred_check
      _
    $region23: #{image_encoder_forward.7} parent=1 // pred_check_branch
      %36 = sbr.rel (0) target = $region25
    $region24: #{image_encoder_forward.7} parent=1 // pred_region
      _
    $region25: #{image_encoder_forward.7} parent=1 // pred_fallthru
      _
    // Predicated region
    $region26: #{image_encoder_forward.7} parent=1 // pred_check
      _
    $region27: #{image_encoder_forward.7} parent=1 // pred_check_branch
      %38 = sbr.rel (0) target = $region29
    $region28: #{image_encoder_forward.7} parent=1 // pred_region
      _
    $region29: #{image_encoder_forward.7} parent=1 // pred_fallthru
      _
    // Predicated region
    $region30: #{image_encoder_forward.7} parent=1 // pred_check
      _
    $region31: #{image_encoder_forward.7} parent=1 // pred_check_branch
      %40 = sbr.rel (0) target = $region33
    $region32: #{image_encoder_forward.7} parent=1 // pred_region
      _
    $region33: #{image_encoder_forward.7} parent=1 // pred_fallthru
      _
    // Predicated region
    $region34: #{image_encoder_forward.7} parent=1 // pred_check
      _
    $region35: #{image_encoder_forward.7} parent=1 // pred_check_branch
      %42 = sbr.rel (0) target = $region37
    $region36: #{image_encoder_forward.7} parent=1 // pred_region
      %43 = dma.done [#allocation3], 12288
    $region37: #{image_encoder_forward.7} parent=1 // pred_fallthru
      _
    %v44 = vld [vmem:[%s0] sm:$0xff]
    %v45 = vld [vmem:[%s0 + $0x18] sm:$0xff]
    %v46 = vld [vmem:[%s1] sm:$0x1]
    %v47 = vld [vmem:[%s2] sm:$0x1]
    %v50 = vrot.slane %v45, 7
    %vm51 = vcmask 1041409
    %v52 = vsel %vm51, %v50, %v44
    %vm54 = vcmask 1041408
    %v55 = vsel %vm54, %v52, 0.0
    %56 = vadd.xlane.f32.xlu0 %v55
    %v57 = vpop.xlane.xlu0 %56
    %v58 = vrcp.pop 128.0
    %v59 = vmul.f32 %v57, %v58
    %v61 = vrot.slane %v59, 1
    %v64 = vsub.f32 %v44, %v59
    %v65 = vsub.f32 %v45, %v61
    %v66 = vmul.f32 %v64, %v64
    %v67 = vmul.f32 %v65, %v65
    %v70 = vrot.slane %v67, 7
    %v71 = vsel %vm51, %v70, %v66
    %v73 = vsel %vm54, %v71, 0.0
    %74 = vadd.xlane.f32.xlu0 %v73
    %v75 = vpop.xlane.xlu0 %74
    %v76 = vmul.f32 %v75, %v58
    %v77 = vadd.f32 %v76, 1e-05
    %v78 = vrsqrt.pop %v77
    %v80 = vrot.slane %v78, 1
    %v83 = vmul.f32 %v64, %v78
    %v84 = vmul.f32 %v65, %v80
    %v86 = vlaneseq
    %v87 = vshrl.u32 %v86, 7
    %v88 = vsub.s32 0, %v87
    %v89 = vrot.slane %v46, %v88
    %v91 = vmul.f32 %v83, %v89
    %v92 = vmul.f32 %v84, %v89
    %v94 = vlaneseq
    %v95 = vshrl.u32 %v94, 7
    %v96 = vsub.s32 0, %v95
    %v97 = vrot.slane %v47, %v96
    %v99 = vadd.f32 %v91, %v97
    %v100 = vadd.f32 %v92, %v97
    %v101 = vld [vmem:[#allocation2] sm:$0xff]
    %v102 = vld [vmem:[#allocation2 + $0x8] sm:$0xff]
    %v103 = vld [vmem:[#allocation2 + $0x10] sm:$0xff]
    %v104 = vld [vmem:[#allocation2 + $0x18] sm:$0xff]
    %v105 = vld [vmem:[#allocation2 + $0x20] sm:$0xff]
    %v106 = vld [vmem:[#allocation2 + $0x28] sm:$0xff]
    %v107 = vld [vmem:[#allocation2 + $0x30] sm:$0xff]
    %v108 = vld [vmem:[#allocation2 + $0x38] sm:$0xff]
    %v109 = vld [vmem:[#allocation2 + $0x40] sm:$0xff]
    %v110 = vld [vmem:[#allocation2 + $0x48] sm:$0xff]
    %v111 = vld [vmem:[#allocation2 + $0x50] sm:$0xff]
    %v112 = vld [vmem:[#allocation2 + $0x58] sm:$0xff]
    %v113 = vld [vmem:[#allocation2 + $0x60] sm:$0xff]
    %v114 = vld [vmem:[#allocation2 + $0x68] sm:$0xff]
    %v115 = vld [vmem:[#allocation2 + $0x70] sm:$0xff]
    %v116 = vld [vmem:[#allocation2 + $0x78] sm:$0xff]
    %v117 = vld [vmem:[#allocation2 + $0x80] sm:$0xff]
    %v118 = vld [vmem:[#allocation2 + $0x88] sm:$0xff]
    %v119 = vld [vmem:[#allocation2 + $0x90] sm:$0xff]
    %v120 = vld [vmem:[#allocation2 + $0x98] sm:$0xff]
    %v121 = vld [vmem:[#allocation2 + $0xa0] sm:$0xff]
    %v122 = vld [vmem:[#allocation2 + $0xa8] sm:$0xff]
    %v123 = vld [vmem:[#allocation2 + $0xb0] sm:$0xff]
    %v124 = vld [vmem:[#allocation2 + $0xb8] sm:$0xff]
    %v125 = vld [vmem:[#allocation2 + $0xc0] sm:$0xff]
    %v126 = vld [vmem:[#allocation2 + $0xc8] sm:$0xff]
    %v127 = vld [vmem:[#allocation2 + $0xd0] sm:$0xff]
    %v128 = vld [vmem:[#allocation2 + $0xd8] sm:$0xff]
    %v129 = vld [vmem:[#allocation2 + $0xe0] sm:$0xff]
    %v130 = vld [vmem:[#allocation2 + $0xe8] sm:$0xff]
    %v131 = vld [vmem:[#allocation2 + $0xf0] sm:$0xff]
    %v132 = vld [vmem:[#allocation2 + $0xf8] sm:$0xff]
    %v133 = vld [vmem:[#allocation2 + $0x100] sm:$0xff]
    %v134 = vld [vmem:[#allocation2 + $0x108] sm:$0xff]
    %v135 = vld [vmem:[#allocation2 + $0x110] sm:$0xff]
    %v136 = vld [vmem:[#allocation2 + $0x118] sm:$0xff]
    %v137 = vld [vmem:[#allocation2 + $0x120] sm:$0xff]
    %v138 = vld [vmem:[#allocation2 + $0x128] sm:$0xff]
    %v139 = vld [vmem:[#allocation2 + $0x130] sm:$0xff]
    %v140 = vld [vmem:[#allocation2 + $0x138] sm:$0xff]
    %v141 = vld [vmem:[#allocation2 + $0x140] sm:$0xff]
    %v142 = vld [vmem:[#allocation2 + $0x148] sm:$0xff]
    %v143 = vld [vmem:[#allocation2 + $0x150] sm:$0xff]
    %v144 = vld [vmem:[#allocation2 + $0x158] sm:$0xff]
    %v145 = vld [vmem:[#allocation2 + $0x160] sm:$0xff]
    %v146 = vld [vmem:[#allocation2 + $0x168] sm:$0xff]
    %v147 = vld [vmem:[#allocation2 + $0x170] sm:$0xff]
    %v148 = vld [vmem:[#allocation2 + $0x178] sm:$0xff]
    %v149 = vld [vmem:[#allocation2 + $0x180] sm:$0xff]
    %v150 = vld [vmem:[#allocation2 + $0x188] sm:$0xff]
    %v151 = vld [vmem:[#allocation2 + $0x190] sm:$0xff]
    %v152 = vld [vmem:[#allocation2 + $0x198] sm:$0xff]
    %v153 = vld [vmem:[#allocation2 + $0x1a0] sm:$0xff]
    %v154 = vld [vmem:[#allocation2 + $0x1a8] sm:$0xff]
    %v155 = vld [vmem:[#allocation2 + $0x1b0] sm:$0xff]
    %v156 = vld [vmem:[#allocation2 + $0x1b8] sm:$0xff]
    %v157 = vld [vmem:[#allocation2 + $0x1c0] sm:$0xff]
    %v158 = vld [vmem:[#allocation2 + $0x1c8] sm:$0xff]
    %v159 = vld [vmem:[#allocation2 + $0x1d0] sm:$0xff]
    %v160 = vld [vmem:[#allocation2 + $0x1d8] sm:$0xff]
    %v161 = vld [vmem:[#allocation2 + $0x1e0] sm:$0xff]
    %v162 = vld [vmem:[#allocation2 + $0x1e8] sm:$0xff]
    %v163 = vld [vmem:[#allocation2 + $0x1f0] sm:$0xff]
    %v164 = vld [vmem:[#allocation2 + $0x1f8] sm:$0xff]
    %v165 = vld [vmem:[#allocation2 + $0x200] sm:$0xff]
    %v166 = vld [vmem:[#allocation2 + $0x208] sm:$0xff]
    %v167 = vld [vmem:[#allocation2 + $0x210] sm:$0xff]
    %v168 = vld [vmem:[#allocation2 + $0x218] sm:$0xff]
    %v169 = vld [vmem:[#allocation2 + $0x220] sm:$0xff]
    %v170 = vld [vmem:[#allocation2 + $0x228] sm:$0xff]
    %v171 = vld [vmem:[#allocation2 + $0x230] sm:$0xff]
    %v172 = vld [vmem:[#allocation2 + $0x238] sm:$0xff]
    %v173 = vld [vmem:[#allocation2 + $0x240] sm:$0xff]
    %v174 = vld [vmem:[#allocation2 + $0x248] sm:$0xff]
    %v175 = vld [vmem:[#allocation2 + $0x250] sm:$0xff]
    %v176 = vld [vmem:[#allocation2 + $0x258] sm:$0xff]
    %v177 = vld [vmem:[#allocation2 + $0x260] sm:$0xff]
    %v178 = vld [vmem:[#allocation2 + $0x268] sm:$0xff]
    %v179 = vld [vmem:[#allocation2 + $0x270] sm:$0xff]
    %v180 = vld [vmem:[#allocation2 + $0x278] sm:$0xff]
    %v181 = vld [vmem:[#allocation2 + $0x280] sm:$0xff]
    %v182 = vld [vmem:[#allocation2 + $0x288] sm:$0xff]
    %v183 = vld [vmem:[#allocation2 + $0x290] sm:$0xff]
    %v184 = vld [vmem:[#allocation2 + $0x298] sm:$0xff]
    %v185 = vld [vmem:[#allocation2 + $0x2a0] sm:$0xff]
    %v186 = vld [vmem:[#allocation2 + $0x2a8] sm:$0xff]
    %v187 = vld [vmem:[#allocation2 + $0x2b0] sm:$0xff]
    %v188 = vld [vmem:[#allocation2 + $0x2b8] sm:$0xff]
    %v189 = vld [vmem:[#allocation2 + $0x2c0] sm:$0xff]
    %v190 = vld [vmem:[#allocation2 + $0x2c8] sm:$0xff]
    %v191 = vld [vmem:[#allocation2 + $0x2d0] sm:$0xff]
    %v192 = vld [vmem:[#allocation2 + $0x2d8] sm:$0xff]
    %v193 = vld [vmem:[#allocation2 + $0x2e0] sm:$0xff]
    %v194 = vld [vmem:[#allocation2 + $0x2e8] sm:$0xff]
    %v195 = vld [vmem:[#allocation2 + $0x2f0] sm:$0xff]
    %v196 = vld [vmem:[#allocation2 + $0x2f8] sm:$0xff]
    %v199 = vrot.slane %v100, 7
    %v200 = vsel %vm51, %v199, %v99
    %202 = vmatprep.subr.mxu0 %v192
    %203 = vmatpush1.msra.mxu0 %v191
    %204 = vmatprep.subr.mxu0 %v186
    %205 = vmatpush1.msra.mxu0 %v185
    %206 = vmatprep.subr.mxu0 %v180
    %207 = vmatpush1.msra.mxu0 %v179
    %208 = vmatprep.subr.mxu0 %v174
    %209 = vmatpush1.msra.mxu0 %v173
    %210 = vmatprep.subr.mxu0 %v168
    %211 = vmatpush1.msra.mxu0 %v167
    %212 = vmatprep.subr.mxu0 %v162
    %213 = vmatpush1.msra.mxu0 %v161
    %214 = vmatprep.subr.mxu0 %v156
    %215 = vmatpush1.msra.mxu0 %v155
    %216 = vmatprep.subr.mxu0 %v150
    %217 = vmatpush1.msra.mxu0 %v149
    %218 = vmatprep.subr.mxu0 %v144
    %219 = vmatpush1.msra.mxu0 %v143
    %220 = vmatprep.subr.mxu0 %v138
    %221 = vmatpush1.msra.mxu0 %v137
    %222 = vmatprep.subr.mxu0 %v132
    %223 = vmatpush1.msra.mxu0 %v131
    %224 = vmatprep.subr.mxu0 %v126
    %225 = vmatpush1.msra.mxu0 %v125
    %226 = vmatprep.subr.mxu0 %v120
    %227 = vmatpush1.msra.mxu0 %v119
    %228 = vmatprep.subr.mxu0 %v114
    %229 = vmatpush1.msra.mxu0 %v113
    %230 = vmatprep.subr.mxu0 %v108
    %231 = vmatpush1.msra.mxu0 %v107
    %232 = vmatprep.subr.mxu0 %v102
    %233 = vmatpush1.msra.mxu0 %v101
    %234 = vmatprep.subr.mxu0 0.0
    %235 = vmatpush2.msra.mxu0 0.0
    %236 = vmatprep.subr.mxu0 0.0
    %237 = vmatpush2.msra.mxu0 0.0
    %238 = vmatprep.subr.mxu0 0.0
    %239 = vmatpush2.msra.mxu0 0.0
    %240 = vmatprep.subr.mxu0 0.0
    %241 = vmatpush2.msra.mxu0 0.0
    %242 = vmatprep.subr.mxu0 0.0
    %243 = vmatpush2.msra.mxu0 0.0
    %244 = vmatprep.subr.mxu0 0.0
    %245 = vmatpush2.msra.mxu0 0.0
    %246 = vmatprep.subr.mxu0 0.0
    %247 = vmatpush2.msra.mxu0 0.0
    %248 = vmatprep.subr.mxu0 0.0
    %249 = vmatpush2.msra.mxu0 0.0
    %250 = vmatprep.subr.mxu0 0.0
    %251 = vmatpush2.msra.mxu0 0.0
    %252 = vmatprep.subr.mxu0 0.0
    %253 = vmatpush2.msra.mxu0 0.0
    %254 = vmatprep.subr.mxu0 0.0
    %255 = vmatpush2.msra.mxu0 0.0
    %256 = vmatprep.subr.mxu0 0.0
    %257 = vmatpush2.msra.mxu0 0.0
    %258 = vmatprep.subr.mxu0 0.0
    %259 = vmatpush2.msra.mxu0 0.0
    %260 = vmatprep.subr.mxu0 0.0
    %261 = vmatpush2.msra.mxu0 0.0
    %262 = vmatprep.subr.mxu0 0.0
    %263 = vmatpush2.msra.mxu0 0.0
    %264 = vmatprep.subr.mxu0 0.0
    %265 = vmatpush2.msra.mxu0 0.0
    %266 = vmatprep.mubr.f32.mxu0 0.0
    %267 = vmatmul.mubr.f32.gmra.mxu0 %v200
    %v268 = vpop.f32.mrf.mxu0
    %v269 = vadd.f32 0.0, %v268
    %v270 = vpop.f32.mrf.mxu0
    %v271 = vadd.f32 0.0, %v270
    %272 = vdwg.mxu0
    %273 = vmatprep.subr.mxu0 %v194
    %274 = vmatpush1.msra.mxu0 %v193
    %275 = vmatprep.subr.mxu0 %v188
    %276 = vmatpush1.msra.mxu0 %v187
    %277 = vmatprep.subr.mxu0 %v182
    %278 = vmatpush1.msra.mxu0 %v181
    %279 = vmatprep.subr.mxu0 %v176
    %280 = vmatpush1.msra.mxu0 %v175
    %281 = vmatprep.subr.mxu0 %v170
    %282 = vmatpush1.msra.mxu0 %v169
    %283 = vmatprep.subr.mxu0 %v164
    %284 = vmatpush1.msra.mxu0 %v163
    %285 = vmatprep.subr.mxu0 %v158
    %286 = vmatpush1.msra.mxu0 %v157
    %287 = vmatprep.subr.mxu0 %v152
    %288 = vmatpush1.msra.mxu0 %v151
    %289 = vmatprep.subr.mxu0 %v146
    %290 = vmatpush1.msra.mxu0 %v145
    %291 = vmatprep.subr.mxu0 %v140
    %292 = vmatpush1.msra.mxu0 %v139
    %293 = vmatprep.subr.mxu0 %v134
    %294 = vmatpush1.msra.mxu0 %v133
    %295 = vmatprep.subr.mxu0 %v128
    %296 = vmatpush1.msra.mxu0 %v127
    %297 = vmatprep.subr.mxu0 %v122
    %298 = vmatpush1.msra.mxu0 %v121
    %299 = vmatprep.subr.mxu0 %v116
    %300 = vmatpush1.msra.mxu0 %v115
    %301 = vmatprep.subr.mxu0 %v110
    %302 = vmatpush1.msra.mxu0 %v109
    %303 = vmatprep.subr.mxu0 %v104
    %304 = vmatpush1.msra.mxu0 %v103
    %305 = vmatprep.subr.mxu0 0.0
    %306 = vmatpush2.msra.mxu0 0.0
    %307 = vmatprep.subr.mxu0 0.0
    %308 = vmatpush2.msra.mxu0 0.0
    %309 = vmatprep.subr.mxu0 0.0
    %310 = vmatpush2.msra.mxu0 0.0
    %311 = vmatprep.subr.mxu0 0.0
    %312 = vmatpush2.msra.mxu0 0.0
    %313 = vmatprep.subr.mxu0 0.0
    %314 = vmatpush2.msra.mxu0 0.0
    %315 = vmatprep.subr.mxu0 0.0
    %316 = vmatpush2.msra.mxu0 0.0
    %317 = vmatprep.subr.mxu0 0.0
    %318 = vmatpush2.msra.mxu0 0.0
    %319 = vmatprep.subr.mxu0 0.0
    %320 = vmatpush2.msra.mxu0 0.0
    %321 = vmatprep.subr.mxu0 0.0
    %322 = vmatpush2.msra.mxu0 0.0
    %323 = vmatprep.subr.mxu0 0.0
    %324 = vmatpush2.msra.mxu0 0.0
    %325 = vmatprep.subr.mxu0 0.0
    %326 = vmatpush2.msra.mxu0 0.0
    %327 = vmatprep.subr.mxu0 0.0
    %328 = vmatpush2.msra.mxu0 0.0
    %329 = vmatprep.subr.mxu0 0.0
    %330 = vmatpush2.msra.mxu0 0.0
    %331 = vmatprep.subr.mxu0 0.0
    %332 = vmatpush2.msra.mxu0 0.0
    %333 = vmatprep.subr.mxu0 0.0
    %334 = vmatpush2.msra.mxu0 0.0
    %335 = vmatprep.subr.mxu0 0.0
    %336 = vmatpush2.msra.mxu0 0.0
    %337 = vmatprep.mubr.f32.mxu0 0.0
    %338 = vmatmul.mubr.f32.gmra.mxu0 %v200
    %v339 = vpop.f32.mrf.mxu0
    %v340 = vadd.f32 0.0, %v339
    %v341 = vpop.f32.mrf.mxu0
    %v342 = vadd.f32 0.0, %v341
    %343 = vdwg.mxu0
    %344 = vmatprep.subr.mxu0 %v196
    %345 = vmatpush1.msra.mxu0 %v195
    %346 = vmatprep.subr.mxu0 %v190
    %347 = vmatpush1.msra.mxu0 %v189
    %348 = vmatprep.subr.mxu0 %v184
    %349 = vmatpush1.msra.mxu0 %v183
    %350 = vmatprep.subr.mxu0 %v178
    %351 = vmatpush1.msra.mxu0 %v177
    %352 = vmatprep.subr.mxu0 %v172
    %353 = vmatpush1.msra.mxu0 %v171
    %354 = vmatprep.subr.mxu0 %v166
    %355 = vmatpush1.msra.mxu0 %v165
    %356 = vmatprep.subr.mxu0 %v160
    %357 = vmatpush1.msra.mxu0 %v159
    %358 = vmatprep.subr.mxu0 %v154
    %359 = vmatpush1.msra.mxu0 %v153
    %360 = vmatprep.subr.mxu0 %v148
    %361 = vmatpush1.msra.mxu0 %v147
    %362 = vmatprep.subr.mxu0 %v142
    %363 = vmatpush1.msra.mxu0 %v141
    %364 = vmatprep.subr.mxu0 %v136
    %365 = vmatpush1.msra.mxu0 %v135
    %366 = vmatprep.subr.mxu0 %v130
    %367 = vmatpush1.msra.mxu0 %v129
    %368 = vmatprep.subr.mxu0 %v124
    %369 = vmatpush1.msra.mxu0 %v123
    %370 = vmatprep.subr.mxu0 %v118
    %371 = vmatpush1.msra.mxu0 %v117
    %372 = vmatprep.subr.mxu0 %v112
    %373 = vmatpush1.msra.mxu0 %v111
    %374 = vmatprep.subr.mxu0 %v106
    %375 = vmatpush1.msra.mxu0 %v105
    %376 = vmatprep.subr.mxu0 0.0
    %377 = vmatpush2.msra.mxu0 0.0
    %378 = vmatprep.subr.mxu0 0.0
    %379 = vmatpush2.msra.mxu0 0.0
    %380 = vmatprep.subr.mxu0 0.0
    %381 = vmatpush2.msra.mxu0 0.0
    %382 = vmatprep.subr.mxu0 0.0
    %383 = vmatpush2.msra.mxu0 0.0
    %384 = vmatprep.subr.mxu0 0.0
    %385 = vmatpush2.msra.mxu0 0.0
    %386 = vmatprep.subr.mxu0 0.0
    %387 = vmatpush2.msra.mxu0 0.0
    %388 = vmatprep.subr.mxu0 0.0
    %389 = vmatpush2.msra.mxu0 0.0
    %390 = vmatprep.subr.mxu0 0.0
    %391 = vmatpush2.msra.mxu0 0.0
    %392 = vmatprep.subr.mxu0 0.0
    %393 = vmatpush2.msra.mxu0 0.0
    %394 = vmatprep.subr.mxu0 0.0
    %395 = vmatpush2.msra.mxu0 0.0
    %396 = vmatprep.subr.mxu0 0.0
    %397 = vmatpush2.msra.mxu0 0.0
    %398 = vmatprep.subr.mxu0 0.0
    %399 = vmatpush2.msra.mxu0 0.0
    %400 = vmatprep.subr.mxu0 0.0
    %401 = vmatpush2.msra.mxu0 0.0
    %402 = vmatprep.subr.mxu0 0.0
    %403 = vmatpush2.msra.mxu0 0.0
    %404 = vmatprep.subr.mxu0 0.0
    %405 = vmatpush2.msra.mxu0 0.0
    %406 = vmatprep.subr.mxu0 0.0
    %407 = vmatpush2.msra.mxu0 0.0
    %408 = vmatprep.mubr.f32.mxu0 0.0
    %409 = vmatmul.mubr.f32.gmra.mxu0 %v200
    %v410 = vpop.f32.mrf.mxu0
    %v411 = vadd.f32 0.0, %v410
    %v412 = vpop.f32.mrf.mxu0
    %v413 = vadd.f32 0.0, %v412
    %414 = vdwg.mxu0
    %v415 = vld [vmem:[%s4] sm:$0xff]
    %v416 = vld [vmem:[%s4 + $0x8] sm:$0xff]
    %v417 = vld [vmem:[%s4 + $0x10] sm:$0xff]
    %v418 = vld [vmem:[%s4 + $0x18] sm:$0xff]
    %v419 = vld [vmem:[%s4 + $0x20] sm:$0xff]
    %v420 = vld [vmem:[%s4 + $0x28] sm:$0xff]
    %v421 = vld [vmem:[%s4 + $0x30] sm:$0xff]
    %v422 = vld [vmem:[%s4 + $0x38] sm:$0xff]
    %v423 = vld [vmem:[%s4 + $0x40] sm:$0xff]
    %v424 = vld [vmem:[%s4 + $0x48] sm:$0xff]
    %v425 = vld [vmem:[%s4 + $0x50] sm:$0xff]
    %v426 = vld [vmem:[%s4 + $0x58] sm:$0xff]
    %v427 = vld [vmem:[%s4 + $0x60] sm:$0xff]
    %v428 = vld [vmem:[%s4 + $0x68] sm:$0xff]
    %v429 = vld [vmem:[%s4 + $0x70] sm:$0xff]
    %v430 = vld [vmem:[%s4 + $0x78] sm:$0xff]
    %v431 = vld [vmem:[%s4 + $0x80] sm:$0xff]
    %v432 = vld [vmem:[%s4 + $0x88] sm:$0xff]
    %v433 = vld [vmem:[%s4 + $0x90] sm:$0xff]
    %v434 = vld [vmem:[%s4 + $0x98] sm:$0xff]
    %v435 = vld [vmem:[%s4 + $0xa0] sm:$0xff]
    %v436 = vld [vmem:[%s4 + $0xa8] sm:$0xff]
    %v437 = vld [vmem:[%s4 + $0xb0] sm:$0xff]
    %v438 = vld [vmem:[%s4 + $0xb8] sm:$0xff]
    %v439 = vld [vmem:[%s4 + $0xc0] sm:$0xff]
    %v440 = vld [vmem:[%s4 + $0xc8] sm:$0xff]
    %v441 = vld [vmem:[%s4 + $0xd0] sm:$0xff]
    %v442 = vld [vmem:[%s4 + $0xd8] sm:$0xff]
    %v443 = vld [vmem:[%s4 + $0xe0] sm:$0xff]
    %v444 = vld [vmem:[%s4 + $0xe8] sm:$0xff]
    %v445 = vld [vmem:[%s4 + $0xf0] sm:$0xff]
    %v446 = vld [vmem:[%s4 + $0xf8] sm:$0xff]
    %v447 = vld [vmem:[%s4 + $0x100] sm:$0xff]
    %v448 = vld [vmem:[%s4 + $0x108] sm:$0xff]
    %v449 = vld [vmem:[%s4 + $0x110] sm:$0xff]
    %v450 = vld [vmem:[%s4 + $0x118] sm:$0xff]
    %v451 = vld [vmem:[%s4 + $0x120] sm:$0xff]
    %v452 = vld [vmem:[%s4 + $0x128] sm:$0xff]
    %v453 = vld [vmem:[%s4 + $0x130] sm:$0xff]
    %v454 = vld [vmem:[%s4 + $0x138] sm:$0xff]
    %v455 = vld [vmem:[%s4 + $0x140] sm:$0xff]
    %v456 = vld [vmem:[%s4 + $0x148] sm:$0xff]
    %v457 = vld [vmem:[%s4 + $0x150] sm:$0xff]
    %v458 = vld [vmem:[%s4 + $0x158] sm:$0xff]
    %v459 = vld [vmem:[%s4 + $0x160] sm:$0xff]
    %v460 = vld [vmem:[%s4 + $0x168] sm:$0xff]
    %v461 = vld [vmem:[%s4 + $0x170] sm:$0xff]
    %v462 = vld [vmem:[%s4 + $0x178] sm:$0xff]
    %v463 = vld [vmem:[%s4 + $0x180] sm:$0xff]
    %v464 = vld [vmem:[%s4 + $0x188] sm:$0xff]
    %v465 = vld [vmem:[%s4 + $0x190] sm:$0xff]
    %v466 = vld [vmem:[%s4 + $0x198] sm:$0xff]
    %v467 = vld [vmem:[%s4 + $0x1a0] sm:$0xff]
    %v468 = vld [vmem:[%s4 + $0x1a8] sm:$0xff]
    %v469 = vld [vmem:[%s4 + $0x1b0] sm:$0xff]
    %v470 = vld [vmem:[%s4 + $0x1b8] sm:$0xff]
    %v471 = vld [vmem:[%s4 + $0x1c0] sm:$0xff]
    %v472 = vld [vmem:[%s4 + $0x1c8] sm:$0xff]
    %v473 = vld [vmem:[%s4 + $0x1d0] sm:$0xff]
    %v474 = vld [vmem:[%s4 + $0x1d8] sm:$0xff]
    %v475 = vld [vmem:[%s4 + $0x1e0] sm:$0xff]
    %v476 = vld [vmem:[%s4 + $0x1e8] sm:$0xff]
    %v477 = vld [vmem:[%s4 + $0x1f0] sm:$0xff]
    %v478 = vld [vmem:[%s4 + $0x1f8] sm:$0xff]
    %v479 = vld [vmem:[%s4 + $0x200] sm:$0xff]
    %v480 = vld [vmem:[%s4 + $0x208] sm:$0xff]
    %v481 = vld [vmem:[%s4 + $0x210] sm:$0xff]
    %v482 = vld [vmem:[%s4 + $0x218] sm:$0xff]
    %v483 = vld [vmem:[%s4 + $0x220] sm:$0xff]
    %v484 = vld [vmem:[%s4 + $0x228] sm:$0xff]
    %v485 = vld [vmem:[%s4 + $0x230] sm:$0xff]
    %v486 = vld [vmem:[%s4 + $0x238] sm:$0xff]
    %v487 = vld [vmem:[%s4 + $0x240] sm:$0xff]
    %v488 = vld [vmem:[%s4 + $0x248] sm:$0xff]
    %v489 = vld [vmem:[%s4 + $0x250] sm:$0xff]
    %v490 = vld [vmem:[%s4 + $0x258] sm:$0xff]
    %v491 = vld [vmem:[%s4 + $0x260] sm:$0xff]
    %v492 = vld [vmem:[%s4 + $0x268] sm:$0xff]
    %v493 = vld [vmem:[%s4 + $0x270] sm:$0xff]
    %v494 = vld [vmem:[%s4 + $0x278] sm:$0xff]
    %v495 = vld [vmem:[%s4 + $0x280] sm:$0xff]
    %v496 = vld [vmem:[%s4 + $0x288] sm:$0xff]
    %v497 = vld [vmem:[%s4 + $0x290] sm:$0xff]
    %v498 = vld [vmem:[%s4 + $0x298] sm:$0xff]
    %v499 = vld [vmem:[%s4 + $0x2a0] sm:$0xff]
    %v500 = vld [vmem:[%s4 + $0x2a8] sm:$0xff]
    %v501 = vld [vmem:[%s4 + $0x2b0] sm:$0xff]
    %v502 = vld [vmem:[%s4 + $0x2b8] sm:$0xff]
    %v503 = vld [vmem:[%s4 + $0x2c0] sm:$0xff]
    %v504 = vld [vmem:[%s4 + $0x2c8] sm:$0xff]
    %v505 = vld [vmem:[%s4 + $0x2d0] sm:$0xff]
    %v506 = vld [vmem:[%s4 + $0x2d8] sm:$0xff]
    %v507 = vld [vmem:[%s4 + $0x2e0] sm:$0xff]
    %v508 = vld [vmem:[%s4 + $0x2e8] sm:$0xff]
    %v509 = vld [vmem:[%s4 + $0x2f0] sm:$0xff]
    %v510 = vld [vmem:[%s4 + $0x2f8] sm:$0xff]
    %v511 = vld [vmem:[%s4 + $0x300] sm:$0xff]
    %v512 = vld [vmem:[%s4 + $0x308] sm:$0xff]
    %v513 = vld [vmem:[%s4 + $0x310] sm:$0xff]
    %v514 = vld [vmem:[%s4 + $0x318] sm:$0xff]
    %v515 = vld [vmem:[%s4 + $0x320] sm:$0xff]
    %v516 = vld [vmem:[%s4 + $0x328] sm:$0xff]
    %v517 = vld [vmem:[%s4 + $0x330] sm:$0xff]
    %v518 = vld [vmem:[%s4 + $0x338] sm:$0xff]
    %v519 = vld [vmem:[%s4 + $0x340] sm:$0xff]
    %v520 = vld [vmem:[%s4 + $0x348] sm:$0xff]
    %v521 = vld [vmem:[%s4 + $0x350] sm:$0xff]
    %v522 = vld [vmem:[%s4 + $0x358] sm:$0xff]
    %v523 = vld [vmem:[%s4 + $0x360] sm:$0xff]
    %v524 = vld [vmem:[%s4 + $0x368] sm:$0xff]
    %v525 = vld [vmem:[%s4 + $0x370] sm:$0xff]
    %v526 = vld [vmem:[%s4 + $0x378] sm:$0xff]
    %v527 = vld [vmem:[%s4 + $0x380] sm:$0xff]
    %v528 = vld [vmem:[%s4 + $0x388] sm:$0xff]
    %v529 = vld [vmem:[%s4 + $0x390] sm:$0xff]
    %v530 = vld [vmem:[%s4 + $0x398] sm:$0xff]
    %v531 = vld [vmem:[%s4 + $0x3a0] sm:$0xff]
    %v532 = vld [vmem:[%s4 + $0x3a8] sm:$0xff]
    %v533 = vld [vmem:[%s4 + $0x3b0] sm:$0xff]
    %v534 = vld [vmem:[%s4 + $0x3b8] sm:$0xff]
    %v535 = vld [vmem:[%s4 + $0x3c0] sm:$0xff]
    %v536 = vld [vmem:[%s4 + $0x3c8] sm:$0xff]
    %v537 = vld [vmem:[%s4 + $0x3d0] sm:$0xff]
    %v538 = vld [vmem:[%s4 + $0x3d8] sm:$0xff]
    %v539 = vld [vmem:[%s4 + $0x3e0] sm:$0xff]
    %v540 = vld [vmem:[%s4 + $0x3e8] sm:$0xff]
    %v541 = vld [vmem:[%s4 + $0x3f0] sm:$0xff]
    %v542 = vld [vmem:[%s4 + $0x3f8] sm:$0xff]
    %v543 = vld [vmem:[%s4 + $0x400] sm:$0xff]
    %v544 = vld [vmem:[%s4 + $0x408] sm:$0xff]
    %v545 = vld [vmem:[%s4 + $0x410] sm:$0xff]
    %v546 = vld [vmem:[%s4 + $0x418] sm:$0xff]
    %v547 = vld [vmem:[%s4 + $0x420] sm:$0xff]
    %v548 = vld [vmem:[%s4 + $0x428] sm:$0xff]
    %v549 = vld [vmem:[%s4 + $0x430] sm:$0xff]
    %v550 = vld [vmem:[%s4 + $0x438] sm:$0xff]
    %v551 = vld [vmem:[%s4 + $0x440] sm:$0xff]
    %v552 = vld [vmem:[%s4 + $0x448] sm:$0xff]
    %v553 = vld [vmem:[%s4 + $0x450] sm:$0xff]
    %v554 = vld [vmem:[%s4 + $0x458] sm:$0xff]
    %v555 = vld [vmem:[%s4 + $0x460] sm:$0xff]
    %v556 = vld [vmem:[%s4 + $0x468] sm:$0xff]
    %v557 = vld [vmem:[%s4 + $0x470] sm:$0xff]
    %v558 = vld [vmem:[%s4 + $0x478] sm:$0xff]
    %v559 = vld [vmem:[%s4 + $0x480] sm:$0xff]
    %v560 = vld [vmem:[%s4 + $0x488] sm:$0xff]
    %v561 = vld [vmem:[%s4 + $0x490] sm:$0xff]
    %v562 = vld [vmem:[%s4 + $0x498] sm:$0xff]
    %v563 = vld [vmem:[%s4 + $0x4a0] sm:$0xff]
    %v564 = vld [vmem:[%s4 + $0x4a8] sm:$0xff]
    %v565 = vld [vmem:[%s4 + $0x4b0] sm:$0xff]
    %v566 = vld [vmem:[%s4 + $0x4b8] sm:$0xff]
    %v567 = vld [vmem:[%s4 + $0x4c0] sm:$0xff]
    %v568 = vld [vmem:[%s4 + $0x4c8] sm:$0xff]
    %v569 = vld [vmem:[%s4 + $0x4d0] sm:$0xff]
    %v570 = vld [vmem:[%s4 + $0x4d8] sm:$0xff]
    %v571 = vld [vmem:[%s4 + $0x4e0] sm:$0xff]
    %v572 = vld [vmem:[%s4 + $0x4e8] sm:$0xff]
    %v573 = vld [vmem:[%s4 + $0x4f0] sm:$0xff]
    %v574 = vld [vmem:[%s4 + $0x4f8] sm:$0xff]
    %v575 = vld [vmem:[%s4 + $0x500] sm:$0xff]
    %v576 = vld [vmem:[%s4 + $0x508] sm:$0xff]
    %v577 = vld [vmem:[%s4 + $0x510] sm:$0xff]
    %v578 = vld [vmem:[%s4 + $0x518] sm:$0xff]
    %v579 = vld [vmem:[%s4 + $0x520] sm:$0xff]
    %v580 = vld [vmem:[%s4 + $0x528] sm:$0xff]
    %v581 = vld [vmem:[%s4 + $0x530] sm:$0xff]
    %v582 = vld [vmem:[%s4 + $0x538] sm:$0xff]
    %v583 = vld [vmem:[%s4 + $0x540] sm:$0xff]
    %v584 = vld [vmem:[%s4 + $0x548] sm:$0xff]
    %v585 = vld [vmem:[%s4 + $0x550] sm:$0xff]
    %v586 = vld [vmem:[%s4 + $0x558] sm:$0xff]
    %v587 = vld [vmem:[%s4 + $0x560] sm:$0xff]
    %v588 = vld [vmem:[%s4 + $0x568] sm:$0xff]
    %v589 = vld [vmem:[%s4 + $0x570] sm:$0xff]
    %v590 = vld [vmem:[%s4 + $0x578] sm:$0xff]
    %v591 = vld [vmem:[%s4 + $0x580] sm:$0xff]
    %v592 = vld [vmem:[%s4 + $0x588] sm:$0xff]
    %v593 = vld [vmem:[%s4 + $0x590] sm:$0xff]
    %v594 = vld [vmem:[%s4 + $0x598] sm:$0xff]
    %v595 = vld [vmem:[%s4 + $0x5a0] sm:$0xff]
    %v596 = vld [vmem:[%s4 + $0x5a8] sm:$0xff]
    %v597 = vld [vmem:[%s4 + $0x5b0] sm:$0xff]
    %v598 = vld [vmem:[%s4 + $0x5b8] sm:$0xff]
    %v599 = vld [vmem:[%s4 + $0x5c0] sm:$0xff]
    %v600 = vld [vmem:[%s4 + $0x5c8] sm:$0xff]
    %v601 = vld [vmem:[%s4 + $0x5d0] sm:$0xff]
    %v602 = vld [vmem:[%s4 + $0x5d8] sm:$0xff]
    %v603 = vld [vmem:[%s4 + $0x5e0] sm:$0xff]
    %v604 = vld [vmem:[%s4 + $0x5e8] sm:$0xff]
    %v605 = vld [vmem:[%s4 + $0x5f0] sm:$0xff]
    %v606 = vld [vmem:[%s4 + $0x5f8] sm:$0xff]
    %v607 = vld [vmem:[%s4 + $0x600] sm:$0xff]
    %v608 = vld [vmem:[%s4 + $0x608] sm:$0xff]
    %v609 = vld [vmem:[%s4 + $0x610] sm:$0xff]
    %v610 = vld [vmem:[%s4 + $0x618] sm:$0xff]
    %v611 = vld [vmem:[%s4 + $0x620] sm:$0xff]
    %v612 = vld [vmem:[%s4 + $0x628] sm:$0xff]
    %v613 = vld [vmem:[%s4 + $0x630] sm:$0xff]
    %v614 = vld [vmem:[%s4 + $0x638] sm:$0xff]
    %v615 = vld [vmem:[%s4 + $0x640] sm:$0xff]
    %v616 = vld [vmem:[%s4 + $0x648] sm:$0xff]
    %v617 = vld [vmem:[%s4 + $0x650] sm:$0xff]
    %v618 = vld [vmem:[%s4 + $0x658] sm:$0xff]
    %v619 = vld [vmem:[%s4 + $0x660] sm:$0xff]
    %v620 = vld [vmem:[%s4 + $0x668] sm:$0xff]
    %v621 = vld [vmem:[%s4 + $0x670] sm:$0xff]
    %v622 = vld [vmem:[%s4 + $0x678] sm:$0xff]
    %v623 = vld [vmem:[%s4 + $0x680] sm:$0xff]
    %v624 = vld [vmem:[%s4 + $0x688] sm:$0xff]
    %v625 = vld [vmem:[%s4 + $0x690] sm:$0xff]
    %v626 = vld [vmem:[%s4 + $0x698] sm:$0xff]
    %v627 = vld [vmem:[%s4 + $0x6a0] sm:$0xff]
    %v628 = vld [vmem:[%s4 + $0x6a8] sm:$0xff]
    %v629 = vld [vmem:[%s4 + $0x6b0] sm:$0xff]
    %v630 = vld [vmem:[%s4 + $0x6b8] sm:$0xff]
    %v631 = vld [vmem:[%s4 + $0x6c0] sm:$0xff]
    %v632 = vld [vmem:[%s4 + $0x6c8] sm:$0xff]
    %v633 = vld [vmem:[%s4 + $0x6d0] sm:$0xff]
    %v634 = vld [vmem:[%s4 + $0x6d8] sm:$0xff]
    %v635 = vld [vmem:[%s4 + $0x6e0] sm:$0xff]
    %v636 = vld [vmem:[%s4 + $0x6e8] sm:$0xff]
    %v637 = vld [vmem:[%s4 + $0x6f0] sm:$0xff]
    %v638 = vld [vmem:[%s4 + $0x6f8] sm:$0xff]
    %v639 = vld [vmem:[%s4 + $0x700] sm:$0xff]
    %v640 = vld [vmem:[%s4 + $0x708] sm:$0xff]
    %v641 = vld [vmem:[%s4 + $0x710] sm:$0xff]
    %v642 = vld [vmem:[%s4 + $0x718] sm:$0xff]
    %v643 = vld [vmem:[%s4 + $0x720] sm:$0xff]
    %v644 = vld [vmem:[%s4 + $0x728] sm:$0xff]
    %v645 = vld [vmem:[%s4 + $0x730] sm:$0xff]
    %v646 = vld [vmem:[%s4 + $0x738] sm:$0xff]
    %v647 = vld [vmem:[%s4 + $0x740] sm:$0xff]
    %v648 = vld [vmem:[%s4 + $0x748] sm:$0xff]
    %v649 = vld [vmem:[%s4 + $0x750] sm:$0xff]
    %v650 = vld [vmem:[%s4 + $0x758] sm:$0xff]
    %v651 = vld [vmem:[%s4 + $0x760] sm:$0xff]
    %v652 = vld [vmem:[%s4 + $0x768] sm:$0xff]
    %v653 = vld [vmem:[%s4 + $0x770] sm:$0xff]
    %v654 = vld [vmem:[%s4 + $0x778] sm:$0xff]
    %v655 = vld [vmem:[%s4 + $0x780] sm:$0xff]
    %v656 = vld [vmem:[%s4 + $0x788] sm:$0xff]
    %v657 = vld [vmem:[%s4 + $0x790] sm:$0xff]
    %v658 = vld [vmem:[%s4 + $0x798] sm:$0xff]
    %v659 = vld [vmem:[%s4 + $0x7a0] sm:$0xff]
    %v660 = vld [vmem:[%s4 + $0x7a8] sm:$0xff]
    %v661 = vld [vmem:[%s4 + $0x7b0] sm:$0xff]
    %v662 = vld [vmem:[%s4 + $0x7b8] sm:$0xff]
    %v663 = vld [vmem:[%s4 + $0x7c0] sm:$0xff]
    %v664 = vld [vmem:[%s4 + $0x7c8] sm:$0xff]
    %v665 = vld [vmem:[%s4 + $0x7d0] sm:$0xff]
    %v666 = vld [vmem:[%s4 + $0x7d8] sm:$0xff]
    %v667 = vld [vmem:[%s4 + $0x7e0] sm:$0xff]
    %v668 = vld [vmem:[%s4 + $0x7e8] sm:$0xff]
    %v669 = vld [vmem:[%s4 + $0x7f0] sm:$0xff]
    %v670 = vld [vmem:[%s4 + $0x7f8] sm:$0xff]
    %v671 = vld [vmem:[%s4 + $0x800] sm:$0xff]
    %v672 = vld [vmem:[%s4 + $0x808] sm:$0xff]
    %v673 = vld [vmem:[%s4 + $0x810] sm:$0xff]
    %v674 = vld [vmem:[%s4 + $0x818] sm:$0xff]
    %v675 = vld [vmem:[%s4 + $0x820] sm:$0xff]
    %v676 = vld [vmem:[%s4 + $0x828] sm:$0xff]
    %v677 = vld [vmem:[%s4 + $0x830] sm:$0xff]
    %v678 = vld [vmem:[%s4 + $0x838] sm:$0xff]
    %v679 = vld [vmem:[%s4 + $0x840] sm:$0xff]
    %v680 = vld [vmem:[%s4 + $0x848] sm:$0xff]
    %v681 = vld [vmem:[%s4 + $0x850] sm:$0xff]
    %v682 = vld [vmem:[%s4 + $0x858] sm:$0xff]
    %v683 = vld [vmem:[%s4 + $0x860] sm:$0xff]
    %v684 = vld [vmem:[%s4 + $0x868] sm:$0xff]
    %v685 = vld [vmem:[%s4 + $0x870] sm:$0xff]
    %v686 = vld [vmem:[%s4 + $0x878] sm:$0xff]
    %v687 = vld [vmem:[%s4 + $0x880] sm:$0xff]
    %v688 = vld [vmem:[%s4 + $0x888] sm:$0xff]
    %v689 = vld [vmem:[%s4 + $0x890] sm:$0xff]
    %v690 = vld [vmem:[%s4 + $0x898] sm:$0xff]
    %v691 = vld [vmem:[%s4 + $0x8a0] sm:$0xff]
    %v692 = vld [vmem:[%s4 + $0x8a8] sm:$0xff]
    %v693 = vld [vmem:[%s4 + $0x8b0] sm:$0xff]
    %v694 = vld [vmem:[%s4 + $0x8b8] sm:$0xff]
    %v695 = vld [vmem:[%s4 + $0x8c0] sm:$0xff]
    %v696 = vld [vmem:[%s4 + $0x8c8] sm:$0xff]
    %v697 = vld [vmem:[%s4 + $0x8d0] sm:$0xff]
    %v698 = vld [vmem:[%s4 + $0x8d8] sm:$0xff]
    %v699 = vld [vmem:[%s4 + $0x8e0] sm:$0xff]
    %v700 = vld [vmem:[%s4 + $0x8e8] sm:$0xff]
    %v701 = vld [vmem:[%s4 + $0x8f0] sm:$0xff]
    %v702 = vld [vmem:[%s4 + $0x8f8] sm:$0xff]
    %v703 = vld [vmem:[%s4 + $0x900] sm:$0xff]
    %v704 = vld [vmem:[%s4 + $0x908] sm:$0xff]
    %v705 = vld [vmem:[%s4 + $0x910] sm:$0xff]
    %v706 = vld [vmem:[%s4 + $0x918] sm:$0xff]
    %v707 = vld [vmem:[%s4 + $0x920] sm:$0xff]
    %v708 = vld [vmem:[%s4 + $0x928] sm:$0xff]
    %v709 = vld [vmem:[%s4 + $0x930] sm:$0xff]
    %v710 = vld [vmem:[%s4 + $0x938] sm:$0xff]
    %v711 = vld [vmem:[%s4 + $0x940] sm:$0xff]
    %v712 = vld [vmem:[%s4 + $0x948] sm:$0xff]
    %v713 = vld [vmem:[%s4 + $0x950] sm:$0xff]
    %v714 = vld [vmem:[%s4 + $0x958] sm:$0xff]
    %v715 = vld [vmem:[%s4 + $0x960] sm:$0xff]
    %v716 = vld [vmem:[%s4 + $0x968] sm:$0xff]
    %v717 = vld [vmem:[%s4 + $0x970] sm:$0xff]
    %v718 = vld [vmem:[%s4 + $0x978] sm:$0xff]
    %v719 = vld [vmem:[%s4 + $0x980] sm:$0xff]
    %v720 = vld [vmem:[%s4 + $0x988] sm:$0xff]
    %v721 = vld [vmem:[%s4 + $0x990] sm:$0xff]
    %v722 = vld [vmem:[%s4 + $0x998] sm:$0xff]
    %v723 = vld [vmem:[%s4 + $0x9a0] sm:$0xff]
    %v724 = vld [vmem:[%s4 + $0x9a8] sm:$0xff]
    %v725 = vld [vmem:[%s4 + $0x9b0] sm:$0xff]
    %v726 = vld [vmem:[%s4 + $0x9b8] sm:$0xff]
    %v727 = vld [vmem:[%s4 + $0x9c0] sm:$0xff]
    %v728 = vld [vmem:[%s4 + $0x9c8] sm:$0xff]
    %v729 = vld [vmem:[%s4 + $0x9d0] sm:$0xff]
    %v730 = vld [vmem:[%s4 + $0x9d8] sm:$0xff]
    %v731 = vld [vmem:[%s4 + $0x9e0] sm:$0xff]
    %v732 = vld [vmem:[%s4 + $0x9e8] sm:$0xff]
    %v733 = vld [vmem:[%s4 + $0x9f0] sm:$0xff]
    %v734 = vld [vmem:[%s4 + $0x9f8] sm:$0xff]
    %v735 = vld [vmem:[%s4 + $0xa00] sm:$0xff]
    %v736 = vld [vmem:[%s4 + $0xa08] sm:$0xff]
    %v737 = vld [vmem:[%s4 + $0xa10] sm:$0xff]
    %v738 = vld [vmem:[%s4 + $0xa18] sm:$0xff]
    %v739 = vld [vmem:[%s4 + $0xa20] sm:$0xff]
    %v740 = vld [vmem:[%s4 + $0xa28] sm:$0xff]
    %v741 = vld [vmem:[%s4 + $0xa30] sm:$0xff]
    %v742 = vld [vmem:[%s4 + $0xa38] sm:$0xff]
    %v743 = vld [vmem:[%s4 + $0xa40] sm:$0xff]
    %v744 = vld [vmem:[%s4 + $0xa48] sm:$0xff]
    %v745 = vld [vmem:[%s4 + $0xa50] sm:$0xff]
    %v746 = vld [vmem:[%s4 + $0xa58] sm:$0xff]
    %v747 = vld [vmem:[%s4 + $0xa60] sm:$0xff]
    %v748 = vld [vmem:[%s4 + $0xa68] sm:$0xff]
    %v749 = vld [vmem:[%s4 + $0xa70] sm:$0xff]
    %v750 = vld [vmem:[%s4 + $0xa78] sm:$0xff]
    %v751 = vld [vmem:[%s4 + $0xa80] sm:$0xff]
    %v752 = vld [vmem:[%s4 + $0xa88] sm:$0xff]
    %v753 = vld [vmem:[%s4 + $0xa90] sm:$0xff]
    %v754 = vld [vmem:[%s4 + $0xa98] sm:$0xff]
    %v755 = vld [vmem:[%s4 + $0xaa0] sm:$0xff]
    %v756 = vld [vmem:[%s4 + $0xaa8] sm:$0xff]
    %v757 = vld [vmem:[%s4 + $0xab0] sm:$0xff]
    %v758 = vld [vmem:[%s4 + $0xab8] sm:$0xff]
    %v759 = vld [vmem:[%s4 + $0xac0] sm:$0xff]
    %v760 = vld [vmem:[%s4 + $0xac8] sm:$0xff]
    %v761 = vld [vmem:[%s4 + $0xad0] sm:$0xff]
    %v762 = vld [vmem:[%s4 + $0xad8] sm:$0xff]
    %v763 = vld [vmem:[%s4 + $0xae0] sm:$0xff]
    %v764 = vld [vmem:[%s4 + $0xae8] sm:$0xff]
    %v765 = vld [vmem:[%s4 + $0xaf0] sm:$0xff]
    %v766 = vld [vmem:[%s4 + $0xaf8] sm:$0xff]
    %v767 = vld [vmem:[%s4 + $0xb00] sm:$0xff]
    %v768 = vld [vmem:[%s4 + $0xb08] sm:$0xff]
    %v769 = vld [vmem:[%s4 + $0xb10] sm:$0xff]
    %v770 = vld [vmem:[%s4 + $0xb18] sm:$0xff]
    %v771 = vld [vmem:[%s4 + $0xb20] sm:$0xff]
    %v772 = vld [vmem:[%s4 + $0xb28] sm:$0xff]
    %v773 = vld [vmem:[%s4 + $0xb30] sm:$0xff]
    %v774 = vld [vmem:[%s4 + $0xb38] sm:$0xff]
    %v775 = vld [vmem:[%s4 + $0xb40] sm:$0xff]
    %v776 = vld [vmem:[%s4 + $0xb48] sm:$0xff]
    %v777 = vld [vmem:[%s4 + $0xb50] sm:$0xff]
    %v778 = vld [vmem:[%s4 + $0xb58] sm:$0xff]
    %v779 = vld [vmem:[%s4 + $0xb60] sm:$0xff]
    %v780 = vld [vmem:[%s4 + $0xb68] sm:$0xff]
    %v781 = vld [vmem:[%s4 + $0xb70] sm:$0xff]
    %v782 = vld [vmem:[%s4 + $0xb78] sm:$0xff]
    %v783 = vld [vmem:[%s4 + $0xb80] sm:$0xff]
    %v784 = vld [vmem:[%s4 + $0xb88] sm:$0xff]
    %v785 = vld [vmem:[%s4 + $0xb90] sm:$0xff]
    %v786 = vld [vmem:[%s4 + $0xb98] sm:$0xff]
    %v787 = vld [vmem:[%s4 + $0xba0] sm:$0xff]
    %v788 = vld [vmem:[%s4 + $0xba8] sm:$0xff]
    %v789 = vld [vmem:[%s4 + $0xbb0] sm:$0xff]
    %v790 = vld [vmem:[%s4 + $0xbb8] sm:$0xff]
    %v791 = vld [vmem:[%s4 + $0xbc0] sm:$0xff]
    %v792 = vld [vmem:[%s4 + $0xbc8] sm:$0xff]
    %v793 = vld [vmem:[%s4 + $0xbd0] sm:$0xff]
    %v794 = vld [vmem:[%s4 + $0xbd8] sm:$0xff]
    %v795 = vld [vmem:[%s4 + $0xbe0] sm:$0xff]
    %v796 = vld [vmem:[%s4 + $0xbe8] sm:$0xff]
    %v797 = vld [vmem:[%s4 + $0xbf0] sm:$0xff]
    %v798 = vld [vmem:[%s4 + $0xbf8] sm:$0xff]
    %v799 = vld [vmem:[%s4 + $0xc00] sm:$0xff]
    %v800 = vld [vmem:[%s4 + $0xc08] sm:$0xff]
    %v801 = vld [vmem:[%s4 + $0xc10] sm:$0xff]
    %v802 = vld [vmem:[%s4 + $0xc18] sm:$0xff]
    %v803 = vld [vmem:[%s4 + $0xc20] sm:$0xff]
    %v804 = vld [vmem:[%s4 + $0xc28] sm:$0xff]
    %v805 = vld [vmem:[%s4 + $0xc30] sm:$0xff]
    %v806 = vld [vmem:[%s4 + $0xc38] sm:$0xff]
    %v807 = vld [vmem:[%s4 + $0xc40] sm:$0xff]
    %v808 = vld [vmem:[%s4 + $0xc48] sm:$0xff]
    %v809 = vld [vmem:[%s4 + $0xc50] sm:$0xff]
    %v810 = vld [vmem:[%s4 + $0xc58] sm:$0xff]
    %v811 = vld [vmem:[%s4 + $0xc60] sm:$0xff]
    %v812 = vld [vmem:[%s4 + $0xc68] sm:$0xff]
    %v813 = vld [vmem:[%s4 + $0xc70] sm:$0xff]
    %v814 = vld [vmem:[%s4 + $0xc78] sm:$0xff]
    %v815 = vld [vmem:[%s4 + $0xc80] sm:$0xff]
    %v816 = vld [vmem:[%s4 + $0xc88] sm:$0xff]
    %v817 = vld [vmem:[%s4 + $0xc90] sm:$0xff]
    %v818 = vld [vmem:[%s4 + $0xc98] sm:$0xff]
    %v819 = vld [vmem:[%s4 + $0xca0] sm:$0xff]
    %v820 = vld [vmem:[%s4 + $0xca8] sm:$0xff]
    %v821 = vld [vmem:[%s4 + $0xcb0] sm:$0xff]
    %v822 = vld [vmem:[%s4 + $0xcb8] sm:$0xff]
    %v823 = vld [vmem:[%s4 + $0xcc0] sm:$0xff]
    %v824 = vld [vmem:[%s4 + $0xcc8] sm:$0xff]
    %v825 = vld [vmem:[%s4 + $0xcd0] sm:$0xff]
    %v826 = vld [vmem:[%s4 + $0xcd8] sm:$0xff]
    %v827 = vld [vmem:[%s4 + $0xce0] sm:$0xff]
    %v828 = vld [vmem:[%s4 + $0xce8] sm:$0xff]
    %v829 = vld [vmem:[%s4 + $0xcf0] sm:$0xff]
    %v830 = vld [vmem:[%s4 + $0xcf8] sm:$0xff]
    %v831 = vld [vmem:[%s4 + $0xd00] sm:$0xff]
    %v832 = vld [vmem:[%s4 + $0xd08] sm:$0xff]
    %v833 = vld [vmem:[%s4 + $0xd10] sm:$0xff]
    %v834 = vld [vmem:[%s4 + $0xd18] sm:$0xff]
    %v835 = vld [vmem:[%s4 + $0xd20] sm:$0xff]
    %v836 = vld [vmem:[%s4 + $0xd28] sm:$0xff]
    %v837 = vld [vmem:[%s4 + $0xd30] sm:$0xff]
    %v838 = vld [vmem:[%s4 + $0xd38] sm:$0xff]
    %v839 = vld [vmem:[%s4 + $0xd40] sm:$0xff]
    %v840 = vld [vmem:[%s4 + $0xd48] sm:$0xff]
    %v841 = vld [vmem:[%s4 + $0xd50] sm:$0xff]
    %v842 = vld [vmem:[%s4 + $0xd58] sm:$0xff]
    %v843 = vld [vmem:[%s4 + $0xd60] sm:$0xff]
    %v844 = vld [vmem:[%s4 + $0xd68] sm:$0xff]
    %v845 = vld [vmem:[%s4 + $0xd70] sm:$0xff]
    %v846 = vld [vmem:[%s4 + $0xd78] sm:$0xff]
    %v847 = vld [vmem:[%s4 + $0xd80] sm:$0xff]
    %v848 = vld [vmem:[%s4 + $0xd88] sm:$0xff]
    %v849 = vld [vmem:[%s4 + $0xd90] sm:$0xff]
    %v850 = vld [vmem:[%s4 + $0xd98] sm:$0xff]
    %v851 = vld [vmem:[%s4 + $0xda0] sm:$0xff]
    %v852 = vld [vmem:[%s4 + $0xda8] sm:$0xff]
    %v853 = vld [vmem:[%s4 + $0xdb0] sm:$0xff]
    %v854 = vld [vmem:[%s4 + $0xdb8] sm:$0xff]
    %v855 = vld [vmem:[%s4 + $0xdc0] sm:$0xff]
    %v856 = vld [vmem:[%s4 + $0xdc8] sm:$0xff]
    %v857 = vld [vmem:[%s4 + $0xdd0] sm:$0xff]
    %v858 = vld [vmem:[%s4 + $0xdd8] sm:$0xff]
    %v859 = vld [vmem:[%s4 + $0xde0] sm:$0xff]
    %v860 = vld [vmem:[%s4 + $0xde8] sm:$0xff]
    %v861 = vld [vmem:[%s4 + $0xdf0] sm:$0xff]
    %v862 = vld [vmem:[%s4 + $0xdf8] sm:$0xff]
    %v863 = vld [vmem:[%s4 + $0xe00] sm:$0xff]
    %v864 = vld [vmem:[%s4 + $0xe08] sm:$0xff]
    %v865 = vld [vmem:[%s4 + $0xe10] sm:$0xff]
    %v866 = vld [vmem:[%s4 + $0xe18] sm:$0xff]
    %v867 = vld [vmem:[%s4 + $0xe20] sm:$0xff]
    %v868 = vld [vmem:[%s4 + $0xe28] sm:$0xff]
    %v869 = vld [vmem:[%s4 + $0xe30] sm:$0xff]
    %v870 = vld [vmem:[%s4 + $0xe38] sm:$0xff]
    %v871 = vld [vmem:[%s4 + $0xe40] sm:$0xff]
    %v872 = vld [vmem:[%s4 + $0xe48] sm:$0xff]
    %v873 = vld [vmem:[%s4 + $0xe50] sm:$0xff]
    %v874 = vld [vmem:[%s4 + $0xe58] sm:$0xff]
    %v875 = vld [vmem:[%s4 + $0xe60] sm:$0xff]
    %v876 = vld [vmem:[%s4 + $0xe68] sm:$0xff]
    %v877 = vld [vmem:[%s4 + $0xe70] sm:$0xff]
    %v878 = vld [vmem:[%s4 + $0xe78] sm:$0xff]
    %v879 = vld [vmem:[%s4 + $0xe80] sm:$0xff]
    %v880 = vld [vmem:[%s4 + $0xe88] sm:$0xff]
    %v881 = vld [vmem:[%s4 + $0xe90] sm:$0xff]
    %v882 = vld [vmem:[%s4 + $0xe98] sm:$0xff]
    %v883 = vld [vmem:[%s4 + $0xea0] sm:$0xff]
    %v884 = vld [vmem:[%s4 + $0xea8] sm:$0xff]
    %v885 = vld [vmem:[%s4 + $0xeb0] sm:$0xff]
    %v886 = vld [vmem:[%s4 + $0xeb8] sm:$0xff]
    %v887 = vld [vmem:[%s4 + $0xec0] sm:$0xff]
    %v888 = vld [vmem:[%s4 + $0xec8] sm:$0xff]
    %v889 = vld [vmem:[%s4 + $0xed0] sm:$0xff]
    %v890 = vld [vmem:[%s4 + $0xed8] sm:$0xff]
    %v891 = vld [vmem:[%s4 + $0xee0] sm:$0xff]
    %v892 = vld [vmem:[%s4 + $0xee8] sm:$0xff]
    %v893 = vld [vmem:[%s4 + $0xef0] sm:$0xff]
    %v894 = vld [vmem:[%s4 + $0xef8] sm:$0xff]
    %v895 = vld [vmem:[%s4 + $0xf00] sm:$0xff]
    %v896 = vld [vmem:[%s4 + $0xf08] sm:$0xff]
    %v897 = vld [vmem:[%s4 + $0xf10] sm:$0xff]
    %v898 = vld [vmem:[%s4 + $0xf18] sm:$0xff]
    %v899 = vld [vmem:[%s4 + $0xf20] sm:$0xff]
    %v900 = vld [vmem:[%s4 + $0xf28] sm:$0xff]
    %v901 = vld [vmem:[%s4 + $0xf30] sm:$0xff]
    %v902 = vld [vmem:[%s4 + $0xf38] sm:$0xff]
    %v903 = vld [vmem:[%s4 + $0xf40] sm:$0xff]
    %v904 = vld [vmem:[%s4 + $0xf48] sm:$0xff]
    %v905 = vld [vmem:[%s4 + $0xf50] sm:$0xff]
    %v906 = vld [vmem:[%s4 + $0xf58] sm:$0xff]
    %v907 = vld [vmem:[%s4 + $0xf60] sm:$0xff]
    %v908 = vld [vmem:[%s4 + $0xf68] sm:$0xff]
    %v909 = vld [vmem:[%s4 + $0xf70] sm:$0xff]
    %v910 = vld [vmem:[%s4 + $0xf78] sm:$0xff]
    %v911 = vld [vmem:[%s4 + $0xf80] sm:$0xff]
    %v912 = vld [vmem:[%s4 + $0xf88] sm:$0xff]
    %v913 = vld [vmem:[%s4 + $0xf90] sm:$0xff]
    %v914 = vld [vmem:[%s4 + $0xf98] sm:$0xff]
    %v915 = vld [vmem:[%s4 + $0xfa0] sm:$0xff]
    %v916 = vld [vmem:[%s4 + $0xfa8] sm:$0xff]
    %v917 = vld [vmem:[%s4 + $0xfb0] sm:$0xff]
    %v918 = vld [vmem:[%s4 + $0xfb8] sm:$0xff]
    %v919 = vld [vmem:[%s4 + $0xfc0] sm:$0xff]
    %v920 = vld [vmem:[%s4 + $0xfc8] sm:$0xff]
    %v921 = vld [vmem:[%s4 + $0xfd0] sm:$0xff]
    %v922 = vld [vmem:[%s4 + $0xfd8] sm:$0xff]
    %v923 = vld [vmem:[%s4 + $0xfe0] sm:$0xff]
    %v924 = vld [vmem:[%s4 + $0xfe8] sm:$0xff]
    %v925 = vld [vmem:[%s4 + $0xff0] sm:$0xff]
    %v926 = vld [vmem:[%s4 + $0xff8] sm:$0xff]
    %v927 = vld [vmem:[%s4 + $0x1000] sm:$0xff]
    %v928 = vld [vmem:[%s4 + $0x1008] sm:$0xff]
    %v929 = vld [vmem:[%s4 + $0x1010] sm:$0xff]
    %v930 = vld [vmem:[%s4 + $0x1018] sm:$0xff]
    %v931 = vld [vmem:[%s4 + $0x1020] sm:$0xff]
    %v932 = vld [vmem:[%s4 + $0x1028] sm:$0xff]
    %v933 = vld [vmem:[%s4 + $0x1030] sm:$0xff]
    %v934 = vld [vmem:[%s4 + $0x1038] sm:$0xff]
    %v935 = vld [vmem:[%s4 + $0x1040] sm:$0xff]
    %v936 = vld [vmem:[%s4 + $0x1048] sm:$0xff]
    %v937 = vld [vmem:[%s4 + $0x1050] sm:$0xff]
    %v938 = vld [vmem:[%s4 + $0x1058] sm:$0xff]
    %v939 = vld [vmem:[%s4 + $0x1060] sm:$0xff]
    %v940 = vld [vmem:[%s4 + $0x1068] sm:$0xff]
    %v941 = vld [vmem:[%s4 + $0x1070] sm:$0xff]
    %v942 = vld [vmem:[%s4 + $0x1078] sm:$0xff]
    %v943 = vld [vmem:[%s4 + $0x1080] sm:$0xff]
    %v944 = vld [vmem:[%s4 + $0x1088] sm:$0xff]
    %v945 = vld [vmem:[%s4 + $0x1090] sm:$0xff]
    %v946 = vld [vmem:[%s4 + $0x1098] sm:$0xff]
    %v947 = vld [vmem:[%s4 + $0x10a0] sm:$0xff]
    %v948 = vld [vmem:[%s4 + $0x10a8] sm:$0xff]
    %v949 = vld [vmem:[%s4 + $0x10b0] sm:$0xff]
    %v950 = vld [vmem:[%s4 + $0x10b8] sm:$0xff]
    %v951 = vld [vmem:[%s4 + $0x10c0] sm:$0xff]
    %v952 = vld [vmem:[%s4 + $0x10c8] sm:$0xff]
    %v953 = vld [vmem:[%s4 + $0x10d0] sm:$0xff]
    %v954 = vld [vmem:[%s4 + $0x10d8] sm:$0xff]
    %v955 = vld [vmem:[%s4 + $0x10e0] sm:$0xff]
    %v956 = vld [vmem:[%s4 + $0x10e8] sm:$0xff]
    %v957 = vld [vmem:[%s4 + $0x10f0] sm:$0xff]
    %v958 = vld [vmem:[%s4 + $0x10f8] sm:$0xff]
    %v959 = vld [vmem:[%s4 + $0x1100] sm:$0xff]
    %v960 = vld [vmem:[%s4 + $0x1108] sm:$0xff]
    %v961 = vld [vmem:[%s4 + $0x1110] sm:$0xff]
    %v962 = vld [vmem:[%s4 + $0x1118] sm:$0xff]
    %v963 = vld [vmem:[%s4 + $0x1120] sm:$0xff]
    %v964 = vld [vmem:[%s4 + $0x1128] sm:$0xff]
    %v965 = vld [vmem:[%s4 + $0x1130] sm:$0xff]
    %v966 = vld [vmem:[%s4 + $0x1138] sm:$0xff]
    %v967 = vld [vmem:[%s4 + $0x1140] sm:$0xff]
    %v968 = vld [vmem:[%s4 + $0x1148] sm:$0xff]
    %v969 = vld [vmem:[%s4 + $0x1150] sm:$0xff]
    %v970 = vld [vmem:[%s4 + $0x1158] sm:$0xff]
    %v971 = vld [vmem:[%s4 + $0x1160] sm:$0xff]
    %v972 = vld [vmem:[%s4 + $0x1168] sm:$0xff]
    %v973 = vld [vmem:[%s4 + $0x1170] sm:$0xff]
    %v974 = vld [vmem:[%s4 + $0x1178] sm:$0xff]
    %v975 = vld [vmem:[%s4 + $0x1180] sm:$0xff]
    %v976 = vld [vmem:[%s4 + $0x1188] sm:$0xff]
    %v977 = vld [vmem:[%s4 + $0x1190] sm:$0xff]
    %v978 = vld [vmem:[%s4 + $0x1198] sm:$0xff]
    %v979 = vld [vmem:[%s4 + $0x11a0] sm:$0xff]
    %v980 = vld [vmem:[%s4 + $0x11a8] sm:$0xff]
    %v981 = vld [vmem:[%s4 + $0x11b0] sm:$0xff]
    %v982 = vld [vmem:[%s4 + $0x11b8] sm:$0xff]
    %v983 = vld [vmem:[%s4 + $0x11c0] sm:$0xff]
    %v984 = vld [vmem:[%s4 + $0x11c8] sm:$0xff]
    %v985 = vld [vmem:[%s4 + $0x11d0] sm:$0xff]
    %v986 = vld [vmem:[%s4 + $0x11d8] sm:$0xff]
    %v987 = vld [vmem:[%s4 + $0x11e0] sm:$0xff]
    %v988 = vld [vmem:[%s4 + $0x11e8] sm:$0xff]
    %v989 = vld [vmem:[%s4 + $0x11f0] sm:$0xff]
    %v990 = vld [vmem:[%s4 + $0x11f8] sm:$0xff]
    %v991 = vld [vmem:[%s5] sm:$0x3f]
    %v993 = vlaneseq
    %v994 = vshrl.u32 %v993, 7
    %v995 = vsub.s32 0, %v994
    %v996 = vrot.slane %v991, %v995
    %v997 = vlaneseq
    %v998 = vshrl.u32 %v997, 7
    %v999 = vsub.s32 1, %v998
    %v1000 = vrot.slane %v991, %v999
    %v1001 = vlaneseq
    %v1002 = vshrl.u32 %v1001, 7
    %v1003 = vsub.s32 2, %v1002
    %v1004 = vrot.slane %v991, %v1003
    %v1005 = vlaneseq
    %v1006 = vshrl.u32 %v1005, 7
    %v1007 = vsub.s32 3, %v1006
    %v1008 = vrot.slane %v991, %v1007
    %v1009 = vlaneseq
    %v1010 = vshrl.u32 %v1009, 7
    %v1011 = vsub.s32 4, %v1010
    %v1012 = vrot.slane %v991, %v1011
    %v1013 = vlaneseq
    %v1014 = vshrl.u32 %v1013, 7
    %v1015 = vsub.s32 5, %v1014
    %v1016 = vrot.slane %v991, %v1015
    %1023 = vmatprep.subr.mxu0 %v506
    %1024 = vmatpush1.msra.mxu0 %v505
    %1025 = vmatprep.subr.mxu0 %v500
    %1026 = vmatpush1.msra.mxu0 %v499
    %1027 = vmatprep.subr.mxu0 %v494
    %1028 = vmatpush1.msra.mxu0 %v493
    %1029 = vmatprep.subr.mxu0 %v488
    %1030 = vmatpush1.msra.mxu0 %v487
    %1031 = vmatprep.subr.mxu0 %v482
    %1032 = vmatpush1.msra.mxu0 %v481
    %1033 = vmatprep.subr.mxu0 %v476
    %1034 = vmatpush1.msra.mxu0 %v475
    %1035 = vmatprep.subr.mxu0 %v470
    %1036 = vmatpush1.msra.mxu0 %v469
    %1037 = vmatprep.subr.mxu0 %v464
    %1038 = vmatpush1.msra.mxu0 %v463
    %1039 = vmatprep.subr.mxu0 %v458
    %1040 = vmatpush1.msra.mxu0 %v457
    %1041 = vmatprep.subr.mxu0 %v452
    %1042 = vmatpush1.msra.mxu0 %v451
    %1043 = vmatprep.subr.mxu0 %v446
    %1044 = vmatpush1.msra.mxu0 %v445
    %1045 = vmatprep.subr.mxu0 %v440
    %1046 = vmatpush1.msra.mxu0 %v439
    %1047 = vmatprep.subr.mxu0 %v434
    %1048 = vmatpush1.msra.mxu0 %v433
    %1049 = vmatprep.subr.mxu0 %v428
    %1050 = vmatpush1.msra.mxu0 %v427
    %1051 = vmatprep.subr.mxu0 %v422
    %1052 = vmatpush1.msra.mxu0 %v421
    %1053 = vmatprep.subr.mxu0 %v416
    %1054 = vmatpush1.msra.mxu0 %v415
    %1055 = vmatprep.subr.mxu0 %v602
    %1056 = vmatpush2.msra.mxu0 %v601
    %1057 = vmatprep.subr.mxu0 %v596
    %1058 = vmatpush2.msra.mxu0 %v595
    %1059 = vmatprep.subr.mxu0 %v590
    %1060 = vmatpush2.msra.mxu0 %v589
    %1061 = vmatprep.subr.mxu0 %v584
    %1062 = vmatpush2.msra.mxu0 %v583
    %1063 = vmatprep.subr.mxu0 %v578
    %1064 = vmatpush2.msra.mxu0 %v577
    %1065 = vmatprep.subr.mxu0 %v572
    %1066 = vmatpush2.msra.mxu0 %v571
    %1067 = vmatprep.subr.mxu0 %v566
    %1068 = vmatpush2.msra.mxu0 %v565
    %1069 = vmatprep.subr.mxu0 %v560
    %1070 = vmatpush2.msra.mxu0 %v559
    %1071 = vmatprep.subr.mxu0 %v554
    %1072 = vmatpush2.msra.mxu0 %v553
    %1073 = vmatprep.subr.mxu0 %v548
    %1074 = vmatpush2.msra.mxu0 %v547
    %1075 = vmatprep.subr.mxu0 %v542
    %1076 = vmatpush2.msra.mxu0 %v541
    %1077 = vmatprep.subr.mxu0 %v536
    %1078 = vmatpush2.msra.mxu0 %v535
    %1079 = vmatprep.subr.mxu0 %v530
    %1080 = vmatpush2.msra.mxu0 %v529
    %1081 = vmatprep.subr.mxu0 %v524
    %1082 = vmatpush2.msra.mxu0 %v523
    %1083 = vmatprep.subr.mxu0 %v518
    %1084 = vmatpush2.msra.mxu0 %v517
    %1085 = vmatprep.subr.mxu0 %v512
    %1086 = vmatpush2.msra.mxu0 %v511
    %1087 = vmatprep.mubr.f32.mxu0 %v271
    %1088 = vmatmul.mubr.f32.gmra.mxu0 %v269
    %v1089 = vpop.f32.mrf.mxu0
    %v1090 = vadd.f32 %v996, %v1089
    %v1091 = vpop.f32.mrf.mxu0
    %v1092 = vadd.f32 %v1000, %v1091
    %1093 = vdwg.mxu0
    %1094 = vmatprep.subr.mxu0 %v698
    %1095 = vmatpush1.msra.mxu0 %v697
    %1096 = vmatprep.subr.mxu0 %v692
    %1097 = vmatpush1.msra.mxu0 %v691
    %1098 = vmatprep.subr.mxu0 %v686
    %1099 = vmatpush1.msra.mxu0 %v685
    %1100 = vmatprep.subr.mxu0 %v680
    %1101 = vmatpush1.msra.mxu0 %v679
    %1102 = vmatprep.subr.mxu0 %v674
    %1103 = vmatpush1.msra.mxu0 %v673
    %1104 = vmatprep.subr.mxu0 %v668
    %1105 = vmatpush1.msra.mxu0 %v667
    %1106 = vmatprep.subr.mxu0 %v662
    %1107 = vmatpush1.msra.mxu0 %v661
    %1108 = vmatprep.subr.mxu0 %v656
    %1109 = vmatpush1.msra.mxu0 %v655
    %1110 = vmatprep.subr.mxu0 %v650
    %1111 = vmatpush1.msra.mxu0 %v649
    %1112 = vmatprep.subr.mxu0 %v644
    %1113 = vmatpush1.msra.mxu0 %v643
    %1114 = vmatprep.subr.mxu0 %v638
    %1115 = vmatpush1.msra.mxu0 %v637
    %1116 = vmatprep.subr.mxu0 %v632
    %1117 = vmatpush1.msra.mxu0 %v631
    %1118 = vmatprep.subr.mxu0 %v626
    %1119 = vmatpush1.msra.mxu0 %v625
    %1120 = vmatprep.subr.mxu0 %v620
    %1121 = vmatpush1.msra.mxu0 %v619
    %1122 = vmatprep.subr.mxu0 %v614
    %1123 = vmatpush1.msra.mxu0 %v613
    %1124 = vmatprep.subr.mxu0 %v608
    %1125 = vmatpush1.msra.mxu0 %v607
    %1126 = vmatprep.subr.mxu0 %v794
    %1127 = vmatpush2.msra.mxu0 %v793
    %1128 = vmatprep.subr.mxu0 %v788
    %1129 = vmatpush2.msra.mxu0 %v787
    %1130 = vmatprep.subr.mxu0 %v782
    %1131 = vmatpush2.msra.mxu0 %v781
    %1132 = vmatprep.subr.mxu0 %v776
    %1133 = vmatpush2.msra.mxu0 %v775
    %1134 = vmatprep.subr.mxu0 %v770
    %1135 = vmatpush2.msra.mxu0 %v769
    %1136 = vmatprep.subr.mxu0 %v764
    %1137 = vmatpush2.msra.mxu0 %v763
    %1138 = vmatprep.subr.mxu0 %v758
    %1139 = vmatpush2.msra.mxu0 %v757
    %1140 = vmatprep.subr.mxu0 %v752
    %1141 = vmatpush2.msra.mxu0 %v751
    %1142 = vmatprep.subr.mxu0 %v746
    %1143 = vmatpush2.msra.mxu0 %v745
    %1144 = vmatprep.subr.mxu0 %v740
    %1145 = vmatpush2.msra.mxu0 %v739
    %1146 = vmatprep.subr.mxu0 %v734
    %1147 = vmatpush2.msra.mxu0 %v733
    %1148 = vmatprep.subr.mxu0 %v728
    %1149 = vmatpush2.msra.mxu0 %v727
    %1150 = vmatprep.subr.mxu0 %v722
    %1151 = vmatpush2.msra.mxu0 %v721
    %1152 = vmatprep.subr.mxu0 %v716
    %1153 = vmatpush2.msra.mxu0 %v715
    %1154 = vmatprep.subr.mxu0 %v710
    %1155 = vmatpush2.msra.mxu0 %v709
    %1156 = vmatprep.subr.mxu0 %v704
    %1157 = vmatpush2.msra.mxu0 %v703
    %1158 = vmatprep.mubr.f32.mxu0 %v342
    %1159 = vmatmul.mubr.f32.gmra.mxu0 %v340
    %v1160 = vpop.f32.mrf.mxu0
    %v1161 = vadd.f32 %v1090, %v1160
    %v1162 = vpop.f32.mrf.mxu0
    %v1163 = vadd.f32 %v1092, %v1162
    %1164 = vdwg.mxu0
    %1165 = vmatprep.subr.mxu0 %v890
    %1166 = vmatpush1.msra.mxu0 %v889
    %1167 = vmatprep.subr.mxu0 %v884
    %1168 = vmatpush1.msra.mxu0 %v883
    %1169 = vmatprep.subr.mxu0 %v878
    %1170 = vmatpush1.msra.mxu0 %v877
    %1171 = vmatprep.subr.mxu0 %v872
    %1172 = vmatpush1.msra.mxu0 %v871
    %1173 = vmatprep.subr.mxu0 %v866
    %1174 = vmatpush1.msra.mxu0 %v865
    %1175 = vmatprep.subr.mxu0 %v860
    %1176 = vmatpush1.msra.mxu0 %v859
    %1177 = vmatprep.subr.mxu0 %v854
    %1178 = vmatpush1.msra.mxu0 %v853
    %1179 = vmatprep.subr.mxu0 %v848
    %1180 = vmatpush1.msra.mxu0 %v847
    %1181 = vmatprep.subr.mxu0 %v842
    %1182 = vmatpush1.msra.mxu0 %v841
    %1183 = vmatprep.subr.mxu0 %v836
    %1184 = vmatpush1.msra.mxu0 %v835
    %1185 = vmatprep.subr.mxu0 %v830
    %1186 = vmatpush1.msra.mxu0 %v829
    %1187 = vmatprep.subr.mxu0 %v824
    %1188 = vmatpush1.msra.mxu0 %v823
    %1189 = vmatprep.subr.mxu0 %v818
    %1190 = vmatpush1.msra.mxu0 %v817
    %1191 = vmatprep.subr.mxu0 %v812
    %1192 = vmatpush1.msra.mxu0 %v811
    %1193 = vmatprep.subr.mxu0 %v806
    %1194 = vmatpush1.msra.mxu0 %v805
    %1195 = vmatprep.subr.mxu0 %v800
    %1196 = vmatpush1.msra.mxu0 %v799
    %1197 = vmatprep.subr.mxu0 %v986
    %1198 = vmatpush2.msra.mxu0 %v985
    %1199 = vmatprep.subr.mxu0 %v980
    %1200 = vmatpush2.msra.mxu0 %v979
    %1201 = vmatprep.subr.mxu0 %v974
    %1202 = vmatpush2.msra.mxu0 %v973
    %1203 = vmatprep.subr.mxu0 %v968
    %1204 = vmatpush2.msra.mxu0 %v967
    %1205 = vmatprep.subr.mxu0 %v962
    %1206 = vmatpush2.msra.mxu0 %v961
    %1207 = vmatprep.subr.mxu0 %v956
    %1208 = vmatpush2.msra.mxu0 %v955
    %1209 = vmatprep.subr.mxu0 %v950
    %1210 = vmatpush2.msra.mxu0 %v949
    %1211 = vmatprep.subr.mxu0 %v944
    %1212 = vmatpush2.msra.mxu0 %v943
    %1213 = vmatprep.subr.mxu0 %v938
    %1214 = vmatpush2.msra.mxu0 %v937
    %1215 = vmatprep.subr.mxu0 %v932
    %1216 = vmatpush2.msra.mxu0 %v931
    %1217 = vmatprep.subr.mxu0 %v926
    %1218 = vmatpush2.msra.mxu0 %v925
    %1219 = vmatprep.subr.mxu0 %v920
    %1220 = vmatpush2.msra.mxu0 %v919
    %1221 = vmatprep.subr.mxu0 %v914
    %1222 = vmatpush2.msra.mxu0 %v913
    %1223 = vmatprep.subr.mxu0 %v908
    %1224 = vmatpush2.msra.mxu0 %v907
    %1225 = vmatprep.subr.mxu0 %v902
    %1226 = vmatpush2.msra.mxu0 %v901
    %1227 = vmatprep.subr.mxu0 %v896
    %1228 = vmatpush2.msra.mxu0 %v895
    %1229 = vmatprep.mubr.f32.mxu0 %v413
    %1230 = vmatmul.mubr.f32.gmra.mxu0 %v411
    %v1231 = vpop.f32.mrf.mxu0
    %v1232 = vadd.f32 %v1161, %v1231
    %v1233 = vpop.f32.mrf.mxu0
    %v1234 = vadd.f32 %v1163, %v1233
    %1235 = vdwg.mxu0
    %1236 = vmatprep.subr.mxu0 %v508
    %1237 = vmatpush1.msra.mxu0 %v507
    %1238 = vmatprep.subr.mxu0 %v502
    %1239 = vmatpush1.msra.mxu0 %v501
    %1240 = vmatprep.subr.mxu0 %v496
    %1241 = vmatpush1.msra.mxu0 %v495
    %1242 = vmatprep.subr.mxu0 %v490
    %1243 = vmatpush1.msra.mxu0 %v489
    %1244 = vmatprep.subr.mxu0 %v484
    %1245 = vmatpush1.msra.mxu0 %v483
    %1246 = vmatprep.subr.mxu0 %v478
    %1247 = vmatpush1.msra.mxu0 %v477
    %1248 = vmatprep.subr.mxu0 %v472
    %1249 = vmatpush1.msra.mxu0 %v471
    %1250 = vmatprep.subr.mxu0 %v466
    %1251 = vmatpush1.msra.mxu0 %v465
    %1252 = vmatprep.subr.mxu0 %v460
    %1253 = vmatpush1.msra.mxu0 %v459
    %1254 = vmatprep.subr.mxu0 %v454
    %1255 = vmatpush1.msra.mxu0 %v453
    %1256 = vmatprep.subr.mxu0 %v448
    %1257 = vmatpush1.msra.mxu0 %v447
    %1258 = vmatprep.subr.mxu0 %v442
    %1259 = vmatpush1.msra.mxu0 %v441
    %1260 = vmatprep.subr.mxu0 %v436
    %1261 = vmatpush1.msra.mxu0 %v435
    %1262 = vmatprep.subr.mxu0 %v430
    %1263 = vmatpush1.msra.mxu0 %v429
    %1264 = vmatprep.subr.mxu0 %v424
    %1265 = vmatpush1.msra.mxu0 %v423
    %1266 = vmatprep.subr.mxu0 %v418
    %1267 = vmatpush1.msra.mxu0 %v417
    %1268 = vmatprep.subr.mxu0 %v604
    %1269 = vmatpush2.msra.mxu0 %v603
    %1270 = vmatprep.subr.mxu0 %v598
    %1271 = vmatpush2.msra.mxu0 %v597
    %1272 = vmatprep.subr.mxu0 %v592
    %1273 = vmatpush2.msra.mxu0 %v591
    %1274 = vmatprep.subr.mxu0 %v586
    %1275 = vmatpush2.msra.mxu0 %v585
    %1276 = vmatprep.subr.mxu0 %v580
    %1277 = vmatpush2.msra.mxu0 %v579
    %1278 = vmatprep.subr.mxu0 %v574
    %1279 = vmatpush2.msra.mxu0 %v573
    %1280 = vmatprep.subr.mxu0 %v568
    %1281 = vmatpush2.msra.mxu0 %v567
    %1282 = vmatprep.subr.mxu0 %v562
    %1283 = vmatpush2.msra.mxu0 %v561
    %1284 = vmatprep.subr.mxu0 %v556
    %1285 = vmatpush2.msra.mxu0 %v555
    %1286 = vmatprep.subr.mxu0 %v550
    %1287 = vmatpush2.msra.mxu0 %v549
    %1288 = vmatprep.subr.mxu0 %v544
    %1289 = vmatpush2.msra.mxu0 %v543
    %1290 = vmatprep.subr.mxu0 %v538
    %1291 = vmatpush2.msra.mxu0 %v537
    %1292 = vmatprep.subr.mxu0 %v532
    %1293 = vmatpush2.msra.mxu0 %v531
    %1294 = vmatprep.subr.mxu0 %v526
    %1295 = vmatpush2.msra.mxu0 %v525
    %1296 = vmatprep.subr.mxu0 %v520
    %1297 = vmatpush2.msra.mxu0 %v519
    %1298 = vmatprep.subr.mxu0 %v514
    %1299 = vmatpush2.msra.mxu0 %v513
    %1300 = vmatprep.mubr.f32.mxu0 %v271
    %1301 = vmatmul.mubr.f32.gmra.mxu0 %v269
    %v1302 = vpop.f32.mrf.mxu0
    %v1303 = vadd.f32 %v1004, %v1302
    %v1304 = vpop.f32.mrf.mxu0
    %v1305 = vadd.f32 %v1008, %v1304
    %1306 = vdwg.mxu0
    %1307 = vmatprep.subr.mxu0 %v700
    %1308 = vmatpush1.msra.mxu0 %v699
    %1309 = vmatprep.subr.mxu0 %v694
    %1310 = vmatpush1.msra.mxu0 %v693
    %1311 = vmatprep.subr.mxu0 %v688
    %1312 = vmatpush1.msra.mxu0 %v687
    %1313 = vmatprep.subr.mxu0 %v682
    %1314 = vmatpush1.msra.mxu0 %v681
    %1315 = vmatprep.subr.mxu0 %v676
    %1316 = vmatpush1.msra.mxu0 %v675
    %1317 = vmatprep.subr.mxu0 %v670
    %1318 = vmatpush1.msra.mxu0 %v669
    %1319 = vmatprep.subr.mxu0 %v664
    %1320 = vmatpush1.msra.mxu0 %v663
    %1321 = vmatprep.subr.mxu0 %v658
    %1322 = vmatpush1.msra.mxu0 %v657
    %1323 = vmatprep.subr.mxu0 %v652
    %1324 = vmatpush1.msra.mxu0 %v651
    %1325 = vmatprep.subr.mxu0 %v646
    %1326 = vmatpush1.msra.mxu0 %v645
    %1327 = vmatprep.subr.mxu0 %v640
    %1328 = vmatpush1.msra.mxu0 %v639
    %1329 = vmatprep.subr.mxu0 %v634
    %1330 = vmatpush1.msra.mxu0 %v633
    %1331 = vmatprep.subr.mxu0 %v628
    %1332 = vmatpush1.msra.mxu0 %v627
    %1333 = vmatprep.subr.mxu0 %v622
    %1334 = vmatpush1.msra.mxu0 %v621
    %1335 = vmatprep.subr.mxu0 %v616
    %1336 = vmatpush1.msra.mxu0 %v615
    %1337 = vmatprep.subr.mxu0 %v610
    %1338 = vmatpush1.msra.mxu0 %v609
    %1339 = vmatprep.subr.mxu0 %v796
    %1340 = vmatpush2.msra.mxu0 %v795
    %1341 = vmatprep.subr.mxu0 %v790
    %1342 = vmatpush2.msra.mxu0 %v789
    %1343 = vmatprep.subr.mxu0 %v784
    %1344 = vmatpush2.msra.mxu0 %v783
    %1345 = vmatprep.subr.mxu0 %v778
    %1346 = vmatpush2.msra.mxu0 %v777
    %1347 = vmatprep.subr.mxu0 %v772
    %1348 = vmatpush2.msra.mxu0 %v771
    %1349 = vmatprep.subr.mxu0 %v766
    %1350 = vmatpush2.msra.mxu0 %v765
    %1351 = vmatprep.subr.mxu0 %v760
    %1352 = vmatpush2.msra.mxu0 %v759
    %1353 = vmatprep.subr.mxu0 %v754
    %1354 = vmatpush2.msra.mxu0 %v753
    %1355 = vmatprep.subr.mxu0 %v748
    %1356 = vmatpush2.msra.mxu0 %v747
    %1357 = vmatprep.subr.mxu0 %v742
    %1358 = vmatpush2.msra.mxu0 %v741
    %1359 = vmatprep.subr.mxu0 %v736
    %1360 = vmatpush2.msra.mxu0 %v735
    %1361 = vmatprep.subr.mxu0 %v730
    %1362 = vmatpush2.msra.mxu0 %v729
    %1363 = vmatprep.subr.mxu0 %v724
    %1364 = vmatpush2.msra.mxu0 %v723
    %1365 = vmatprep.subr.mxu0 %v718
    %1366 = vmatpush2.msra.mxu0 %v717
    %1367 = vmatprep.subr.mxu0 %v712
    %1368 = vmatpush2.msra.mxu0 %v711
    %1369 = vmatprep.subr.mxu0 %v706
    %1370 = vmatpush2.msra.mxu0 %v705
    %1371 = vmatprep.mubr.f32.mxu0 %v342
    %1372 = vmatmul.mubr.f32.gmra.mxu0 %v340
    %v1373 = vpop.f32.mrf.mxu0
    %v1374 = vadd.f32 %v1303, %v1373
    %v1375 = vpop.f32.mrf.mxu0
    %v1376 = vadd.f32 %v1305, %v1375
    %1377 = vdwg.mxu0
    %1378 = vmatprep.subr.mxu0 %v892
    %1379 = vmatpush1.msra.mxu0 %v891
    %1380 = vmatprep.subr.mxu0 %v886
    %1381 = vmatpush1.msra.mxu0 %v885
    %1382 = vmatprep.subr.mxu0 %v880
    %1383 = vmatpush1.msra.mxu0 %v879
    %1384 = vmatprep.subr.mxu0 %v874
    %1385 = vmatpush1.msra.mxu0 %v873
    %1386 = vmatprep.subr.mxu0 %v868
    %1387 = vmatpush1.msra.mxu0 %v867
    %1388 = vmatprep.subr.mxu0 %v862
    %1389 = vmatpush1.msra.mxu0 %v861
    %1390 = vmatprep.subr.mxu0 %v856
    %1391 = vmatpush1.msra.mxu0 %v855
    %1392 = vmatprep.subr.mxu0 %v850
    %1393 = vmatpush1.msra.mxu0 %v849
    %1394 = vmatprep.subr.mxu0 %v844
    %1395 = vmatpush1.msra.mxu0 %v843
    %1396 = vmatprep.subr.mxu0 %v838
    %1397 = vmatpush1.msra.mxu0 %v837
    %1398 = vmatprep.subr.mxu0 %v832
    %1399 = vmatpush1.msra.mxu0 %v831
    %1400 = vmatprep.subr.mxu0 %v826
    %1401 = vmatpush1.msra.mxu0 %v825
    %1402 = vmatprep.subr.mxu0 %v820
    %1403 = vmatpush1.msra.mxu0 %v819
    %1404 = vmatprep.subr.mxu0 %v814
    %1405 = vmatpush1.msra.mxu0 %v813
    %1406 = vmatprep.subr.mxu0 %v808
    %1407 = vmatpush1.msra.mxu0 %v807
    %1408 = vmatprep.subr.mxu0 %v802
    %1409 = vmatpush1.msra.mxu0 %v801
    %1410 = vmatprep.subr.mxu0 %v988
    %1411 = vmatpush2.msra.mxu0 %v987
    %1412 = vmatprep.subr.mxu0 %v982
    %1413 = vmatpush2.msra.mxu0 %v981
    %1414 = vmatprep.subr.mxu0 %v976
    %1415 = vmatpush2.msra.mxu0 %v975
    %1416 = vmatprep.subr.mxu0 %v970
    %1417 = vmatpush2.msra.mxu0 %v969
    %1418 = vmatprep.subr.mxu0 %v964
    %1419 = vmatpush2.msra.mxu0 %v963
    %1420 = vmatprep.subr.mxu0 %v958
    %1421 = vmatpush2.msra.mxu0 %v957
    %1422 = vmatprep.subr.mxu0 %v952
    %1423 = vmatpush2.msra.mxu0 %v951
    %1424 = vmatprep.subr.mxu0 %v946
    %1425 = vmatpush2.msra.mxu0 %v945
    %1426 = vmatprep.subr.mxu0 %v940
    %1427 = vmatpush2.msra.mxu0 %v939
    %1428 = vmatprep.subr.mxu0 %v934
    %1429 = vmatpush2.msra.mxu0 %v933
    %1430 = vmatprep.subr.mxu0 %v928
    %1431 = vmatpush2.msra.mxu0 %v927
    %1432 = vmatprep.subr.mxu0 %v922
    %1433 = vmatpush2.msra.mxu0 %v921
    %1434 = vmatprep.subr.mxu0 %v916
    %1435 = vmatpush2.msra.mxu0 %v915
    %1436 = vmatprep.subr.mxu0 %v910
    %1437 = vmatpush2.msra.mxu0 %v909
    %1438 = vmatprep.subr.mxu0 %v904
    %1439 = vmatpush2.msra.mxu0 %v903
    %1440 = vmatprep.subr.mxu0 %v898
    %1441 = vmatpush2.msra.mxu0 %v897
    %1442 = vmatprep.mubr.f32.mxu0 %v413
    %1443 = vmatmul.mubr.f32.gmra.mxu0 %v411
    %v1444 = vpop.f32.mrf.mxu0
    %v1445 = vadd.f32 %v1374, %v1444
    %v1446 = vpop.f32.mrf.mxu0
    %v1447 = vadd.f32 %v1376, %v1446
    %1448 = vdwg.mxu0
    %1449 = vmatprep.subr.mxu0 %v510
    %1450 = vmatpush1.msra.mxu0 %v509
    %1451 = vmatprep.subr.mxu0 %v504
    %1452 = vmatpush1.msra.mxu0 %v503
    %1453 = vmatprep.subr.mxu0 %v498
    %1454 = vmatpush1.msra.mxu0 %v497
    %1455 = vmatprep.subr.mxu0 %v492
    %1456 = vmatpush1.msra.mxu0 %v491
    %1457 = vmatprep.subr.mxu0 %v486
    %1458 = vmatpush1.msra.mxu0 %v485
    %1459 = vmatprep.subr.mxu0 %v480
    %1460 = vmatpush1.msra.mxu0 %v479
    %1461 = vmatprep.subr.mxu0 %v474
    %1462 = vmatpush1.msra.mxu0 %v473
    %1463 = vmatprep.subr.mxu0 %v468
    %1464 = vmatpush1.msra.mxu0 %v467
    %1465 = vmatprep.subr.mxu0 %v462
    %1466 = vmatpush1.msra.mxu0 %v461
    %1467 = vmatprep.subr.mxu0 %v456
    %1468 = vmatpush1.msra.mxu0 %v455
    %1469 = vmatprep.subr.mxu0 %v450
    %1470 = vmatpush1.msra.mxu0 %v449
    %1471 = vmatprep.subr.mxu0 %v444
    %1472 = vmatpush1.msra.mxu0 %v443
    %1473 = vmatprep.subr.mxu0 %v438
    %1474 = vmatpush1.msra.mxu0 %v437
    %1475 = vmatprep.subr.mxu0 %v432
    %1476 = vmatpush1.msra.mxu0 %v431
    %1477 = vmatprep.subr.mxu0 %v426
    %1478 = vmatpush1.msra.mxu0 %v425
    %1479 = vmatprep.subr.mxu0 %v420
    %1480 = vmatpush1.msra.mxu0 %v419
    %1481 = vmatprep.subr.mxu0 %v606
    %1482 = vmatpush2.msra.mxu0 %v605
    %1483 = vmatprep.subr.mxu0 %v600
    %1484 = vmatpush2.msra.mxu0 %v599
    %1485 = vmatprep.subr.mxu0 %v594
    %1486 = vmatpush2.msra.mxu0 %v593
    %1487 = vmatprep.subr.mxu0 %v588
    %1488 = vmatpush2.msra.mxu0 %v587
    %1489 = vmatprep.subr.mxu0 %v582
    %1490 = vmatpush2.msra.mxu0 %v581
    %1491 = vmatprep.subr.mxu0 %v576
    %1492 = vmatpush2.msra.mxu0 %v575
    %1493 = vmatprep.subr.mxu0 %v570
    %1494 = vmatpush2.msra.mxu0 %v569
    %1495 = vmatprep.subr.mxu0 %v564
    %1496 = vmatpush2.msra.mxu0 %v563
    %1497 = vmatprep.subr.mxu0 %v558
    %1498 = vmatpush2.msra.mxu0 %v557
    %1499 = vmatprep.subr.mxu0 %v552
    %1500 = vmatpush2.msra.mxu0 %v551
    %1501 = vmatprep.subr.mxu0 %v546
    %1502 = vmatpush2.msra.mxu0 %v545
    %1503 = vmatprep.subr.mxu0 %v540
    %1504 = vmatpush2.msra.mxu0 %v539
    %1505 = vmatprep.subr.mxu0 %v534
    %1506 = vmatpush2.msra.mxu0 %v533
    %1507 = vmatprep.subr.mxu0 %v528
    %1508 = vmatpush2.msra.mxu0 %v527
    %1509 = vmatprep.subr.mxu0 %v522
    %1510 = vmatpush2.msra.mxu0 %v521
    %1511 = vmatprep.subr.mxu0 %v516
    %1512 = vmatpush2.msra.mxu0 %v515
    %1513 = vmatprep.mubr.f32.mxu0 %v271
    %1514 = vmatmul.mubr.f32.gmra.mxu0 %v269
    %v1515 = vpop.f32.mrf.mxu0
    %v1516 = vadd.f32 %v1012, %v1515
    %v1517 = vpop.f32.mrf.mxu0
    %v1518 = vadd.f32 %v1016, %v1517
    %1519 = vdwg.mxu0
    %1520 = vmatprep.subr.mxu0 %v702
    %1521 = vmatpush1.msra.mxu0 %v701
    %1522 = vmatprep.subr.mxu0 %v696
    %1523 = vmatpush1.msra.mxu0 %v695
    %1524 = vmatprep.subr.mxu0 %v690
    %1525 = vmatpush1.msra.mxu0 %v689
    %1526 = vmatprep.subr.mxu0 %v684
    %1527 = vmatpush1.msra.mxu0 %v683
    %1528 = vmatprep.subr.mxu0 %v678
    %1529 = vmatpush1.msra.mxu0 %v677
    %1530 = vmatprep.subr.mxu0 %v672
    %1531 = vmatpush1.msra.mxu0 %v671
    %1532 = vmatprep.subr.mxu0 %v666
    %1533 = vmatpush1.msra.mxu0 %v665
    %1534 = vmatprep.subr.mxu0 %v660
    %1535 = vmatpush1.msra.mxu0 %v659
    %1536 = vmatprep.subr.mxu0 %v654
    %1537 = vmatpush1.msra.mxu0 %v653
    %1538 = vmatprep.subr.mxu0 %v648
    %1539 = vmatpush1.msra.mxu0 %v647
    %1540 = vmatprep.subr.mxu0 %v642
    %1541 = vmatpush1.msra.mxu0 %v641
    %1542 = vmatprep.subr.mxu0 %v636
    %1543 = vmatpush1.msra.mxu0 %v635
    %1544 = vmatprep.subr.mxu0 %v630
    %1545 = vmatpush1.msra.mxu0 %v629
    %1546 = vmatprep.subr.mxu0 %v624
    %1547 = vmatpush1.msra.mxu0 %v623
    %1548 = vmatprep.subr.mxu0 %v618
    %1549 = vmatpush1.msra.mxu0 %v617
    %1550 = vmatprep.subr.mxu0 %v612
    %1551 = vmatpush1.msra.mxu0 %v611
    %1552 = vmatprep.subr.mxu0 %v798
    %1553 = vmatpush2.msra.mxu0 %v797
    %1554 = vmatprep.subr.mxu0 %v792
    %1555 = vmatpush2.msra.mxu0 %v791
    %1556 = vmatprep.subr.mxu0 %v786
    %1557 = vmatpush2.msra.mxu0 %v785
    %1558 = vmatprep.subr.mxu0 %v780
    %1559 = vmatpush2.msra.mxu0 %v779
    %1560 = vmatprep.subr.mxu0 %v774
    %1561 = vmatpush2.msra.mxu0 %v773
    %1562 = vmatprep.subr.mxu0 %v768
    %1563 = vmatpush2.msra.mxu0 %v767
    %1564 = vmatprep.subr.mxu0 %v762
    %1565 = vmatpush2.msra.mxu0 %v761
    %1566 = vmatprep.subr.mxu0 %v756
    %1567 = vmatpush2.msra.mxu0 %v755
    %1568 = vmatprep.subr.mxu0 %v750
    %1569 = vmatpush2.msra.mxu0 %v749
    %1570 = vmatprep.subr.mxu0 %v744
    %1571 = vmatpush2.msra.mxu0 %v743
    %1572 = vmatprep.subr.mxu0 %v738
    %1573 = vmatpush2.msra.mxu0 %v737
    %1574 = vmatprep.subr.mxu0 %v732
    %1575 = vmatpush2.msra.mxu0 %v731
    %1576 = vmatprep.subr.mxu0 %v726
    %1577 = vmatpush2.msra.mxu0 %v725
    %1578 = vmatprep.subr.mxu0 %v720
    %1579 = vmatpush2.msra.mxu0 %v719
    %1580 = vmatprep.subr.mxu0 %v714
    %1581 = vmatpush2.msra.mxu0 %v713
    %1582 = vmatprep.subr.mxu0 %v708
    %1583 = vmatpush2.msra.mxu0 %v707
    %1584 = vmatprep.mubr.f32.mxu0 %v342
    %1585 = vmatmul.mubr.f32.gmra.mxu0 %v340
    %v1586 = vpop.f32.mrf.mxu0
    %v1587 = vadd.f32 %v1516, %v1586
    %v1588 = vpop.f32.mrf.mxu0
    %v1589 = vadd.f32 %v1518, %v1588
    %1590 = vdwg.mxu0
    %1591 = vmatprep.subr.mxu0 %v894
    %1592 = vmatpush1.msra.mxu0 %v893
    %1593 = vmatprep.subr.mxu0 %v888
    %1594 = vmatpush1.msra.mxu0 %v887
    %1595 = vmatprep.subr.mxu0 %v882
    %1596 = vmatpush1.msra.mxu0 %v881
    %1597 = vmatprep.subr.mxu0 %v876
    %1598 = vmatpush1.msra.mxu0 %v875
    %1599 = vmatprep.subr.mxu0 %v870
    %1600 = vmatpush1.msra.mxu0 %v869
    %1601 = vmatprep.subr.mxu0 %v864
    %1602 = vmatpush1.msra.mxu0 %v863
    %1603 = vmatprep.subr.mxu0 %v858
    %1604 = vmatpush1.msra.mxu0 %v857
    %1605 = vmatprep.subr.mxu0 %v852
    %1606 = vmatpush1.msra.mxu0 %v851
    %1607 = vmatprep.subr.mxu0 %v846
    %1608 = vmatpush1.msra.mxu0 %v845
    %1609 = vmatprep.subr.mxu0 %v840
    %1610 = vmatpush1.msra.mxu0 %v839
    %1611 = vmatprep.subr.mxu0 %v834
    %1612 = vmatpush1.msra.mxu0 %v833
    %1613 = vmatprep.subr.mxu0 %v828
    %1614 = vmatpush1.msra.mxu0 %v827
    %1615 = vmatprep.subr.mxu0 %v822
    %1616 = vmatpush1.msra.mxu0 %v821
    %1617 = vmatprep.subr.mxu0 %v816
    %1618 = vmatpush1.msra.mxu0 %v815
    %1619 = vmatprep.subr.mxu0 %v810
    %1620 = vmatpush1.msra.mxu0 %v809
    %1621 = vmatprep.subr.mxu0 %v804
    %1622 = vmatpush1.msra.mxu0 %v803
    %1623 = vmatprep.subr.mxu0 %v990
    %1624 = vmatpush2.msra.mxu0 %v989
    %1625 = vmatprep.subr.mxu0 %v984
    %1626 = vmatpush2.msra.mxu0 %v983
    %1627 = vmatprep.subr.mxu0 %v978
    %1628 = vmatpush2.msra.mxu0 %v977
    %1629 = vmatprep.subr.mxu0 %v972
    %1630 = vmatpush2.msra.mxu0 %v971
    %1631 = vmatprep.subr.mxu0 %v966
    %1632 = vmatpush2.msra.mxu0 %v965
    %1633 = vmatprep.subr.mxu0 %v960
    %1634 = vmatpush2.msra.mxu0 %v959
    %1635 = vmatprep.subr.mxu0 %v954
    %1636 = vmatpush2.msra.mxu0 %v953
    %1637 = vmatprep.subr.mxu0 %v948
    %1638 = vmatpush2.msra.mxu0 %v947
    %1639 = vmatprep.subr.mxu0 %v942
    %1640 = vmatpush2.msra.mxu0 %v941
    %1641 = vmatprep.subr.mxu0 %v936
    %1642 = vmatpush2.msra.mxu0 %v935
    %1643 = vmatprep.subr.mxu0 %v930
    %1644 = vmatpush2.msra.mxu0 %v929
    %1645 = vmatprep.subr.mxu0 %v924
    %1646 = vmatpush2.msra.mxu0 %v923
    %1647 = vmatprep.subr.mxu0 %v918
    %1648 = vmatpush2.msra.mxu0 %v917
    %1649 = vmatprep.subr.mxu0 %v912
    %1650 = vmatpush2.msra.mxu0 %v911
    %1651 = vmatprep.subr.mxu0 %v906
    %1652 = vmatpush2.msra.mxu0 %v905
    %1653 = vmatprep.subr.mxu0 %v900
    %1654 = vmatpush2.msra.mxu0 %v899
    %1655 = vmatprep.mubr.f32.mxu0 %v413
    %1656 = vmatmul.mubr.f32.gmra.mxu0 %v411
    %v1657 = vpop.f32.mrf.mxu0
    %v1658 = vadd.f32 %v1587, %v1657
    %v1659 = vpop.f32.mrf.mxu0
    %v1660 = vadd.f32 %v1589, %v1659
    %1661 = vdwg.mxu0
    %v1662 = vmax.f32 %v1232, 0.0
    %v1663 = vmax.f32 %v1234, 0.0
    %v1664 = vmax.f32 %v1445, 0.0
    %v1665 = vmax.f32 %v1447, 0.0
    %v1666 = vmax.f32 %v1658, 0.0
    %v1667 = vmax.f32 %v1660, 0.0
    %v1668 = vld [vmem:[%s6] sm:$0xff]
    %v1669 = vld [vmem:[%s6 + $0x8] sm:$0xff]
    %v1670 = vld [vmem:[%s6 + $0x10] sm:$0xff]
    %v1671 = vld [vmem:[%s6 + $0x18] sm:$0xff]
    %v1672 = vld [vmem:[%s6 + $0x20] sm:$0xff]
    %v1673 = vld [vmem:[%s6 + $0x28] sm:$0xff]
    %v1674 = vld [vmem:[%s6 + $0x30] sm:$0xff]
    %v1675 = vld [vmem:[%s6 + $0x38] sm:$0xff]
    %v1676 = vld [vmem:[%s6 + $0x40] sm:$0xff]
    %v1677 = vld [vmem:[%s6 + $0x48] sm:$0xff]
    %v1678 = vld [vmem:[%s6 + $0x50] sm:$0xff]
    %v1679 = vld [vmem:[%s6 + $0x58] sm:$0xff]
    %v1680 = vld [vmem:[%s6 + $0x60] sm:$0xff]
    %v1681 = vld [vmem:[%s6 + $0x68] sm:$0xff]
    %v1682 = vld [vmem:[%s6 + $0x70] sm:$0xff]
    %v1683 = vld [vmem:[%s6 + $0x78] sm:$0xff]
    %v1684 = vld [vmem:[%s6 + $0x80] sm:$0xff]
    %v1685 = vld [vmem:[%s6 + $0x88] sm:$0xff]
    %v1686 = vld [vmem:[%s6 + $0x90] sm:$0xff]
    %v1687 = vld [vmem:[%s6 + $0x98] sm:$0xff]
    %v1688 = vld [vmem:[%s6 + $0xa0] sm:$0xff]
    %v1689 = vld [vmem:[%s6 + $0xa8] sm:$0xff]
    %v1690 = vld [vmem:[%s6 + $0xb0] sm:$0xff]
    %v1691 = vld [vmem:[%s6 + $0xb8] sm:$0xff]
    %v1692 = vld [vmem:[%s6 + $0xc0] sm:$0xff]
    %v1693 = vld [vmem:[%s6 + $0xc8] sm:$0xff]
    %v1694 = vld [vmem:[%s6 + $0xd0] sm:$0xff]
    %v1695 = vld [vmem:[%s6 + $0xd8] sm:$0xff]
    %v1696 = vld [vmem:[%s6 + $0xe0] sm:$0xff]
    %v1697 = vld [vmem:[%s6 + $0xe8] sm:$0xff]
    %v1698 = vld [vmem:[%s6 + $0xf0] sm:$0xff]
    %v1699 = vld [vmem:[%s6 + $0xf8] sm:$0xff]
    %v1700 = vld [vmem:[%s6 + $0x100] sm:$0xff]
    %v1701 = vld [vmem:[%s6 + $0x108] sm:$0xff]
    %v1702 = vld [vmem:[%s6 + $0x110] sm:$0xff]
    %v1703 = vld [vmem:[%s6 + $0x118] sm:$0xff]
    %v1704 = vld [vmem:[%s6 + $0x120] sm:$0xff]
    %v1705 = vld [vmem:[%s6 + $0x128] sm:$0xff]
    %v1706 = vld [vmem:[%s6 + $0x130] sm:$0xff]
    %v1707 = vld [vmem:[%s6 + $0x138] sm:$0xff]
    %v1708 = vld [vmem:[%s6 + $0x140] sm:$0xff]
    %v1709 = vld [vmem:[%s6 + $0x148] sm:$0xff]
    %v1710 = vld [vmem:[%s6 + $0x150] sm:$0xff]
    %v1711 = vld [vmem:[%s6 + $0x158] sm:$0xff]
    %v1712 = vld [vmem:[%s6 + $0x160] sm:$0xff]
    %v1713 = vld [vmem:[%s6 + $0x168] sm:$0xff]
    %v1714 = vld [vmem:[%s6 + $0x170] sm:$0xff]
    %v1715 = vld [vmem:[%s6 + $0x178] sm:$0xff]
    %v1716 = vld [vmem:[%s6 + $0x180] sm:$0xff]
    %v1717 = vld [vmem:[%s6 + $0x188] sm:$0xff]
    %v1718 = vld [vmem:[%s6 + $0x190] sm:$0xff]
    %v1719 = vld [vmem:[%s6 + $0x198] sm:$0xff]
    %v1720 = vld [vmem:[%s6 + $0x1a0] sm:$0xff]
    %v1721 = vld [vmem:[%s6 + $0x1a8] sm:$0xff]
    %v1722 = vld [vmem:[%s6 + $0x1b0] sm:$0xff]
    %v1723 = vld [vmem:[%s6 + $0x1b8] sm:$0xff]
    %v1724 = vld [vmem:[%s6 + $0x1c0] sm:$0xff]
    %v1725 = vld [vmem:[%s6 + $0x1c8] sm:$0xff]
    %v1726 = vld [vmem:[%s6 + $0x1d0] sm:$0xff]
    %v1727 = vld [vmem:[%s6 + $0x1d8] sm:$0xff]
    %v1728 = vld [vmem:[%s6 + $0x1e0] sm:$0xff]
    %v1729 = vld [vmem:[%s6 + $0x1e8] sm:$0xff]
    %v1730 = vld [vmem:[%s6 + $0x1f0] sm:$0xff]
    %v1731 = vld [vmem:[%s6 + $0x1f8] sm:$0xff]
    %v1732 = vld [vmem:[%s6 + $0x200] sm:$0xff]
    %v1733 = vld [vmem:[%s6 + $0x208] sm:$0xff]
    %v1734 = vld [vmem:[%s6 + $0x210] sm:$0xff]
    %v1735 = vld [vmem:[%s6 + $0x218] sm:$0xff]
    %v1736 = vld [vmem:[%s6 + $0x220] sm:$0xff]
    %v1737 = vld [vmem:[%s6 + $0x228] sm:$0xff]
    %v1738 = vld [vmem:[%s6 + $0x230] sm:$0xff]
    %v1739 = vld [vmem:[%s6 + $0x238] sm:$0xff]
    %v1740 = vld [vmem:[%s6 + $0x240] sm:$0xff]
    %v1741 = vld [vmem:[%s6 + $0x248] sm:$0xff]
    %v1742 = vld [vmem:[%s6 + $0x250] sm:$0xff]
    %v1743 = vld [vmem:[%s6 + $0x258] sm:$0xff]
    %v1744 = vld [vmem:[%s6 + $0x260] sm:$0xff]
    %v1745 = vld [vmem:[%s6 + $0x268] sm:$0xff]
    %v1746 = vld [vmem:[%s6 + $0x270] sm:$0xff]
    %v1747 = vld [vmem:[%s6 + $0x278] sm:$0xff]
    %v1748 = vld [vmem:[%s6 + $0x280] sm:$0xff]
    %v1749 = vld [vmem:[%s6 + $0x288] sm:$0xff]
    %v1750 = vld [vmem:[%s6 + $0x290] sm:$0xff]
    %v1751 = vld [vmem:[%s6 + $0x298] sm:$0xff]
    %v1752 = vld [vmem:[%s6 + $0x2a0] sm:$0xff]
    %v1753 = vld [vmem:[%s6 + $0x2a8] sm:$0xff]
    %v1754 = vld [vmem:[%s6 + $0x2b0] sm:$0xff]
    %v1755 = vld [vmem:[%s6 + $0x2b8] sm:$0xff]
    %v1756 = vld [vmem:[%s6 + $0x2c0] sm:$0xff]
    %v1757 = vld [vmem:[%s6 + $0x2c8] sm:$0xff]
    %v1758 = vld [vmem:[%s6 + $0x2d0] sm:$0xff]
    %v1759 = vld [vmem:[%s6 + $0x2d8] sm:$0xff]
    %v1760 = vld [vmem:[%s6 + $0x2e0] sm:$0xff]
    %v1761 = vld [vmem:[%s6 + $0x2e8] sm:$0xff]
    %v1762 = vld [vmem:[%s6 + $0x2f0] sm:$0xff]
    %v1763 = vld [vmem:[%s6 + $0x2f8] sm:$0xff]
    %v1764 = vld [vmem:[%s6 + $0x300] sm:$0xff]
    %v1765 = vld [vmem:[%s6 + $0x308] sm:$0xff]
    %v1766 = vld [vmem:[%s6 + $0x310] sm:$0xff]
    %v1767 = vld [vmem:[%s6 + $0x318] sm:$0xff]
    %v1768 = vld [vmem:[%s6 + $0x320] sm:$0xff]
    %v1769 = vld [vmem:[%s6 + $0x328] sm:$0xff]
    %v1770 = vld [vmem:[%s6 + $0x330] sm:$0xff]
    %v1771 = vld [vmem:[%s6 + $0x338] sm:$0xff]
    %v1772 = vld [vmem:[%s6 + $0x340] sm:$0xff]
    %v1773 = vld [vmem:[%s6 + $0x348] sm:$0xff]
    %v1774 = vld [vmem:[%s6 + $0x350] sm:$0xff]
    %v1775 = vld [vmem:[%s6 + $0x358] sm:$0xff]
    %v1776 = vld [vmem:[%s6 + $0x360] sm:$0xff]
    %v1777 = vld [vmem:[%s6 + $0x368] sm:$0xff]
    %v1778 = vld [vmem:[%s6 + $0x370] sm:$0xff]
    %v1779 = vld [vmem:[%s6 + $0x378] sm:$0xff]
    %v1780 = vld [vmem:[%s6 + $0x380] sm:$0xff]
    %v1781 = vld [vmem:[%s6 + $0x388] sm:$0xff]
    %v1782 = vld [vmem:[%s6 + $0x390] sm:$0xff]
    %v1783 = vld [vmem:[%s6 + $0x398] sm:$0xff]
    %v1784 = vld [vmem:[%s6 + $0x3a0] sm:$0xff]
    %v1785 = vld [vmem:[%s6 + $0x3a8] sm:$0xff]
    %v1786 = vld [vmem:[%s6 + $0x3b0] sm:$0xff]
    %v1787 = vld [vmem:[%s6 + $0x3b8] sm:$0xff]
    %v1788 = vld [vmem:[%s6 + $0x3c0] sm:$0xff]
    %v1789 = vld [vmem:[%s6 + $0x3c8] sm:$0xff]
    %v1790 = vld [vmem:[%s6 + $0x3d0] sm:$0xff]
    %v1791 = vld [vmem:[%s6 + $0x3d8] sm:$0xff]
    %v1792 = vld [vmem:[%s6 + $0x3e0] sm:$0xff]
    %v1793 = vld [vmem:[%s6 + $0x3e8] sm:$0xff]
    %v1794 = vld [vmem:[%s6 + $0x3f0] sm:$0xff]
    %v1795 = vld [vmem:[%s6 + $0x3f8] sm:$0xff]
    %v1796 = vld [vmem:[%s6 + $0x400] sm:$0xff]
    %v1797 = vld [vmem:[%s6 + $0x408] sm:$0xff]
    %v1798 = vld [vmem:[%s6 + $0x410] sm:$0xff]
    %v1799 = vld [vmem:[%s6 + $0x418] sm:$0xff]
    %v1800 = vld [vmem:[%s6 + $0x420] sm:$0xff]
    %v1801 = vld [vmem:[%s6 + $0x428] sm:$0xff]
    %v1802 = vld [vmem:[%s6 + $0x430] sm:$0xff]
    %v1803 = vld [vmem:[%s6 + $0x438] sm:$0xff]
    %v1804 = vld [vmem:[%s6 + $0x440] sm:$0xff]
    %v1805 = vld [vmem:[%s6 + $0x448] sm:$0xff]
    %v1806 = vld [vmem:[%s6 + $0x450] sm:$0xff]
    %v1807 = vld [vmem:[%s6 + $0x458] sm:$0xff]
    %v1808 = vld [vmem:[%s6 + $0x460] sm:$0xff]
    %v1809 = vld [vmem:[%s6 + $0x468] sm:$0xff]
    %v1810 = vld [vmem:[%s6 + $0x470] sm:$0xff]
    %v1811 = vld [vmem:[%s6 + $0x478] sm:$0xff]
    %v1812 = vld [vmem:[%s6 + $0x480] sm:$0xff]
    %v1813 = vld [vmem:[%s6 + $0x488] sm:$0xff]
    %v1814 = vld [vmem:[%s6 + $0x490] sm:$0xff]
    %v1815 = vld [vmem:[%s6 + $0x498] sm:$0xff]
    %v1816 = vld [vmem:[%s6 + $0x4a0] sm:$0xff]
    %v1817 = vld [vmem:[%s6 + $0x4a8] sm:$0xff]
    %v1818 = vld [vmem:[%s6 + $0x4b0] sm:$0xff]
    %v1819 = vld [vmem:[%s6 + $0x4b8] sm:$0xff]
    %v1820 = vld [vmem:[%s6 + $0x4c0] sm:$0xff]
    %v1821 = vld [vmem:[%s6 + $0x4c8] sm:$0xff]
    %v1822 = vld [vmem:[%s6 + $0x4d0] sm:$0xff]
    %v1823 = vld [vmem:[%s6 + $0x4d8] sm:$0xff]
    %v1824 = vld [vmem:[%s6 + $0x4e0] sm:$0xff]
    %v1825 = vld [vmem:[%s6 + $0x4e8] sm:$0xff]
    %v1826 = vld [vmem:[%s6 + $0x4f0] sm:$0xff]
    %v1827 = vld [vmem:[%s6 + $0x4f8] sm:$0xff]
    %v1828 = vld [vmem:[%s6 + $0x500] sm:$0xff]
    %v1829 = vld [vmem:[%s6 + $0x508] sm:$0xff]
    %v1830 = vld [vmem:[%s6 + $0x510] sm:$0xff]
    %v1831 = vld [vmem:[%s6 + $0x518] sm:$0xff]
    %v1832 = vld [vmem:[%s6 + $0x520] sm:$0xff]
    %v1833 = vld [vmem:[%s6 + $0x528] sm:$0xff]
    %v1834 = vld [vmem:[%s6 + $0x530] sm:$0xff]
    %v1835 = vld [vmem:[%s6 + $0x538] sm:$0xff]
    %v1836 = vld [vmem:[%s6 + $0x540] sm:$0xff]
    %v1837 = vld [vmem:[%s6 + $0x548] sm:$0xff]
    %v1838 = vld [vmem:[%s6 + $0x550] sm:$0xff]
    %v1839 = vld [vmem:[%s6 + $0x558] sm:$0xff]
    %v1840 = vld [vmem:[%s6 + $0x560] sm:$0xff]
    %v1841 = vld [vmem:[%s6 + $0x568] sm:$0xff]
    %v1842 = vld [vmem:[%s6 + $0x570] sm:$0xff]
    %v1843 = vld [vmem:[%s6 + $0x578] sm:$0xff]
    %v1844 = vld [vmem:[%s6 + $0x580] sm:$0xff]
    %v1845 = vld [vmem:[%s6 + $0x588] sm:$0xff]
    %v1846 = vld [vmem:[%s6 + $0x590] sm:$0xff]
    %v1847 = vld [vmem:[%s6 + $0x598] sm:$0xff]
    %v1848 = vld [vmem:[%s6 + $0x5a0] sm:$0xff]
    %v1849 = vld [vmem:[%s6 + $0x5a8] sm:$0xff]
    %v1850 = vld [vmem:[%s6 + $0x5b0] sm:$0xff]
    %v1851 = vld [vmem:[%s6 + $0x5b8] sm:$0xff]
    %v1852 = vld [vmem:[%s6 + $0x5c0] sm:$0xff]
    %v1853 = vld [vmem:[%s6 + $0x5c8] sm:$0xff]
    %v1854 = vld [vmem:[%s6 + $0x5d0] sm:$0xff]
    %v1855 = vld [vmem:[%s6 + $0x5d8] sm:$0xff]
    %v1856 = vld [vmem:[%s6 + $0x5e0] sm:$0xff]
    %v1857 = vld [vmem:[%s6 + $0x5e8] sm:$0xff]
    %v1858 = vld [vmem:[%s6 + $0x5f0] sm:$0xff]
    %v1859 = vld [vmem:[%s6 + $0x5f8] sm:$0xff]
    %v1860 = vld [vmem:[%s6 + $0x600] sm:$0xff]
    %v1861 = vld [vmem:[%s6 + $0x608] sm:$0xff]
    %v1862 = vld [vmem:[%s6 + $0x610] sm:$0xff]
    %v1863 = vld [vmem:[%s6 + $0x618] sm:$0xff]
    %v1864 = vld [vmem:[%s6 + $0x620] sm:$0xff]
    %v1865 = vld [vmem:[%s6 + $0x628] sm:$0xff]
    %v1866 = vld [vmem:[%s6 + $0x630] sm:$0xff]
    %v1867 = vld [vmem:[%s6 + $0x638] sm:$0xff]
    %v1868 = vld [vmem:[%s6 + $0x640] sm:$0xff]
    %v1869 = vld [vmem:[%s6 + $0x648] sm:$0xff]
    %v1870 = vld [vmem:[%s6 + $0x650] sm:$0xff]
    %v1871 = vld [vmem:[%s6 + $0x658] sm:$0xff]
    %v1872 = vld [vmem:[%s6 + $0x660] sm:$0xff]
    %v1873 = vld [vmem:[%s6 + $0x668] sm:$0xff]
    %v1874 = vld [vmem:[%s6 + $0x670] sm:$0xff]
    %v1875 = vld [vmem:[%s6 + $0x678] sm:$0xff]
    %v1876 = vld [vmem:[%s6 + $0x680] sm:$0xff]
    %v1877 = vld [vmem:[%s6 + $0x688] sm:$0xff]
    %v1878 = vld [vmem:[%s6 + $0x690] sm:$0xff]
    %v1879 = vld [vmem:[%s6 + $0x698] sm:$0xff]
    %v1880 = vld [vmem:[%s6 + $0x6a0] sm:$0xff]
    %v1881 = vld [vmem:[%s6 + $0x6a8] sm:$0xff]
    %v1882 = vld [vmem:[%s6 + $0x6b0] sm:$0xff]
    %v1883 = vld [vmem:[%s6 + $0x6b8] sm:$0xff]
    %v1884 = vld [vmem:[%s6 + $0x6c0] sm:$0xff]
    %v1885 = vld [vmem:[%s6 + $0x6c8] sm:$0xff]
    %v1886 = vld [vmem:[%s6 + $0x6d0] sm:$0xff]
    %v1887 = vld [vmem:[%s6 + $0x6d8] sm:$0xff]
    %v1888 = vld [vmem:[%s6 + $0x6e0] sm:$0xff]
    %v1889 = vld [vmem:[%s6 + $0x6e8] sm:$0xff]
    %v1890 = vld [vmem:[%s6 + $0x6f0] sm:$0xff]
    %v1891 = vld [vmem:[%s6 + $0x6f8] sm:$0xff]
    %v1892 = vld [vmem:[%s6 + $0x700] sm:$0xff]
    %v1893 = vld [vmem:[%s6 + $0x708] sm:$0xff]
    %v1894 = vld [vmem:[%s6 + $0x710] sm:$0xff]
    %v1895 = vld [vmem:[%s6 + $0x718] sm:$0xff]
    %v1896 = vld [vmem:[%s6 + $0x720] sm:$0xff]
    %v1897 = vld [vmem:[%s6 + $0x728] sm:$0xff]
    %v1898 = vld [vmem:[%s6 + $0x730] sm:$0xff]
    %v1899 = vld [vmem:[%s6 + $0x738] sm:$0xff]
    %v1900 = vld [vmem:[%s6 + $0x740] sm:$0xff]
    %v1901 = vld [vmem:[%s6 + $0x748] sm:$0xff]
    %v1902 = vld [vmem:[%s6 + $0x750] sm:$0xff]
    %v1903 = vld [vmem:[%s6 + $0x758] sm:$0xff]
    %v1904 = vld [vmem:[%s6 + $0x760] sm:$0xff]
    %v1905 = vld [vmem:[%s6 + $0x768] sm:$0xff]
    %v1906 = vld [vmem:[%s6 + $0x770] sm:$0xff]
    %v1907 = vld [vmem:[%s6 + $0x778] sm:$0xff]
    %v1908 = vld [vmem:[%s6 + $0x780] sm:$0xff]
    %v1909 = vld [vmem:[%s6 + $0x788] sm:$0xff]
    %v1910 = vld [vmem:[%s6 + $0x790] sm:$0xff]
    %v1911 = vld [vmem:[%s6 + $0x798] sm:$0xff]
    %v1912 = vld [vmem:[%s6 + $0x7a0] sm:$0xff]
    %v1913 = vld [vmem:[%s6 + $0x7a8] sm:$0xff]
    %v1914 = vld [vmem:[%s6 + $0x7b0] sm:$0xff]
    %v1915 = vld [vmem:[%s6 + $0x7b8] sm:$0xff]
    %v1916 = vld [vmem:[%s6 + $0x7c0] sm:$0xff]
    %v1917 = vld [vmem:[%s6 + $0x7c8] sm:$0xff]
    %v1918 = vld [vmem:[%s6 + $0x7d0] sm:$0xff]
    %v1919 = vld [vmem:[%s6 + $0x7d8] sm:$0xff]
    %v1920 = vld [vmem:[%s6 + $0x7e0] sm:$0xff]
    %v1921 = vld [vmem:[%s6 + $0x7e8] sm:$0xff]
    %v1922 = vld [vmem:[%s6 + $0x7f0] sm:$0xff]
    %v1923 = vld [vmem:[%s6 + $0x7f8] sm:$0xff]
    %v1924 = vld [vmem:[%s6 + $0x800] sm:$0xff]
    %v1925 = vld [vmem:[%s6 + $0x808] sm:$0xff]
    %v1926 = vld [vmem:[%s6 + $0x810] sm:$0xff]
    %v1927 = vld [vmem:[%s6 + $0x818] sm:$0xff]
    %v1928 = vld [vmem:[%s6 + $0x820] sm:$0xff]
    %v1929 = vld [vmem:[%s6 + $0x828] sm:$0xff]
    %v1930 = vld [vmem:[%s6 + $0x830] sm:$0xff]
    %v1931 = vld [vmem:[%s6 + $0x838] sm:$0xff]
    %v1932 = vld [vmem:[%s6 + $0x840] sm:$0xff]
    %v1933 = vld [vmem:[%s6 + $0x848] sm:$0xff]
    %v1934 = vld [vmem:[%s6 + $0x850] sm:$0xff]
    %v1935 = vld [vmem:[%s6 + $0x858] sm:$0xff]
    %v1936 = vld [vmem:[%s6 + $0x860] sm:$0xff]
    %v1937 = vld [vmem:[%s6 + $0x868] sm:$0xff]
    %v1938 = vld [vmem:[%s6 + $0x870] sm:$0xff]
    %v1939 = vld [vmem:[%s6 + $0x878] sm:$0xff]
    %v1940 = vld [vmem:[%s6 + $0x880] sm:$0xff]
    %v1941 = vld [vmem:[%s6 + $0x888] sm:$0xff]
    %v1942 = vld [vmem:[%s6 + $0x890] sm:$0xff]
    %v1943 = vld [vmem:[%s6 + $0x898] sm:$0xff]
    %v1944 = vld [vmem:[%s6 + $0x8a0] sm:$0xff]
    %v1945 = vld [vmem:[%s6 + $0x8a8] sm:$0xff]
    %v1946 = vld [vmem:[%s6 + $0x8b0] sm:$0xff]
    %v1947 = vld [vmem:[%s6 + $0x8b8] sm:$0xff]
    %v1948 = vld [vmem:[%s6 + $0x8c0] sm:$0xff]
    %v1949 = vld [vmem:[%s6 + $0x8c8] sm:$0xff]
    %v1950 = vld [vmem:[%s6 + $0x8d0] sm:$0xff]
    %v1951 = vld [vmem:[%s6 + $0x8d8] sm:$0xff]
    %v1952 = vld [vmem:[%s6 + $0x8e0] sm:$0xff]
    %v1953 = vld [vmem:[%s6 + $0x8e8] sm:$0xff]
    %v1954 = vld [vmem:[%s6 + $0x8f0] sm:$0xff]
    %v1955 = vld [vmem:[%s6 + $0x8f8] sm:$0xff]
    %v1956 = vld [vmem:[%s6 + $0x900] sm:$0xff]
    %v1957 = vld [vmem:[%s6 + $0x908] sm:$0xff]
    %v1958 = vld [vmem:[%s6 + $0x910] sm:$0xff]
    %v1959 = vld [vmem:[%s6 + $0x918] sm:$0xff]
    %v1960 = vld [vmem:[%s6 + $0x920] sm:$0xff]
    %v1961 = vld [vmem:[%s6 + $0x928] sm:$0xff]
    %v1962 = vld [vmem:[%s6 + $0x930] sm:$0xff]
    %v1963 = vld [vmem:[%s6 + $0x938] sm:$0xff]
    %v1964 = vld [vmem:[%s6 + $0x940] sm:$0xff]
    %v1965 = vld [vmem:[%s6 + $0x948] sm:$0xff]
    %v1966 = vld [vmem:[%s6 + $0x950] sm:$0xff]
    %v1967 = vld [vmem:[%s6 + $0x958] sm:$0xff]
    %v1968 = vld [vmem:[%s6 + $0x960] sm:$0xff]
    %v1969 = vld [vmem:[%s6 + $0x968] sm:$0xff]
    %v1970 = vld [vmem:[%s6 + $0x970] sm:$0xff]
    %v1971 = vld [vmem:[%s6 + $0x978] sm:$0xff]
    %v1972 = vld [vmem:[%s6 + $0x980] sm:$0xff]
    %v1973 = vld [vmem:[%s6 + $0x988] sm:$0xff]
    %v1974 = vld [vmem:[%s6 + $0x990] sm:$0xff]
    %v1975 = vld [vmem:[%s6 + $0x998] sm:$0xff]
    %v1976 = vld [vmem:[%s6 + $0x9a0] sm:$0xff]
    %v1977 = vld [vmem:[%s6 + $0x9a8] sm:$0xff]
    %v1978 = vld [vmem:[%s6 + $0x9b0] sm:$0xff]
    %v1979 = vld [vmem:[%s6 + $0x9b8] sm:$0xff]
    %v1980 = vld [vmem:[%s6 + $0x9c0] sm:$0xff]
    %v1981 = vld [vmem:[%s6 + $0x9c8] sm:$0xff]
    %v1982 = vld [vmem:[%s6 + $0x9d0] sm:$0xff]
    %v1983 = vld [vmem:[%s6 + $0x9d8] sm:$0xff]
    %v1984 = vld [vmem:[%s6 + $0x9e0] sm:$0xff]
    %v1985 = vld [vmem:[%s6 + $0x9e8] sm:$0xff]
    %v1986 = vld [vmem:[%s6 + $0x9f0] sm:$0xff]
    %v1987 = vld [vmem:[%s6 + $0x9f8] sm:$0xff]
    %v1988 = vld [vmem:[%s6 + $0xa00] sm:$0xff]
    %v1989 = vld [vmem:[%s6 + $0xa08] sm:$0xff]
    %v1990 = vld [vmem:[%s6 + $0xa10] sm:$0xff]
    %v1991 = vld [vmem:[%s6 + $0xa18] sm:$0xff]
    %v1992 = vld [vmem:[%s6 + $0xa20] sm:$0xff]
    %v1993 = vld [vmem:[%s6 + $0xa28] sm:$0xff]
    %v1994 = vld [vmem:[%s6 + $0xa30] sm:$0xff]
    %v1995 = vld [vmem:[%s6 + $0xa38] sm:$0xff]
    %v1996 = vld [vmem:[%s6 + $0xa40] sm:$0xff]
    %v1997 = vld [vmem:[%s6 + $0xa48] sm:$0xff]
    %v1998 = vld [vmem:[%s6 + $0xa50] sm:$0xff]
    %v1999 = vld [vmem:[%s6 + $0xa58] sm:$0xff]
    %v2000 = vld [vmem:[%s6 + $0xa60] sm:$0xff]
    %v2001 = vld [vmem:[%s6 + $0xa68] sm:$0xff]
    %v2002 = vld [vmem:[%s6 + $0xa70] sm:$0xff]
    %v2003 = vld [vmem:[%s6 + $0xa78] sm:$0xff]
    %v2004 = vld [vmem:[%s6 + $0xa80] sm:$0xff]
    %v2005 = vld [vmem:[%s6 + $0xa88] sm:$0xff]
    %v2006 = vld [vmem:[%s6 + $0xa90] sm:$0xff]
    %v2007 = vld [vmem:[%s6 + $0xa98] sm:$0xff]
    %v2008 = vld [vmem:[%s6 + $0xaa0] sm:$0xff]
    %v2009 = vld [vmem:[%s6 + $0xaa8] sm:$0xff]
    %v2010 = vld [vmem:[%s6 + $0xab0] sm:$0xff]
    %v2011 = vld [vmem:[%s6 + $0xab8] sm:$0xff]
    %v2012 = vld [vmem:[%s6 + $0xac0] sm:$0xff]
    %v2013 = vld [vmem:[%s6 + $0xac8] sm:$0xff]
    %v2014 = vld [vmem:[%s6 + $0xad0] sm:$0xff]
    %v2015 = vld [vmem:[%s6 + $0xad8] sm:$0xff]
    %v2016 = vld [vmem:[%s6 + $0xae0] sm:$0xff]
    %v2017 = vld [vmem:[%s6 + $0xae8] sm:$0xff]
    %v2018 = vld [vmem:[%s6 + $0xaf0] sm:$0xff]
    %v2019 = vld [vmem:[%s6 + $0xaf8] sm:$0xff]
    %v2020 = vld [vmem:[%s6 + $0xb00] sm:$0xff]
    %v2021 = vld [vmem:[%s6 + $0xb08] sm:$0xff]
    %v2022 = vld [vmem:[%s6 + $0xb10] sm:$0xff]
    %v2023 = vld [vmem:[%s6 + $0xb18] sm:$0xff]
    %v2024 = vld [vmem:[%s6 + $0xb20] sm:$0xff]
    %v2025 = vld [vmem:[%s6 + $0xb28] sm:$0xff]
    %v2026 = vld [vmem:[%s6 + $0xb30] sm:$0xff]
    %v2027 = vld [vmem:[%s6 + $0xb38] sm:$0xff]
    %v2028 = vld [vmem:[%s6 + $0xb40] sm:$0xff]
    %v2029 = vld [vmem:[%s6 + $0xb48] sm:$0xff]
    %v2030 = vld [vmem:[%s6 + $0xb50] sm:$0xff]
    %v2031 = vld [vmem:[%s6 + $0xb58] sm:$0xff]
    %v2032 = vld [vmem:[%s6 + $0xb60] sm:$0xff]
    %v2033 = vld [vmem:[%s6 + $0xb68] sm:$0xff]
    %v2034 = vld [vmem:[%s6 + $0xb70] sm:$0xff]
    %v2035 = vld [vmem:[%s6 + $0xb78] sm:$0xff]
    %v2036 = vld [vmem:[%s6 + $0xb80] sm:$0xff]
    %v2037 = vld [vmem:[%s6 + $0xb88] sm:$0xff]
    %v2038 = vld [vmem:[%s6 + $0xb90] sm:$0xff]
    %v2039 = vld [vmem:[%s6 + $0xb98] sm:$0xff]
    %v2040 = vld [vmem:[%s6 + $0xba0] sm:$0xff]
    %v2041 = vld [vmem:[%s6 + $0xba8] sm:$0xff]
    %v2042 = vld [vmem:[%s6 + $0xbb0] sm:$0xff]
    %v2043 = vld [vmem:[%s6 + $0xbb8] sm:$0xff]
    %v2044 = vld [vmem:[%s6 + $0xbc0] sm:$0xff]
    %v2045 = vld [vmem:[%s6 + $0xbc8] sm:$0xff]
    %v2046 = vld [vmem:[%s6 + $0xbd0] sm:$0xff]
    %v2047 = vld [vmem:[%s6 + $0xbd8] sm:$0xff]
    %v2048 = vld [vmem:[%s6 + $0xbe0] sm:$0xff]
    %v2049 = vld [vmem:[%s6 + $0xbe8] sm:$0xff]
    %v2050 = vld [vmem:[%s6 + $0xbf0] sm:$0xff]
    %v2051 = vld [vmem:[%s6 + $0xbf8] sm:$0xff]
    %v2052 = vld [vmem:[%s7] sm:$0xf]
    %v2054 = vlaneseq
    %v2055 = vshrl.u32 %v2054, 7
    %v2056 = vsub.s32 0, %v2055
    %v2057 = vrot.slane %v2052, %v2056
    %v2058 = vlaneseq
    %v2059 = vshrl.u32 %v2058, 7
    %v2060 = vsub.s32 1, %v2059
    %v2061 = vrot.slane %v2052, %v2060
    %v2062 = vlaneseq
    %v2063 = vshrl.u32 %v2062, 7
    %v2064 = vsub.s32 2, %v2063
    %v2065 = vrot.slane %v2052, %v2064
    %v2066 = vlaneseq
    %v2067 = vshrl.u32 %v2066, 7
    %v2068 = vsub.s32 3, %v2067
    %v2069 = vrot.slane %v2052, %v2068
    %2074 = vmatprep.subr.mxu0 %v1729
    %2075 = vmatpush1.msra.mxu0 %v1728
    %2076 = vmatprep.subr.mxu0 %v1725
    %2077 = vmatpush1.msra.mxu0 %v1724
    %2078 = vmatprep.subr.mxu0 %v1721
    %2079 = vmatpush1.msra.mxu0 %v1720
    %2080 = vmatprep.subr.mxu0 %v1717
    %2081 = vmatpush1.msra.mxu0 %v1716
    %2082 = vmatprep.subr.mxu0 %v1713
    %2083 = vmatpush1.msra.mxu0 %v1712
    %2084 = vmatprep.subr.mxu0 %v1709
    %2085 = vmatpush1.msra.mxu0 %v1708
    %2086 = vmatprep.subr.mxu0 %v1705
    %2087 = vmatpush1.msra.mxu0 %v1704
    %2088 = vmatprep.subr.mxu0 %v1701
    %2089 = vmatpush1.msra.mxu0 %v1700
    %2090 = vmatprep.subr.mxu0 %v1697
    %2091 = vmatpush1.msra.mxu0 %v1696
    %2092 = vmatprep.subr.mxu0 %v1693
    %2093 = vmatpush1.msra.mxu0 %v1692
    %2094 = vmatprep.subr.mxu0 %v1689
    %2095 = vmatpush1.msra.mxu0 %v1688
    %2096 = vmatprep.subr.mxu0 %v1685
    %2097 = vmatpush1.msra.mxu0 %v1684
    %2098 = vmatprep.subr.mxu0 %v1681
    %2099 = vmatpush1.msra.mxu0 %v1680
    %2100 = vmatprep.subr.mxu0 %v1677
    %2101 = vmatpush1.msra.mxu0 %v1676
    %2102 = vmatprep.subr.mxu0 %v1673
    %2103 = vmatpush1.msra.mxu0 %v1672
    %2104 = vmatprep.subr.mxu0 %v1669
    %2105 = vmatpush1.msra.mxu0 %v1668
    %2106 = vmatprep.subr.mxu0 %v1793
    %2107 = vmatpush2.msra.mxu0 %v1792
    %2108 = vmatprep.subr.mxu0 %v1789
    %2109 = vmatpush2.msra.mxu0 %v1788
    %2110 = vmatprep.subr.mxu0 %v1785
    %2111 = vmatpush2.msra.mxu0 %v1784
    %2112 = vmatprep.subr.mxu0 %v1781
    %2113 = vmatpush2.msra.mxu0 %v1780
    %2114 = vmatprep.subr.mxu0 %v1777
    %2115 = vmatpush2.msra.mxu0 %v1776
    %2116 = vmatprep.subr.mxu0 %v1773
    %2117 = vmatpush2.msra.mxu0 %v1772
    %2118 = vmatprep.subr.mxu0 %v1769
    %2119 = vmatpush2.msra.mxu0 %v1768
    %2120 = vmatprep.subr.mxu0 %v1765
    %2121 = vmatpush2.msra.mxu0 %v1764
    %2122 = vmatprep.subr.mxu0 %v1761
    %2123 = vmatpush2.msra.mxu0 %v1760
    %2124 = vmatprep.subr.mxu0 %v1757
    %2125 = vmatpush2.msra.mxu0 %v1756
    %2126 = vmatprep.subr.mxu0 %v1753
    %2127 = vmatpush2.msra.mxu0 %v1752
    %2128 = vmatprep.subr.mxu0 %v1749
    %2129 = vmatpush2.msra.mxu0 %v1748
    %2130 = vmatprep.subr.mxu0 %v1745
    %2131 = vmatpush2.msra.mxu0 %v1744
    %2132 = vmatprep.subr.mxu0 %v1741
    %2133 = vmatpush2.msra.mxu0 %v1740
    %2134 = vmatprep.subr.mxu0 %v1737
    %2135 = vmatpush2.msra.mxu0 %v1736
    %2136 = vmatprep.subr.mxu0 %v1733
    %2137 = vmatpush2.msra.mxu0 %v1732
    %2138 = vmatprep.mubr.f32.mxu0 %v1663
    %2139 = vmatmul.mubr.f32.gmra.mxu0 %v1662
    %v2140 = vpop.f32.mrf.mxu0
    %v2141 = vadd.f32 %v2057, %v2140
    %v2142 = vpop.f32.mrf.mxu0
    %v2143 = vadd.f32 %v2061, %v2142
    %2144 = vdwg.mxu0
    %2145 = vmatprep.subr.mxu0 %v1857
    %2146 = vmatpush1.msra.mxu0 %v1856
    %2147 = vmatprep.subr.mxu0 %v1853
    %2148 = vmatpush1.msra.mxu0 %v1852
    %2149 = vmatprep.subr.mxu0 %v1849
    %2150 = vmatpush1.msra.mxu0 %v1848
    %2151 = vmatprep.subr.mxu0 %v1845
    %2152 = vmatpush1.msra.mxu0 %v1844
    %2153 = vmatprep.subr.mxu0 %v1841
    %2154 = vmatpush1.msra.mxu0 %v1840
    %2155 = vmatprep.subr.mxu0 %v1837
    %2156 = vmatpush1.msra.mxu0 %v1836
    %2157 = vmatprep.subr.mxu0 %v1833
    %2158 = vmatpush1.msra.mxu0 %v1832
    %2159 = vmatprep.subr.mxu0 %v1829
    %2160 = vmatpush1.msra.mxu0 %v1828
    %2161 = vmatprep.subr.mxu0 %v1825
    %2162 = vmatpush1.msra.mxu0 %v1824
    %2163 = vmatprep.subr.mxu0 %v1821
    %2164 = vmatpush1.msra.mxu0 %v1820
    %2165 = vmatprep.subr.mxu0 %v1817
    %2166 = vmatpush1.msra.mxu0 %v1816
    %2167 = vmatprep.subr.mxu0 %v1813
    %2168 = vmatpush1.msra.mxu0 %v1812
    %2169 = vmatprep.subr.mxu0 %v1809
    %2170 = vmatpush1.msra.mxu0 %v1808
    %2171 = vmatprep.subr.mxu0 %v1805
    %2172 = vmatpush1.msra.mxu0 %v1804
    %2173 = vmatprep.subr.mxu0 %v1801
    %2174 = vmatpush1.msra.mxu0 %v1800
    %2175 = vmatprep.subr.mxu0 %v1797
    %2176 = vmatpush1.msra.mxu0 %v1796
    %2177 = vmatprep.subr.mxu0 %v1921
    %2178 = vmatpush2.msra.mxu0 %v1920
    %2179 = vmatprep.subr.mxu0 %v1917
    %2180 = vmatpush2.msra.mxu0 %v1916
    %2181 = vmatprep.subr.mxu0 %v1913
    %2182 = vmatpush2.msra.mxu0 %v1912
    %2183 = vmatprep.subr.mxu0 %v1909
    %2184 = vmatpush2.msra.mxu0 %v1908
    %2185 = vmatprep.subr.mxu0 %v1905
    %2186 = vmatpush2.msra.mxu0 %v1904
    %2187 = vmatprep.subr.mxu0 %v1901
    %2188 = vmatpush2.msra.mxu0 %v1900
    %2189 = vmatprep.subr.mxu0 %v1897
    %2190 = vmatpush2.msra.mxu0 %v1896
    %2191 = vmatprep.subr.mxu0 %v1893
    %2192 = vmatpush2.msra.mxu0 %v1892
    %2193 = vmatprep.subr.mxu0 %v1889
    %2194 = vmatpush2.msra.mxu0 %v1888
    %2195 = vmatprep.subr.mxu0 %v1885
    %2196 = vmatpush2.msra.mxu0 %v1884
    %2197 = vmatprep.subr.mxu0 %v1881
    %2198 = vmatpush2.msra.mxu0 %v1880
    %2199 = vmatprep.subr.mxu0 %v1877
    %2200 = vmatpush2.msra.mxu0 %v1876
    %2201 = vmatprep.subr.mxu0 %v1873
    %2202 = vmatpush2.msra.mxu0 %v1872
    %2203 = vmatprep.subr.mxu0 %v1869
    %2204 = vmatpush2.msra.mxu0 %v1868
    %2205 = vmatprep.subr.mxu0 %v1865
    %2206 = vmatpush2.msra.mxu0 %v1864
    %2207 = vmatprep.subr.mxu0 %v1861
    %2208 = vmatpush2.msra.mxu0 %v1860
    %2209 = vmatprep.mubr.f32.mxu0 %v1665
    %2210 = vmatmul.mubr.f32.gmra.mxu0 %v1664
    %v2211 = vpop.f32.mrf.mxu0
    %v2212 = vadd.f32 %v2141, %v2211
    %v2213 = vpop.f32.mrf.mxu0
    %v2214 = vadd.f32 %v2143, %v2213
    %2215 = vdwg.mxu0
    %2216 = vmatprep.subr.mxu0 %v1985
    %2217 = vmatpush1.msra.mxu0 %v1984
    %2218 = vmatprep.subr.mxu0 %v1981
    %2219 = vmatpush1.msra.mxu0 %v1980
    %2220 = vmatprep.subr.mxu0 %v1977
    %2221 = vmatpush1.msra.mxu0 %v1976
    %2222 = vmatprep.subr.mxu0 %v1973
    %2223 = vmatpush1.msra.mxu0 %v1972
    %2224 = vmatprep.subr.mxu0 %v1969
    %2225 = vmatpush1.msra.mxu0 %v1968
    %2226 = vmatprep.subr.mxu0 %v1965
    %2227 = vmatpush1.msra.mxu0 %v1964
    %2228 = vmatprep.subr.mxu0 %v1961
    %2229 = vmatpush1.msra.mxu0 %v1960
    %2230 = vmatprep.subr.mxu0 %v1957
    %2231 = vmatpush1.msra.mxu0 %v1956
    %2232 = vmatprep.subr.mxu0 %v1953
    %2233 = vmatpush1.msra.mxu0 %v1952
    %2234 = vmatprep.subr.mxu0 %v1949
    %2235 = vmatpush1.msra.mxu0 %v1948
    %2236 = vmatprep.subr.mxu0 %v1945
    %2237 = vmatpush1.msra.mxu0 %v1944
    %2238 = vmatprep.subr.mxu0 %v1941
    %2239 = vmatpush1.msra.mxu0 %v1940
    %2240 = vmatprep.subr.mxu0 %v1937
    %2241 = vmatpush1.msra.mxu0 %v1936
    %2242 = vmatprep.subr.mxu0 %v1933
    %2243 = vmatpush1.msra.mxu0 %v1932
    %2244 = vmatprep.subr.mxu0 %v1929
    %2245 = vmatpush1.msra.mxu0 %v1928
    %2246 = vmatprep.subr.mxu0 %v1925
    %2247 = vmatpush1.msra.mxu0 %v1924
    %2248 = vmatprep.subr.mxu0 %v2049
    %2249 = vmatpush2.msra.mxu0 %v2048
    %2250 = vmatprep.subr.mxu0 %v2045
    %2251 = vmatpush2.msra.mxu0 %v2044
    %2252 = vmatprep.subr.mxu0 %v2041
    %2253 = vmatpush2.msra.mxu0 %v2040
    %2254 = vmatprep.subr.mxu0 %v2037
    %2255 = vmatpush2.msra.mxu0 %v2036
    %2256 = vmatprep.subr.mxu0 %v2033
    %2257 = vmatpush2.msra.mxu0 %v2032
    %2258 = vmatprep.subr.mxu0 %v2029
    %2259 = vmatpush2.msra.mxu0 %v2028
    %2260 = vmatprep.subr.mxu0 %v2025
    %2261 = vmatpush2.msra.mxu0 %v2024
    %2262 = vmatprep.subr.mxu0 %v2021
    %2263 = vmatpush2.msra.mxu0 %v2020
    %2264 = vmatprep.subr.mxu0 %v2017
    %2265 = vmatpush2.msra.mxu0 %v2016
    %2266 = vmatprep.subr.mxu0 %v2013
    %2267 = vmatpush2.msra.mxu0 %v2012
    %2268 = vmatprep.subr.mxu0 %v2009
    %2269 = vmatpush2.msra.mxu0 %v2008
    %2270 = vmatprep.subr.mxu0 %v2005
    %2271 = vmatpush2.msra.mxu0 %v2004
    %2272 = vmatprep.subr.mxu0 %v2001
    %2273 = vmatpush2.msra.mxu0 %v2000
    %2274 = vmatprep.subr.mxu0 %v1997
    %2275 = vmatpush2.msra.mxu0 %v1996
    %2276 = vmatprep.subr.mxu0 %v1993
    %2277 = vmatpush2.msra.mxu0 %v1992
    %2278 = vmatprep.subr.mxu0 %v1989
    %2279 = vmatpush2.msra.mxu0 %v1988
    %2280 = vmatprep.mubr.f32.mxu0 %v1667
    %2281 = vmatmul.mubr.f32.gmra.mxu0 %v1666
    %v2282 = vpop.f32.mrf.mxu0
    %v2283 = vadd.f32 %v2212, %v2282
    %v2284 = vpop.f32.mrf.mxu0
    %v2285 = vadd.f32 %v2214, %v2284
    %2286 = vdwg.mxu0
    %2287 = vmatprep.subr.mxu0 %v1731
    %2288 = vmatpush1.msra.mxu0 %v1730
    %2289 = vmatprep.subr.mxu0 %v1727
    %2290 = vmatpush1.msra.mxu0 %v1726
    %2291 = vmatprep.subr.mxu0 %v1723
    %2292 = vmatpush1.msra.mxu0 %v1722
    %2293 = vmatprep.subr.mxu0 %v1719
    %2294 = vmatpush1.msra.mxu0 %v1718
    %2295 = vmatprep.subr.mxu0 %v1715
    %2296 = vmatpush1.msra.mxu0 %v1714
    %2297 = vmatprep.subr.mxu0 %v1711
    %2298 = vmatpush1.msra.mxu0 %v1710
    %2299 = vmatprep.subr.mxu0 %v1707
    %2300 = vmatpush1.msra.mxu0 %v1706
    %2301 = vmatprep.subr.mxu0 %v1703
    %2302 = vmatpush1.msra.mxu0 %v1702
    %2303 = vmatprep.subr.mxu0 %v1699
    %2304 = vmatpush1.msra.mxu0 %v1698
    %2305 = vmatprep.subr.mxu0 %v1695
    %2306 = vmatpush1.msra.mxu0 %v1694
    %2307 = vmatprep.subr.mxu0 %v1691
    %2308 = vmatpush1.msra.mxu0 %v1690
    %2309 = vmatprep.subr.mxu0 %v1687
    %2310 = vmatpush1.msra.mxu0 %v1686
    %2311 = vmatprep.subr.mxu0 %v1683
    %2312 = vmatpush1.msra.mxu0 %v1682
    %2313 = vmatprep.subr.mxu0 %v1679
    %2314 = vmatpush1.msra.mxu0 %v1678
    %2315 = vmatprep.subr.mxu0 %v1675
    %2316 = vmatpush1.msra.mxu0 %v1674
    %2317 = vmatprep.subr.mxu0 %v1671
    %2318 = vmatpush1.msra.mxu0 %v1670
    %2319 = vmatprep.subr.mxu0 %v1795
    %2320 = vmatpush2.msra.mxu0 %v1794
    %2321 = vmatprep.subr.mxu0 %v1791
    %2322 = vmatpush2.msra.mxu0 %v1790
    %2323 = vmatprep.subr.mxu0 %v1787
    %2324 = vmatpush2.msra.mxu0 %v1786
    %2325 = vmatprep.subr.mxu0 %v1783
    %2326 = vmatpush2.msra.mxu0 %v1782
    %2327 = vmatprep.subr.mxu0 %v1779
    %2328 = vmatpush2.msra.mxu0 %v1778
    %2329 = vmatprep.subr.mxu0 %v1775
    %2330 = vmatpush2.msra.mxu0 %v1774
    %2331 = vmatprep.subr.mxu0 %v1771
    %2332 = vmatpush2.msra.mxu0 %v1770
    %2333 = vmatprep.subr.mxu0 %v1767
    %2334 = vmatpush2.msra.mxu0 %v1766
    %2335 = vmatprep.subr.mxu0 %v1763
    %2336 = vmatpush2.msra.mxu0 %v1762
    %2337 = vmatprep.subr.mxu0 %v1759
    %2338 = vmatpush2.msra.mxu0 %v1758
    %2339 = vmatprep.subr.mxu0 %v1755
    %2340 = vmatpush2.msra.mxu0 %v1754
    %2341 = vmatprep.subr.mxu0 %v1751
    %2342 = vmatpush2.msra.mxu0 %v1750
    %2343 = vmatprep.subr.mxu0 %v1747
    %2344 = vmatpush2.msra.mxu0 %v1746
    %2345 = vmatprep.subr.mxu0 %v1743
    %2346 = vmatpush2.msra.mxu0 %v1742
    %2347 = vmatprep.subr.mxu0 %v1739
    %2348 = vmatpush2.msra.mxu0 %v1738
    %2349 = vmatprep.subr.mxu0 %v1735
    %2350 = vmatpush2.msra.mxu0 %v1734
    %2351 = vmatprep.mubr.f32.mxu0 %v1663
    %2352 = vmatmul.mubr.f32.gmra.mxu0 %v1662
    %v2353 = vpop.f32.mrf.mxu0
    %v2354 = vadd.f32 %v2065, %v2353
    %v2355 = vpop.f32.mrf.mxu0
    %v2356 = vadd.f32 %v2069, %v2355
    %2357 = vdwg.mxu0
    %2358 = vmatprep.subr.mxu0 %v1859
    %2359 = vmatpush1.msra.mxu0 %v1858
    %2360 = vmatprep.subr.mxu0 %v1855
    %2361 = vmatpush1.msra.mxu0 %v1854
    %2362 = vmatprep.subr.mxu0 %v1851
    %2363 = vmatpush1.msra.mxu0 %v1850
    %2364 = vmatprep.subr.mxu0 %v1847
    %2365 = vmatpush1.msra.mxu0 %v1846
    %2366 = vmatprep.subr.mxu0 %v1843
    %2367 = vmatpush1.msra.mxu0 %v1842
    %2368 = vmatprep.subr.mxu0 %v1839
    %2369 = vmatpush1.msra.mxu0 %v1838
    %2370 = vmatprep.subr.mxu0 %v1835
    %2371 = vmatpush1.msra.mxu0 %v1834
    %2372 = vmatprep.subr.mxu0 %v1831
    %2373 = vmatpush1.msra.mxu0 %v1830
    %2374 = vmatprep.subr.mxu0 %v1827
    %2375 = vmatpush1.msra.mxu0 %v1826
    %2376 = vmatprep.subr.mxu0 %v1823
    %2377 = vmatpush1.msra.mxu0 %v1822
    %2378 = vmatprep.subr.mxu0 %v1819
    %2379 = vmatpush1.msra.mxu0 %v1818
    %2380 = vmatprep.subr.mxu0 %v1815
    %2381 = vmatpush1.msra.mxu0 %v1814
    %2382 = vmatprep.subr.mxu0 %v1811
    %2383 = vmatpush1.msra.mxu0 %v1810
    %2384 = vmatprep.subr.mxu0 %v1807
    %2385 = vmatpush1.msra.mxu0 %v1806
    %2386 = vmatprep.subr.mxu0 %v1803
    %2387 = vmatpush1.msra.mxu0 %v1802
    %2388 = vmatprep.subr.mxu0 %v1799
    %2389 = vmatpush1.msra.mxu0 %v1798
    %2390 = vmatprep.subr.mxu0 %v1923
    %2391 = vmatpush2.msra.mxu0 %v1922
    %2392 = vmatprep.subr.mxu0 %v1919
    %2393 = vmatpush2.msra.mxu0 %v1918
    %2394 = vmatprep.subr.mxu0 %v1915
    %2395 = vmatpush2.msra.mxu0 %v1914
    %2396 = vmatprep.subr.mxu0 %v1911
    %2397 = vmatpush2.msra.mxu0 %v1910
    %2398 = vmatprep.subr.mxu0 %v1907
    %2399 = vmatpush2.msra.mxu0 %v1906
    %2400 = vmatprep.subr.mxu0 %v1903
    %2401 = vmatpush2.msra.mxu0 %v1902
    %2402 = vmatprep.subr.mxu0 %v1899
    %2403 = vmatpush2.msra.mxu0 %v1898
    %2404 = vmatprep.subr.mxu0 %v1895
    %2405 = vmatpush2.msra.mxu0 %v1894
    %2406 = vmatprep.subr.mxu0 %v1891
    %2407 = vmatpush2.msra.mxu0 %v1890
    %2408 = vmatprep.subr.mxu0 %v1887
    %2409 = vmatpush2.msra.mxu0 %v1886
    %2410 = vmatprep.subr.mxu0 %v1883
    %2411 = vmatpush2.msra.mxu0 %v1882
    %2412 = vmatprep.subr.mxu0 %v1879
    %2413 = vmatpush2.msra.mxu0 %v1878
    %2414 = vmatprep.subr.mxu0 %v1875
    %2415 = vmatpush2.msra.mxu0 %v1874
    %2416 = vmatprep.subr.mxu0 %v1871
    %2417 = vmatpush2.msra.mxu0 %v1870
    %2418 = vmatprep.subr.mxu0 %v1867
    %2419 = vmatpush2.msra.mxu0 %v1866
    %2420 = vmatprep.subr.mxu0 %v1863
    %2421 = vmatpush2.msra.mxu0 %v1862
    %2422 = vmatprep.mubr.f32.mxu0 %v1665
    %2423 = vmatmul.mubr.f32.gmra.mxu0 %v1664
    %v2424 = vpop.f32.mrf.mxu0
    %v2425 = vadd.f32 %v2354, %v2424
    %v2426 = vpop.f32.mrf.mxu0
    %v2427 = vadd.f32 %v2356, %v2426
    %2428 = vdwg.mxu0
    %2429 = vmatprep.subr.mxu0 %v1987
    %2430 = vmatpush1.msra.mxu0 %v1986
    %2431 = vmatprep.subr.mxu0 %v1983
    %2432 = vmatpush1.msra.mxu0 %v1982
    %2433 = vmatprep.subr.mxu0 %v1979
    %2434 = vmatpush1.msra.mxu0 %v1978
    %2435 = vmatprep.subr.mxu0 %v1975
    %2436 = vmatpush1.msra.mxu0 %v1974
    %2437 = vmatprep.subr.mxu0 %v1971
    %2438 = vmatpush1.msra.mxu0 %v1970
    %2439 = vmatprep.subr.mxu0 %v1967
    %2440 = vmatpush1.msra.mxu0 %v1966
    %2441 = vmatprep.subr.mxu0 %v1963
    %2442 = vmatpush1.msra.mxu0 %v1962
    %2443 = vmatprep.subr.mxu0 %v1959
    %2444 = vmatpush1.msra.mxu0 %v1958
    %2445 = vmatprep.subr.mxu0 %v1955
    %2446 = vmatpush1.msra.mxu0 %v1954
    %2447 = vmatprep.subr.mxu0 %v1951
    %2448 = vmatpush1.msra.mxu0 %v1950
    %2449 = vmatprep.subr.mxu0 %v1947
    %2450 = vmatpush1.msra.mxu0 %v1946
    %2451 = vmatprep.subr.mxu0 %v1943
    %2452 = vmatpush1.msra.mxu0 %v1942
    %2453 = vmatprep.subr.mxu0 %v1939
    %2454 = vmatpush1.msra.mxu0 %v1938
    %2455 = vmatprep.subr.mxu0 %v1935
    %2456 = vmatpush1.msra.mxu0 %v1934
    %2457 = vmatprep.subr.mxu0 %v1931
    %2458 = vmatpush1.msra.mxu0 %v1930
    %2459 = vmatprep.subr.mxu0 %v1927
    %2460 = vmatpush1.msra.mxu0 %v1926
    %2461 = vmatprep.subr.mxu0 %v2051
    %2462 = vmatpush2.msra.mxu0 %v2050
    %2463 = vmatprep.subr.mxu0 %v2047
    %2464 = vmatpush2.msra.mxu0 %v2046
    %2465 = vmatprep.subr.mxu0 %v2043
    %2466 = vmatpush2.msra.mxu0 %v2042
    %2467 = vmatprep.subr.mxu0 %v2039
    %2468 = vmatpush2.msra.mxu0 %v2038
    %2469 = vmatprep.subr.mxu0 %v2035
    %2470 = vmatpush2.msra.mxu0 %v2034
    %2471 = vmatprep.subr.mxu0 %v2031
    %2472 = vmatpush2.msra.mxu0 %v2030
    %2473 = vmatprep.subr.mxu0 %v2027
    %2474 = vmatpush2.msra.mxu0 %v2026
    %2475 = vmatprep.subr.mxu0 %v2023
    %2476 = vmatpush2.msra.mxu0 %v2022
    %2477 = vmatprep.subr.mxu0 %v2019
    %2478 = vmatpush2.msra.mxu0 %v2018
    %2479 = vmatprep.subr.mxu0 %v2015
    %2480 = vmatpush2.msra.mxu0 %v2014
    %2481 = vmatprep.subr.mxu0 %v2011
    %2482 = vmatpush2.msra.mxu0 %v2010
    %2483 = vmatprep.subr.mxu0 %v2007
    %2484 = vmatpush2.msra.mxu0 %v2006
    %2485 = vmatprep.subr.mxu0 %v2003
    %2486 = vmatpush2.msra.mxu0 %v2002
    %2487 = vmatprep.subr.mxu0 %v1999
    %2488 = vmatpush2.msra.mxu0 %v1998
    %2489 = vmatprep.subr.mxu0 %v1995
    %2490 = vmatpush2.msra.mxu0 %v1994
    %2491 = vmatprep.subr.mxu0 %v1991
    %2492 = vmatpush2.msra.mxu0 %v1990
    %2493 = vmatprep.mubr.f32.mxu0 %v1667
    %2494 = vmatmul.mubr.f32.gmra.mxu0 %v1666
    %v2495 = vpop.f32.mrf.mxu0
    %v2496 = vadd.f32 %v2425, %v2495
    %v2497 = vpop.f32.mrf.mxu0
    %v2498 = vadd.f32 %v2427, %v2497
    %2499 = vdwg.mxu0
    %v2504 = vcombine.low %v2283, %v2285
    %v2505 = vcombine.low %v2496, %v2498
    %v2507 = vunpack.c.l.s4 1983009808
    %v2508 = vunpack.c.0.s8 %v2507
    %v2509 = vlaneseq
    %v2510 = vshrl.u32 %v2509, 7
    %v2511 = vsub.s32 %v2508, %v2510
    %v2512 = vrot.slane %v2504, %v2511
    %v2514 = vunpack.c.l.s4 1983009808
    %v2515 = vunpack.c.0.s8 %v2514
    %v2516 = vlaneseq
    %v2517 = vshrl.u32 %v2516, 7
    %v2518 = vsub.s32 %v2515, %v2517
    %v2519 = vrot.slane %v2505, %v2518
    %v2520 = vcombine.low %v2512, %v2519
    %2522 = vst [vmem:[#allocation5] sm:$0xff] %v2520
    // Predicated region
    $region38: #{image_encoder_forward.7} parent=1 // pred_check
      _
    $region39: #{image_encoder_forward.7} parent=1 // pred_check_branch
      %2524 = sbr.rel (0) target = $region41
    $region40: #{image_encoder_forward.7} parent=1 // pred_region
      %s2526 = ssub.s32 128, 128
      %2527 = vsyncadd [#allocation4], %s2526
      %s2529 = sshll.u32 [#allocation5], 4
      %s2530 = int_to_ptr.vmem [resolvable:$true] %s2529
      %2532 = dma.vmem_to_hbm [thread:$0]  %s2530, 128, %s8, [#allocation4]
    $region41: #{image_encoder_forward.7} parent=1 // pred_fallthru
      _
    // Predicated region
    $region42: #{image_encoder_forward.7} parent=1 // pred_check
      _
    $region43: #{image_encoder_forward.7} parent=1 // pred_check_branch
      %2534 = sbr.rel (0) target = $region45
    $region44: #{image_encoder_forward.7} parent=1 // pred_region
      %2535 = dma.done [#allocation4], 128
    $region45: #{image_encoder_forward.7} parent=1 // pred_fallthru
      _
    %2536 = vsyncpa [#allocation3], 1
    %2537 = vsyncpa [#allocation4], 1

</llo_original>
